<compile_context>
chip_gen: v5e
topology: v5e:2x2
jax: 0.10.0
libtpu: 0.0.40
codegen_flags: <defaults>
</compile_context>

<pallas_src>
import functools

import jax
import jax.numpy as jnp
from jax.experimental import pallas as pl
from jax.experimental.pallas import tpu as pltpu

# ----------------------------- configuration ------------------------------
D_MODEL  = 32          # d_model
DFF      = 64          # feed-forward hidden dim
NHEADS   = 4
DHEAD    = D_MODEL // NHEADS
NLAYERS  = 2
VOCAB    = 20
PAD_IDX  = 0           # vocab.stoi[vocab.pad_token]
NCLASSES = 10          # len(vocab.output_cats)
NEG      = -1e9        # additive mask value (stand-in for -inf)

_NT = (((1,), (1,)), ((), ()))   # dot_general dims for q @ k.T (no explicit transpose)


# ------------------------------ fused kernel -------------------------------
def _mcan_kernel(treedef, B, Nv, Lq, *refs):
    q_tok_ref, q_tok_t_ref, q_emb_ref, v_feat_ref = refs[:4]
    out_ref = refs[-1]
    p = jax.tree_util.tree_unflatten(treedef, refs[4:-1])

    f32 = jnp.float32
    D = D_MODEL
    scale = 1.0 / (DHEAD ** 0.5)

    # ----------------- helpers (operate on in-register values) -------------
    def linear(x, w, b, relu=False):
        y = jnp.dot(x, w, preferred_element_type=f32) + b
        return jnp.maximum(y, 0.0) if relu else y

    def layernorm(x, gb):                       # gb: (2, D) = [gamma; beta]
        mu = jnp.mean(x, axis=-1, keepdims=True)
        var = jnp.mean(jnp.square(x - mu), axis=-1, keepdims=True)
        return (x - mu) * jax.lax.rsqrt(var + 1e-5) * gb[0:1, :] + gb[1:2, :]

    def softmax_rows(s):
        s = s - jnp.max(s, axis=-1, keepdims=True)
        e = jnp.exp(s)
        return e * pl.reciprocal(jnp.sum(e, axis=-1, keepdims=True), approx=True)

    def mha(x_query, x_kv, lq, lk, wqkv, bqkv, wo, bo, masks):
        """Multi-head attention on flattened (B*len, D) activations."""
        if x_query is x_kv:                       # self-attention: fused QKV matmul
            qkv = linear(x_query, wqkv, bqkv)     # (B*lq, 3D)
            q, k, v = qkv[:, :D], qkv[:, D:2 * D], qkv[:, 2 * D:]
        else:                                     # cross-attention: Q + fused KV
            q = linear(x_query, wqkv[:, :D], bqkv[:, :D])
            kv = linear(x_kv, wqkv[:, D:], bqkv[:, D:])
            k, v = kv[:, :D], kv[:, D:]
        rows = []
        for b in range(B):
            qb = q[b * lq:(b + 1) * lq, :]
            kb = k[b * lk:(b + 1) * lk, :]
            vb = v[b * lk:(b + 1) * lk, :]
            heads = []
            for h in range(NHEADS):
                sl = slice(h * DHEAD, (h + 1) * DHEAD)
                s = jax.lax.dot_general(qb[:, sl], kb[:, sl], _NT,
                                        preferred_element_type=f32) * scale
                if masks is not None:
                    s = s + masks[b]              # broadcasts (1,lk) or (lq,lk)
                heads.append(jnp.dot(softmax_rows(s), vb[:, sl],
                                     preferred_element_type=f32))
            rows.append(jnp.concatenate(heads, axis=-1))
        return linear(jnp.concatenate(rows, axis=0), wo, bo)

    def att_flat(x, l, w1, b1, w2, b2, pad_cols):
        """MCAN AttFlat: MLP logits -> softmax over sequence -> weighted sum."""
        h = linear(x, w1, b1, relu=True)          # (B*l, DFF)
        logits = linear(h, w2, b2)                # (B*l, 1)
        pooled = []
        for b in range(B):
            lb = logits[b * l:(b + 1) * l, :]
            if pad_cols is not None:
                lb = lb + pad_cols[b]
            lb = lb - jnp.max(lb, axis=0, keepdims=True)
            e = jnp.exp(lb)
            w = e * pl.reciprocal(jnp.sum(e, axis=0, keepdims=True), approx=True)
            pooled.append(jnp.sum(x[b * l:(b + 1) * l, :] * w, axis=0, keepdims=True))
        return jnp.concatenate(pooled, axis=0)    # (B, D)

    # ----------------- masks built in-kernel from token ids -----------------
    pad_row = jnp.where(q_tok_ref[...] == PAD_IDX, NEG, 0.0).astype(f32)    # (B, Lq)
    pad_col = jnp.where(q_tok_t_ref[...] == PAD_IDX, NEG, 0.0).astype(f32)  # (Lq, B)
    rr = jax.lax.broadcasted_iota(jnp.int32, (Lq, Lq), 0)
    cc = jax.lax.broadcasted_iota(jnp.int32, (Lq, Lq), 1)
    causal = jnp.where(cc > rr, NEG, 0.0).astype(f32)                       # (Lq, Lq)
    q_sa_masks   = [jnp.minimum(causal, pad_row[b:b + 1, :]) for b in range(B)]
    ga_masks     = [pad_row[b:b + 1, :] for b in range(B)]
    q_flat_masks = [pad_col[:, b:b + 1] for b in range(B)]

    # ----------------- embeddings -------------------------------------------
    x_q = q_emb_ref[...]                                                    # (B*Lq, D)
    x_v = linear(v_feat_ref[...], p["vis_w"][...], p["vis_b"][...])         # (B*Nv, D)

    # ----------------- DeepCoAttention: question encoder --------------------
    enc = p["enc"]
    for lyr in range(NLAYERS):
        sa = mha(x_q, x_q, Lq, Lq, enc["sa_wqkv"][lyr], enc["sa_bqkv"][lyr],
                 enc["sa_wo"][lyr], enc["sa_bo"][lyr], q_sa_masks)
        x_q = layernorm(x_q + sa, enc["ln1"][lyr])
        ff = linear(linear(x_q, enc["ffn_w1"][lyr], enc["ffn_b1"][lyr], relu=True),
                    enc["ffn_w2"][lyr], enc["ffn_b2"][lyr])
        x_q = layernorm(x_q + ff, enc["ln2"][lyr])

    # ----------------- DeepCoAttention: visual decoder ----------------------
    dec = p["dec"]
    for lyr in range(NLAYERS):
        sa = mha(x_v, x_v, Nv, Nv, dec["sa_wqkv"][lyr], dec["sa_bqkv"][lyr],
                 dec["sa_wo"][lyr], dec["sa_bo"][lyr], None)   # all-zero mask skipped
        x_v = layernorm(x_v + sa, dec["ln1"][lyr])
        ga = mha(x_v, x_q, Nv, Lq, dec["ga_wqkv"][lyr], dec["ga_bqkv"][lyr],
                 dec["ga_wo"][lyr], dec["ga_bo"][lyr], ga_masks)
        x_v = layernorm(x_v + ga, dec["ln2"][lyr])
        ff = linear(linear(x_v, dec["ffn_w1"][lyr], dec["ffn_b1"][lyr], relu=True),
                    dec["ffn_w2"][lyr], dec["ffn_b2"][lyr])
        x_v = layernorm(x_v + ff, dec["ln3"][lyr])

    # ----------------- fusion + generator ------------------------------------
    fu = p["fusion"]
    q_pool = att_flat(x_q, Lq, fu["q_w1"][...], fu["q_b1"][...],
                      fu["q_w2"][...], fu["q_b2"][...], q_flat_masks)
    v_pool = att_flat(x_v, Nv, fu["v_w1"][...], fu["v_b1"][...],
                      fu["v_w2"][...], fu["v_b2"][...], None)
    fused = linear(q_pool, fu["q_proj_w"][...], fu["q_proj_b"][...]) + \
            linear(v_pool, fu["v_proj_w"][...], fu["v_proj_b"][...])
    fused = layernorm(fused, fu["ln"][...])
    out_ref[...] = linear(fused, p["gen_w"][...], p["gen_b"][...])


# --------------------------------- forward ---------------------------------
def mcan_forward(params, v_feats, q_tokens):
    B, Nv, Dv = v_feats.shape
    Lq = q_tokens.shape[1]

    # Plain-JAX glue: embedding-table gather + flattening (one XLA op each).
    q_emb = (params["embed"][q_tokens] * (D_MODEL ** 0.5)).reshape(B * Lq, D_MODEL)
    v_flat = v_feats.reshape(B * Nv, Dv)

    kparams = {k: v for k, v in params.items() if k != "embed"}
    leaves, treedef = jax.tree_util.tree_flatten(kparams)

    kernel = functools.partial(_mcan_kernel, treedef, B, Nv, Lq)
    n_in = 4 + len(leaves)
    return pl.pallas_call(
        kernel,
        in_specs=[pl.BlockSpec(memory_space=pltpu.MemorySpace.VMEM)] * n_in,
        out_specs=pl.BlockSpec(memory_space=pltpu.MemorySpace.VMEM),
        out_shape=jax.ShapeDtypeStruct((B, NCLASSES), jnp.float32),
    )(q_tokens, q_tokens.T, q_emb, v_flat, *leaves)


# ----------------------------- parameter init ------------------------------
def init_params(key, dv):
    keys = iter(jax.random.split(key, 64))

    def dense(fi, fo):
        w = jax.random.normal(next(keys), (fi, fo), jnp.float32) * (fi ** -0.5)
        return w, jnp.zeros((1, fo), jnp.float32)

    def ln_gb():   # (2, D): row0 = gamma, row1 = beta
        return jnp.stack([jnp.ones((D_MODEL,), jnp.float32),
                          jnp.zeros((D_MODEL,), jnp.float32)])

    def enc_layer():
        wqkv, bqkv = dense(D_MODEL, 3 * D_MODEL)
        wo, bo = dense(D_MODEL, D_MODEL)
        w1, b1 = dense(D_MODEL, DFF)
        w2, b2 = dense(DFF, D_MODEL)
        return {"sa_wqkv": wqkv, "sa_bqkv": bqkv, "sa_wo": wo, "sa_bo": bo,
                "ln1": ln_gb(),
                "ffn_w1": w1, "ffn_b1": b1, "ffn_w2": w2, "ffn_b2": b2,
                "ln2": ln_gb()}

    def dec_layer():
        sa_wqkv, sa_bqkv = dense(D_MODEL, 3 * D_MODEL)
        sa_wo, sa_bo = dense(D_MODEL, D_MODEL)
        ga_wqkv, ga_bqkv = dense(D_MODEL, 3 * D_MODEL)
        ga_wo, ga_bo = dense(D_MODEL, D_MODEL)
        w1, b1 = dense(D_MODEL, DFF)
        w2, b2 = dense(DFF, D_MODEL)
        return {"sa_wqkv": sa_wqkv, "sa_bqkv": sa_bqkv, "sa_wo": sa_wo, "sa_bo": sa_bo,
                "ln1": ln_gb(),
                "ga_wqkv": ga_wqkv, "ga_bqkv": ga_bqkv, "ga_wo": ga_wo, "ga_bo": ga_bo,
                "ln2": ln_gb(),
                "ffn_w1": w1, "ffn_b1": b1, "ffn_w2": w2, "ffn_b2": b2,
                "ln3": ln_gb()}

    def stack_layers(make, n):   # stack each param across layers -> leading L axis
        layers = [make() for _ in range(n)]
        return {k: jnp.stack([l[k] for l in layers]) for k in layers[0]}

    vis_w, vis_b = dense(dv, D_MODEL)
    q_w1, q_b1 = dense(D_MODEL, DFF)
    q_w2, q_b2 = dense(DFF, 1)
    v_w1, v_b1 = dense(D_MODEL, DFF)
    v_w2, v_b2 = dense(DFF, 1)
    q_pw, q_pb = dense(D_MODEL, D_MODEL)
    v_pw, v_pb = dense(D_MODEL, D_MODEL)
    gen_w, gen_b = dense(D_MODEL, NCLASSES)

    return {
        "embed": jax.random.normal(next(keys), (VOCAB, D_MODEL), jnp.float32) * 0.02,
        "vis_w": vis_w, "vis_b": vis_b,
        "enc": stack_layers(enc_layer, NLAYERS),
        "dec": stack_layers(dec_layer, NLAYERS),
        "fusion": {"q_w1": q_w1, "q_b1": q_b1, "q_w2": q_w2, "q_b2": q_b2,
                   "v_w1": v_w1, "v_b1": v_b1, "v_w2": v_w2, "v_b2": v_b2,
                   "q_proj_w": q_pw, "q_proj_b": q_pb,
                   "v_proj_w": v_pw, "v_proj_b": v_pb,
                   "ln": ln_gb()},
        "gen_w": gen_w, "gen_b": gen_b,
    }


# ----------------------------------- main -----------------------------------
if __name__ == "__main__":
    B, Nv, Dv, Lq = 2, 16, 48, 8

    key = jax.random.PRNGKey(0)
    pkey, vkey, qkey = jax.random.split(key, 3)

    params = init_params(pkey, Dv)
    v = jax.random.normal(vkey, (B, Nv, Dv), jnp.float32)
    q = jax.random.randint(qkey, (B, Lq), 1, VOCAB, dtype=jnp.int32)
    q = q.at[:, -2:].set(PAD_IDX)   # trailing padding tokens

    fwd = jax.jit(mcan_forward)
    out = jax.block_until_ready(fwd(params, v, q))

    assert out.shape == (B, NCLASSES), out.shape
    assert jnp.all(jnp.isfinite(out))
    print("KERNEL_OK")
</pallas_src>

<mosaic_0001>
module attributes {stable_mosaic.version = 11 : i64} {
  func.func @_mcan_kernel(%arg0: memref<2x8xi32, #tpu.memory_space<vmem>>, %arg1: memref<8x2xi32, #tpu.memory_space<vmem>>, %arg2: memref<16x32xf32, #tpu.memory_space<vmem>>, %arg3: memref<32x48xf32, #tpu.memory_space<vmem>>, %arg4: memref<2x1x64xf32, #tpu.memory_space<vmem>>, %arg5: memref<2x1x32xf32, #tpu.memory_space<vmem>>, %arg6: memref<2x32x64xf32, #tpu.memory_space<vmem>>, %arg7: memref<2x64x32xf32, #tpu.memory_space<vmem>>, %arg8: memref<2x1x32xf32, #tpu.memory_space<vmem>>, %arg9: memref<2x1x96xf32, #tpu.memory_space<vmem>>, %arg10: memref<2x32x32xf32, #tpu.memory_space<vmem>>, %arg11: memref<2x32x96xf32, #tpu.memory_space<vmem>>, %arg12: memref<2x2x32xf32, #tpu.memory_space<vmem>>, %arg13: memref<2x2x32xf32, #tpu.memory_space<vmem>>, %arg14: memref<2x2x32xf32, #tpu.memory_space<vmem>>, %arg15: memref<2x1x32xf32, #tpu.memory_space<vmem>>, %arg16: memref<2x1x96xf32, #tpu.memory_space<vmem>>, %arg17: memref<2x32x32xf32, #tpu.memory_space<vmem>>, %arg18: memref<2x32x96xf32, #tpu.memory_space<vmem>>, %arg19: memref<2x1x64xf32, #tpu.memory_space<vmem>>, %arg20: memref<2x1x32xf32, #tpu.memory_space<vmem>>, %arg21: memref<2x32x64xf32, #tpu.memory_space<vmem>>, %arg22: memref<2x64x32xf32, #tpu.memory_space<vmem>>, %arg23: memref<2x2x32xf32, #tpu.memory_space<vmem>>, %arg24: memref<2x2x32xf32, #tpu.memory_space<vmem>>, %arg25: memref<2x1x32xf32, #tpu.memory_space<vmem>>, %arg26: memref<2x1x96xf32, #tpu.memory_space<vmem>>, %arg27: memref<2x32x32xf32, #tpu.memory_space<vmem>>, %arg28: memref<2x32x96xf32, #tpu.memory_space<vmem>>, %arg29: memref<2x32xf32, #tpu.memory_space<vmem>>, %arg30: memref<1x64xf32, #tpu.memory_space<vmem>>, %arg31: memref<1x1xf32, #tpu.memory_space<vmem>>, %arg32: memref<1x32xf32, #tpu.memory_space<vmem>>, %arg33: memref<32x32xf32, #tpu.memory_space<vmem>>, %arg34: memref<32x64xf32, #tpu.memory_space<vmem>>, %arg35: memref<64x1xf32, #tpu.memory_space<vmem>>, %arg36: memref<1x64xf32, #tpu.memory_space<vmem>>, %arg37: memref<1x1xf32, #tpu.memory_space<vmem>>, %arg38: memref<1x32xf32, #tpu.memory_space<vmem>>, %arg39: memref<32x32xf32, #tpu.memory_space<vmem>>, %arg40: memref<32x64xf32, #tpu.memory_space<vmem>>, %arg41: memref<64x1xf32, #tpu.memory_space<vmem>>, %arg42: memref<1x10xf32, #tpu.memory_space<vmem>>, %arg43: memref<32x10xf32, #tpu.memory_space<vmem>>, %arg44: memref<1x32xf32, #tpu.memory_space<vmem>>, %arg45: memref<48x32xf32, #tpu.memory_space<vmem>>, %arg46: memref<2x10xf32, #tpu.memory_space<vmem>>) attributes {dimension_semantics = [], scalar_prefetch = 0 : i64, scratch_operands = 0 : i64, tpu.core_type = #tpu.core_type<tc>} {
    %c0 = arith.constant 0 : index
    %c0_0 = arith.constant 0 : index
    %0 = vector.load %arg0[%c0, %c0_0] : memref<2x8xi32, #tpu.memory_space<vmem>>, vector<2x8xi32>
    %c0_i32 = arith.constant 0 : i32
    %1 = vector.broadcast %c0_i32 : i32 to vector<2x8xi32>
    %2 = arith.cmpi eq, %0, %1 : vector<2x8xi32>
    %cst = arith.constant -1.000000e+09 : f32
    %cst_1 = arith.constant 0.000000e+00 : f32
    %3 = vector.broadcast %cst : f32 to vector<2x8xf32>
    %4 = vector.broadcast %cst_1 : f32 to vector<2x8xf32>
    %5 = arith.select %2, %3, %4 : vector<2x8xi1>, vector<2x8xf32>
    %c0_2 = arith.constant 0 : index
    %c0_3 = arith.constant 0 : index
    %6 = vector.load %arg1[%c0_2, %c0_3] : memref<8x2xi32, #tpu.memory_space<vmem>>, vector<8x2xi32>
    %c0_i32_4 = arith.constant 0 : i32
    %7 = vector.broadcast %c0_i32_4 : i32 to vector<8x2xi32>
    %8 = arith.cmpi eq, %6, %7 : vector<8x2xi32>
    %cst_5 = arith.constant -1.000000e+09 : f32
    %cst_6 = arith.constant 0.000000e+00 : f32
    %9 = vector.broadcast %cst_5 : f32 to vector<8x2xf32>
    %10 = vector.broadcast %cst_6 : f32 to vector<8x2xf32>
    %11 = arith.select %8, %9, %10 : vector<8x2xi1>, vector<8x2xf32>
    %12 = tpu.iota {dimensions = array<i32: 0>} : vector<8x8xi32>
    %13 = tpu.iota {dimensions = array<i32: 1>} : vector<8x8xi32>
    %14 = arith.cmpi sgt, %13, %12 : vector<8x8xi32>
    %cst_7 = arith.constant -1.000000e+09 : f32
    %cst_8 = arith.constant 0.000000e+00 : f32
    %15 = vector.broadcast %cst_7 : f32 to vector<8x8xf32>
    %16 = vector.broadcast %cst_8 : f32 to vector<8x8xf32>
    %17 = arith.select %14, %15, %16 : vector<8x8xi1>, vector<8x8xf32>
    %18 = vector.extract_strided_slice %5 {offsets = [0, 0], sizes = [1, 8], strides = [1, 1]} : vector<2x8xf32> to vector<1x8xf32>
    %19 = vector.broadcast %18 : vector<1x8xf32> to vector<8x8xf32>
    %20 = arith.minimumf %17, %19 : vector<8x8xf32>
    %21 = vector.extract_strided_slice %5 {offsets = [1, 0], sizes = [1, 8], strides = [1, 1]} : vector<2x8xf32> to vector<1x8xf32>
    %22 = vector.broadcast %21 : vector<1x8xf32> to vector<8x8xf32>
    %23 = arith.minimumf %17, %22 : vector<8x8xf32>
    %24 = vector.extract_strided_slice %5 {offsets = [0, 0], sizes = [1, 8], strides = [1, 1]} : vector<2x8xf32> to vector<1x8xf32>
    %25 = vector.extract_strided_slice %5 {offsets = [1, 0], sizes = [1, 8], strides = [1, 1]} : vector<2x8xf32> to vector<1x8xf32>
    %26 = vector.extract_strided_slice %11 {offsets = [0, 0], sizes = [8, 1], strides = [1, 1]} : vector<8x2xf32> to vector<8x1xf32>
    %27 = vector.extract_strided_slice %11 {offsets = [0, 1], sizes = [8, 1], strides = [1, 1]} : vector<8x2xf32> to vector<8x1xf32>
    %c0_9 = arith.constant 0 : index
    %c0_10 = arith.constant 0 : index
    %28 = vector.load %arg2[%c0_9, %c0_10] : memref<16x32xf32, #tpu.memory_space<vmem>>, vector<16x32xf32>
    %c0_11 = arith.constant 0 : index
    %c0_12 = arith.constant 0 : index
    %29 = vector.load %arg3[%c0_11, %c0_12] : memref<32x48xf32, #tpu.memory_space<vmem>>, vector<32x48xf32>
    %c0_13 = arith.constant 0 : index
    %c0_14 = arith.constant 0 : index
    %30 = vector.load %arg45[%c0_13, %c0_14] : memref<48x32xf32, #tpu.memory_space<vmem>>, vector<48x32xf32>
    %c0_15 = arith.constant 0 : index
    %c0_16 = arith.constant 0 : index
    %31 = vector.load %arg44[%c0_15, %c0_16] : memref<1x32xf32, #tpu.memory_space<vmem>>, vector<1x32xf32>
    %cst_17 = arith.constant dense<0.000000e+00> : vector<32x32xf32>
    %32 = tpu.matmul %29, %30, %cst_17 {dimension_numbers = #tpu.dot_dimension_numbers<[1], [0], [0], [1], [0, 0, 1, 1], [], []>} : vector<32x48xf32>, vector<48x32xf32>, vector<32x32xf32> -> vector<32x32xf32>
    %33 = vector.broadcast %31 : vector<1x32xf32> to vector<32x32xf32>
    %34 = arith.addf %32, %33 : vector<32x32xf32>
    %c0_18 = arith.constant 0 : index
    %c0_19 = arith.constant 0 : index
    %c0_20 = arith.constant 0 : index
    %35 = vector.load %arg28[%c0_18, %c0_19, %c0_20] : memref<2x32x96xf32, #tpu.memory_space<vmem>>, vector<1x32x96xf32>
    %36 = vector.shape_cast %35 : vector<1x32x96xf32> to vector<32x96xf32>
    %c0_21 = arith.constant 0 : index
    %c0_22 = arith.constant 0 : index
    %c0_23 = arith.constant 0 : index
    %37 = vector.load %arg26[%c0_21, %c0_22, %c0_23] : memref<2x1x96xf32, #tpu.memory_space<vmem>>, vector<1x1x96xf32>
    %38 = vector.shape_cast %37 : vector<1x1x96xf32> to vector<1x96xf32>
    %c0_24 = arith.constant 0 : index
    %c0_25 = arith.constant 0 : index
    %c0_26 = arith.constant 0 : index
    %39 = vector.load %arg27[%c0_24, %c0_25, %c0_26] : memref<2x32x32xf32, #tpu.memory_space<vmem>>, vector<1x32x32xf32>
    %40 = vector.shape_cast %39 : vector<1x32x32xf32> to vector<32x32xf32>
    %c0_27 = arith.constant 0 : index
    %c0_28 = arith.constant 0 : index
    %c0_29 = arith.constant 0 : index
    %41 = vector.load %arg25[%c0_27, %c0_28, %c0_29] : memref<2x1x32xf32, #tpu.memory_space<vmem>>, vector<1x1x32xf32>
    %42 = vector.shape_cast %41 : vector<1x1x32xf32> to vector<1x32xf32>
    %cst_30 = arith.constant dense<0.000000e+00> : vector<16x96xf32>
    %43 = tpu.matmul %28, %36, %cst_30 {dimension_numbers = #tpu.dot_dimension_numbers<[1], [0], [0], [1], [0, 0, 1, 1], [], []>} : vector<16x32xf32>, vector<32x96xf32>, vector<16x96xf32> -> vector<16x96xf32>
    %44 = vector.broadcast %38 : vector<1x96xf32> to vector<16x96xf32>
    %45 = arith.addf %43, %44 : vector<16x96xf32>
    %46 = vector.extract_strided_slice %45 {offsets = [0, 0], sizes = [16, 32], strides = [1, 1]} : vector<16x96xf32> to vector<16x32xf32>
    %47 = vector.extract_strided_slice %45 {offsets = [0, 32], sizes = [16, 32], strides = [1, 1]} : vector<16x96xf32> to vector<16x32xf32>
    %48 = vector.extract_strided_slice %45 {offsets = [0, 64], sizes = [16, 32], strides = [1, 1]} : vector<16x96xf32> to vector<16x32xf32>
    %49 = vector.extract_strided_slice %46 {offsets = [0, 0], sizes = [8, 32], strides = [1, 1]} : vector<16x32xf32> to vector<8x32xf32>
    %50 = vector.extract_strided_slice %47 {offsets = [0, 0], sizes = [8, 32], strides = [1, 1]} : vector<16x32xf32> to vector<8x32xf32>
    %51 = vector.extract_strided_slice %48 {offsets = [0, 0], sizes = [8, 32], strides = [1, 1]} : vector<16x32xf32> to vector<8x32xf32>
    %52 = vector.extract_strided_slice %49 {offsets = [0, 0], sizes = [8, 8], strides = [1, 1]} : vector<8x32xf32> to vector<8x8xf32>
    %53 = vector.extract_strided_slice %50 {offsets = [0, 0], sizes = [8, 8], strides = [1, 1]} : vector<8x32xf32> to vector<8x8xf32>
    %cst_31 = arith.constant dense<0.000000e+00> : vector<8x8xf32>
    %54 = tpu.matmul %52, %53, %cst_31 {dimension_numbers = #tpu.dot_dimension_numbers<[1], [1], [0], [0], [0, 0, 1, 0], [], []>} : vector<8x8xf32>, vector<8x8xf32>, vector<8x8xf32> -> vector<8x8xf32>
    %cst_32 = arith.constant 0.353553385 : f32
    %55 = vector.broadcast %cst_32 : f32 to vector<8x8xf32>
    %56 = arith.mulf %54, %55 : vector<8x8xf32>
    %57 = arith.addf %56, %20 : vector<8x8xf32>
    %cst_33 = arith.constant dense<0xFF800000> : vector<8xf32>
    %58 = vector.multi_reduction <maximumf>, %57, %cst_33 [1] : vector<8x8xf32> to vector<8xf32>
    %59 = vector.shape_cast %58 : vector<8xf32> to vector<8x1xf32>
    %60 = vector.broadcast %59 : vector<8x1xf32> to vector<8x8xf32>
    %61 = arith.subf %57, %60 : vector<8x8xf32>
    %62 = math.exp %61 : vector<8x8xf32>
    %cst_34 = arith.constant dense<0.000000e+00> : vector<8xf32>
    %63 = vector.multi_reduction <add>, %62, %cst_34 [1] : vector<8x8xf32> to vector<8xf32>
    %64 = vector.shape_cast %63 : vector<8xf32> to vector<8x1xf32>
    %65 = tpu.reciprocal %64 {approx = true} : vector<8x1xf32> -> vector<8x1xf32>
    %66 = vector.broadcast %65 : vector<8x1xf32> to vector<8x8xf32>
    %67 = arith.mulf %62, %66 : vector<8x8xf32>
    %68 = vector.extract_strided_slice %51 {offsets = [0, 0], sizes = [8, 8], strides = [1, 1]} : vector<8x32xf32> to vector<8x8xf32>
    %cst_35 = arith.constant dense<0.000000e+00> : vector<8x8xf32>
    %69 = tpu.matmul %67, %68, %cst_35 {dimension_numbers = #tpu.dot_dimension_numbers<[1], [0], [0], [1], [0, 0, 1, 1], [], []>} : vector<8x8xf32>, vector<8x8xf32>, vector<8x8xf32> -> vector<8x8xf32>
    %70 = vector.extract_strided_slice %49 {offsets = [0, 8], sizes = [8, 8], strides = [1, 1]} : vector<8x32xf32> to vector<8x8xf32>
    %71 = vector.extract_strided_slice %50 {offsets = [0, 8], sizes = [8, 8], strides = [1, 1]} : vector<8x32xf32> to vector<8x8xf32>
    %cst_36 = arith.constant dense<0.000000e+00> : vector<8x8xf32>
    %72 = tpu.matmul %70, %71, %cst_36 {dimension_numbers = #tpu.dot_dimension_numbers<[1], [1], [0], [0], [0, 0, 1, 0], [], []>} : vector<8x8xf32>, vector<8x8xf32>, vector<8x8xf32> -> vector<8x8xf32>
    %cst_37 = arith.constant 0.353553385 : f32
    %73 = vector.broadcast %cst_37 : f32 to vector<8x8xf32>
    %74 = arith.mulf %72, %73 : vector<8x8xf32>
    %75 = arith.addf %74, %20 : vector<8x8xf32>
    %cst_38 = arith.constant dense<0xFF800000> : vector<8xf32>
    %76 = vector.multi_reduction <maximumf>, %75, %cst_38 [1] : vector<8x8xf32> to vector<8xf32>
    %77 = vector.shape_cast %76 : vector<8xf32> to vector<8x1xf32>
    %78 = vector.broadcast %77 : vector<8x1xf32> to vector<8x8xf32>
    %79 = arith.subf %75, %78 : vector<8x8xf32>
    %80 = math.exp %79 : vector<8x8xf32>
    %cst_39 = arith.constant dense<0.000000e+00> : vector<8xf32>
    %81 = vector.multi_reduction <add>, %80, %cst_39 [1] : vector<8x8xf32> to vector<8xf32>
    %82 = vector.shape_cast %81 : vector<8xf32> to vector<8x1xf32>
    %83 = tpu.reciprocal %82 {approx = true} : vector<8x1xf32> -> vector<8x1xf32>
    %84 = vector.broadcast %83 : vector<8x1xf32> to vector<8x8xf32>
    %85 = arith.mulf %80, %84 : vector<8x8xf32>
    %86 = vector.extract_strided_slice %51 {offsets = [0, 8], sizes = [8, 8], strides = [1, 1]} : vector<8x32xf32> to vector<8x8xf32>
    %cst_40 = arith.constant dense<0.000000e+00> : vector<8x8xf32>
    %87 = tpu.matmul %85, %86, %cst_40 {dimension_numbers = #tpu.dot_dimension_numbers<[1], [0], [0], [1], [0, 0, 1, 1], [], []>} : vector<8x8xf32>, vector<8x8xf32>, vector<8x8xf32> -> vector<8x8xf32>
    %88 = vector.extract_strided_slice %49 {offsets = [0, 16], sizes = [8, 8], strides = [1, 1]} : vector<8x32xf32> to vector<8x8xf32>
    %89 = vector.extract_strided_slice %50 {offsets = [0, 16], sizes = [8, 8], strides = [1, 1]} : vector<8x32xf32> to vector<8x8xf32>
    %cst_41 = arith.constant dense<0.000000e+00> : vector<8x8xf32>
    %90 = tpu.matmul %88, %89, %cst_41 {dimension_numbers = #tpu.dot_dimension_numbers<[1], [1], [0], [0], [0, 0, 1, 0], [], []>} : vector<8x8xf32>, vector<8x8xf32>, vector<8x8xf32> -> vector<8x8xf32>
    %cst_42 = arith.constant 0.353553385 : f32
    %91 = vector.broadcast %cst_42 : f32 to vector<8x8xf32>
    %92 = arith.mulf %90, %91 : vector<8x8xf32>
    %93 = arith.addf %92, %20 : vector<8x8xf32>
    %cst_43 = arith.constant dense<0xFF800000> : vector<8xf32>
    %94 = vector.multi_reduction <maximumf>, %93, %cst_43 [1] : vector<8x8xf32> to vector<8xf32>
    %95 = vector.shape_cast %94 : vector<8xf32> to vector<8x1xf32>
    %96 = vector.broadcast %95 : vector<8x1xf32> to vector<8x8xf32>
    %97 = arith.subf %93, %96 : vector<8x8xf32>
    %98 = math.exp %97 : vector<8x8xf32>
    %cst_44 = arith.constant dense<0.000000e+00> : vector<8xf32>
    %99 = vector.multi_reduction <add>, %98, %cst_44 [1] : vector<8x8xf32> to vector<8xf32>
    %100 = vector.shape_cast %99 : vector<8xf32> to vector<8x1xf32>
    %101 = tpu.reciprocal %100 {approx = true} : vector<8x1xf32> -> vector<8x1xf32>
    %102 = vector.broadcast %101 : vector<8x1xf32> to vector<8x8xf32>
    %103 = arith.mulf %98, %102 : vector<8x8xf32>
    %104 = vector.extract_strided_slice %51 {offsets = [0, 16], sizes = [8, 8], strides = [1, 1]} : vector<8x32xf32> to vector<8x8xf32>
    %cst_45 = arith.constant dense<0.000000e+00> : vector<8x8xf32>
    %105 = tpu.matmul %103, %104, %cst_45 {dimension_numbers = #tpu.dot_dimension_numbers<[1], [0], [0], [1], [0, 0, 1, 1], [], []>} : vector<8x8xf32>, vector<8x8xf32>, vector<8x8xf32> -> vector<8x8xf32>
    %106 = vector.extract_strided_slice %49 {offsets = [0, 24], sizes = [8, 8], strides = [1, 1]} : vector<8x32xf32> to vector<8x8xf32>
    %107 = vector.extract_strided_slice %50 {offsets = [0, 24], sizes = [8, 8], strides = [1, 1]} : vector<8x32xf32> to vector<8x8xf32>
    %cst_46 = arith.constant dense<0.000000e+00> : vector<8x8xf32>
    %108 = tpu.matmul %106, %107, %cst_46 {dimension_numbers = #tpu.dot_dimension_numbers<[1], [1], [0], [0], [0, 0, 1, 0], [], []>} : vector<8x8xf32>, vector<8x8xf32>, vector<8x8xf32> -> vector<8x8xf32>
    %cst_47 = arith.constant 0.353553385 : f32
    %109 = vector.broadcast %cst_47 : f32 to vector<8x8xf32>
    %110 = arith.mulf %108, %109 : vector<8x8xf32>
    %111 = arith.addf %110, %20 : vector<8x8xf32>
    %cst_48 = arith.constant dense<0xFF800000> : vector<8xf32>
    %112 = vector.multi_reduction <maximumf>, %111, %cst_48 [1] : vector<8x8xf32> to vector<8xf32>
    %113 = vector.shape_cast %112 : vector<8xf32> to vector<8x1xf32>
    %114 = vector.broadcast %113 : vector<8x1xf32> to vector<8x8xf32>
    %115 = arith.subf %111, %114 : vector<8x8xf32>
    %116 = math.exp %115 : vector<8x8xf32>
    %cst_49 = arith.constant dense<0.000000e+00> : vector<8xf32>
    %117 = vector.multi_reduction <add>, %116, %cst_49 [1] : vector<8x8xf32> to vector<8xf32>
    %118 = vector.shape_cast %117 : vector<8xf32> to vector<8x1xf32>
    %119 = tpu.reciprocal %118 {approx = true} : vector<8x1xf32> -> vector<8x1xf32>
    %120 = vector.broadcast %119 : vector<8x1xf32> to vector<8x8xf32>
    %121 = arith.mulf %116, %120 : vector<8x8xf32>
    %122 = vector.extract_strided_slice %51 {offsets = [0, 24], sizes = [8, 8], strides = [1, 1]} : vector<8x32xf32> to vector<8x8xf32>
    %cst_50 = arith.constant dense<0.000000e+00> : vector<8x8xf32>
    %123 = tpu.matmul %121, %122, %cst_50 {dimension_numbers = #tpu.dot_dimension_numbers<[1], [0], [0], [1], [0, 0, 1, 1], [], []>} : vector<8x8xf32>, vector<8x8xf32>, vector<8x8xf32> -> vector<8x8xf32>
    %124 = tpu.concatenate %69, %87, %105, %123 in 1 : vector<8x8xf32>, vector<8x8xf32>, vector<8x8xf32>, vector<8x8xf32> -> vector<8x32xf32>
    %125 = vector.extract_strided_slice %46 {offsets = [8, 0], sizes = [8, 32], strides = [1, 1]} : vector<16x32xf32> to vector<8x32xf32>
    %126 = vector.extract_strided_slice %47 {offsets = [8, 0], sizes = [8, 32], strides = [1, 1]} : vector<16x32xf32> to vector<8x32xf32>
    %127 = vector.extract_strided_slice %48 {offsets = [8, 0], sizes = [8, 32], strides = [1, 1]} : vector<16x32xf32> to vector<8x32xf32>
    %128 = vector.extract_strided_slice %125 {offsets = [0, 0], sizes = [8, 8], strides = [1, 1]} : vector<8x32xf32> to vector<8x8xf32>
    %129 = vector.extract_strided_slice %126 {offsets = [0, 0], sizes = [8, 8], strides = [1, 1]} : vector<8x32xf32> to vector<8x8xf32>
    %cst_51 = arith.constant dense<0.000000e+00> : vector<8x8xf32>
    %130 = tpu.matmul %128, %129, %cst_51 {dimension_numbers = #tpu.dot_dimension_numbers<[1], [1], [0], [0], [0, 0, 1, 0], [], []>} : vector<8x8xf32>, vector<8x8xf32>, vector<8x8xf32> -> vector<8x8xf32>
    %cst_52 = arith.constant 0.353553385 : f32
    %131 = vector.broadcast %cst_52 : f32 to vector<8x8xf32>
    %132 = arith.mulf %130, %131 : vector<8x8xf32>
    %133 = arith.addf %132, %23 : vector<8x8xf32>
    %cst_53 = arith.constant dense<0xFF800000> : vector<8xf32>
    %134 = vector.multi_reduction <maximumf>, %133, %cst_53 [1] : vector<8x8xf32> to vector<8xf32>
    %135 = vector.shape_cast %134 : vector<8xf32> to vector<8x1xf32>
    %136 = vector.broadcast %135 : vector<8x1xf32> to vector<8x8xf32>
    %137 = arith.subf %133, %136 : vector<8x8xf32>
    %138 = math.exp %137 : vector<8x8xf32>
    %cst_54 = arith.constant dense<0.000000e+00> : vector<8xf32>
    %139 = vector.multi_reduction <add>, %138, %cst_54 [1] : vector<8x8xf32> to vector<8xf32>
    %140 = vector.shape_cast %139 : vector<8xf32> to vector<8x1xf32>
    %141 = tpu.reciprocal %140 {approx = true} : vector<8x1xf32> -> vector<8x1xf32>
    %142 = vector.broadcast %141 : vector<8x1xf32> to vector<8x8xf32>
    %143 = arith.mulf %138, %142 : vector<8x8xf32>
    %144 = vector.extract_strided_slice %127 {offsets = [0, 0], sizes = [8, 8], strides = [1, 1]} : vector<8x32xf32> to vector<8x8xf32>
    %cst_55 = arith.constant dense<0.000000e+00> : vector<8x8xf32>
    %145 = tpu.matmul %143, %144, %cst_55 {dimension_numbers = #tpu.dot_dimension_numbers<[1], [0], [0], [1], [0, 0, 1, 1], [], []>} : vector<8x8xf32>, vector<8x8xf32>, vector<8x8xf32> -> vector<8x8xf32>
    %146 = vector.extract_strided_slice %125 {offsets = [0, 8], sizes = [8, 8], strides = [1, 1]} : vector<8x32xf32> to vector<8x8xf32>
    %147 = vector.extract_strided_slice %126 {offsets = [0, 8], sizes = [8, 8], strides = [1, 1]} : vector<8x32xf32> to vector<8x8xf32>
    %cst_56 = arith.constant dense<0.000000e+00> : vector<8x8xf32>
    %148 = tpu.matmul %146, %147, %cst_56 {dimension_numbers = #tpu.dot_dimension_numbers<[1], [1], [0], [0], [0, 0, 1, 0], [], []>} : vector<8x8xf32>, vector<8x8xf32>, vector<8x8xf32> -> vector<8x8xf32>
    %cst_57 = arith.constant 0.353553385 : f32
    %149 = vector.broadcast %cst_57 : f32 to vector<8x8xf32>
    %150 = arith.mulf %148, %149 : vector<8x8xf32>
    %151 = arith.addf %150, %23 : vector<8x8xf32>
    %cst_58 = arith.constant dense<0xFF800000> : vector<8xf32>
    %152 = vector.multi_reduction <maximumf>, %151, %cst_58 [1] : vector<8x8xf32> to vector<8xf32>
    %153 = vector.shape_cast %152 : vector<8xf32> to vector<8x1xf32>
    %154 = vector.broadcast %153 : vector<8x1xf32> to vector<8x8xf32>
    %155 = arith.subf %151, %154 : vector<8x8xf32>
    %156 = math.exp %155 : vector<8x8xf32>
    %cst_59 = arith.constant dense<0.000000e+00> : vector<8xf32>
    %157 = vector.multi_reduction <add>, %156, %cst_59 [1] : vector<8x8xf32> to vector<8xf32>
    %158 = vector.shape_cast %157 : vector<8xf32> to vector<8x1xf32>
    %159 = tpu.reciprocal %158 {approx = true} : vector<8x1xf32> -> vector<8x1xf32>
    %160 = vector.broadcast %159 : vector<8x1xf32> to vector<8x8xf32>
    %161 = arith.mulf %156, %160 : vector<8x8xf32>
    %162 = vector.extract_strided_slice %127 {offsets = [0, 8], sizes = [8, 8], strides = [1, 1]} : vector<8x32xf32> to vector<8x8xf32>
    %cst_60 = arith.constant dense<0.000000e+00> : vector<8x8xf32>
    %163 = tpu.matmul %161, %162, %cst_60 {dimension_numbers = #tpu.dot_dimension_numbers<[1], [0], [0], [1], [0, 0, 1, 1], [], []>} : vector<8x8xf32>, vector<8x8xf32>, vector<8x8xf32> -> vector<8x8xf32>
    %164 = vector.extract_strided_slice %125 {offsets = [0, 16], sizes = [8, 8], strides = [1, 1]} : vector<8x32xf32> to vector<8x8xf32>
    %165 = vector.extract_strided_slice %126 {offsets = [0, 16], sizes = [8, 8], strides = [1, 1]} : vector<8x32xf32> to vector<8x8xf32>
    %cst_61 = arith.constant dense<0.000000e+00> : vector<8x8xf32>
    %166 = tpu.matmul %164, %165, %cst_61 {dimension_numbers = #tpu.dot_dimension_numbers<[1], [1], [0], [0], [0, 0, 1, 0], [], []>} : vector<8x8xf32>, vector<8x8xf32>, vector<8x8xf32> -> vector<8x8xf32>
    %cst_62 = arith.constant 0.353553385 : f32
    %167 = vector.broadcast %cst_62 : f32 to vector<8x8xf32>
    %168 = arith.mulf %166, %167 : vector<8x8xf32>
    %169 = arith.addf %168, %23 : vector<8x8xf32>
    %cst_63 = arith.constant dense<0xFF800000> : vector<8xf32>
    %170 = vector.multi_reduction <maximumf>, %169, %cst_63 [1] : vector<8x8xf32> to vector<8xf32>
    %171 = vector.shape_cast %170 : vector<8xf32> to vector<8x1xf32>
    %172 = vector.broadcast %171 : vector<8x1xf32> to vector<8x8xf32>
    %173 = arith.subf %169, %172 : vector<8x8xf32>
    %174 = math.exp %173 : vector<8x8xf32>
    %cst_64 = arith.constant dense<0.000000e+00> : vector<8xf32>
    %175 = vector.multi_reduction <add>, %174, %cst_64 [1] : vector<8x8xf32> to vector<8xf32>
    %176 = vector.shape_cast %175 : vector<8xf32> to vector<8x1xf32>
    %177 = tpu.reciprocal %176 {approx = true} : vector<8x1xf32> -> vector<8x1xf32>
    %178 = vector.broadcast %177 : vector<8x1xf32> to vector<8x8xf32>
    %179 = arith.mulf %174, %178 : vector<8x8xf32>
    %180 = vector.extract_strided_slice %127 {offsets = [0, 16], sizes = [8, 8], strides = [1, 1]} : vector<8x32xf32> to vector<8x8xf32>
    %cst_65 = arith.constant dense<0.000000e+00> : vector<8x8xf32>
    %181 = tpu.matmul %179, %180, %cst_65 {dimension_numbers = #tpu.dot_dimension_numbers<[1], [0], [0], [1], [0, 0, 1, 1], [], []>} : vector<8x8xf32>, vector<8x8xf32>, vector<8x8xf32> -> vector<8x8xf32>
    %182 = vector.extract_strided_slice %125 {offsets = [0, 24], sizes = [8, 8], strides = [1, 1]} : vector<8x32xf32> to vector<8x8xf32>
    %183 = vector.extract_strided_slice %126 {offsets = [0, 24], sizes = [8, 8], strides = [1, 1]} : vector<8x32xf32> to vector<8x8xf32>
    %cst_66 = arith.constant dense<0.000000e+00> : vector<8x8xf32>
    %184 = tpu.matmul %182, %183, %cst_66 {dimension_numbers = #tpu.dot_dimension_numbers<[1], [1], [0], [0], [0, 0, 1, 0], [], []>} : vector<8x8xf32>, vector<8x8xf32>, vector<8x8xf32> -> vector<8x8xf32>
    %cst_67 = arith.constant 0.353553385 : f32
    %185 = vector.broadcast %cst_67 : f32 to vector<8x8xf32>
    %186 = arith.mulf %184, %185 : vector<8x8xf32>
    %187 = arith.addf %186, %23 : vector<8x8xf32>
    %cst_68 = arith.constant dense<0xFF800000> : vector<8xf32>
    %188 = vector.multi_reduction <maximumf>, %187, %cst_68 [1] : vector<8x8xf32> to vector<8xf32>
    %189 = vector.shape_cast %188 : vector<8xf32> to vector<8x1xf32>
    %190 = vector.broadcast %189 : vector<8x1xf32> to vector<8x8xf32>
    %191 = arith.subf %187, %190 : vector<8x8xf32>
    %192 = math.exp %191 : vector<8x8xf32>
    %cst_69 = arith.constant dense<0.000000e+00> : vector<8xf32>
    %193 = vector.multi_reduction <add>, %192, %cst_69 [1] : vector<8x8xf32> to vector<8xf32>
    %194 = vector.shape_cast %193 : vector<8xf32> to vector<8x1xf32>
    %195 = tpu.reciprocal %194 {approx = true} : vector<8x1xf32> -> vector<8x1xf32>
    %196 = vector.broadcast %195 : vector<8x1xf32> to vector<8x8xf32>
    %197 = arith.mulf %192, %196 : vector<8x8xf32>
    %198 = vector.extract_strided_slice %127 {offsets = [0, 24], sizes = [8, 8], strides = [1, 1]} : vector<8x32xf32> to vector<8x8xf32>
    %cst_70 = arith.constant dense<0.000000e+00> : vector<8x8xf32>
    %199 = tpu.matmul %197, %198, %cst_70 {dimension_numbers = #tpu.dot_dimension_numbers<[1], [0], [0], [1], [0, 0, 1, 1], [], []>} : vector<8x8xf32>, vector<8x8xf32>, vector<8x8xf32> -> vector<8x8xf32>
    %200 = tpu.concatenate %145, %163, %181, %199 in 1 : vector<8x8xf32>, vector<8x8xf32>, vector<8x8xf32>, vector<8x8xf32> -> vector<8x32xf32>
    %201 = tpu.concatenate %124, %200 in 0 : vector<8x32xf32>, vector<8x32xf32> -> vector<16x32xf32>
    %cst_71 = arith.constant dense<0.000000e+00> : vector<16x32xf32>
    %202 = tpu.matmul %201, %40, %cst_71 {dimension_numbers = #tpu.dot_dimension_numbers<[1], [0], [0], [1], [0, 0, 1, 1], [], []>} : vector<16x32xf32>, vector<32x32xf32>, vector<16x32xf32> -> vector<16x32xf32>
    %203 = vector.broadcast %42 : vector<1x32xf32> to vector<16x32xf32>
    %204 = arith.addf %202, %203 : vector<16x32xf32>
    %205 = arith.addf %28, %204 : vector<16x32xf32>
    %c0_72 = arith.constant 0 : index
    %c0_73 = arith.constant 0 : index
    %c0_74 = arith.constant 0 : index
    %206 = vector.load %arg23[%c0_72, %c0_73, %c0_74] : memref<2x2x32xf32, #tpu.memory_space<vmem>>, vector<1x2x32xf32>
    %207 = vector.shape_cast %206 : vector<1x2x32xf32> to vector<2x32xf32>
    %cst_75 = arith.constant dense<0.000000e+00> : vector<16xf32>
    %208 = vector.multi_reduction <add>, %205, %cst_75 [1] : vector<16x32xf32> to vector<16xf32>
    %209 = vector.shape_cast %208 : vector<16xf32> to vector<16x1xf32>
    %cst_76 = arith.constant 3.200000e+01 : f32
    %210 = vector.broadcast %cst_76 : f32 to vector<16x1xf32>
    %211 = arith.divf %209, %210 : vector<16x1xf32>
    %212 = vector.broadcast %211 : vector<16x1xf32> to vector<16x32xf32>
    %213 = arith.subf %205, %212 : vector<16x32xf32>
    %214 = arith.mulf %213, %213 : vector<16x32xf32>
    %cst_77 = arith.constant dense<0.000000e+00> : vector<16xf32>
    %215 = vector.multi_reduction <add>, %214, %cst_77 [1] : vector<16x32xf32> to vector<16xf32>
    %216 = vector.shape_cast %215 : vector<16xf32> to vector<16x1xf32>
    %cst_78 = arith.constant 3.200000e+01 : f32
    %217 = vector.broadcast %cst_78 : f32 to vector<16x1xf32>
    %218 = arith.divf %216, %217 : vector<16x1xf32>
    %219 = vector.broadcast %211 : vector<16x1xf32> to vector<16x32xf32>
    %220 = arith.subf %205, %219 : vector<16x32xf32>
    %cst_79 = arith.constant 9.99999974E-6 : f32
    %221 = vector.broadcast %cst_79 : f32 to vector<16x1xf32>
    %222 = arith.addf %218, %221 : vector<16x1xf32>
    %223 = math.rsqrt %222 : vector<16x1xf32>
    %224 = vector.broadcast %223 : vector<16x1xf32> to vector<16x32xf32>
    %225 = arith.mulf %220, %224 : vector<16x32xf32>
    %226 = vector.extract_strided_slice %207 {offsets = [0, 0], sizes = [1, 32], strides = [1, 1]} : vector<2x32xf32> to vector<1x32xf32>
    %227 = vector.broadcast %226 : vector<1x32xf32> to vector<16x32xf32>
    %228 = arith.mulf %225, %227 : vector<16x32xf32>
    %229 = vector.extract_strided_slice %207 {offsets = [1, 0], sizes = [1, 32], strides = [1, 1]} : vector<2x32xf32> to vector<1x32xf32>
    %230 = vector.broadcast %229 : vector<1x32xf32> to vector<16x32xf32>
    %231 = arith.addf %228, %230 : vector<16x32xf32>
    %c0_80 = arith.constant 0 : index
    %c0_81 = arith.constant 0 : index
    %c0_82 = arith.constant 0 : index
    %232 = vector.load %arg21[%c0_80, %c0_81, %c0_82] : memref<2x32x64xf32, #tpu.memory_space<vmem>>, vector<1x32x64xf32>
    %233 = vector.shape_cast %232 : vector<1x32x64xf32> to vector<32x64xf32>
    %c0_83 = arith.constant 0 : index
    %c0_84 = arith.constant 0 : index
    %c0_85 = arith.constant 0 : index
    %234 = vector.load %arg19[%c0_83, %c0_84, %c0_85] : memref<2x1x64xf32, #tpu.memory_space<vmem>>, vector<1x1x64xf32>
    %235 = vector.shape_cast %234 : vector<1x1x64xf32> to vector<1x64xf32>
    %cst_86 = arith.constant dense<0.000000e+00> : vector<16x64xf32>
    %236 = tpu.matmul %231, %233, %cst_86 {dimension_numbers = #tpu.dot_dimension_numbers<[1], [0], [0], [1], [0, 0, 1, 1], [], []>} : vector<16x32xf32>, vector<32x64xf32>, vector<16x64xf32> -> vector<16x64xf32>
    %237 = vector.broadcast %235 : vector<1x64xf32> to vector<16x64xf32>
    %238 = arith.addf %236, %237 : vector<16x64xf32>
    %cst_87 = arith.constant 0.000000e+00 : f32
    %239 = vector.broadcast %cst_87 : f32 to vector<16x64xf32>
    %240 = arith.maximumf %238, %239 : vector<16x64xf32>
    %c0_88 = arith.constant 0 : index
    %c0_89 = arith.constant 0 : index
    %c0_90 = arith.constant 0 : index
    %241 = vector.load %arg22[%c0_88, %c0_89, %c0_90] : memref<2x64x32xf32, #tpu.memory_space<vmem>>, vector<1x64x32xf32>
    %242 = vector.shape_cast %241 : vector<1x64x32xf32> to vector<64x32xf32>
    %c0_91 = arith.constant 0 : index
    %c0_92 = arith.constant 0 : index
    %c0_93 = arith.constant 0 : index
    %243 = vector.load %arg20[%c0_91, %c0_92, %c0_93] : memref<2x1x32xf32, #tpu.memory_space<vmem>>, vector<1x1x32xf32>
    %244 = vector.shape_cast %243 : vector<1x1x32xf32> to vector<1x32xf32>
    %cst_94 = arith.constant dense<0.000000e+00> : vector<16x32xf32>
    %245 = tpu.matmul %240, %242, %cst_94 {dimension_numbers = #tpu.dot_dimension_numbers<[1], [0], [0], [1], [0, 0, 1, 1], [], []>} : vector<16x64xf32>, vector<64x32xf32>, vector<16x32xf32> -> vector<16x32xf32>
    %246 = vector.broadcast %244 : vector<1x32xf32> to vector<16x32xf32>
    %247 = arith.addf %245, %246 : vector<16x32xf32>
    %248 = arith.addf %231, %247 : vector<16x32xf32>
    %c0_95 = arith.constant 0 : index
    %c0_96 = arith.constant 0 : index
    %c0_97 = arith.constant 0 : index
    %249 = vector.load %arg24[%c0_95, %c0_96, %c0_97] : memref<2x2x32xf32, #tpu.memory_space<vmem>>, vector<1x2x32xf32>
    %250 = vector.shape_cast %249 : vector<1x2x32xf32> to vector<2x32xf32>
    %cst_98 = arith.constant dense<0.000000e+00> : vector<16xf32>
    %251 = vector.multi_reduction <add>, %248, %cst_98 [1] : vector<16x32xf32> to vector<16xf32>
    %252 = vector.shape_cast %251 : vector<16xf32> to vector<16x1xf32>
    %cst_99 = arith.constant 3.200000e+01 : f32
    %253 = vector.broadcast %cst_99 : f32 to vector<16x1xf32>
    %254 = arith.divf %252, %253 : vector<16x1xf32>
    %255 = vector.broadcast %254 : vector<16x1xf32> to vector<16x32xf32>
    %256 = arith.subf %248, %255 : vector<16x32xf32>
    %257 = arith.mulf %256, %256 : vector<16x32xf32>
    %cst_100 = arith.constant dense<0.000000e+00> : vector<16xf32>
    %258 = vector.multi_reduction <add>, %257, %cst_100 [1] : vector<16x32xf32> to vector<16xf32>
    %259 = vector.shape_cast %258 : vector<16xf32> to vector<16x1xf32>
    %cst_101 = arith.constant 3.200000e+01 : f32
    %260 = vector.broadcast %cst_101 : f32 to vector<16x1xf32>
    %261 = arith.divf %259, %260 : vector<16x1xf32>
    %262 = vector.broadcast %254 : vector<16x1xf32> to vector<16x32xf32>
    %263 = arith.subf %248, %262 : vector<16x32xf32>
    %cst_102 = arith.constant 9.99999974E-6 : f32
    %264 = vector.broadcast %cst_102 : f32 to vector<16x1xf32>
    %265 = arith.addf %261, %264 : vector<16x1xf32>
    %266 = math.rsqrt %265 : vector<16x1xf32>
    %267 = vector.broadcast %266 : vector<16x1xf32> to vector<16x32xf32>
    %268 = arith.mulf %263, %267 : vector<16x32xf32>
    %269 = vector.extract_strided_slice %250 {offsets = [0, 0], sizes = [1, 32], strides = [1, 1]} : vector<2x32xf32> to vector<1x32xf32>
    %270 = vector.broadcast %269 : vector<1x32xf32> to vector<16x32xf32>
    %271 = arith.mulf %268, %270 : vector<16x32xf32>
    %272 = vector.extract_strided_slice %250 {offsets = [1, 0], sizes = [1, 32], strides = [1, 1]} : vector<2x32xf32> to vector<1x32xf32>
    %273 = vector.broadcast %272 : vector<1x32xf32> to vector<16x32xf32>
    %274 = arith.addf %271, %273 : vector<16x32xf32>
    %c1 = arith.constant 1 : index
    %c0_103 = arith.constant 0 : index
    %c0_104 = arith.constant 0 : index
    %275 = vector.load %arg28[%c1, %c0_103, %c0_104] : memref<2x32x96xf32, #tpu.memory_space<vmem>>, vector<1x32x96xf32>
    %276 = vector.shape_cast %275 : vector<1x32x96xf32> to vector<32x96xf32>
    %c1_105 = arith.constant 1 : index
    %c0_106 = arith.constant 0 : index
    %c0_107 = arith.constant 0 : index
    %277 = vector.load %arg26[%c1_105, %c0_106, %c0_107] : memref<2x1x96xf32, #tpu.memory_space<vmem>>, vector<1x1x96xf32>
    %278 = vector.shape_cast %277 : vector<1x1x96xf32> to vector<1x96xf32>
    %c1_108 = arith.constant 1 : index
    %c0_109 = arith.constant 0 : index
    %c0_110 = arith.constant 0 : index
    %279 = vector.load %arg27[%c1_108, %c0_109, %c0_110] : memref<2x32x32xf32, #tpu.memory_space<vmem>>, vector<1x32x32xf32>
    %280 = vector.shape_cast %279 : vector<1x32x32xf32> to vector<32x32xf32>
    %c1_111 = arith.constant 1 : index
    %c0_112 = arith.constant 0 : index
    %c0_113 = arith.constant 0 : index
    %281 = vector.load %arg25[%c1_111, %c0_112, %c0_113] : memref<2x1x32xf32, #tpu.memory_space<vmem>>, vector<1x1x32xf32>
    %282 = vector.shape_cast %281 : vector<1x1x32xf32> to vector<1x32xf32>
    %cst_114 = arith.constant dense<0.000000e+00> : vector<16x96xf32>
    %283 = tpu.matmul %274, %276, %cst_114 {dimension_numbers = #tpu.dot_dimension_numbers<[1], [0], [0], [1], [0, 0, 1, 1], [], []>} : vector<16x32xf32>, vector<32x96xf32>, vector<16x96xf32> -> vector<16x96xf32>
    %284 = vector.broadcast %278 : vector<1x96xf32> to vector<16x96xf32>
    %285 = arith.addf %283, %284 : vector<16x96xf32>
    %286 = vector.extract_strided_slice %285 {offsets = [0, 0], sizes = [16, 32], strides = [1, 1]} : vector<16x96xf32> to vector<16x32xf32>
    %287 = vector.extract_strided_slice %285 {offsets = [0, 32], sizes = [16, 32], strides = [1, 1]} : vector<16x96xf32> to vector<16x32xf32>
    %288 = vector.extract_strided_slice %285 {offsets = [0, 64], sizes = [16, 32], strides = [1, 1]} : vector<16x96xf32> to vector<16x32xf32>
    %289 = vector.extract_strided_slice %286 {offsets = [0, 0], sizes = [8, 32], strides = [1, 1]} : vector<16x32xf32> to vector<8x32xf32>
    %290 = vector.extract_strided_slice %287 {offsets = [0, 0], sizes = [8, 32], strides = [1, 1]} : vector<16x32xf32> to vector<8x32xf32>
    %291 = vector.extract_strided_slice %288 {offsets = [0, 0], sizes = [8, 32], strides = [1, 1]} : vector<16x32xf32> to vector<8x32xf32>
    %292 = vector.extract_strided_slice %289 {offsets = [0, 0], sizes = [8, 8], strides = [1, 1]} : vector<8x32xf32> to vector<8x8xf32>
    %293 = vector.extract_strided_slice %290 {offsets = [0, 0], sizes = [8, 8], strides = [1, 1]} : vector<8x32xf32> to vector<8x8xf32>
    %cst_115 = arith.constant dense<0.000000e+00> : vector<8x8xf32>
    %294 = tpu.matmul %292, %293, %cst_115 {dimension_numbers = #tpu.dot_dimension_numbers<[1], [1], [0], [0], [0, 0, 1, 0], [], []>} : vector<8x8xf32>, vector<8x8xf32>, vector<8x8xf32> -> vector<8x8xf32>
    %cst_116 = arith.constant 0.353553385 : f32
    %295 = vector.broadcast %cst_116 : f32 to vector<8x8xf32>
    %296 = arith.mulf %294, %295 : vector<8x8xf32>
    %297 = arith.addf %296, %20 : vector<8x8xf32>
    %cst_117 = arith.constant dense<0xFF800000> : vector<8xf32>
    %298 = vector.multi_reduction <maximumf>, %297, %cst_117 [1] : vector<8x8xf32> to vector<8xf32>
    %299 = vector.shape_cast %298 : vector<8xf32> to vector<8x1xf32>
    %300 = vector.broadcast %299 : vector<8x1xf32> to vector<8x8xf32>
    %301 = arith.subf %297, %300 : vector<8x8xf32>
    %302 = math.exp %301 : vector<8x8xf32>
    %cst_118 = arith.constant dense<0.000000e+00> : vector<8xf32>
    %303 = vector.multi_reduction <add>, %302, %cst_118 [1] : vector<8x8xf32> to vector<8xf32>
    %304 = vector.shape_cast %303 : vector<8xf32> to vector<8x1xf32>
    %305 = tpu.reciprocal %304 {approx = true} : vector<8x1xf32> -> vector<8x1xf32>
    %306 = vector.broadcast %305 : vector<8x1xf32> to vector<8x8xf32>
    %307 = arith.mulf %302, %306 : vector<8x8xf32>
    %308 = vector.extract_strided_slice %291 {offsets = [0, 0], sizes = [8, 8], strides = [1, 1]} : vector<8x32xf32> to vector<8x8xf32>
    %cst_119 = arith.constant dense<0.000000e+00> : vector<8x8xf32>
    %309 = tpu.matmul %307, %308, %cst_119 {dimension_numbers = #tpu.dot_dimension_numbers<[1], [0], [0], [1], [0, 0, 1, 1], [], []>} : vector<8x8xf32>, vector<8x8xf32>, vector<8x8xf32> -> vector<8x8xf32>
    %310 = vector.extract_strided_slice %289 {offsets = [0, 8], sizes = [8, 8], strides = [1, 1]} : vector<8x32xf32> to vector<8x8xf32>
    %311 = vector.extract_strided_slice %290 {offsets = [0, 8], sizes = [8, 8], strides = [1, 1]} : vector<8x32xf32> to vector<8x8xf32>
    %cst_120 = arith.constant dense<0.000000e+00> : vector<8x8xf32>
    %312 = tpu.matmul %310, %311, %cst_120 {dimension_numbers = #tpu.dot_dimension_numbers<[1], [1], [0], [0], [0, 0, 1, 0], [], []>} : vector<8x8xf32>, vector<8x8xf32>, vector<8x8xf32> -> vector<8x8xf32>
    %cst_121 = arith.constant 0.353553385 : f32
    %313 = vector.broadcast %cst_121 : f32 to vector<8x8xf32>
    %314 = arith.mulf %312, %313 : vector<8x8xf32>
    %315 = arith.addf %314, %20 : vector<8x8xf32>
    %cst_122 = arith.constant dense<0xFF800000> : vector<8xf32>
    %316 = vector.multi_reduction <maximumf>, %315, %cst_122 [1] : vector<8x8xf32> to vector<8xf32>
    %317 = vector.shape_cast %316 : vector<8xf32> to vector<8x1xf32>
    %318 = vector.broadcast %317 : vector<8x1xf32> to vector<8x8xf32>
    %319 = arith.subf %315, %318 : vector<8x8xf32>
    %320 = math.exp %319 : vector<8x8xf32>
    %cst_123 = arith.constant dense<0.000000e+00> : vector<8xf32>
    %321 = vector.multi_reduction <add>, %320, %cst_123 [1] : vector<8x8xf32> to vector<8xf32>
    %322 = vector.shape_cast %321 : vector<8xf32> to vector<8x1xf32>
    %323 = tpu.reciprocal %322 {approx = true} : vector<8x1xf32> -> vector<8x1xf32>
    %324 = vector.broadcast %323 : vector<8x1xf32> to vector<8x8xf32>
    %325 = arith.mulf %320, %324 : vector<8x8xf32>
    %326 = vector.extract_strided_slice %291 {offsets = [0, 8], sizes = [8, 8], strides = [1, 1]} : vector<8x32xf32> to vector<8x8xf32>
    %cst_124 = arith.constant dense<0.000000e+00> : vector<8x8xf32>
    %327 = tpu.matmul %325, %326, %cst_124 {dimension_numbers = #tpu.dot_dimension_numbers<[1], [0], [0], [1], [0, 0, 1, 1], [], []>} : vector<8x8xf32>, vector<8x8xf32>, vector<8x8xf32> -> vector<8x8xf32>
    %328 = vector.extract_strided_slice %289 {offsets = [0, 16], sizes = [8, 8], strides = [1, 1]} : vector<8x32xf32> to vector<8x8xf32>
    %329 = vector.extract_strided_slice %290 {offsets = [0, 16], sizes = [8, 8], strides = [1, 1]} : vector<8x32xf32> to vector<8x8xf32>
    %cst_125 = arith.constant dense<0.000000e+00> : vector<8x8xf32>
    %330 = tpu.matmul %328, %329, %cst_125 {dimension_numbers = #tpu.dot_dimension_numbers<[1], [1], [0], [0], [0, 0, 1, 0], [], []>} : vector<8x8xf32>, vector<8x8xf32>, vector<8x8xf32> -> vector<8x8xf32>
    %cst_126 = arith.constant 0.353553385 : f32
    %331 = vector.broadcast %cst_126 : f32 to vector<8x8xf32>
    %332 = arith.mulf %330, %331 : vector<8x8xf32>
    %333 = arith.addf %332, %20 : vector<8x8xf32>
    %cst_127 = arith.constant dense<0xFF800000> : vector<8xf32>
    %334 = vector.multi_reduction <maximumf>, %333, %cst_127 [1] : vector<8x8xf32> to vector<8xf32>
    %335 = vector.shape_cast %334 : vector<8xf32> to vector<8x1xf32>
    %336 = vector.broadcast %335 : vector<8x1xf32> to vector<8x8xf32>
    %337 = arith.subf %333, %336 : vector<8x8xf32>
    %338 = math.exp %337 : vector<8x8xf32>
    %cst_128 = arith.constant dense<0.000000e+00> : vector<8xf32>
    %339 = vector.multi_reduction <add>, %338, %cst_128 [1] : vector<8x8xf32> to vector<8xf32>
    %340 = vector.shape_cast %339 : vector<8xf32> to vector<8x1xf32>
    %341 = tpu.reciprocal %340 {approx = true} : vector<8x1xf32> -> vector<8x1xf32>
    %342 = vector.broadcast %341 : vector<8x1xf32> to vector<8x8xf32>
    %343 = arith.mulf %338, %342 : vector<8x8xf32>
    %344 = vector.extract_strided_slice %291 {offsets = [0, 16], sizes = [8, 8], strides = [1, 1]} : vector<8x32xf32> to vector<8x8xf32>
    %cst_129 = arith.constant dense<0.000000e+00> : vector<8x8xf32>
    %345 = tpu.matmul %343, %344, %cst_129 {dimension_numbers = #tpu.dot_dimension_numbers<[1], [0], [0], [1], [0, 0, 1, 1], [], []>} : vector<8x8xf32>, vector<8x8xf32>, vector<8x8xf32> -> vector<8x8xf32>
    %346 = vector.extract_strided_slice %289 {offsets = [0, 24], sizes = [8, 8], strides = [1, 1]} : vector<8x32xf32> to vector<8x8xf32>
    %347 = vector.extract_strided_slice %290 {offsets = [0, 24], sizes = [8, 8], strides = [1, 1]} : vector<8x32xf32> to vector<8x8xf32>
    %cst_130 = arith.constant dense<0.000000e+00> : vector<8x8xf32>
    %348 = tpu.matmul %346, %347, %cst_130 {dimension_numbers = #tpu.dot_dimension_numbers<[1], [1], [0], [0], [0, 0, 1, 0], [], []>} : vector<8x8xf32>, vector<8x8xf32>, vector<8x8xf32> -> vector<8x8xf32>
    %cst_131 = arith.constant 0.353553385 : f32
    %349 = vector.broadcast %cst_131 : f32 to vector<8x8xf32>
    %350 = arith.mulf %348, %349 : vector<8x8xf32>
    %351 = arith.addf %350, %20 : vector<8x8xf32>
    %cst_132 = arith.constant dense<0xFF800000> : vector<8xf32>
    %352 = vector.multi_reduction <maximumf>, %351, %cst_132 [1] : vector<8x8xf32> to vector<8xf32>
    %353 = vector.shape_cast %352 : vector<8xf32> to vector<8x1xf32>
    %354 = vector.broadcast %353 : vector<8x1xf32> to vector<8x8xf32>
    %355 = arith.subf %351, %354 : vector<8x8xf32>
    %356 = math.exp %355 : vector<8x8xf32>
    %cst_133 = arith.constant dense<0.000000e+00> : vector<8xf32>
    %357 = vector.multi_reduction <add>, %356, %cst_133 [1] : vector<8x8xf32> to vector<8xf32>
    %358 = vector.shape_cast %357 : vector<8xf32> to vector<8x1xf32>
    %359 = tpu.reciprocal %358 {approx = true} : vector<8x1xf32> -> vector<8x1xf32>
    %360 = vector.broadcast %359 : vector<8x1xf32> to vector<8x8xf32>
    %361 = arith.mulf %356, %360 : vector<8x8xf32>
    %362 = vector.extract_strided_slice %291 {offsets = [0, 24], sizes = [8, 8], strides = [1, 1]} : vector<8x32xf32> to vector<8x8xf32>
    %cst_134 = arith.constant dense<0.000000e+00> : vector<8x8xf32>
    %363 = tpu.matmul %361, %362, %cst_134 {dimension_numbers = #tpu.dot_dimension_numbers<[1], [0], [0], [1], [0, 0, 1, 1], [], []>} : vector<8x8xf32>, vector<8x8xf32>, vector<8x8xf32> -> vector<8x8xf32>
    %364 = tpu.concatenate %309, %327, %345, %363 in 1 : vector<8x8xf32>, vector<8x8xf32>, vector<8x8xf32>, vector<8x8xf32> -> vector<8x32xf32>
    %365 = vector.extract_strided_slice %286 {offsets = [8, 0], sizes = [8, 32], strides = [1, 1]} : vector<16x32xf32> to vector<8x32xf32>
    %366 = vector.extract_strided_slice %287 {offsets = [8, 0], sizes = [8, 32], strides = [1, 1]} : vector<16x32xf32> to vector<8x32xf32>
    %367 = vector.extract_strided_slice %288 {offsets = [8, 0], sizes = [8, 32], strides = [1, 1]} : vector<16x32xf32> to vector<8x32xf32>
    %368 = vector.extract_strided_slice %365 {offsets = [0, 0], sizes = [8, 8], strides = [1, 1]} : vector<8x32xf32> to vector<8x8xf32>
    %369 = vector.extract_strided_slice %366 {offsets = [0, 0], sizes = [8, 8], strides = [1, 1]} : vector<8x32xf32> to vector<8x8xf32>
    %cst_135 = arith.constant dense<0.000000e+00> : vector<8x8xf32>
    %370 = tpu.matmul %368, %369, %cst_135 {dimension_numbers = #tpu.dot_dimension_numbers<[1], [1], [0], [0], [0, 0, 1, 0], [], []>} : vector<8x8xf32>, vector<8x8xf32>, vector<8x8xf32> -> vector<8x8xf32>
    %cst_136 = arith.constant 0.353553385 : f32
    %371 = vector.broadcast %cst_136 : f32 to vector<8x8xf32>
    %372 = arith.mulf %370, %371 : vector<8x8xf32>
    %373 = arith.addf %372, %23 : vector<8x8xf32>
    %cst_137 = arith.constant dense<0xFF800000> : vector<8xf32>
    %374 = vector.multi_reduction <maximumf>, %373, %cst_137 [1] : vector<8x8xf32> to vector<8xf32>
    %375 = vector.shape_cast %374 : vector<8xf32> to vector<8x1xf32>
    %376 = vector.broadcast %375 : vector<8x1xf32> to vector<8x8xf32>
    %377 = arith.subf %373, %376 : vector<8x8xf32>
    %378 = math.exp %377 : vector<8x8xf32>
    %cst_138 = arith.constant dense<0.000000e+00> : vector<8xf32>
    %379 = vector.multi_reduction <add>, %378, %cst_138 [1] : vector<8x8xf32> to vector<8xf32>
    %380 = vector.shape_cast %379 : vector<8xf32> to vector<8x1xf32>
    %381 = tpu.reciprocal %380 {approx = true} : vector<8x1xf32> -> vector<8x1xf32>
    %382 = vector.broadcast %381 : vector<8x1xf32> to vector<8x8xf32>
    %383 = arith.mulf %378, %382 : vector<8x8xf32>
    %384 = vector.extract_strided_slice %367 {offsets = [0, 0], sizes = [8, 8], strides = [1, 1]} : vector<8x32xf32> to vector<8x8xf32>
    %cst_139 = arith.constant dense<0.000000e+00> : vector<8x8xf32>
    %385 = tpu.matmul %383, %384, %cst_139 {dimension_numbers = #tpu.dot_dimension_numbers<[1], [0], [0], [1], [0, 0, 1, 1], [], []>} : vector<8x8xf32>, vector<8x8xf32>, vector<8x8xf32> -> vector<8x8xf32>
    %386 = vector.extract_strided_slice %365 {offsets = [0, 8], sizes = [8, 8], strides = [1, 1]} : vector<8x32xf32> to vector<8x8xf32>
    %387 = vector.extract_strided_slice %366 {offsets = [0, 8], sizes = [8, 8], strides = [1, 1]} : vector<8x32xf32> to vector<8x8xf32>
    %cst_140 = arith.constant dense<0.000000e+00> : vector<8x8xf32>
    %388 = tpu.matmul %386, %387, %cst_140 {dimension_numbers = #tpu.dot_dimension_numbers<[1], [1], [0], [0], [0, 0, 1, 0], [], []>} : vector<8x8xf32>, vector<8x8xf32>, vector<8x8xf32> -> vector<8x8xf32>
    %cst_141 = arith.constant 0.353553385 : f32
    %389 = vector.broadcast %cst_141 : f32 to vector<8x8xf32>
    %390 = arith.mulf %388, %389 : vector<8x8xf32>
    %391 = arith.addf %390, %23 : vector<8x8xf32>
    %cst_142 = arith.constant dense<0xFF800000> : vector<8xf32>
    %392 = vector.multi_reduction <maximumf>, %391, %cst_142 [1] : vector<8x8xf32> to vector<8xf32>
    %393 = vector.shape_cast %392 : vector<8xf32> to vector<8x1xf32>
    %394 = vector.broadcast %393 : vector<8x1xf32> to vector<8x8xf32>
    %395 = arith.subf %391, %394 : vector<8x8xf32>
    %396 = math.exp %395 : vector<8x8xf32>
    %cst_143 = arith.constant dense<0.000000e+00> : vector<8xf32>
    %397 = vector.multi_reduction <add>, %396, %cst_143 [1] : vector<8x8xf32> to vector<8xf32>
    %398 = vector.shape_cast %397 : vector<8xf32> to vector<8x1xf32>
    %399 = tpu.reciprocal %398 {approx = true} : vector<8x1xf32> -> vector<8x1xf32>
    %400 = vector.broadcast %399 : vector<8x1xf32> to vector<8x8xf32>
    %401 = arith.mulf %396, %400 : vector<8x8xf32>
    %402 = vector.extract_strided_slice %367 {offsets = [0, 8], sizes = [8, 8], strides = [1, 1]} : vector<8x32xf32> to vector<8x8xf32>
    %cst_144 = arith.constant dense<0.000000e+00> : vector<8x8xf32>
    %403 = tpu.matmul %401, %402, %cst_144 {dimension_numbers = #tpu.dot_dimension_numbers<[1], [0], [0], [1], [0, 0, 1, 1], [], []>} : vector<8x8xf32>, vector<8x8xf32>, vector<8x8xf32> -> vector<8x8xf32>
    %404 = vector.extract_strided_slice %365 {offsets = [0, 16], sizes = [8, 8], strides = [1, 1]} : vector<8x32xf32> to vector<8x8xf32>
    %405 = vector.extract_strided_slice %366 {offsets = [0, 16], sizes = [8, 8], strides = [1, 1]} : vector<8x32xf32> to vector<8x8xf32>
    %cst_145 = arith.constant dense<0.000000e+00> : vector<8x8xf32>
    %406 = tpu.matmul %404, %405, %cst_145 {dimension_numbers = #tpu.dot_dimension_numbers<[1], [1], [0], [0], [0, 0, 1, 0], [], []>} : vector<8x8xf32>, vector<8x8xf32>, vector<8x8xf32> -> vector<8x8xf32>
    %cst_146 = arith.constant 0.353553385 : f32
    %407 = vector.broadcast %cst_146 : f32 to vector<8x8xf32>
    %408 = arith.mulf %406, %407 : vector<8x8xf32>
    %409 = arith.addf %408, %23 : vector<8x8xf32>
    %cst_147 = arith.constant dense<0xFF800000> : vector<8xf32>
    %410 = vector.multi_reduction <maximumf>, %409, %cst_147 [1] : vector<8x8xf32> to vector<8xf32>
    %411 = vector.shape_cast %410 : vector<8xf32> to vector<8x1xf32>
    %412 = vector.broadcast %411 : vector<8x1xf32> to vector<8x8xf32>
    %413 = arith.subf %409, %412 : vector<8x8xf32>
    %414 = math.exp %413 : vector<8x8xf32>
    %cst_148 = arith.constant dense<0.000000e+00> : vector<8xf32>
    %415 = vector.multi_reduction <add>, %414, %cst_148 [1] : vector<8x8xf32> to vector<8xf32>
    %416 = vector.shape_cast %415 : vector<8xf32> to vector<8x1xf32>
    %417 = tpu.reciprocal %416 {approx = true} : vector<8x1xf32> -> vector<8x1xf32>
    %418 = vector.broadcast %417 : vector<8x1xf32> to vector<8x8xf32>
    %419 = arith.mulf %414, %418 : vector<8x8xf32>
    %420 = vector.extract_strided_slice %367 {offsets = [0, 16], sizes = [8, 8], strides = [1, 1]} : vector<8x32xf32> to vector<8x8xf32>
    %cst_149 = arith.constant dense<0.000000e+00> : vector<8x8xf32>
    %421 = tpu.matmul %419, %420, %cst_149 {dimension_numbers = #tpu.dot_dimension_numbers<[1], [0], [0], [1], [0, 0, 1, 1], [], []>} : vector<8x8xf32>, vector<8x8xf32>, vector<8x8xf32> -> vector<8x8xf32>
    %422 = vector.extract_strided_slice %365 {offsets = [0, 24], sizes = [8, 8], strides = [1, 1]} : vector<8x32xf32> to vector<8x8xf32>
    %423 = vector.extract_strided_slice %366 {offsets = [0, 24], sizes = [8, 8], strides = [1, 1]} : vector<8x32xf32> to vector<8x8xf32>
    %cst_150 = arith.constant dense<0.000000e+00> : vector<8x8xf32>
    %424 = tpu.matmul %422, %423, %cst_150 {dimension_numbers = #tpu.dot_dimension_numbers<[1], [1], [0], [0], [0, 0, 1, 0], [], []>} : vector<8x8xf32>, vector<8x8xf32>, vector<8x8xf32> -> vector<8x8xf32>
    %cst_151 = arith.constant 0.353553385 : f32
    %425 = vector.broadcast %cst_151 : f32 to vector<8x8xf32>
    %426 = arith.mulf %424, %425 : vector<8x8xf32>
    %427 = arith.addf %426, %23 : vector<8x8xf32>
    %cst_152 = arith.constant dense<0xFF800000> : vector<8xf32>
    %428 = vector.multi_reduction <maximumf>, %427, %cst_152 [1] : vector<8x8xf32> to vector<8xf32>
    %429 = vector.shape_cast %428 : vector<8xf32> to vector<8x1xf32>
    %430 = vector.broadcast %429 : vector<8x1xf32> to vector<8x8xf32>
    %431 = arith.subf %427, %430 : vector<8x8xf32>
    %432 = math.exp %431 : vector<8x8xf32>
    %cst_153 = arith.constant dense<0.000000e+00> : vector<8xf32>
    %433 = vector.multi_reduction <add>, %432, %cst_153 [1] : vector<8x8xf32> to vector<8xf32>
    %434 = vector.shape_cast %433 : vector<8xf32> to vector<8x1xf32>
    %435 = tpu.reciprocal %434 {approx = true} : vector<8x1xf32> -> vector<8x1xf32>
    %436 = vector.broadcast %435 : vector<8x1xf32> to vector<8x8xf32>
    %437 = arith.mulf %432, %436 : vector<8x8xf32>
    %438 = vector.extract_strided_slice %367 {offsets = [0, 24], sizes = [8, 8], strides = [1, 1]} : vector<8x32xf32> to vector<8x8xf32>
    %cst_154 = arith.constant dense<0.000000e+00> : vector<8x8xf32>
    %439 = tpu.matmul %437, %438, %cst_154 {dimension_numbers = #tpu.dot_dimension_numbers<[1], [0], [0], [1], [0, 0, 1, 1], [], []>} : vector<8x8xf32>, vector<8x8xf32>, vector<8x8xf32> -> vector<8x8xf32>
    %440 = tpu.concatenate %385, %403, %421, %439 in 1 : vector<8x8xf32>, vector<8x8xf32>, vector<8x8xf32>, vector<8x8xf32> -> vector<8x32xf32>
    %441 = tpu.concatenate %364, %440 in 0 : vector<8x32xf32>, vector<8x32xf32> -> vector<16x32xf32>
    %cst_155 = arith.constant dense<0.000000e+00> : vector<16x32xf32>
    %442 = tpu.matmul %441, %280, %cst_155 {dimension_numbers = #tpu.dot_dimension_numbers<[1], [0], [0], [1], [0, 0, 1, 1], [], []>} : vector<16x32xf32>, vector<32x32xf32>, vector<16x32xf32> -> vector<16x32xf32>
    %443 = vector.broadcast %282 : vector<1x32xf32> to vector<16x32xf32>
    %444 = arith.addf %442, %443 : vector<16x32xf32>
    %445 = arith.addf %274, %444 : vector<16x32xf32>
    %c1_156 = arith.constant 1 : index
    %c0_157 = arith.constant 0 : index
    %c0_158 = arith.constant 0 : index
    %446 = vector.load %arg23[%c1_156, %c0_157, %c0_158] : memref<2x2x32xf32, #tpu.memory_space<vmem>>, vector<1x2x32xf32>
    %447 = vector.shape_cast %446 : vector<1x2x32xf32> to vector<2x32xf32>
    %cst_159 = arith.constant dense<0.000000e+00> : vector<16xf32>
    %448 = vector.multi_reduction <add>, %445, %cst_159 [1] : vector<16x32xf32> to vector<16xf32>
    %449 = vector.shape_cast %448 : vector<16xf32> to vector<16x1xf32>
    %cst_160 = arith.constant 3.200000e+01 : f32
    %450 = vector.broadcast %cst_160 : f32 to vector<16x1xf32>
    %451 = arith.divf %449, %450 : vector<16x1xf32>
    %452 = vector.broadcast %451 : vector<16x1xf32> to vector<16x32xf32>
    %453 = arith.subf %445, %452 : vector<16x32xf32>
    %454 = arith.mulf %453, %453 : vector<16x32xf32>
    %cst_161 = arith.constant dense<0.000000e+00> : vector<16xf32>
    %455 = vector.multi_reduction <add>, %454, %cst_161 [1] : vector<16x32xf32> to vector<16xf32>
    %456 = vector.shape_cast %455 : vector<16xf32> to vector<16x1xf32>
    %cst_162 = arith.constant 3.200000e+01 : f32
    %457 = vector.broadcast %cst_162 : f32 to vector<16x1xf32>
    %458 = arith.divf %456, %457 : vector<16x1xf32>
    %459 = vector.broadcast %451 : vector<16x1xf32> to vector<16x32xf32>
    %460 = arith.subf %445, %459 : vector<16x32xf32>
    %cst_163 = arith.constant 9.99999974E-6 : f32
    %461 = vector.broadcast %cst_163 : f32 to vector<16x1xf32>
    %462 = arith.addf %458, %461 : vector<16x1xf32>
    %463 = math.rsqrt %462 : vector<16x1xf32>
    %464 = vector.broadcast %463 : vector<16x1xf32> to vector<16x32xf32>
    %465 = arith.mulf %460, %464 : vector<16x32xf32>
    %466 = vector.extract_strided_slice %447 {offsets = [0, 0], sizes = [1, 32], strides = [1, 1]} : vector<2x32xf32> to vector<1x32xf32>
    %467 = vector.broadcast %466 : vector<1x32xf32> to vector<16x32xf32>
    %468 = arith.mulf %465, %467 : vector<16x32xf32>
    %469 = vector.extract_strided_slice %447 {offsets = [1, 0], sizes = [1, 32], strides = [1, 1]} : vector<2x32xf32> to vector<1x32xf32>
    %470 = vector.broadcast %469 : vector<1x32xf32> to vector<16x32xf32>
    %471 = arith.addf %468, %470 : vector<16x32xf32>
    %c1_164 = arith.constant 1 : index
    %c0_165 = arith.constant 0 : index
    %c0_166 = arith.constant 0 : index
    %472 = vector.load %arg21[%c1_164, %c0_165, %c0_166] : memref<2x32x64xf32, #tpu.memory_space<vmem>>, vector<1x32x64xf32>
    %473 = vector.shape_cast %472 : vector<1x32x64xf32> to vector<32x64xf32>
    %c1_167 = arith.constant 1 : index
    %c0_168 = arith.constant 0 : index
    %c0_169 = arith.constant 0 : index
    %474 = vector.load %arg19[%c1_167, %c0_168, %c0_169] : memref<2x1x64xf32, #tpu.memory_space<vmem>>, vector<1x1x64xf32>
    %475 = vector.shape_cast %474 : vector<1x1x64xf32> to vector<1x64xf32>
    %cst_170 = arith.constant dense<0.000000e+00> : vector<16x64xf32>
    %476 = tpu.matmul %471, %473, %cst_170 {dimension_numbers = #tpu.dot_dimension_numbers<[1], [0], [0], [1], [0, 0, 1, 1], [], []>} : vector<16x32xf32>, vector<32x64xf32>, vector<16x64xf32> -> vector<16x64xf32>
    %477 = vector.broadcast %475 : vector<1x64xf32> to vector<16x64xf32>
    %478 = arith.addf %476, %477 : vector<16x64xf32>
    %cst_171 = arith.constant 0.000000e+00 : f32
    %479 = vector.broadcast %cst_171 : f32 to vector<16x64xf32>
    %480 = arith.maximumf %478, %479 : vector<16x64xf32>
    %c1_172 = arith.constant 1 : index
    %c0_173 = arith.constant 0 : index
    %c0_174 = arith.constant 0 : index
    %481 = vector.load %arg22[%c1_172, %c0_173, %c0_174] : memref<2x64x32xf32, #tpu.memory_space<vmem>>, vector<1x64x32xf32>
    %482 = vector.shape_cast %481 : vector<1x64x32xf32> to vector<64x32xf32>
    %c1_175 = arith.constant 1 : index
    %c0_176 = arith.constant 0 : index
    %c0_177 = arith.constant 0 : index
    %483 = vector.load %arg20[%c1_175, %c0_176, %c0_177] : memref<2x1x32xf32, #tpu.memory_space<vmem>>, vector<1x1x32xf32>
    %484 = vector.shape_cast %483 : vector<1x1x32xf32> to vector<1x32xf32>
    %cst_178 = arith.constant dense<0.000000e+00> : vector<16x32xf32>
    %485 = tpu.matmul %480, %482, %cst_178 {dimension_numbers = #tpu.dot_dimension_numbers<[1], [0], [0], [1], [0, 0, 1, 1], [], []>} : vector<16x64xf32>, vector<64x32xf32>, vector<16x32xf32> -> vector<16x32xf32>
    %486 = vector.broadcast %484 : vector<1x32xf32> to vector<16x32xf32>
    %487 = arith.addf %485, %486 : vector<16x32xf32>
    %488 = arith.addf %471, %487 : vector<16x32xf32>
    %c1_179 = arith.constant 1 : index
    %c0_180 = arith.constant 0 : index
    %c0_181 = arith.constant 0 : index
    %489 = vector.load %arg24[%c1_179, %c0_180, %c0_181] : memref<2x2x32xf32, #tpu.memory_space<vmem>>, vector<1x2x32xf32>
    %490 = vector.shape_cast %489 : vector<1x2x32xf32> to vector<2x32xf32>
    %cst_182 = arith.constant dense<0.000000e+00> : vector<16xf32>
    %491 = vector.multi_reduction <add>, %488, %cst_182 [1] : vector<16x32xf32> to vector<16xf32>
    %492 = vector.shape_cast %491 : vector<16xf32> to vector<16x1xf32>
    %cst_183 = arith.constant 3.200000e+01 : f32
    %493 = vector.broadcast %cst_183 : f32 to vector<16x1xf32>
    %494 = arith.divf %492, %493 : vector<16x1xf32>
    %495 = vector.broadcast %494 : vector<16x1xf32> to vector<16x32xf32>
    %496 = arith.subf %488, %495 : vector<16x32xf32>
    %497 = arith.mulf %496, %496 : vector<16x32xf32>
    %cst_184 = arith.constant dense<0.000000e+00> : vector<16xf32>
    %498 = vector.multi_reduction <add>, %497, %cst_184 [1] : vector<16x32xf32> to vector<16xf32>
    %499 = vector.shape_cast %498 : vector<16xf32> to vector<16x1xf32>
    %cst_185 = arith.constant 3.200000e+01 : f32
    %500 = vector.broadcast %cst_185 : f32 to vector<16x1xf32>
    %501 = arith.divf %499, %500 : vector<16x1xf32>
    %502 = vector.broadcast %494 : vector<16x1xf32> to vector<16x32xf32>
    %503 = arith.subf %488, %502 : vector<16x32xf32>
    %cst_186 = arith.constant 9.99999974E-6 : f32
    %504 = vector.broadcast %cst_186 : f32 to vector<16x1xf32>
    %505 = arith.addf %501, %504 : vector<16x1xf32>
    %506 = math.rsqrt %505 : vector<16x1xf32>
    %507 = vector.broadcast %506 : vector<16x1xf32> to vector<16x32xf32>
    %508 = arith.mulf %503, %507 : vector<16x32xf32>
    %509 = vector.extract_strided_slice %490 {offsets = [0, 0], sizes = [1, 32], strides = [1, 1]} : vector<2x32xf32> to vector<1x32xf32>
    %510 = vector.broadcast %509 : vector<1x32xf32> to vector<16x32xf32>
    %511 = arith.mulf %508, %510 : vector<16x32xf32>
    %512 = vector.extract_strided_slice %490 {offsets = [1, 0], sizes = [1, 32], strides = [1, 1]} : vector<2x32xf32> to vector<1x32xf32>
    %513 = vector.broadcast %512 : vector<1x32xf32> to vector<16x32xf32>
    %514 = arith.addf %511, %513 : vector<16x32xf32>
    %c0_187 = arith.constant 0 : index
    %c0_188 = arith.constant 0 : index
    %c0_189 = arith.constant 0 : index
    %515 = vector.load %arg18[%c0_187, %c0_188, %c0_189] : memref<2x32x96xf32, #tpu.memory_space<vmem>>, vector<1x32x96xf32>
    %516 = vector.shape_cast %515 : vector<1x32x96xf32> to vector<32x96xf32>
    %c0_190 = arith.constant 0 : index
    %c0_191 = arith.constant 0 : index
    %c0_192 = arith.constant 0 : index
    %517 = vector.load %arg16[%c0_190, %c0_191, %c0_192] : memref<2x1x96xf32, #tpu.memory_space<vmem>>, vector<1x1x96xf32>
    %518 = vector.shape_cast %517 : vector<1x1x96xf32> to vector<1x96xf32>
    %c0_193 = arith.constant 0 : index
    %c0_194 = arith.constant 0 : index
    %c0_195 = arith.constant 0 : index
    %519 = vector.load %arg17[%c0_193, %c0_194, %c0_195] : memref<2x32x32xf32, #tpu.memory_space<vmem>>, vector<1x32x32xf32>
    %520 = vector.shape_cast %519 : vector<1x32x32xf32> to vector<32x32xf32>
    %c0_196 = arith.constant 0 : index
    %c0_197 = arith.constant 0 : index
    %c0_198 = arith.constant 0 : index
    %521 = vector.load %arg15[%c0_196, %c0_197, %c0_198] : memref<2x1x32xf32, #tpu.memory_space<vmem>>, vector<1x1x32xf32>
    %522 = vector.shape_cast %521 : vector<1x1x32xf32> to vector<1x32xf32>
    %cst_199 = arith.constant dense<0.000000e+00> : vector<32x96xf32>
    %523 = tpu.matmul %34, %516, %cst_199 {dimension_numbers = #tpu.dot_dimension_numbers<[1], [0], [0], [1], [0, 0, 1, 1], [], []>} : vector<32x32xf32>, vector<32x96xf32>, vector<32x96xf32> -> vector<32x96xf32>
    %524 = vector.broadcast %518 : vector<1x96xf32> to vector<32x96xf32>
    %525 = arith.addf %523, %524 : vector<32x96xf32>
    %526 = vector.extract_strided_slice %525 {offsets = [0, 0], sizes = [32, 32], strides = [1, 1]} : vector<32x96xf32> to vector<32x32xf32>
    %527 = vector.extract_strided_slice %525 {offsets = [0, 32], sizes = [32, 32], strides = [1, 1]} : vector<32x96xf32> to vector<32x32xf32>
    %528 = vector.extract_strided_slice %525 {offsets = [0, 64], sizes = [32, 32], strides = [1, 1]} : vector<32x96xf32> to vector<32x32xf32>
    %529 = vector.extract_strided_slice %526 {offsets = [0, 0], sizes = [16, 32], strides = [1, 1]} : vector<32x32xf32> to vector<16x32xf32>
    %530 = vector.extract_strided_slice %527 {offsets = [0, 0], sizes = [16, 32], strides = [1, 1]} : vector<32x32xf32> to vector<16x32xf32>
    %531 = vector.extract_strided_slice %528 {offsets = [0, 0], sizes = [16, 32], strides = [1, 1]} : vector<32x32xf32> to vector<16x32xf32>
    %532 = vector.extract_strided_slice %529 {offsets = [0, 0], sizes = [16, 8], strides = [1, 1]} : vector<16x32xf32> to vector<16x8xf32>
    %533 = vector.extract_strided_slice %530 {offsets = [0, 0], sizes = [16, 8], strides = [1, 1]} : vector<16x32xf32> to vector<16x8xf32>
    %cst_200 = arith.constant dense<0.000000e+00> : vector<16x16xf32>
    %534 = tpu.matmul %532, %533, %cst_200 {dimension_numbers = #tpu.dot_dimension_numbers<[1], [1], [0], [0], [0, 0, 1, 0], [], []>} : vector<16x8xf32>, vector<16x8xf32>, vector<16x16xf32> -> vector<16x16xf32>
    %cst_201 = arith.constant 0.353553385 : f32
    %535 = vector.broadcast %cst_201 : f32 to vector<16x16xf32>
    %536 = arith.mulf %534, %535 : vector<16x16xf32>
    %cst_202 = arith.constant dense<0xFF800000> : vector<16xf32>
    %537 = vector.multi_reduction <maximumf>, %536, %cst_202 [1] : vector<16x16xf32> to vector<16xf32>
    %538 = vector.shape_cast %537 : vector<16xf32> to vector<16x1xf32>
    %539 = vector.broadcast %538 : vector<16x1xf32> to vector<16x16xf32>
    %540 = arith.subf %536, %539 : vector<16x16xf32>
    %541 = math.exp %540 : vector<16x16xf32>
    %cst_203 = arith.constant dense<0.000000e+00> : vector<16xf32>
    %542 = vector.multi_reduction <add>, %541, %cst_203 [1] : vector<16x16xf32> to vector<16xf32>
    %543 = vector.shape_cast %542 : vector<16xf32> to vector<16x1xf32>
    %544 = tpu.reciprocal %543 {approx = true} : vector<16x1xf32> -> vector<16x1xf32>
    %545 = vector.broadcast %544 : vector<16x1xf32> to vector<16x16xf32>
    %546 = arith.mulf %541, %545 : vector<16x16xf32>
    %547 = vector.extract_strided_slice %531 {offsets = [0, 0], sizes = [16, 8], strides = [1, 1]} : vector<16x32xf32> to vector<16x8xf32>
    %cst_204 = arith.constant dense<0.000000e+00> : vector<16x8xf32>
    %548 = tpu.matmul %546, %547, %cst_204 {dimension_numbers = #tpu.dot_dimension_numbers<[1], [0], [0], [1], [0, 0, 1, 1], [], []>} : vector<16x16xf32>, vector<16x8xf32>, vector<16x8xf32> -> vector<16x8xf32>
    %549 = vector.extract_strided_slice %529 {offsets = [0, 8], sizes = [16, 8], strides = [1, 1]} : vector<16x32xf32> to vector<16x8xf32>
    %550 = vector.extract_strided_slice %530 {offsets = [0, 8], sizes = [16, 8], strides = [1, 1]} : vector<16x32xf32> to vector<16x8xf32>
    %cst_205 = arith.constant dense<0.000000e+00> : vector<16x16xf32>
    %551 = tpu.matmul %549, %550, %cst_205 {dimension_numbers = #tpu.dot_dimension_numbers<[1], [1], [0], [0], [0, 0, 1, 0], [], []>} : vector<16x8xf32>, vector<16x8xf32>, vector<16x16xf32> -> vector<16x16xf32>
    %cst_206 = arith.constant 0.353553385 : f32
    %552 = vector.broadcast %cst_206 : f32 to vector<16x16xf32>
    %553 = arith.mulf %551, %552 : vector<16x16xf32>
    %cst_207 = arith.constant dense<0xFF800000> : vector<16xf32>
    %554 = vector.multi_reduction <maximumf>, %553, %cst_207 [1] : vector<16x16xf32> to vector<16xf32>
    %555 = vector.shape_cast %554 : vector<16xf32> to vector<16x1xf32>
    %556 = vector.broadcast %555 : vector<16x1xf32> to vector<16x16xf32>
    %557 = arith.subf %553, %556 : vector<16x16xf32>
    %558 = math.exp %557 : vector<16x16xf32>
    %cst_208 = arith.constant dense<0.000000e+00> : vector<16xf32>
    %559 = vector.multi_reduction <add>, %558, %cst_208 [1] : vector<16x16xf32> to vector<16xf32>
    %560 = vector.shape_cast %559 : vector<16xf32> to vector<16x1xf32>
    %561 = tpu.reciprocal %560 {approx = true} : vector<16x1xf32> -> vector<16x1xf32>
    %562 = vector.broadcast %561 : vector<16x1xf32> to vector<16x16xf32>
    %563 = arith.mulf %558, %562 : vector<16x16xf32>
    %564 = vector.extract_strided_slice %531 {offsets = [0, 8], sizes = [16, 8], strides = [1, 1]} : vector<16x32xf32> to vector<16x8xf32>
    %cst_209 = arith.constant dense<0.000000e+00> : vector<16x8xf32>
    %565 = tpu.matmul %563, %564, %cst_209 {dimension_numbers = #tpu.dot_dimension_numbers<[1], [0], [0], [1], [0, 0, 1, 1], [], []>} : vector<16x16xf32>, vector<16x8xf32>, vector<16x8xf32> -> vector<16x8xf32>
    %566 = vector.extract_strided_slice %529 {offsets = [0, 16], sizes = [16, 8], strides = [1, 1]} : vector<16x32xf32> to vector<16x8xf32>
    %567 = vector.extract_strided_slice %530 {offsets = [0, 16], sizes = [16, 8], strides = [1, 1]} : vector<16x32xf32> to vector<16x8xf32>
    %cst_210 = arith.constant dense<0.000000e+00> : vector<16x16xf32>
    %568 = tpu.matmul %566, %567, %cst_210 {dimension_numbers = #tpu.dot_dimension_numbers<[1], [1], [0], [0], [0, 0, 1, 0], [], []>} : vector<16x8xf32>, vector<16x8xf32>, vector<16x16xf32> -> vector<16x16xf32>
    %cst_211 = arith.constant 0.353553385 : f32
    %569 = vector.broadcast %cst_211 : f32 to vector<16x16xf32>
    %570 = arith.mulf %568, %569 : vector<16x16xf32>
    %cst_212 = arith.constant dense<0xFF800000> : vector<16xf32>
    %571 = vector.multi_reduction <maximumf>, %570, %cst_212 [1] : vector<16x16xf32> to vector<16xf32>
    %572 = vector.shape_cast %571 : vector<16xf32> to vector<16x1xf32>
    %573 = vector.broadcast %572 : vector<16x1xf32> to vector<16x16xf32>
    %574 = arith.subf %570, %573 : vector<16x16xf32>
    %575 = math.exp %574 : vector<16x16xf32>
    %cst_213 = arith.constant dense<0.000000e+00> : vector<16xf32>
    %576 = vector.multi_reduction <add>, %575, %cst_213 [1] : vector<16x16xf32> to vector<16xf32>
    %577 = vector.shape_cast %576 : vector<16xf32> to vector<16x1xf32>
    %578 = tpu.reciprocal %577 {approx = true} : vector<16x1xf32> -> vector<16x1xf32>
    %579 = vector.broadcast %578 : vector<16x1xf32> to vector<16x16xf32>
    %580 = arith.mulf %575, %579 : vector<16x16xf32>
    %581 = vector.extract_strided_slice %531 {offsets = [0, 16], sizes = [16, 8], strides = [1, 1]} : vector<16x32xf32> to vector<16x8xf32>
    %cst_214 = arith.constant dense<0.000000e+00> : vector<16x8xf32>
    %582 = tpu.matmul %580, %581, %cst_214 {dimension_numbers = #tpu.dot_dimension_numbers<[1], [0], [0], [1], [0, 0, 1, 1], [], []>} : vector<16x16xf32>, vector<16x8xf32>, vector<16x8xf32> -> vector<16x8xf32>
    %583 = vector.extract_strided_slice %529 {offsets = [0, 24], sizes = [16, 8], strides = [1, 1]} : vector<16x32xf32> to vector<16x8xf32>
    %584 = vector.extract_strided_slice %530 {offsets = [0, 24], sizes = [16, 8], strides = [1, 1]} : vector<16x32xf32> to vector<16x8xf32>
    %cst_215 = arith.constant dense<0.000000e+00> : vector<16x16xf32>
    %585 = tpu.matmul %583, %584, %cst_215 {dimension_numbers = #tpu.dot_dimension_numbers<[1], [1], [0], [0], [0, 0, 1, 0], [], []>} : vector<16x8xf32>, vector<16x8xf32>, vector<16x16xf32> -> vector<16x16xf32>
    %cst_216 = arith.constant 0.353553385 : f32
    %586 = vector.broadcast %cst_216 : f32 to vector<16x16xf32>
    %587 = arith.mulf %585, %586 : vector<16x16xf32>
    %cst_217 = arith.constant dense<0xFF800000> : vector<16xf32>
    %588 = vector.multi_reduction <maximumf>, %587, %cst_217 [1] : vector<16x16xf32> to vector<16xf32>
    %589 = vector.shape_cast %588 : vector<16xf32> to vector<16x1xf32>
    %590 = vector.broadcast %589 : vector<16x1xf32> to vector<16x16xf32>
    %591 = arith.subf %587, %590 : vector<16x16xf32>
    %592 = math.exp %591 : vector<16x16xf32>
    %cst_218 = arith.constant dense<0.000000e+00> : vector<16xf32>
    %593 = vector.multi_reduction <add>, %592, %cst_218 [1] : vector<16x16xf32> to vector<16xf32>
    %594 = vector.shape_cast %593 : vector<16xf32> to vector<16x1xf32>
    %595 = tpu.reciprocal %594 {approx = true} : vector<16x1xf32> -> vector<16x1xf32>
    %596 = vector.broadcast %595 : vector<16x1xf32> to vector<16x16xf32>
    %597 = arith.mulf %592, %596 : vector<16x16xf32>
    %598 = vector.extract_strided_slice %531 {offsets = [0, 24], sizes = [16, 8], strides = [1, 1]} : vector<16x32xf32> to vector<16x8xf32>
    %cst_219 = arith.constant dense<0.000000e+00> : vector<16x8xf32>
    %599 = tpu.matmul %597, %598, %cst_219 {dimension_numbers = #tpu.dot_dimension_numbers<[1], [0], [0], [1], [0, 0, 1, 1], [], []>} : vector<16x16xf32>, vector<16x8xf32>, vector<16x8xf32> -> vector<16x8xf32>
    %600 = tpu.concatenate %548, %565, %582, %599 in 1 : vector<16x8xf32>, vector<16x8xf32>, vector<16x8xf32>, vector<16x8xf32> -> vector<16x32xf32>
    %601 = vector.extract_strided_slice %526 {offsets = [16, 0], sizes = [16, 32], strides = [1, 1]} : vector<32x32xf32> to vector<16x32xf32>
    %602 = vector.extract_strided_slice %527 {offsets = [16, 0], sizes = [16, 32], strides = [1, 1]} : vector<32x32xf32> to vector<16x32xf32>
    %603 = vector.extract_strided_slice %528 {offsets = [16, 0], sizes = [16, 32], strides = [1, 1]} : vector<32x32xf32> to vector<16x32xf32>
    %604 = vector.extract_strided_slice %601 {offsets = [0, 0], sizes = [16, 8], strides = [1, 1]} : vector<16x32xf32> to vector<16x8xf32>
    %605 = vector.extract_strided_slice %602 {offsets = [0, 0], sizes = [16, 8], strides = [1, 1]} : vector<16x32xf32> to vector<16x8xf32>
    %cst_220 = arith.constant dense<0.000000e+00> : vector<16x16xf32>
    %606 = tpu.matmul %604, %605, %cst_220 {dimension_numbers = #tpu.dot_dimension_numbers<[1], [1], [0], [0], [0, 0, 1, 0], [], []>} : vector<16x8xf32>, vector<16x8xf32>, vector<16x16xf32> -> vector<16x16xf32>
    %cst_221 = arith.constant 0.353553385 : f32
    %607 = vector.broadcast %cst_221 : f32 to vector<16x16xf32>
    %608 = arith.mulf %606, %607 : vector<16x16xf32>
    %cst_222 = arith.constant dense<0xFF800000> : vector<16xf32>
    %609 = vector.multi_reduction <maximumf>, %608, %cst_222 [1] : vector<16x16xf32> to vector<16xf32>
    %610 = vector.shape_cast %609 : vector<16xf32> to vector<16x1xf32>
    %611 = vector.broadcast %610 : vector<16x1xf32> to vector<16x16xf32>
    %612 = arith.subf %608, %611 : vector<16x16xf32>
    %613 = math.exp %612 : vector<16x16xf32>
    %cst_223 = arith.constant dense<0.000000e+00> : vector<16xf32>
    %614 = vector.multi_reduction <add>, %613, %cst_223 [1] : vector<16x16xf32> to vector<16xf32>
    %615 = vector.shape_cast %614 : vector<16xf32> to vector<16x1xf32>
    %616 = tpu.reciprocal %615 {approx = true} : vector<16x1xf32> -> vector<16x1xf32>
    %617 = vector.broadcast %616 : vector<16x1xf32> to vector<16x16xf32>
    %618 = arith.mulf %613, %617 : vector<16x16xf32>
    %619 = vector.extract_strided_slice %603 {offsets = [0, 0], sizes = [16, 8], strides = [1, 1]} : vector<16x32xf32> to vector<16x8xf32>
    %cst_224 = arith.constant dense<0.000000e+00> : vector<16x8xf32>
    %620 = tpu.matmul %618, %619, %cst_224 {dimension_numbers = #tpu.dot_dimension_numbers<[1], [0], [0], [1], [0, 0, 1, 1], [], []>} : vector<16x16xf32>, vector<16x8xf32>, vector<16x8xf32> -> vector<16x8xf32>
    %621 = vector.extract_strided_slice %601 {offsets = [0, 8], sizes = [16, 8], strides = [1, 1]} : vector<16x32xf32> to vector<16x8xf32>
    %622 = vector.extract_strided_slice %602 {offsets = [0, 8], sizes = [16, 8], strides = [1, 1]} : vector<16x32xf32> to vector<16x8xf32>
    %cst_225 = arith.constant dense<0.000000e+00> : vector<16x16xf32>
    %623 = tpu.matmul %621, %622, %cst_225 {dimension_numbers = #tpu.dot_dimension_numbers<[1], [1], [0], [0], [0, 0, 1, 0], [], []>} : vector<16x8xf32>, vector<16x8xf32>, vector<16x16xf32> -> vector<16x16xf32>
    %cst_226 = arith.constant 0.353553385 : f32
    %624 = vector.broadcast %cst_226 : f32 to vector<16x16xf32>
    %625 = arith.mulf %623, %624 : vector<16x16xf32>
    %cst_227 = arith.constant dense<0xFF800000> : vector<16xf32>
    %626 = vector.multi_reduction <maximumf>, %625, %cst_227 [1] : vector<16x16xf32> to vector<16xf32>
    %627 = vector.shape_cast %626 : vector<16xf32> to vector<16x1xf32>
    %628 = vector.broadcast %627 : vector<16x1xf32> to vector<16x16xf32>
    %629 = arith.subf %625, %628 : vector<16x16xf32>
    %630 = math.exp %629 : vector<16x16xf32>
    %cst_228 = arith.constant dense<0.000000e+00> : vector<16xf32>
    %631 = vector.multi_reduction <add>, %630, %cst_228 [1] : vector<16x16xf32> to vector<16xf32>
    %632 = vector.shape_cast %631 : vector<16xf32> to vector<16x1xf32>
    %633 = tpu.reciprocal %632 {approx = true} : vector<16x1xf32> -> vector<16x1xf32>
    %634 = vector.broadcast %633 : vector<16x1xf32> to vector<16x16xf32>
    %635 = arith.mulf %630, %634 : vector<16x16xf32>
    %636 = vector.extract_strided_slice %603 {offsets = [0, 8], sizes = [16, 8], strides = [1, 1]} : vector<16x32xf32> to vector<16x8xf32>
    %cst_229 = arith.constant dense<0.000000e+00> : vector<16x8xf32>
    %637 = tpu.matmul %635, %636, %cst_229 {dimension_numbers = #tpu.dot_dimension_numbers<[1], [0], [0], [1], [0, 0, 1, 1], [], []>} : vector<16x16xf32>, vector<16x8xf32>, vector<16x8xf32> -> vector<16x8xf32>
    %638 = vector.extract_strided_slice %601 {offsets = [0, 16], sizes = [16, 8], strides = [1, 1]} : vector<16x32xf32> to vector<16x8xf32>
    %639 = vector.extract_strided_slice %602 {offsets = [0, 16], sizes = [16, 8], strides = [1, 1]} : vector<16x32xf32> to vector<16x8xf32>
    %cst_230 = arith.constant dense<0.000000e+00> : vector<16x16xf32>
    %640 = tpu.matmul %638, %639, %cst_230 {dimension_numbers = #tpu.dot_dimension_numbers<[1], [1], [0], [0], [0, 0, 1, 0], [], []>} : vector<16x8xf32>, vector<16x8xf32>, vector<16x16xf32> -> vector<16x16xf32>
    %cst_231 = arith.constant 0.353553385 : f32
    %641 = vector.broadcast %cst_231 : f32 to vector<16x16xf32>
    %642 = arith.mulf %640, %641 : vector<16x16xf32>
    %cst_232 = arith.constant dense<0xFF800000> : vector<16xf32>
    %643 = vector.multi_reduction <maximumf>, %642, %cst_232 [1] : vector<16x16xf32> to vector<16xf32>
    %644 = vector.shape_cast %643 : vector<16xf32> to vector<16x1xf32>
    %645 = vector.broadcast %644 : vector<16x1xf32> to vector<16x16xf32>
    %646 = arith.subf %642, %645 : vector<16x16xf32>
    %647 = math.exp %646 : vector<16x16xf32>
    %cst_233 = arith.constant dense<0.000000e+00> : vector<16xf32>
    %648 = vector.multi_reduction <add>, %647, %cst_233 [1] : vector<16x16xf32> to vector<16xf32>
    %649 = vector.shape_cast %648 : vector<16xf32> to vector<16x1xf32>
    %650 = tpu.reciprocal %649 {approx = true} : vector<16x1xf32> -> vector<16x1xf32>
    %651 = vector.broadcast %650 : vector<16x1xf32> to vector<16x16xf32>
    %652 = arith.mulf %647, %651 : vector<16x16xf32>
    %653 = vector.extract_strided_slice %603 {offsets = [0, 16], sizes = [16, 8], strides = [1, 1]} : vector<16x32xf32> to vector<16x8xf32>
    %cst_234 = arith.constant dense<0.000000e+00> : vector<16x8xf32>
    %654 = tpu.matmul %652, %653, %cst_234 {dimension_numbers = #tpu.dot_dimension_numbers<[1], [0], [0], [1], [0, 0, 1, 1], [], []>} : vector<16x16xf32>, vector<16x8xf32>, vector<16x8xf32> -> vector<16x8xf32>
    %655 = vector.extract_strided_slice %601 {offsets = [0, 24], sizes = [16, 8], strides = [1, 1]} : vector<16x32xf32> to vector<16x8xf32>
    %656 = vector.extract_strided_slice %602 {offsets = [0, 24], sizes = [16, 8], strides = [1, 1]} : vector<16x32xf32> to vector<16x8xf32>
    %cst_235 = arith.constant dense<0.000000e+00> : vector<16x16xf32>
    %657 = tpu.matmul %655, %656, %cst_235 {dimension_numbers = #tpu.dot_dimension_numbers<[1], [1], [0], [0], [0, 0, 1, 0], [], []>} : vector<16x8xf32>, vector<16x8xf32>, vector<16x16xf32> -> vector<16x16xf32>
    %cst_236 = arith.constant 0.353553385 : f32
    %658 = vector.broadcast %cst_236 : f32 to vector<16x16xf32>
    %659 = arith.mulf %657, %658 : vector<16x16xf32>
    %cst_237 = arith.constant dense<0xFF800000> : vector<16xf32>
    %660 = vector.multi_reduction <maximumf>, %659, %cst_237 [1] : vector<16x16xf32> to vector<16xf32>
    %661 = vector.shape_cast %660 : vector<16xf32> to vector<16x1xf32>
    %662 = vector.broadcast %661 : vector<16x1xf32> to vector<16x16xf32>
    %663 = arith.subf %659, %662 : vector<16x16xf32>
    %664 = math.exp %663 : vector<16x16xf32>
    %cst_238 = arith.constant dense<0.000000e+00> : vector<16xf32>
    %665 = vector.multi_reduction <add>, %664, %cst_238 [1] : vector<16x16xf32> to vector<16xf32>
    %666 = vector.shape_cast %665 : vector<16xf32> to vector<16x1xf32>
    %667 = tpu.reciprocal %666 {approx = true} : vector<16x1xf32> -> vector<16x1xf32>
    %668 = vector.broadcast %667 : vector<16x1xf32> to vector<16x16xf32>
    %669 = arith.mulf %664, %668 : vector<16x16xf32>
    %670 = vector.extract_strided_slice %603 {offsets = [0, 24], sizes = [16, 8], strides = [1, 1]} : vector<16x32xf32> to vector<16x8xf32>
    %cst_239 = arith.constant dense<0.000000e+00> : vector<16x8xf32>
    %671 = tpu.matmul %669, %670, %cst_239 {dimension_numbers = #tpu.dot_dimension_numbers<[1], [0], [0], [1], [0, 0, 1, 1], [], []>} : vector<16x16xf32>, vector<16x8xf32>, vector<16x8xf32> -> vector<16x8xf32>
    %672 = tpu.concatenate %620, %637, %654, %671 in 1 : vector<16x8xf32>, vector<16x8xf32>, vector<16x8xf32>, vector<16x8xf32> -> vector<16x32xf32>
    %673 = tpu.concatenate %600, %672 in 0 : vector<16x32xf32>, vector<16x32xf32> -> vector<32x32xf32>
    %cst_240 = arith.constant dense<0.000000e+00> : vector<32x32xf32>
    %674 = tpu.matmul %673, %520, %cst_240 {dimension_numbers = #tpu.dot_dimension_numbers<[1], [0], [0], [1], [0, 0, 1, 1], [], []>} : vector<32x32xf32>, vector<32x32xf32>, vector<32x32xf32> -> vector<32x32xf32>
    %675 = vector.broadcast %522 : vector<1x32xf32> to vector<32x32xf32>
    %676 = arith.addf %674, %675 : vector<32x32xf32>
    %677 = arith.addf %34, %676 : vector<32x32xf32>
    %c0_241 = arith.constant 0 : index
    %c0_242 = arith.constant 0 : index
    %c0_243 = arith.constant 0 : index
    %678 = vector.load %arg12[%c0_241, %c0_242, %c0_243] : memref<2x2x32xf32, #tpu.memory_space<vmem>>, vector<1x2x32xf32>
    %679 = vector.shape_cast %678 : vector<1x2x32xf32> to vector<2x32xf32>
    %cst_244 = arith.constant dense<0.000000e+00> : vector<32xf32>
    %680 = vector.multi_reduction <add>, %677, %cst_244 [1] : vector<32x32xf32> to vector<32xf32>
    %681 = vector.shape_cast %680 : vector<32xf32> to vector<32x1xf32>
    %cst_245 = arith.constant 3.200000e+01 : f32
    %682 = vector.broadcast %cst_245 : f32 to vector<32x1xf32>
    %683 = arith.divf %681, %682 : vector<32x1xf32>
    %684 = vector.broadcast %683 : vector<32x1xf32> to vector<32x32xf32>
    %685 = arith.subf %677, %684 : vector<32x32xf32>
    %686 = arith.mulf %685, %685 : vector<32x32xf32>
    %cst_246 = arith.constant dense<0.000000e+00> : vector<32xf32>
    %687 = vector.multi_reduction <add>, %686, %cst_246 [1] : vector<32x32xf32> to vector<32xf32>
    %688 = vector.shape_cast %687 : vector<32xf32> to vector<32x1xf32>
    %cst_247 = arith.constant 3.200000e+01 : f32
    %689 = vector.broadcast %cst_247 : f32 to vector<32x1xf32>
    %690 = arith.divf %688, %689 : vector<32x1xf32>
    %691 = vector.broadcast %683 : vector<32x1xf32> to vector<32x32xf32>
    %692 = arith.subf %677, %691 : vector<32x32xf32>
    %cst_248 = arith.constant 9.99999974E-6 : f32
    %693 = vector.broadcast %cst_248 : f32 to vector<32x1xf32>
    %694 = arith.addf %690, %693 : vector<32x1xf32>
    %695 = math.rsqrt %694 : vector<32x1xf32>
    %696 = vector.broadcast %695 : vector<32x1xf32> to vector<32x32xf32>
    %697 = arith.mulf %692, %696 : vector<32x32xf32>
    %698 = vector.extract_strided_slice %679 {offsets = [0, 0], sizes = [1, 32], strides = [1, 1]} : vector<2x32xf32> to vector<1x32xf32>
    %699 = vector.broadcast %698 : vector<1x32xf32> to vector<32x32xf32>
    %700 = arith.mulf %697, %699 : vector<32x32xf32>
    %701 = vector.extract_strided_slice %679 {offsets = [1, 0], sizes = [1, 32], strides = [1, 1]} : vector<2x32xf32> to vector<1x32xf32>
    %702 = vector.broadcast %701 : vector<1x32xf32> to vector<32x32xf32>
    %703 = arith.addf %700, %702 : vector<32x32xf32>
    %c0_249 = arith.constant 0 : index
    %c0_250 = arith.constant 0 : index
    %c0_251 = arith.constant 0 : index
    %704 = vector.load %arg11[%c0_249, %c0_250, %c0_251] : memref<2x32x96xf32, #tpu.memory_space<vmem>>, vector<1x32x96xf32>
    %705 = vector.shape_cast %704 : vector<1x32x96xf32> to vector<32x96xf32>
    %c0_252 = arith.constant 0 : index
    %c0_253 = arith.constant 0 : index
    %c0_254 = arith.constant 0 : index
    %706 = vector.load %arg9[%c0_252, %c0_253, %c0_254] : memref<2x1x96xf32, #tpu.memory_space<vmem>>, vector<1x1x96xf32>
    %707 = vector.shape_cast %706 : vector<1x1x96xf32> to vector<1x96xf32>
    %c0_255 = arith.constant 0 : index
    %c0_256 = arith.constant 0 : index
    %c0_257 = arith.constant 0 : index
    %708 = vector.load %arg10[%c0_255, %c0_256, %c0_257] : memref<2x32x32xf32, #tpu.memory_space<vmem>>, vector<1x32x32xf32>
    %709 = vector.shape_cast %708 : vector<1x32x32xf32> to vector<32x32xf32>
    %c0_258 = arith.constant 0 : index
    %c0_259 = arith.constant 0 : index
    %c0_260 = arith.constant 0 : index
    %710 = vector.load %arg8[%c0_258, %c0_259, %c0_260] : memref<2x1x32xf32, #tpu.memory_space<vmem>>, vector<1x1x32xf32>
    %711 = vector.shape_cast %710 : vector<1x1x32xf32> to vector<1x32xf32>
    %712 = vector.extract_strided_slice %705 {offsets = [0, 0], sizes = [32, 32], strides = [1, 1]} : vector<32x96xf32> to vector<32x32xf32>
    %713 = vector.extract_strided_slice %707 {offsets = [0, 0], sizes = [1, 32], strides = [1, 1]} : vector<1x96xf32> to vector<1x32xf32>
    %cst_261 = arith.constant dense<0.000000e+00> : vector<32x32xf32>
    %714 = tpu.matmul %703, %712, %cst_261 {dimension_numbers = #tpu.dot_dimension_numbers<[1], [0], [0], [1], [0, 0, 1, 1], [], []>} : vector<32x32xf32>, vector<32x32xf32>, vector<32x32xf32> -> vector<32x32xf32>
    %715 = vector.broadcast %713 : vector<1x32xf32> to vector<32x32xf32>
    %716 = arith.addf %714, %715 : vector<32x32xf32>
    %717 = vector.extract_strided_slice %705 {offsets = [0, 32], sizes = [32, 64], strides = [1, 1]} : vector<32x96xf32> to vector<32x64xf32>
    %718 = vector.extract_strided_slice %707 {offsets = [0, 32], sizes = [1, 64], strides = [1, 1]} : vector<1x96xf32> to vector<1x64xf32>
    %cst_262 = arith.constant dense<0.000000e+00> : vector<16x64xf32>
    %719 = tpu.matmul %514, %717, %cst_262 {dimension_numbers = #tpu.dot_dimension_numbers<[1], [0], [0], [1], [0, 0, 1, 1], [], []>} : vector<16x32xf32>, vector<32x64xf32>, vector<16x64xf32> -> vector<16x64xf32>
    %720 = vector.broadcast %718 : vector<1x64xf32> to vector<16x64xf32>
    %721 = arith.addf %719, %720 : vector<16x64xf32>
    %722 = vector.extract_strided_slice %721 {offsets = [0, 0], sizes = [16, 32], strides = [1, 1]} : vector<16x64xf32> to vector<16x32xf32>
    %723 = vector.extract_strided_slice %721 {offsets = [0, 32], sizes = [16, 32], strides = [1, 1]} : vector<16x64xf32> to vector<16x32xf32>
    %724 = vector.extract_strided_slice %716 {offsets = [0, 0], sizes = [16, 32], strides = [1, 1]} : vector<32x32xf32> to vector<16x32xf32>
    %725 = vector.extract_strided_slice %722 {offsets = [0, 0], sizes = [8, 32], strides = [1, 1]} : vector<16x32xf32> to vector<8x32xf32>
    %726 = vector.extract_strided_slice %723 {offsets = [0, 0], sizes = [8, 32], strides = [1, 1]} : vector<16x32xf32> to vector<8x32xf32>
    %727 = vector.extract_strided_slice %724 {offsets = [0, 0], sizes = [16, 8], strides = [1, 1]} : vector<16x32xf32> to vector<16x8xf32>
    %728 = vector.extract_strided_slice %725 {offsets = [0, 0], sizes = [8, 8], strides = [1, 1]} : vector<8x32xf32> to vector<8x8xf32>
    %cst_263 = arith.constant dense<0.000000e+00> : vector<16x8xf32>
    %729 = tpu.matmul %727, %728, %cst_263 {dimension_numbers = #tpu.dot_dimension_numbers<[1], [1], [0], [0], [0, 0, 1, 0], [], []>} : vector<16x8xf32>, vector<8x8xf32>, vector<16x8xf32> -> vector<16x8xf32>
    %cst_264 = arith.constant 0.353553385 : f32
    %730 = vector.broadcast %cst_264 : f32 to vector<16x8xf32>
    %731 = arith.mulf %729, %730 : vector<16x8xf32>
    %732 = vector.broadcast %24 : vector<1x8xf32> to vector<16x8xf32>
    %733 = arith.addf %731, %732 : vector<16x8xf32>
    %cst_265 = arith.constant dense<0xFF800000> : vector<16xf32>
    %734 = vector.multi_reduction <maximumf>, %733, %cst_265 [1] : vector<16x8xf32> to vector<16xf32>
    %735 = vector.shape_cast %734 : vector<16xf32> to vector<16x1xf32>
    %736 = vector.broadcast %735 : vector<16x1xf32> to vector<16x8xf32>
    %737 = arith.subf %733, %736 : vector<16x8xf32>
    %738 = math.exp %737 : vector<16x8xf32>
    %cst_266 = arith.constant dense<0.000000e+00> : vector<16xf32>
    %739 = vector.multi_reduction <add>, %738, %cst_266 [1] : vector<16x8xf32> to vector<16xf32>
    %740 = vector.shape_cast %739 : vector<16xf32> to vector<16x1xf32>
    %741 = tpu.reciprocal %740 {approx = true} : vector<16x1xf32> -> vector<16x1xf32>
    %742 = vector.broadcast %741 : vector<16x1xf32> to vector<16x8xf32>
    %743 = arith.mulf %738, %742 : vector<16x8xf32>
    %744 = vector.extract_strided_slice %726 {offsets = [0, 0], sizes = [8, 8], strides = [1, 1]} : vector<8x32xf32> to vector<8x8xf32>
    %cst_267 = arith.constant dense<0.000000e+00> : vector<16x8xf32>
    %745 = tpu.matmul %743, %744, %cst_267 {dimension_numbers = #tpu.dot_dimension_numbers<[1], [0], [0], [1], [0, 0, 1, 1], [], []>} : vector<16x8xf32>, vector<8x8xf32>, vector<16x8xf32> -> vector<16x8xf32>
    %746 = vector.extract_strided_slice %724 {offsets = [0, 8], sizes = [16, 8], strides = [1, 1]} : vector<16x32xf32> to vector<16x8xf32>
    %747 = vector.extract_strided_slice %725 {offsets = [0, 8], sizes = [8, 8], strides = [1, 1]} : vector<8x32xf32> to vector<8x8xf32>
    %cst_268 = arith.constant dense<0.000000e+00> : vector<16x8xf32>
    %748 = tpu.matmul %746, %747, %cst_268 {dimension_numbers = #tpu.dot_dimension_numbers<[1], [1], [0], [0], [0, 0, 1, 0], [], []>} : vector<16x8xf32>, vector<8x8xf32>, vector<16x8xf32> -> vector<16x8xf32>
    %cst_269 = arith.constant 0.353553385 : f32
    %749 = vector.broadcast %cst_269 : f32 to vector<16x8xf32>
    %750 = arith.mulf %748, %749 : vector<16x8xf32>
    %751 = vector.broadcast %24 : vector<1x8xf32> to vector<16x8xf32>
    %752 = arith.addf %750, %751 : vector<16x8xf32>
    %cst_270 = arith.constant dense<0xFF800000> : vector<16xf32>
    %753 = vector.multi_reduction <maximumf>, %752, %cst_270 [1] : vector<16x8xf32> to vector<16xf32>
    %754 = vector.shape_cast %753 : vector<16xf32> to vector<16x1xf32>
    %755 = vector.broadcast %754 : vector<16x1xf32> to vector<16x8xf32>
    %756 = arith.subf %752, %755 : vector<16x8xf32>
    %757 = math.exp %756 : vector<16x8xf32>
    %cst_271 = arith.constant dense<0.000000e+00> : vector<16xf32>
    %758 = vector.multi_reduction <add>, %757, %cst_271 [1] : vector<16x8xf32> to vector<16xf32>
    %759 = vector.shape_cast %758 : vector<16xf32> to vector<16x1xf32>
    %760 = tpu.reciprocal %759 {approx = true} : vector<16x1xf32> -> vector<16x1xf32>
    %761 = vector.broadcast %760 : vector<16x1xf32> to vector<16x8xf32>
    %762 = arith.mulf %757, %761 : vector<16x8xf32>
    %763 = vector.extract_strided_slice %726 {offsets = [0, 8], sizes = [8, 8], strides = [1, 1]} : vector<8x32xf32> to vector<8x8xf32>
    %cst_272 = arith.constant dense<0.000000e+00> : vector<16x8xf32>
    %764 = tpu.matmul %762, %763, %cst_272 {dimension_numbers = #tpu.dot_dimension_numbers<[1], [0], [0], [1], [0, 0, 1, 1], [], []>} : vector<16x8xf32>, vector<8x8xf32>, vector<16x8xf32> -> vector<16x8xf32>
    %765 = vector.extract_strided_slice %724 {offsets = [0, 16], sizes = [16, 8], strides = [1, 1]} : vector<16x32xf32> to vector<16x8xf32>
    %766 = vector.extract_strided_slice %725 {offsets = [0, 16], sizes = [8, 8], strides = [1, 1]} : vector<8x32xf32> to vector<8x8xf32>
    %cst_273 = arith.constant dense<0.000000e+00> : vector<16x8xf32>
    %767 = tpu.matmul %765, %766, %cst_273 {dimension_numbers = #tpu.dot_dimension_numbers<[1], [1], [0], [0], [0, 0, 1, 0], [], []>} : vector<16x8xf32>, vector<8x8xf32>, vector<16x8xf32> -> vector<16x8xf32>
    %cst_274 = arith.constant 0.353553385 : f32
    %768 = vector.broadcast %cst_274 : f32 to vector<16x8xf32>
    %769 = arith.mulf %767, %768 : vector<16x8xf32>
    %770 = vector.broadcast %24 : vector<1x8xf32> to vector<16x8xf32>
    %771 = arith.addf %769, %770 : vector<16x8xf32>
    %cst_275 = arith.constant dense<0xFF800000> : vector<16xf32>
    %772 = vector.multi_reduction <maximumf>, %771, %cst_275 [1] : vector<16x8xf32> to vector<16xf32>
    %773 = vector.shape_cast %772 : vector<16xf32> to vector<16x1xf32>
    %774 = vector.broadcast %773 : vector<16x1xf32> to vector<16x8xf32>
    %775 = arith.subf %771, %774 : vector<16x8xf32>
    %776 = math.exp %775 : vector<16x8xf32>
    %cst_276 = arith.constant dense<0.000000e+00> : vector<16xf32>
    %777 = vector.multi_reduction <add>, %776, %cst_276 [1] : vector<16x8xf32> to vector<16xf32>
    %778 = vector.shape_cast %777 : vector<16xf32> to vector<16x1xf32>
    %779 = tpu.reciprocal %778 {approx = true} : vector<16x1xf32> -> vector<16x1xf32>
    %780 = vector.broadcast %779 : vector<16x1xf32> to vector<16x8xf32>
    %781 = arith.mulf %776, %780 : vector<16x8xf32>
    %782 = vector.extract_strided_slice %726 {offsets = [0, 16], sizes = [8, 8], strides = [1, 1]} : vector<8x32xf32> to vector<8x8xf32>
    %cst_277 = arith.constant dense<0.000000e+00> : vector<16x8xf32>
    %783 = tpu.matmul %781, %782, %cst_277 {dimension_numbers = #tpu.dot_dimension_numbers<[1], [0], [0], [1], [0, 0, 1, 1], [], []>} : vector<16x8xf32>, vector<8x8xf32>, vector<16x8xf32> -> vector<16x8xf32>
    %784 = vector.extract_strided_slice %724 {offsets = [0, 24], sizes = [16, 8], strides = [1, 1]} : vector<16x32xf32> to vector<16x8xf32>
    %785 = vector.extract_strided_slice %725 {offsets = [0, 24], sizes = [8, 8], strides = [1, 1]} : vector<8x32xf32> to vector<8x8xf32>
    %cst_278 = arith.constant dense<0.000000e+00> : vector<16x8xf32>
    %786 = tpu.matmul %784, %785, %cst_278 {dimension_numbers = #tpu.dot_dimension_numbers<[1], [1], [0], [0], [0, 0, 1, 0], [], []>} : vector<16x8xf32>, vector<8x8xf32>, vector<16x8xf32> -> vector<16x8xf32>
    %cst_279 = arith.constant 0.353553385 : f32
    %787 = vector.broadcast %cst_279 : f32 to vector<16x8xf32>
    %788 = arith.mulf %786, %787 : vector<16x8xf32>
    %789 = vector.broadcast %24 : vector<1x8xf32> to vector<16x8xf32>
    %790 = arith.addf %788, %789 : vector<16x8xf32>
    %cst_280 = arith.constant dense<0xFF800000> : vector<16xf32>
    %791 = vector.multi_reduction <maximumf>, %790, %cst_280 [1] : vector<16x8xf32> to vector<16xf32>
    %792 = vector.shape_cast %791 : vector<16xf32> to vector<16x1xf32>
    %793 = vector.broadcast %792 : vector<16x1xf32> to vector<16x8xf32>
    %794 = arith.subf %790, %793 : vector<16x8xf32>
    %795 = math.exp %794 : vector<16x8xf32>
    %cst_281 = arith.constant dense<0.000000e+00> : vector<16xf32>
    %796 = vector.multi_reduction <add>, %795, %cst_281 [1] : vector<16x8xf32> to vector<16xf32>
    %797 = vector.shape_cast %796 : vector<16xf32> to vector<16x1xf32>
    %798 = tpu.reciprocal %797 {approx = true} : vector<16x1xf32> -> vector<16x1xf32>
    %799 = vector.broadcast %798 : vector<16x1xf32> to vector<16x8xf32>
    %800 = arith.mulf %795, %799 : vector<16x8xf32>
    %801 = vector.extract_strided_slice %726 {offsets = [0, 24], sizes = [8, 8], strides = [1, 1]} : vector<8x32xf32> to vector<8x8xf32>
    %cst_282 = arith.constant dense<0.000000e+00> : vector<16x8xf32>
    %802 = tpu.matmul %800, %801, %cst_282 {dimension_numbers = #tpu.dot_dimension_numbers<[1], [0], [0], [1], [0, 0, 1, 1], [], []>} : vector<16x8xf32>, vector<8x8xf32>, vector<16x8xf32> -> vector<16x8xf32>
    %803 = tpu.concatenate %745, %764, %783, %802 in 1 : vector<16x8xf32>, vector<16x8xf32>, vector<16x8xf32>, vector<16x8xf32> -> vector<16x32xf32>
    %804 = vector.extract_strided_slice %716 {offsets = [16, 0], sizes = [16, 32], strides = [1, 1]} : vector<32x32xf32> to vector<16x32xf32>
    %805 = vector.extract_strided_slice %722 {offsets = [8, 0], sizes = [8, 32], strides = [1, 1]} : vector<16x32xf32> to vector<8x32xf32>
    %806 = vector.extract_strided_slice %723 {offsets = [8, 0], sizes = [8, 32], strides = [1, 1]} : vector<16x32xf32> to vector<8x32xf32>
    %807 = vector.extract_strided_slice %804 {offsets = [0, 0], sizes = [16, 8], strides = [1, 1]} : vector<16x32xf32> to vector<16x8xf32>
    %808 = vector.extract_strided_slice %805 {offsets = [0, 0], sizes = [8, 8], strides = [1, 1]} : vector<8x32xf32> to vector<8x8xf32>
    %cst_283 = arith.constant dense<0.000000e+00> : vector<16x8xf32>
    %809 = tpu.matmul %807, %808, %cst_283 {dimension_numbers = #tpu.dot_dimension_numbers<[1], [1], [0], [0], [0, 0, 1, 0], [], []>} : vector<16x8xf32>, vector<8x8xf32>, vector<16x8xf32> -> vector<16x8xf32>
    %cst_284 = arith.constant 0.353553385 : f32
    %810 = vector.broadcast %cst_284 : f32 to vector<16x8xf32>
    %811 = arith.mulf %809, %810 : vector<16x8xf32>
    %812 = vector.broadcast %25 : vector<1x8xf32> to vector<16x8xf32>
    %813 = arith.addf %811, %812 : vector<16x8xf32>
    %cst_285 = arith.constant dense<0xFF800000> : vector<16xf32>
    %814 = vector.multi_reduction <maximumf>, %813, %cst_285 [1] : vector<16x8xf32> to vector<16xf32>
    %815 = vector.shape_cast %814 : vector<16xf32> to vector<16x1xf32>
    %816 = vector.broadcast %815 : vector<16x1xf32> to vector<16x8xf32>
    %817 = arith.subf %813, %816 : vector<16x8xf32>
    %818 = math.exp %817 : vector<16x8xf32>
    %cst_286 = arith.constant dense<0.000000e+00> : vector<16xf32>
    %819 = vector.multi_reduction <add>, %818, %cst_286 [1] : vector<16x8xf32> to vector<16xf32>
    %820 = vector.shape_cast %819 : vector<16xf32> to vector<16x1xf32>
    %821 = tpu.reciprocal %820 {approx = true} : vector<16x1xf32> -> vector<16x1xf32>
    %822 = vector.broadcast %821 : vector<16x1xf32> to vector<16x8xf32>
    %823 = arith.mulf %818, %822 : vector<16x8xf32>
    %824 = vector.extract_strided_slice %806 {offsets = [0, 0], sizes = [8, 8], strides = [1, 1]} : vector<8x32xf32> to vector<8x8xf32>
    %cst_287 = arith.constant dense<0.000000e+00> : vector<16x8xf32>
    %825 = tpu.matmul %823, %824, %cst_287 {dimension_numbers = #tpu.dot_dimension_numbers<[1], [0], [0], [1], [0, 0, 1, 1], [], []>} : vector<16x8xf32>, vector<8x8xf32>, vector<16x8xf32> -> vector<16x8xf32>
    %826 = vector.extract_strided_slice %804 {offsets = [0, 8], sizes = [16, 8], strides = [1, 1]} : vector<16x32xf32> to vector<16x8xf32>
    %827 = vector.extract_strided_slice %805 {offsets = [0, 8], sizes = [8, 8], strides = [1, 1]} : vector<8x32xf32> to vector<8x8xf32>
    %cst_288 = arith.constant dense<0.000000e+00> : vector<16x8xf32>
    %828 = tpu.matmul %826, %827, %cst_288 {dimension_numbers = #tpu.dot_dimension_numbers<[1], [1], [0], [0], [0, 0, 1, 0], [], []>} : vector<16x8xf32>, vector<8x8xf32>, vector<16x8xf32> -> vector<16x8xf32>
    %cst_289 = arith.constant 0.353553385 : f32
    %829 = vector.broadcast %cst_289 : f32 to vector<16x8xf32>
    %830 = arith.mulf %828, %829 : vector<16x8xf32>
    %831 = vector.broadcast %25 : vector<1x8xf32> to vector<16x8xf32>
    %832 = arith.addf %830, %831 : vector<16x8xf32>
    %cst_290 = arith.constant dense<0xFF800000> : vector<16xf32>
    %833 = vector.multi_reduction <maximumf>, %832, %cst_290 [1] : vector<16x8xf32> to vector<16xf32>
    %834 = vector.shape_cast %833 : vector<16xf32> to vector<16x1xf32>
    %835 = vector.broadcast %834 : vector<16x1xf32> to vector<16x8xf32>
    %836 = arith.subf %832, %835 : vector<16x8xf32>
    %837 = math.exp %836 : vector<16x8xf32>
    %cst_291 = arith.constant dense<0.000000e+00> : vector<16xf32>
    %838 = vector.multi_reduction <add>, %837, %cst_291 [1] : vector<16x8xf32> to vector<16xf32>
    %839 = vector.shape_cast %838 : vector<16xf32> to vector<16x1xf32>
    %840 = tpu.reciprocal %839 {approx = true} : vector<16x1xf32> -> vector<16x1xf32>
    %841 = vector.broadcast %840 : vector<16x1xf32> to vector<16x8xf32>
    %842 = arith.mulf %837, %841 : vector<16x8xf32>
    %843 = vector.extract_strided_slice %806 {offsets = [0, 8], sizes = [8, 8], strides = [1, 1]} : vector<8x32xf32> to vector<8x8xf32>
    %cst_292 = arith.constant dense<0.000000e+00> : vector<16x8xf32>
    %844 = tpu.matmul %842, %843, %cst_292 {dimension_numbers = #tpu.dot_dimension_numbers<[1], [0], [0], [1], [0, 0, 1, 1], [], []>} : vector<16x8xf32>, vector<8x8xf32>, vector<16x8xf32> -> vector<16x8xf32>
    %845 = vector.extract_strided_slice %804 {offsets = [0, 16], sizes = [16, 8], strides = [1, 1]} : vector<16x32xf32> to vector<16x8xf32>
    %846 = vector.extract_strided_slice %805 {offsets = [0, 16], sizes = [8, 8], strides = [1, 1]} : vector<8x32xf32> to vector<8x8xf32>
    %cst_293 = arith.constant dense<0.000000e+00> : vector<16x8xf32>
    %847 = tpu.matmul %845, %846, %cst_293 {dimension_numbers = #tpu.dot_dimension_numbers<[1], [1], [0], [0], [0, 0, 1, 0], [], []>} : vector<16x8xf32>, vector<8x8xf32>, vector<16x8xf32> -> vector<16x8xf32>
    %cst_294 = arith.constant 0.353553385 : f32
    %848 = vector.broadcast %cst_294 : f32 to vector<16x8xf32>
    %849 = arith.mulf %847, %848 : vector<16x8xf32>
    %850 = vector.broadcast %25 : vector<1x8xf32> to vector<16x8xf32>
    %851 = arith.addf %849, %850 : vector<16x8xf32>
    %cst_295 = arith.constant dense<0xFF800000> : vector<16xf32>
    %852 = vector.multi_reduction <maximumf>, %851, %cst_295 [1] : vector<16x8xf32> to vector<16xf32>
    %853 = vector.shape_cast %852 : vector<16xf32> to vector<16x1xf32>
    %854 = vector.broadcast %853 : vector<16x1xf32> to vector<16x8xf32>
    %855 = arith.subf %851, %854 : vector<16x8xf32>
    %856 = math.exp %855 : vector<16x8xf32>
    %cst_296 = arith.constant dense<0.000000e+00> : vector<16xf32>
    %857 = vector.multi_reduction <add>, %856, %cst_296 [1] : vector<16x8xf32> to vector<16xf32>
    %858 = vector.shape_cast %857 : vector<16xf32> to vector<16x1xf32>
    %859 = tpu.reciprocal %858 {approx = true} : vector<16x1xf32> -> vector<16x1xf32>
    %860 = vector.broadcast %859 : vector<16x1xf32> to vector<16x8xf32>
    %861 = arith.mulf %856, %860 : vector<16x8xf32>
    %862 = vector.extract_strided_slice %806 {offsets = [0, 16], sizes = [8, 8], strides = [1, 1]} : vector<8x32xf32> to vector<8x8xf32>
    %cst_297 = arith.constant dense<0.000000e+00> : vector<16x8xf32>
    %863 = tpu.matmul %861, %862, %cst_297 {dimension_numbers = #tpu.dot_dimension_numbers<[1], [0], [0], [1], [0, 0, 1, 1], [], []>} : vector<16x8xf32>, vector<8x8xf32>, vector<16x8xf32> -> vector<16x8xf32>
    %864 = vector.extract_strided_slice %804 {offsets = [0, 24], sizes = [16, 8], strides = [1, 1]} : vector<16x32xf32> to vector<16x8xf32>
    %865 = vector.extract_strided_slice %805 {offsets = [0, 24], sizes = [8, 8], strides = [1, 1]} : vector<8x32xf32> to vector<8x8xf32>
    %cst_298 = arith.constant dense<0.000000e+00> : vector<16x8xf32>
    %866 = tpu.matmul %864, %865, %cst_298 {dimension_numbers = #tpu.dot_dimension_numbers<[1], [1], [0], [0], [0, 0, 1, 0], [], []>} : vector<16x8xf32>, vector<8x8xf32>, vector<16x8xf32> -> vector<16x8xf32>
    %cst_299 = arith.constant 0.353553385 : f32
    %867 = vector.broadcast %cst_299 : f32 to vector<16x8xf32>
    %868 = arith.mulf %866, %867 : vector<16x8xf32>
    %869 = vector.broadcast %25 : vector<1x8xf32> to vector<16x8xf32>
    %870 = arith.addf %868, %869 : vector<16x8xf32>
    %cst_300 = arith.constant dense<0xFF800000> : vector<16xf32>
    %871 = vector.multi_reduction <maximumf>, %870, %cst_300 [1] : vector<16x8xf32> to vector<16xf32>
    %872 = vector.shape_cast %871 : vector<16xf32> to vector<16x1xf32>
    %873 = vector.broadcast %872 : vector<16x1xf32> to vector<16x8xf32>
    %874 = arith.subf %870, %873 : vector<16x8xf32>
    %875 = math.exp %874 : vector<16x8xf32>
    %cst_301 = arith.constant dense<0.000000e+00> : vector<16xf32>
    %876 = vector.multi_reduction <add>, %875, %cst_301 [1] : vector<16x8xf32> to vector<16xf32>
    %877 = vector.shape_cast %876 : vector<16xf32> to vector<16x1xf32>
    %878 = tpu.reciprocal %877 {approx = true} : vector<16x1xf32> -> vector<16x1xf32>
    %879 = vector.broadcast %878 : vector<16x1xf32> to vector<16x8xf32>
    %880 = arith.mulf %875, %879 : vector<16x8xf32>
    %881 = vector.extract_strided_slice %806 {offsets = [0, 24], sizes = [8, 8], strides = [1, 1]} : vector<8x32xf32> to vector<8x8xf32>
    %cst_302 = arith.constant dense<0.000000e+00> : vector<16x8xf32>
    %882 = tpu.matmul %880, %881, %cst_302 {dimension_numbers = #tpu.dot_dimension_numbers<[1], [0], [0], [1], [0, 0, 1, 1], [], []>} : vector<16x8xf32>, vector<8x8xf32>, vector<16x8xf32> -> vector<16x8xf32>
    %883 = tpu.concatenate %825, %844, %863, %882 in 1 : vector<16x8xf32>, vector<16x8xf32>, vector<16x8xf32>, vector<16x8xf32> -> vector<16x32xf32>
    %884 = tpu.concatenate %803, %883 in 0 : vector<16x32xf32>, vector<16x32xf32> -> vector<32x32xf32>
    %cst_303 = arith.constant dense<0.000000e+00> : vector<32x32xf32>
    %885 = tpu.matmul %884, %709, %cst_303 {dimension_numbers = #tpu.dot_dimension_numbers<[1], [0], [0], [1], [0, 0, 1, 1], [], []>} : vector<32x32xf32>, vector<32x32xf32>, vector<32x32xf32> -> vector<32x32xf32>
    %886 = vector.broadcast %711 : vector<1x32xf32> to vector<32x32xf32>
    %887 = arith.addf %885, %886 : vector<32x32xf32>
    %888 = arith.addf %703, %887 : vector<32x32xf32>
    %c0_304 = arith.constant 0 : index
    %c0_305 = arith.constant 0 : index
    %c0_306 = arith.constant 0 : index
    %889 = vector.load %arg13[%c0_304, %c0_305, %c0_306] : memref<2x2x32xf32, #tpu.memory_space<vmem>>, vector<1x2x32xf32>
    %890 = vector.shape_cast %889 : vector<1x2x32xf32> to vector<2x32xf32>
    %cst_307 = arith.constant dense<0.000000e+00> : vector<32xf32>
    %891 = vector.multi_reduction <add>, %888, %cst_307 [1] : vector<32x32xf32> to vector<32xf32>
    %892 = vector.shape_cast %891 : vector<32xf32> to vector<32x1xf32>
    %cst_308 = arith.constant 3.200000e+01 : f32
    %893 = vector.broadcast %cst_308 : f32 to vector<32x1xf32>
    %894 = arith.divf %892, %893 : vector<32x1xf32>
    %895 = vector.broadcast %894 : vector<32x1xf32> to vector<32x32xf32>
    %896 = arith.subf %888, %895 : vector<32x32xf32>
    %897 = arith.mulf %896, %896 : vector<32x32xf32>
    %cst_309 = arith.constant dense<0.000000e+00> : vector<32xf32>
    %898 = vector.multi_reduction <add>, %897, %cst_309 [1] : vector<32x32xf32> to vector<32xf32>
    %899 = vector.shape_cast %898 : vector<32xf32> to vector<32x1xf32>
    %cst_310 = arith.constant 3.200000e+01 : f32
    %900 = vector.broadcast %cst_310 : f32 to vector<32x1xf32>
    %901 = arith.divf %899, %900 : vector<32x1xf32>
    %902 = vector.broadcast %894 : vector<32x1xf32> to vector<32x32xf32>
    %903 = arith.subf %888, %902 : vector<32x32xf32>
    %cst_311 = arith.constant 9.99999974E-6 : f32
    %904 = vector.broadcast %cst_311 : f32 to vector<32x1xf32>
    %905 = arith.addf %901, %904 : vector<32x1xf32>
    %906 = math.rsqrt %905 : vector<32x1xf32>
    %907 = vector.broadcast %906 : vector<32x1xf32> to vector<32x32xf32>
    %908 = arith.mulf %903, %907 : vector<32x32xf32>
    %909 = vector.extract_strided_slice %890 {offsets = [0, 0], sizes = [1, 32], strides = [1, 1]} : vector<2x32xf32> to vector<1x32xf32>
    %910 = vector.broadcast %909 : vector<1x32xf32> to vector<32x32xf32>
    %911 = arith.mulf %908, %910 : vector<32x32xf32>
    %912 = vector.extract_strided_slice %890 {offsets = [1, 0], sizes = [1, 32], strides = [1, 1]} : vector<2x32xf32> to vector<1x32xf32>
    %913 = vector.broadcast %912 : vector<1x32xf32> to vector<32x32xf32>
    %914 = arith.addf %911, %913 : vector<32x32xf32>
    %c0_312 = arith.constant 0 : index
    %c0_313 = arith.constant 0 : index
    %c0_314 = arith.constant 0 : index
    %915 = vector.load %arg6[%c0_312, %c0_313, %c0_314] : memref<2x32x64xf32, #tpu.memory_space<vmem>>, vector<1x32x64xf32>
    %916 = vector.shape_cast %915 : vector<1x32x64xf32> to vector<32x64xf32>
    %c0_315 = arith.constant 0 : index
    %c0_316 = arith.constant 0 : index
    %c0_317 = arith.constant 0 : index
    %917 = vector.load %arg4[%c0_315, %c0_316, %c0_317] : memref<2x1x64xf32, #tpu.memory_space<vmem>>, vector<1x1x64xf32>
    %918 = vector.shape_cast %917 : vector<1x1x64xf32> to vector<1x64xf32>
    %cst_318 = arith.constant dense<0.000000e+00> : vector<32x64xf32>
    %919 = tpu.matmul %914, %916, %cst_318 {dimension_numbers = #tpu.dot_dimension_numbers<[1], [0], [0], [1], [0, 0, 1, 1], [], []>} : vector<32x32xf32>, vector<32x64xf32>, vector<32x64xf32> -> vector<32x64xf32>
    %920 = vector.broadcast %918 : vector<1x64xf32> to vector<32x64xf32>
    %921 = arith.addf %919, %920 : vector<32x64xf32>
    %cst_319 = arith.constant 0.000000e+00 : f32
    %922 = vector.broadcast %cst_319 : f32 to vector<32x64xf32>
    %923 = arith.maximumf %921, %922 : vector<32x64xf32>
    %c0_320 = arith.constant 0 : index
    %c0_321 = arith.constant 0 : index
    %c0_322 = arith.constant 0 : index
    %924 = vector.load %arg7[%c0_320, %c0_321, %c0_322] : memref<2x64x32xf32, #tpu.memory_space<vmem>>, vector<1x64x32xf32>
    %925 = vector.shape_cast %924 : vector<1x64x32xf32> to vector<64x32xf32>
    %c0_323 = arith.constant 0 : index
    %c0_324 = arith.constant 0 : index
    %c0_325 = arith.constant 0 : index
    %926 = vector.load %arg5[%c0_323, %c0_324, %c0_325] : memref<2x1x32xf32, #tpu.memory_space<vmem>>, vector<1x1x32xf32>
    %927 = vector.shape_cast %926 : vector<1x1x32xf32> to vector<1x32xf32>
    %cst_326 = arith.constant dense<0.000000e+00> : vector<32x32xf32>
    %928 = tpu.matmul %923, %925, %cst_326 {dimension_numbers = #tpu.dot_dimension_numbers<[1], [0], [0], [1], [0, 0, 1, 1], [], []>} : vector<32x64xf32>, vector<64x32xf32>, vector<32x32xf32> -> vector<32x32xf32>
    %929 = vector.broadcast %927 : vector<1x32xf32> to vector<32x32xf32>
    %930 = arith.addf %928, %929 : vector<32x32xf32>
    %931 = arith.addf %914, %930 : vector<32x32xf32>
    %c0_327 = arith.constant 0 : index
    %c0_328 = arith.constant 0 : index
    %c0_329 = arith.constant 0 : index
    %932 = vector.load %arg14[%c0_327, %c0_328, %c0_329] : memref<2x2x32xf32, #tpu.memory_space<vmem>>, vector<1x2x32xf32>
    %933 = vector.shape_cast %932 : vector<1x2x32xf32> to vector<2x32xf32>
    %cst_330 = arith.constant dense<0.000000e+00> : vector<32xf32>
    %934 = vector.multi_reduction <add>, %931, %cst_330 [1] : vector<32x32xf32> to vector<32xf32>
    %935 = vector.shape_cast %934 : vector<32xf32> to vector<32x1xf32>
    %cst_331 = arith.constant 3.200000e+01 : f32
    %936 = vector.broadcast %cst_331 : f32 to vector<32x1xf32>
    %937 = arith.divf %935, %936 : vector<32x1xf32>
    %938 = vector.broadcast %937 : vector<32x1xf32> to vector<32x32xf32>
    %939 = arith.subf %931, %938 : vector<32x32xf32>
    %940 = arith.mulf %939, %939 : vector<32x32xf32>
    %cst_332 = arith.constant dense<0.000000e+00> : vector<32xf32>
    %941 = vector.multi_reduction <add>, %940, %cst_332 [1] : vector<32x32xf32> to vector<32xf32>
    %942 = vector.shape_cast %941 : vector<32xf32> to vector<32x1xf32>
    %cst_333 = arith.constant 3.200000e+01 : f32
    %943 = vector.broadcast %cst_333 : f32 to vector<32x1xf32>
    %944 = arith.divf %942, %943 : vector<32x1xf32>
    %945 = vector.broadcast %937 : vector<32x1xf32> to vector<32x32xf32>
    %946 = arith.subf %931, %945 : vector<32x32xf32>
    %cst_334 = arith.constant 9.99999974E-6 : f32
    %947 = vector.broadcast %cst_334 : f32 to vector<32x1xf32>
    %948 = arith.addf %944, %947 : vector<32x1xf32>
    %949 = math.rsqrt %948 : vector<32x1xf32>
    %950 = vector.broadcast %949 : vector<32x1xf32> to vector<32x32xf32>
    %951 = arith.mulf %946, %950 : vector<32x32xf32>
    %952 = vector.extract_strided_slice %933 {offsets = [0, 0], sizes = [1, 32], strides = [1, 1]} : vector<2x32xf32> to vector<1x32xf32>
    %953 = vector.broadcast %952 : vector<1x32xf32> to vector<32x32xf32>
    %954 = arith.mulf %951, %953 : vector<32x32xf32>
    %955 = vector.extract_strided_slice %933 {offsets = [1, 0], sizes = [1, 32], strides = [1, 1]} : vector<2x32xf32> to vector<1x32xf32>
    %956 = vector.broadcast %955 : vector<1x32xf32> to vector<32x32xf32>
    %957 = arith.addf %954, %956 : vector<32x32xf32>
    %c1_335 = arith.constant 1 : index
    %c0_336 = arith.constant 0 : index
    %c0_337 = arith.constant 0 : index
    %958 = vector.load %arg18[%c1_335, %c0_336, %c0_337] : memref<2x32x96xf32, #tpu.memory_space<vmem>>, vector<1x32x96xf32>
    %959 = vector.shape_cast %958 : vector<1x32x96xf32> to vector<32x96xf32>
    %c1_338 = arith.constant 1 : index
    %c0_339 = arith.constant 0 : index
    %c0_340 = arith.constant 0 : index
    %960 = vector.load %arg16[%c1_338, %c0_339, %c0_340] : memref<2x1x96xf32, #tpu.memory_space<vmem>>, vector<1x1x96xf32>
    %961 = vector.shape_cast %960 : vector<1x1x96xf32> to vector<1x96xf32>
    %c1_341 = arith.constant 1 : index
    %c0_342 = arith.constant 0 : index
    %c0_343 = arith.constant 0 : index
    %962 = vector.load %arg17[%c1_341, %c0_342, %c0_343] : memref<2x32x32xf32, #tpu.memory_space<vmem>>, vector<1x32x32xf32>
    %963 = vector.shape_cast %962 : vector<1x32x32xf32> to vector<32x32xf32>
    %c1_344 = arith.constant 1 : index
    %c0_345 = arith.constant 0 : index
    %c0_346 = arith.constant 0 : index
    %964 = vector.load %arg15[%c1_344, %c0_345, %c0_346] : memref<2x1x32xf32, #tpu.memory_space<vmem>>, vector<1x1x32xf32>
    %965 = vector.shape_cast %964 : vector<1x1x32xf32> to vector<1x32xf32>
    %cst_347 = arith.constant dense<0.000000e+00> : vector<32x96xf32>
    %966 = tpu.matmul %957, %959, %cst_347 {dimension_numbers = #tpu.dot_dimension_numbers<[1], [0], [0], [1], [0, 0, 1, 1], [], []>} : vector<32x32xf32>, vector<32x96xf32>, vector<32x96xf32> -> vector<32x96xf32>
    %967 = vector.broadcast %961 : vector<1x96xf32> to vector<32x96xf32>
    %968 = arith.addf %966, %967 : vector<32x96xf32>
    %969 = vector.extract_strided_slice %968 {offsets = [0, 0], sizes = [32, 32], strides = [1, 1]} : vector<32x96xf32> to vector<32x32xf32>
    %970 = vector.extract_strided_slice %968 {offsets = [0, 32], sizes = [32, 32], strides = [1, 1]} : vector<32x96xf32> to vector<32x32xf32>
    %971 = vector.extract_strided_slice %968 {offsets = [0, 64], sizes = [32, 32], strides = [1, 1]} : vector<32x96xf32> to vector<32x32xf32>
    %972 = vector.extract_strided_slice %969 {offsets = [0, 0], sizes = [16, 32], strides = [1, 1]} : vector<32x32xf32> to vector<16x32xf32>
    %973 = vector.extract_strided_slice %970 {offsets = [0, 0], sizes = [16, 32], strides = [1, 1]} : vector<32x32xf32> to vector<16x32xf32>
    %974 = vector.extract_strided_slice %971 {offsets = [0, 0], sizes = [16, 32], strides = [1, 1]} : vector<32x32xf32> to vector<16x32xf32>
    %975 = vector.extract_strided_slice %972 {offsets = [0, 0], sizes = [16, 8], strides = [1, 1]} : vector<16x32xf32> to vector<16x8xf32>
    %976 = vector.extract_strided_slice %973 {offsets = [0, 0], sizes = [16, 8], strides = [1, 1]} : vector<16x32xf32> to vector<16x8xf32>
    %cst_348 = arith.constant dense<0.000000e+00> : vector<16x16xf32>
    %977 = tpu.matmul %975, %976, %cst_348 {dimension_numbers = #tpu.dot_dimension_numbers<[1], [1], [0], [0], [0, 0, 1, 0], [], []>} : vector<16x8xf32>, vector<16x8xf32>, vector<16x16xf32> -> vector<16x16xf32>
    %cst_349 = arith.constant 0.353553385 : f32
    %978 = vector.broadcast %cst_349 : f32 to vector<16x16xf32>
    %979 = arith.mulf %977, %978 : vector<16x16xf32>
    %cst_350 = arith.constant dense<0xFF800000> : vector<16xf32>
    %980 = vector.multi_reduction <maximumf>, %979, %cst_350 [1] : vector<16x16xf32> to vector<16xf32>
    %981 = vector.shape_cast %980 : vector<16xf32> to vector<16x1xf32>
    %982 = vector.broadcast %981 : vector<16x1xf32> to vector<16x16xf32>
    %983 = arith.subf %979, %982 : vector<16x16xf32>
    %984 = math.exp %983 : vector<16x16xf32>
    %cst_351 = arith.constant dense<0.000000e+00> : vector<16xf32>
    %985 = vector.multi_reduction <add>, %984, %cst_351 [1] : vector<16x16xf32> to vector<16xf32>
    %986 = vector.shape_cast %985 : vector<16xf32> to vector<16x1xf32>
    %987 = tpu.reciprocal %986 {approx = true} : vector<16x1xf32> -> vector<16x1xf32>
    %988 = vector.broadcast %987 : vector<16x1xf32> to vector<16x16xf32>
    %989 = arith.mulf %984, %988 : vector<16x16xf32>
    %990 = vector.extract_strided_slice %974 {offsets = [0, 0], sizes = [16, 8], strides = [1, 1]} : vector<16x32xf32> to vector<16x8xf32>
    %cst_352 = arith.constant dense<0.000000e+00> : vector<16x8xf32>
    %991 = tpu.matmul %989, %990, %cst_352 {dimension_numbers = #tpu.dot_dimension_numbers<[1], [0], [0], [1], [0, 0, 1, 1], [], []>} : vector<16x16xf32>, vector<16x8xf32>, vector<16x8xf32> -> vector<16x8xf32>
    %992 = vector.extract_strided_slice %972 {offsets = [0, 8], sizes = [16, 8], strides = [1, 1]} : vector<16x32xf32> to vector<16x8xf32>
    %993 = vector.extract_strided_slice %973 {offsets = [0, 8], sizes = [16, 8], strides = [1, 1]} : vector<16x32xf32> to vector<16x8xf32>
    %cst_353 = arith.constant dense<0.000000e+00> : vector<16x16xf32>
    %994 = tpu.matmul %992, %993, %cst_353 {dimension_numbers = #tpu.dot_dimension_numbers<[1], [1], [0], [0], [0, 0, 1, 0], [], []>} : vector<16x8xf32>, vector<16x8xf32>, vector<16x16xf32> -> vector<16x16xf32>
    %cst_354 = arith.constant 0.353553385 : f32
    %995 = vector.broadcast %cst_354 : f32 to vector<16x16xf32>
    %996 = arith.mulf %994, %995 : vector<16x16xf32>
    %cst_355 = arith.constant dense<0xFF800000> : vector<16xf32>
    %997 = vector.multi_reduction <maximumf>, %996, %cst_355 [1] : vector<16x16xf32> to vector<16xf32>
    %998 = vector.shape_cast %997 : vector<16xf32> to vector<16x1xf32>
    %999 = vector.broadcast %998 : vector<16x1xf32> to vector<16x16xf32>
    %1000 = arith.subf %996, %999 : vector<16x16xf32>
    %1001 = math.exp %1000 : vector<16x16xf32>
    %cst_356 = arith.constant dense<0.000000e+00> : vector<16xf32>
    %1002 = vector.multi_reduction <add>, %1001, %cst_356 [1] : vector<16x16xf32> to vector<16xf32>
    %1003 = vector.shape_cast %1002 : vector<16xf32> to vector<16x1xf32>
    %1004 = tpu.reciprocal %1003 {approx = true} : vector<16x1xf32> -> vector<16x1xf32>
    %1005 = vector.broadcast %1004 : vector<16x1xf32> to vector<16x16xf32>
    %1006 = arith.mulf %1001, %1005 : vector<16x16xf32>
    %1007 = vector.extract_strided_slice %974 {offsets = [0, 8], sizes = [16, 8], strides = [1, 1]} : vector<16x32xf32> to vector<16x8xf32>
    %cst_357 = arith.constant dense<0.000000e+00> : vector<16x8xf32>
    %1008 = tpu.matmul %1006, %1007, %cst_357 {dimension_numbers = #tpu.dot_dimension_numbers<[1], [0], [0], [1], [0, 0, 1, 1], [], []>} : vector<16x16xf32>, vector<16x8xf32>, vector<16x8xf32> -> vector<16x8xf32>
    %1009 = vector.extract_strided_slice %972 {offsets = [0, 16], sizes = [16, 8], strides = [1, 1]} : vector<16x32xf32> to vector<16x8xf32>
    %1010 = vector.extract_strided_slice %973 {offsets = [0, 16], sizes = [16, 8], strides = [1, 1]} : vector<16x32xf32> to vector<16x8xf32>
    %cst_358 = arith.constant dense<0.000000e+00> : vector<16x16xf32>
    %1011 = tpu.matmul %1009, %1010, %cst_358 {dimension_numbers = #tpu.dot_dimension_numbers<[1], [1], [0], [0], [0, 0, 1, 0], [], []>} : vector<16x8xf32>, vector<16x8xf32>, vector<16x16xf32> -> vector<16x16xf32>
    %cst_359 = arith.constant 0.353553385 : f32
    %1012 = vector.broadcast %cst_359 : f32 to vector<16x16xf32>
    %1013 = arith.mulf %1011, %1012 : vector<16x16xf32>
    %cst_360 = arith.constant dense<0xFF800000> : vector<16xf32>
    %1014 = vector.multi_reduction <maximumf>, %1013, %cst_360 [1] : vector<16x16xf32> to vector<16xf32>
    %1015 = vector.shape_cast %1014 : vector<16xf32> to vector<16x1xf32>
    %1016 = vector.broadcast %1015 : vector<16x1xf32> to vector<16x16xf32>
    %1017 = arith.subf %1013, %1016 : vector<16x16xf32>
    %1018 = math.exp %1017 : vector<16x16xf32>
    %cst_361 = arith.constant dense<0.000000e+00> : vector<16xf32>
    %1019 = vector.multi_reduction <add>, %1018, %cst_361 [1] : vector<16x16xf32> to vector<16xf32>
    %1020 = vector.shape_cast %1019 : vector<16xf32> to vector<16x1xf32>
    %1021 = tpu.reciprocal %1020 {approx = true} : vector<16x1xf32> -> vector<16x1xf32>
    %1022 = vector.broadcast %1021 : vector<16x1xf32> to vector<16x16xf32>
    %1023 = arith.mulf %1018, %1022 : vector<16x16xf32>
    %1024 = vector.extract_strided_slice %974 {offsets = [0, 16], sizes = [16, 8], strides = [1, 1]} : vector<16x32xf32> to vector<16x8xf32>
    %cst_362 = arith.constant dense<0.000000e+00> : vector<16x8xf32>
    %1025 = tpu.matmul %1023, %1024, %cst_362 {dimension_numbers = #tpu.dot_dimension_numbers<[1], [0], [0], [1], [0, 0, 1, 1], [], []>} : vector<16x16xf32>, vector<16x8xf32>, vector<16x8xf32> -> vector<16x8xf32>
    %1026 = vector.extract_strided_slice %972 {offsets = [0, 24], sizes = [16, 8], strides = [1, 1]} : vector<16x32xf32> to vector<16x8xf32>
    %1027 = vector.extract_strided_slice %973 {offsets = [0, 24], sizes = [16, 8], strides = [1, 1]} : vector<16x32xf32> to vector<16x8xf32>
    %cst_363 = arith.constant dense<0.000000e+00> : vector<16x16xf32>
    %1028 = tpu.matmul %1026, %1027, %cst_363 {dimension_numbers = #tpu.dot_dimension_numbers<[1], [1], [0], [0], [0, 0, 1, 0], [], []>} : vector<16x8xf32>, vector<16x8xf32>, vector<16x16xf32> -> vector<16x16xf32>
    %cst_364 = arith.constant 0.353553385 : f32
    %1029 = vector.broadcast %cst_364 : f32 to vector<16x16xf32>
    %1030 = arith.mulf %1028, %1029 : vector<16x16xf32>
    %cst_365 = arith.constant dense<0xFF800000> : vector<16xf32>
    %1031 = vector.multi_reduction <maximumf>, %1030, %cst_365 [1] : vector<16x16xf32> to vector<16xf32>
    %1032 = vector.shape_cast %1031 : vector<16xf32> to vector<16x1xf32>
    %1033 = vector.broadcast %1032 : vector<16x1xf32> to vector<16x16xf32>
    %1034 = arith.subf %1030, %1033 : vector<16x16xf32>
    %1035 = math.exp %1034 : vector<16x16xf32>
    %cst_366 = arith.constant dense<0.000000e+00> : vector<16xf32>
    %1036 = vector.multi_reduction <add>, %1035, %cst_366 [1] : vector<16x16xf32> to vector<16xf32>
    %1037 = vector.shape_cast %1036 : vector<16xf32> to vector<16x1xf32>
    %1038 = tpu.reciprocal %1037 {approx = true} : vector<16x1xf32> -> vector<16x1xf32>
    %1039 = vector.broadcast %1038 : vector<16x1xf32> to vector<16x16xf32>
    %1040 = arith.mulf %1035, %1039 : vector<16x16xf32>
    %1041 = vector.extract_strided_slice %974 {offsets = [0, 24], sizes = [16, 8], strides = [1, 1]} : vector<16x32xf32> to vector<16x8xf32>
    %cst_367 = arith.constant dense<0.000000e+00> : vector<16x8xf32>
    %1042 = tpu.matmul %1040, %1041, %cst_367 {dimension_numbers = #tpu.dot_dimension_numbers<[1], [0], [0], [1], [0, 0, 1, 1], [], []>} : vector<16x16xf32>, vector<16x8xf32>, vector<16x8xf32> -> vector<16x8xf32>
    %1043 = tpu.concatenate %991, %1008, %1025, %1042 in 1 : vector<16x8xf32>, vector<16x8xf32>, vector<16x8xf32>, vector<16x8xf32> -> vector<16x32xf32>
    %1044 = vector.extract_strided_slice %969 {offsets = [16, 0], sizes = [16, 32], strides = [1, 1]} : vector<32x32xf32> to vector<16x32xf32>
    %1045 = vector.extract_strided_slice %970 {offsets = [16, 0], sizes = [16, 32], strides = [1, 1]} : vector<32x32xf32> to vector<16x32xf32>
    %1046 = vector.extract_strided_slice %971 {offsets = [16, 0], sizes = [16, 32], strides = [1, 1]} : vector<32x32xf32> to vector<16x32xf32>
    %1047 = vector.extract_strided_slice %1044 {offsets = [0, 0], sizes = [16, 8], strides = [1, 1]} : vector<16x32xf32> to vector<16x8xf32>
    %1048 = vector.extract_strided_slice %1045 {offsets = [0, 0], sizes = [16, 8], strides = [1, 1]} : vector<16x32xf32> to vector<16x8xf32>
    %cst_368 = arith.constant dense<0.000000e+00> : vector<16x16xf32>
    %1049 = tpu.matmul %1047, %1048, %cst_368 {dimension_numbers = #tpu.dot_dimension_numbers<[1], [1], [0], [0], [0, 0, 1, 0], [], []>} : vector<16x8xf32>, vector<16x8xf32>, vector<16x16xf32> -> vector<16x16xf32>
    %cst_369 = arith.constant 0.353553385 : f32
    %1050 = vector.broadcast %cst_369 : f32 to vector<16x16xf32>
    %1051 = arith.mulf %1049, %1050 : vector<16x16xf32>
    %cst_370 = arith.constant dense<0xFF800000> : vector<16xf32>
    %1052 = vector.multi_reduction <maximumf>, %1051, %cst_370 [1] : vector<16x16xf32> to vector<16xf32>
    %1053 = vector.shape_cast %1052 : vector<16xf32> to vector<16x1xf32>
    %1054 = vector.broadcast %1053 : vector<16x1xf32> to vector<16x16xf32>
    %1055 = arith.subf %1051, %1054 : vector<16x16xf32>
    %1056 = math.exp %1055 : vector<16x16xf32>
    %cst_371 = arith.constant dense<0.000000e+00> : vector<16xf32>
    %1057 = vector.multi_reduction <add>, %1056, %cst_371 [1] : vector<16x16xf32> to vector<16xf32>
    %1058 = vector.shape_cast %1057 : vector<16xf32> to vector<16x1xf32>
    %1059 = tpu.reciprocal %1058 {approx = true} : vector<16x1xf32> -> vector<16x1xf32>
    %1060 = vector.broadcast %1059 : vector<16x1xf32> to vector<16x16xf32>
    %1061 = arith.mulf %1056, %1060 : vector<16x16xf32>
    %1062 = vector.extract_strided_slice %1046 {offsets = [0, 0], sizes = [16, 8], strides = [1, 1]} : vector<16x32xf32> to vector<16x8xf32>
    %cst_372 = arith.constant dense<0.000000e+00> : vector<16x8xf32>
    %1063 = tpu.matmul %1061, %1062, %cst_372 {dimension_numbers = #tpu.dot_dimension_numbers<[1], [0], [0], [1], [0, 0, 1, 1], [], []>} : vector<16x16xf32>, vector<16x8xf32>, vector<16x8xf32> -> vector<16x8xf32>
    %1064 = vector.extract_strided_slice %1044 {offsets = [0, 8], sizes = [16, 8], strides = [1, 1]} : vector<16x32xf32> to vector<16x8xf32>
    %1065 = vector.extract_strided_slice %1045 {offsets = [0, 8], sizes = [16, 8], strides = [1, 1]} : vector<16x32xf32> to vector<16x8xf32>
    %cst_373 = arith.constant dense<0.000000e+00> : vector<16x16xf32>
    %1066 = tpu.matmul %1064, %1065, %cst_373 {dimension_numbers = #tpu.dot_dimension_numbers<[1], [1], [0], [0], [0, 0, 1, 0], [], []>} : vector<16x8xf32>, vector<16x8xf32>, vector<16x16xf32> -> vector<16x16xf32>
    %cst_374 = arith.constant 0.353553385 : f32
    %1067 = vector.broadcast %cst_374 : f32 to vector<16x16xf32>
    %1068 = arith.mulf %1066, %1067 : vector<16x16xf32>
    %cst_375 = arith.constant dense<0xFF800000> : vector<16xf32>
    %1069 = vector.multi_reduction <maximumf>, %1068, %cst_375 [1] : vector<16x16xf32> to vector<16xf32>
    %1070 = vector.shape_cast %1069 : vector<16xf32> to vector<16x1xf32>
    %1071 = vector.broadcast %1070 : vector<16x1xf32> to vector<16x16xf32>
    %1072 = arith.subf %1068, %1071 : vector<16x16xf32>
    %1073 = math.exp %1072 : vector<16x16xf32>
    %cst_376 = arith.constant dense<0.000000e+00> : vector<16xf32>
    %1074 = vector.multi_reduction <add>, %1073, %cst_376 [1] : vector<16x16xf32> to vector<16xf32>
    %1075 = vector.shape_cast %1074 : vector<16xf32> to vector<16x1xf32>
    %1076 = tpu.reciprocal %1075 {approx = true} : vector<16x1xf32> -> vector<16x1xf32>
    %1077 = vector.broadcast %1076 : vector<16x1xf32> to vector<16x16xf32>
    %1078 = arith.mulf %1073, %1077 : vector<16x16xf32>
    %1079 = vector.extract_strided_slice %1046 {offsets = [0, 8], sizes = [16, 8], strides = [1, 1]} : vector<16x32xf32> to vector<16x8xf32>
    %cst_377 = arith.constant dense<0.000000e+00> : vector<16x8xf32>
    %1080 = tpu.matmul %1078, %1079, %cst_377 {dimension_numbers = #tpu.dot_dimension_numbers<[1], [0], [0], [1], [0, 0, 1, 1], [], []>} : vector<16x16xf32>, vector<16x8xf32>, vector<16x8xf32> -> vector<16x8xf32>
    %1081 = vector.extract_strided_slice %1044 {offsets = [0, 16], sizes = [16, 8], strides = [1, 1]} : vector<16x32xf32> to vector<16x8xf32>
    %1082 = vector.extract_strided_slice %1045 {offsets = [0, 16], sizes = [16, 8], strides = [1, 1]} : vector<16x32xf32> to vector<16x8xf32>
    %cst_378 = arith.constant dense<0.000000e+00> : vector<16x16xf32>
    %1083 = tpu.matmul %1081, %1082, %cst_378 {dimension_numbers = #tpu.dot_dimension_numbers<[1], [1], [0], [0], [0, 0, 1, 0], [], []>} : vector<16x8xf32>, vector<16x8xf32>, vector<16x16xf32> -> vector<16x16xf32>
    %cst_379 = arith.constant 0.353553385 : f32
    %1084 = vector.broadcast %cst_379 : f32 to vector<16x16xf32>
    %1085 = arith.mulf %1083, %1084 : vector<16x16xf32>
    %cst_380 = arith.constant dense<0xFF800000> : vector<16xf32>
    %1086 = vector.multi_reduction <maximumf>, %1085, %cst_380 [1] : vector<16x16xf32> to vector<16xf32>
    %1087 = vector.shape_cast %1086 : vector<16xf32> to vector<16x1xf32>
    %1088 = vector.broadcast %1087 : vector<16x1xf32> to vector<16x16xf32>
    %1089 = arith.subf %1085, %1088 : vector<16x16xf32>
    %1090 = math.exp %1089 : vector<16x16xf32>
    %cst_381 = arith.constant dense<0.000000e+00> : vector<16xf32>
    %1091 = vector.multi_reduction <add>, %1090, %cst_381 [1] : vector<16x16xf32> to vector<16xf32>
    %1092 = vector.shape_cast %1091 : vector<16xf32> to vector<16x1xf32>
    %1093 = tpu.reciprocal %1092 {approx = true} : vector<16x1xf32> -> vector<16x1xf32>
    %1094 = vector.broadcast %1093 : vector<16x1xf32> to vector<16x16xf32>
    %1095 = arith.mulf %1090, %1094 : vector<16x16xf32>
    %1096 = vector.extract_strided_slice %1046 {offsets = [0, 16], sizes = [16, 8], strides = [1, 1]} : vector<16x32xf32> to vector<16x8xf32>
    %cst_382 = arith.constant dense<0.000000e+00> : vector<16x8xf32>
    %1097 = tpu.matmul %1095, %1096, %cst_382 {dimension_numbers = #tpu.dot_dimension_numbers<[1], [0], [0], [1], [0, 0, 1, 1], [], []>} : vector<16x16xf32>, vector<16x8xf32>, vector<16x8xf32> -> vector<16x8xf32>
    %1098 = vector.extract_strided_slice %1044 {offsets = [0, 24], sizes = [16, 8], strides = [1, 1]} : vector<16x32xf32> to vector<16x8xf32>
    %1099 = vector.extract_strided_slice %1045 {offsets = [0, 24], sizes = [16, 8], strides = [1, 1]} : vector<16x32xf32> to vector<16x8xf32>
    %cst_383 = arith.constant dense<0.000000e+00> : vector<16x16xf32>
    %1100 = tpu.matmul %1098, %1099, %cst_383 {dimension_numbers = #tpu.dot_dimension_numbers<[1], [1], [0], [0], [0, 0, 1, 0], [], []>} : vector<16x8xf32>, vector<16x8xf32>, vector<16x16xf32> -> vector<16x16xf32>
    %cst_384 = arith.constant 0.353553385 : f32
    %1101 = vector.broadcast %cst_384 : f32 to vector<16x16xf32>
    %1102 = arith.mulf %1100, %1101 : vector<16x16xf32>
    %cst_385 = arith.constant dense<0xFF800000> : vector<16xf32>
    %1103 = vector.multi_reduction <maximumf>, %1102, %cst_385 [1] : vector<16x16xf32> to vector<16xf32>
    %1104 = vector.shape_cast %1103 : vector<16xf32> to vector<16x1xf32>
    %1105 = vector.broadcast %1104 : vector<16x1xf32> to vector<16x16xf32>
    %1106 = arith.subf %1102, %1105 : vector<16x16xf32>
    %1107 = math.exp %1106 : vector<16x16xf32>
    %cst_386 = arith.constant dense<0.000000e+00> : vector<16xf32>
    %1108 = vector.multi_reduction <add>, %1107, %cst_386 [1] : vector<16x16xf32> to vector<16xf32>
    %1109 = vector.shape_cast %1108 : vector<16xf32> to vector<16x1xf32>
    %1110 = tpu.reciprocal %1109 {approx = true} : vector<16x1xf32> -> vector<16x1xf32>
    %1111 = vector.broadcast %1110 : vector<16x1xf32> to vector<16x16xf32>
    %1112 = arith.mulf %1107, %1111 : vector<16x16xf32>
    %1113 = vector.extract_strided_slice %1046 {offsets = [0, 24], sizes = [16, 8], strides = [1, 1]} : vector<16x32xf32> to vector<16x8xf32>
    %cst_387 = arith.constant dense<0.000000e+00> : vector<16x8xf32>
    %1114 = tpu.matmul %1112, %1113, %cst_387 {dimension_numbers = #tpu.dot_dimension_numbers<[1], [0], [0], [1], [0, 0, 1, 1], [], []>} : vector<16x16xf32>, vector<16x8xf32>, vector<16x8xf32> -> vector<16x8xf32>
    %1115 = tpu.concatenate %1063, %1080, %1097, %1114 in 1 : vector<16x8xf32>, vector<16x8xf32>, vector<16x8xf32>, vector<16x8xf32> -> vector<16x32xf32>
    %1116 = tpu.concatenate %1043, %1115 in 0 : vector<16x32xf32>, vector<16x32xf32> -> vector<32x32xf32>
    %cst_388 = arith.constant dense<0.000000e+00> : vector<32x32xf32>
    %1117 = tpu.matmul %1116, %963, %cst_388 {dimension_numbers = #tpu.dot_dimension_numbers<[1], [0], [0], [1], [0, 0, 1, 1], [], []>} : vector<32x32xf32>, vector<32x32xf32>, vector<32x32xf32> -> vector<32x32xf32>
    %1118 = vector.broadcast %965 : vector<1x32xf32> to vector<32x32xf32>
    %1119 = arith.addf %1117, %1118 : vector<32x32xf32>
    %1120 = arith.addf %957, %1119 : vector<32x32xf32>
    %c1_389 = arith.constant 1 : index
    %c0_390 = arith.constant 0 : index
    %c0_391 = arith.constant 0 : index
    %1121 = vector.load %arg12[%c1_389, %c0_390, %c0_391] : memref<2x2x32xf32, #tpu.memory_space<vmem>>, vector<1x2x32xf32>
    %1122 = vector.shape_cast %1121 : vector<1x2x32xf32> to vector<2x32xf32>
    %cst_392 = arith.constant dense<0.000000e+00> : vector<32xf32>
    %1123 = vector.multi_reduction <add>, %1120, %cst_392 [1] : vector<32x32xf32> to vector<32xf32>
    %1124 = vector.shape_cast %1123 : vector<32xf32> to vector<32x1xf32>
    %cst_393 = arith.constant 3.200000e+01 : f32
    %1125 = vector.broadcast %cst_393 : f32 to vector<32x1xf32>
    %1126 = arith.divf %1124, %1125 : vector<32x1xf32>
    %1127 = vector.broadcast %1126 : vector<32x1xf32> to vector<32x32xf32>
    %1128 = arith.subf %1120, %1127 : vector<32x32xf32>
    %1129 = arith.mulf %1128, %1128 : vector<32x32xf32>
    %cst_394 = arith.constant dense<0.000000e+00> : vector<32xf32>
    %1130 = vector.multi_reduction <add>, %1129, %cst_394 [1] : vector<32x32xf32> to vector<32xf32>
    %1131 = vector.shape_cast %1130 : vector<32xf32> to vector<32x1xf32>
    %cst_395 = arith.constant 3.200000e+01 : f32
    %1132 = vector.broadcast %cst_395 : f32 to vector<32x1xf32>
    %1133 = arith.divf %1131, %1132 : vector<32x1xf32>
    %1134 = vector.broadcast %1126 : vector<32x1xf32> to vector<32x32xf32>
    %1135 = arith.subf %1120, %1134 : vector<32x32xf32>
    %cst_396 = arith.constant 9.99999974E-6 : f32
    %1136 = vector.broadcast %cst_396 : f32 to vector<32x1xf32>
    %1137 = arith.addf %1133, %1136 : vector<32x1xf32>
    %1138 = math.rsqrt %1137 : vector<32x1xf32>
    %1139 = vector.broadcast %1138 : vector<32x1xf32> to vector<32x32xf32>
    %1140 = arith.mulf %1135, %1139 : vector<32x32xf32>
    %1141 = vector.extract_strided_slice %1122 {offsets = [0, 0], sizes = [1, 32], strides = [1, 1]} : vector<2x32xf32> to vector<1x32xf32>
    %1142 = vector.broadcast %1141 : vector<1x32xf32> to vector<32x32xf32>
    %1143 = arith.mulf %1140, %1142 : vector<32x32xf32>
    %1144 = vector.extract_strided_slice %1122 {offsets = [1, 0], sizes = [1, 32], strides = [1, 1]} : vector<2x32xf32> to vector<1x32xf32>
    %1145 = vector.broadcast %1144 : vector<1x32xf32> to vector<32x32xf32>
    %1146 = arith.addf %1143, %1145 : vector<32x32xf32>
    %c1_397 = arith.constant 1 : index
    %c0_398 = arith.constant 0 : index
    %c0_399 = arith.constant 0 : index
    %1147 = vector.load %arg11[%c1_397, %c0_398, %c0_399] : memref<2x32x96xf32, #tpu.memory_space<vmem>>, vector<1x32x96xf32>
    %1148 = vector.shape_cast %1147 : vector<1x32x96xf32> to vector<32x96xf32>
    %c1_400 = arith.constant 1 : index
    %c0_401 = arith.constant 0 : index
    %c0_402 = arith.constant 0 : index
    %1149 = vector.load %arg9[%c1_400, %c0_401, %c0_402] : memref<2x1x96xf32, #tpu.memory_space<vmem>>, vector<1x1x96xf32>
    %1150 = vector.shape_cast %1149 : vector<1x1x96xf32> to vector<1x96xf32>
    %c1_403 = arith.constant 1 : index
    %c0_404 = arith.constant 0 : index
    %c0_405 = arith.constant 0 : index
    %1151 = vector.load %arg10[%c1_403, %c0_404, %c0_405] : memref<2x32x32xf32, #tpu.memory_space<vmem>>, vector<1x32x32xf32>
    %1152 = vector.shape_cast %1151 : vector<1x32x32xf32> to vector<32x32xf32>
    %c1_406 = arith.constant 1 : index
    %c0_407 = arith.constant 0 : index
    %c0_408 = arith.constant 0 : index
    %1153 = vector.load %arg8[%c1_406, %c0_407, %c0_408] : memref<2x1x32xf32, #tpu.memory_space<vmem>>, vector<1x1x32xf32>
    %1154 = vector.shape_cast %1153 : vector<1x1x32xf32> to vector<1x32xf32>
    %1155 = vector.extract_strided_slice %1148 {offsets = [0, 0], sizes = [32, 32], strides = [1, 1]} : vector<32x96xf32> to vector<32x32xf32>
    %1156 = vector.extract_strided_slice %1150 {offsets = [0, 0], sizes = [1, 32], strides = [1, 1]} : vector<1x96xf32> to vector<1x32xf32>
    %cst_409 = arith.constant dense<0.000000e+00> : vector<32x32xf32>
    %1157 = tpu.matmul %1146, %1155, %cst_409 {dimension_numbers = #tpu.dot_dimension_numbers<[1], [0], [0], [1], [0, 0, 1, 1], [], []>} : vector<32x32xf32>, vector<32x32xf32>, vector<32x32xf32> -> vector<32x32xf32>
    %1158 = vector.broadcast %1156 : vector<1x32xf32> to vector<32x32xf32>
    %1159 = arith.addf %1157, %1158 : vector<32x32xf32>
    %1160 = vector.extract_strided_slice %1148 {offsets = [0, 32], sizes = [32, 64], strides = [1, 1]} : vector<32x96xf32> to vector<32x64xf32>
    %1161 = vector.extract_strided_slice %1150 {offsets = [0, 32], sizes = [1, 64], strides = [1, 1]} : vector<1x96xf32> to vector<1x64xf32>
    %cst_410 = arith.constant dense<0.000000e+00> : vector<16x64xf32>
    %1162 = tpu.matmul %514, %1160, %cst_410 {dimension_numbers = #tpu.dot_dimension_numbers<[1], [0], [0], [1], [0, 0, 1, 1], [], []>} : vector<16x32xf32>, vector<32x64xf32>, vector<16x64xf32> -> vector<16x64xf32>
    %1163 = vector.broadcast %1161 : vector<1x64xf32> to vector<16x64xf32>
    %1164 = arith.addf %1162, %1163 : vector<16x64xf32>
    %1165 = vector.extract_strided_slice %1164 {offsets = [0, 0], sizes = [16, 32], strides = [1, 1]} : vector<16x64xf32> to vector<16x32xf32>
    %1166 = vector.extract_strided_slice %1164 {offsets = [0, 32], sizes = [16, 32], strides = [1, 1]} : vector<16x64xf32> to vector<16x32xf32>
    %1167 = vector.extract_strided_slice %1159 {offsets = [0, 0], sizes = [16, 32], strides = [1, 1]} : vector<32x32xf32> to vector<16x32xf32>
    %1168 = vector.extract_strided_slice %1165 {offsets = [0, 0], sizes = [8, 32], strides = [1, 1]} : vector<16x32xf32> to vector<8x32xf32>
    %1169 = vector.extract_strided_slice %1166 {offsets = [0, 0], sizes = [8, 32], strides = [1, 1]} : vector<16x32xf32> to vector<8x32xf32>
    %1170 = vector.extract_strided_slice %1167 {offsets = [0, 0], sizes = [16, 8], strides = [1, 1]} : vector<16x32xf32> to vector<16x8xf32>
    %1171 = vector.extract_strided_slice %1168 {offsets = [0, 0], sizes = [8, 8], strides = [1, 1]} : vector<8x32xf32> to vector<8x8xf32>
    %cst_411 = arith.constant dense<0.000000e+00> : vector<16x8xf32>
    %1172 = tpu.matmul %1170, %1171, %cst_411 {dimension_numbers = #tpu.dot_dimension_numbers<[1], [1], [0], [0], [0, 0, 1, 0], [], []>} : vector<16x8xf32>, vector<8x8xf32>, vector<16x8xf32> -> vector<16x8xf32>
    %cst_412 = arith.constant 0.353553385 : f32
    %1173 = vector.broadcast %cst_412 : f32 to vector<16x8xf32>
    %1174 = arith.mulf %1172, %1173 : vector<16x8xf32>
    %1175 = vector.broadcast %24 : vector<1x8xf32> to vector<16x8xf32>
    %1176 = arith.addf %1174, %1175 : vector<16x8xf32>
    %cst_413 = arith.constant dense<0xFF800000> : vector<16xf32>
    %1177 = vector.multi_reduction <maximumf>, %1176, %cst_413 [1] : vector<16x8xf32> to vector<16xf32>
    %1178 = vector.shape_cast %1177 : vector<16xf32> to vector<16x1xf32>
    %1179 = vector.broadcast %1178 : vector<16x1xf32> to vector<16x8xf32>
    %1180 = arith.subf %1176, %1179 : vector<16x8xf32>
    %1181 = math.exp %1180 : vector<16x8xf32>
    %cst_414 = arith.constant dense<0.000000e+00> : vector<16xf32>
    %1182 = vector.multi_reduction <add>, %1181, %cst_414 [1] : vector<16x8xf32> to vector<16xf32>
    %1183 = vector.shape_cast %1182 : vector<16xf32> to vector<16x1xf32>
    %1184 = tpu.reciprocal %1183 {approx = true} : vector<16x1xf32> -> vector<16x1xf32>
    %1185 = vector.broadcast %1184 : vector<16x1xf32> to vector<16x8xf32>
    %1186 = arith.mulf %1181, %1185 : vector<16x8xf32>
    %1187 = vector.extract_strided_slice %1169 {offsets = [0, 0], sizes = [8, 8], strides = [1, 1]} : vector<8x32xf32> to vector<8x8xf32>
    %cst_415 = arith.constant dense<0.000000e+00> : vector<16x8xf32>
    %1188 = tpu.matmul %1186, %1187, %cst_415 {dimension_numbers = #tpu.dot_dimension_numbers<[1], [0], [0], [1], [0, 0, 1, 1], [], []>} : vector<16x8xf32>, vector<8x8xf32>, vector<16x8xf32> -> vector<16x8xf32>
    %1189 = vector.extract_strided_slice %1167 {offsets = [0, 8], sizes = [16, 8], strides = [1, 1]} : vector<16x32xf32> to vector<16x8xf32>
    %1190 = vector.extract_strided_slice %1168 {offsets = [0, 8], sizes = [8, 8], strides = [1, 1]} : vector<8x32xf32> to vector<8x8xf32>
    %cst_416 = arith.constant dense<0.000000e+00> : vector<16x8xf32>
    %1191 = tpu.matmul %1189, %1190, %cst_416 {dimension_numbers = #tpu.dot_dimension_numbers<[1], [1], [0], [0], [0, 0, 1, 0], [], []>} : vector<16x8xf32>, vector<8x8xf32>, vector<16x8xf32> -> vector<16x8xf32>
    %cst_417 = arith.constant 0.353553385 : f32
    %1192 = vector.broadcast %cst_417 : f32 to vector<16x8xf32>
    %1193 = arith.mulf %1191, %1192 : vector<16x8xf32>
    %1194 = vector.broadcast %24 : vector<1x8xf32> to vector<16x8xf32>
    %1195 = arith.addf %1193, %1194 : vector<16x8xf32>
    %cst_418 = arith.constant dense<0xFF800000> : vector<16xf32>
    %1196 = vector.multi_reduction <maximumf>, %1195, %cst_418 [1] : vector<16x8xf32> to vector<16xf32>
    %1197 = vector.shape_cast %1196 : vector<16xf32> to vector<16x1xf32>
    %1198 = vector.broadcast %1197 : vector<16x1xf32> to vector<16x8xf32>
    %1199 = arith.subf %1195, %1198 : vector<16x8xf32>
    %1200 = math.exp %1199 : vector<16x8xf32>
    %cst_419 = arith.constant dense<0.000000e+00> : vector<16xf32>
    %1201 = vector.multi_reduction <add>, %1200, %cst_419 [1] : vector<16x8xf32> to vector<16xf32>
    %1202 = vector.shape_cast %1201 : vector<16xf32> to vector<16x1xf32>
    %1203 = tpu.reciprocal %1202 {approx = true} : vector<16x1xf32> -> vector<16x1xf32>
    %1204 = vector.broadcast %1203 : vector<16x1xf32> to vector<16x8xf32>
    %1205 = arith.mulf %1200, %1204 : vector<16x8xf32>
    %1206 = vector.extract_strided_slice %1169 {offsets = [0, 8], sizes = [8, 8], strides = [1, 1]} : vector<8x32xf32> to vector<8x8xf32>
    %cst_420 = arith.constant dense<0.000000e+00> : vector<16x8xf32>
    %1207 = tpu.matmul %1205, %1206, %cst_420 {dimension_numbers = #tpu.dot_dimension_numbers<[1], [0], [0], [1], [0, 0, 1, 1], [], []>} : vector<16x8xf32>, vector<8x8xf32>, vector<16x8xf32> -> vector<16x8xf32>
    %1208 = vector.extract_strided_slice %1167 {offsets = [0, 16], sizes = [16, 8], strides = [1, 1]} : vector<16x32xf32> to vector<16x8xf32>
    %1209 = vector.extract_strided_slice %1168 {offsets = [0, 16], sizes = [8, 8], strides = [1, 1]} : vector<8x32xf32> to vector<8x8xf32>
    %cst_421 = arith.constant dense<0.000000e+00> : vector<16x8xf32>
    %1210 = tpu.matmul %1208, %1209, %cst_421 {dimension_numbers = #tpu.dot_dimension_numbers<[1], [1], [0], [0], [0, 0, 1, 0], [], []>} : vector<16x8xf32>, vector<8x8xf32>, vector<16x8xf32> -> vector<16x8xf32>
    %cst_422 = arith.constant 0.353553385 : f32
    %1211 = vector.broadcast %cst_422 : f32 to vector<16x8xf32>
    %1212 = arith.mulf %1210, %1211 : vector<16x8xf32>
    %1213 = vector.broadcast %24 : vector<1x8xf32> to vector<16x8xf32>
    %1214 = arith.addf %1212, %1213 : vector<16x8xf32>
    %cst_423 = arith.constant dense<0xFF800000> : vector<16xf32>
    %1215 = vector.multi_reduction <maximumf>, %1214, %cst_423 [1] : vector<16x8xf32> to vector<16xf32>
    %1216 = vector.shape_cast %1215 : vector<16xf32> to vector<16x1xf32>
    %1217 = vector.broadcast %1216 : vector<16x1xf32> to vector<16x8xf32>
    %1218 = arith.subf %1214, %1217 : vector<16x8xf32>
    %1219 = math.exp %1218 : vector<16x8xf32>
    %cst_424 = arith.constant dense<0.000000e+00> : vector<16xf32>
    %1220 = vector.multi_reduction <add>, %1219, %cst_424 [1] : vector<16x8xf32> to vector<16xf32>
    %1221 = vector.shape_cast %1220 : vector<16xf32> to vector<16x1xf32>
    %1222 = tpu.reciprocal %1221 {approx = true} : vector<16x1xf32> -> vector<16x1xf32>
    %1223 = vector.broadcast %1222 : vector<16x1xf32> to vector<16x8xf32>
    %1224 = arith.mulf %1219, %1223 : vector<16x8xf32>
    %1225 = vector.extract_strided_slice %1169 {offsets = [0, 16], sizes = [8, 8], strides = [1, 1]} : vector<8x32xf32> to vector<8x8xf32>
    %cst_425 = arith.constant dense<0.000000e+00> : vector<16x8xf32>
    %1226 = tpu.matmul %1224, %1225, %cst_425 {dimension_numbers = #tpu.dot_dimension_numbers<[1], [0], [0], [1], [0, 0, 1, 1], [], []>} : vector<16x8xf32>, vector<8x8xf32>, vector<16x8xf32> -> vector<16x8xf32>
    %1227 = vector.extract_strided_slice %1167 {offsets = [0, 24], sizes = [16, 8], strides = [1, 1]} : vector<16x32xf32> to vector<16x8xf32>
    %1228 = vector.extract_strided_slice %1168 {offsets = [0, 24], sizes = [8, 8], strides = [1, 1]} : vector<8x32xf32> to vector<8x8xf32>
    %cst_426 = arith.constant dense<0.000000e+00> : vector<16x8xf32>
    %1229 = tpu.matmul %1227, %1228, %cst_426 {dimension_numbers = #tpu.dot_dimension_numbers<[1], [1], [0], [0], [0, 0, 1, 0], [], []>} : vector<16x8xf32>, vector<8x8xf32>, vector<16x8xf32> -> vector<16x8xf32>
    %cst_427 = arith.constant 0.353553385 : f32
    %1230 = vector.broadcast %cst_427 : f32 to vector<16x8xf32>
    %1231 = arith.mulf %1229, %1230 : vector<16x8xf32>
    %1232 = vector.broadcast %24 : vector<1x8xf32> to vector<16x8xf32>
    %1233 = arith.addf %1231, %1232 : vector<16x8xf32>
    %cst_428 = arith.constant dense<0xFF800000> : vector<16xf32>
    %1234 = vector.multi_reduction <maximumf>, %1233, %cst_428 [1] : vector<16x8xf32> to vector<16xf32>
    %1235 = vector.shape_cast %1234 : vector<16xf32> to vector<16x1xf32>
    %1236 = vector.broadcast %1235 : vector<16x1xf32> to vector<16x8xf32>
    %1237 = arith.subf %1233, %1236 : vector<16x8xf32>
    %1238 = math.exp %1237 : vector<16x8xf32>
    %cst_429 = arith.constant dense<0.000000e+00> : vector<16xf32>
    %1239 = vector.multi_reduction <add>, %1238, %cst_429 [1] : vector<16x8xf32> to vector<16xf32>
    %1240 = vector.shape_cast %1239 : vector<16xf32> to vector<16x1xf32>
    %1241 = tpu.reciprocal %1240 {approx = true} : vector<16x1xf32> -> vector<16x1xf32>
    %1242 = vector.broadcast %1241 : vector<16x1xf32> to vector<16x8xf32>
    %1243 = arith.mulf %1238, %1242 : vector<16x8xf32>
    %1244 = vector.extract_strided_slice %1169 {offsets = [0, 24], sizes = [8, 8], strides = [1, 1]} : vector<8x32xf32> to vector<8x8xf32>
    %cst_430 = arith.constant dense<0.000000e+00> : vector<16x8xf32>
    %1245 = tpu.matmul %1243, %1244, %cst_430 {dimension_numbers = #tpu.dot_dimension_numbers<[1], [0], [0], [1], [0, 0, 1, 1], [], []>} : vector<16x8xf32>, vector<8x8xf32>, vector<16x8xf32> -> vector<16x8xf32>
    %1246 = tpu.concatenate %1188, %1207, %1226, %1245 in 1 : vector<16x8xf32>, vector<16x8xf32>, vector<16x8xf32>, vector<16x8xf32> -> vector<16x32xf32>
    %1247 = vector.extract_strided_slice %1159 {offsets = [16, 0], sizes = [16, 32], strides = [1, 1]} : vector<32x32xf32> to vector<16x32xf32>
    %1248 = vector.extract_strided_slice %1165 {offsets = [8, 0], sizes = [8, 32], strides = [1, 1]} : vector<16x32xf32> to vector<8x32xf32>
    %1249 = vector.extract_strided_slice %1166 {offsets = [8, 0], sizes = [8, 32], strides = [1, 1]} : vector<16x32xf32> to vector<8x32xf32>
    %1250 = vector.extract_strided_slice %1247 {offsets = [0, 0], sizes = [16, 8], strides = [1, 1]} : vector<16x32xf32> to vector<16x8xf32>
    %1251 = vector.extract_strided_slice %1248 {offsets = [0, 0], sizes = [8, 8], strides = [1, 1]} : vector<8x32xf32> to vector<8x8xf32>
    %cst_431 = arith.constant dense<0.000000e+00> : vector<16x8xf32>
    %1252 = tpu.matmul %1250, %1251, %cst_431 {dimension_numbers = #tpu.dot_dimension_numbers<[1], [1], [0], [0], [0, 0, 1, 0], [], []>} : vector<16x8xf32>, vector<8x8xf32>, vector<16x8xf32> -> vector<16x8xf32>
    %cst_432 = arith.constant 0.353553385 : f32
    %1253 = vector.broadcast %cst_432 : f32 to vector<16x8xf32>
    %1254 = arith.mulf %1252, %1253 : vector<16x8xf32>
    %1255 = vector.broadcast %25 : vector<1x8xf32> to vector<16x8xf32>
    %1256 = arith.addf %1254, %1255 : vector<16x8xf32>
    %cst_433 = arith.constant dense<0xFF800000> : vector<16xf32>
    %1257 = vector.multi_reduction <maximumf>, %1256, %cst_433 [1] : vector<16x8xf32> to vector<16xf32>
    %1258 = vector.shape_cast %1257 : vector<16xf32> to vector<16x1xf32>
    %1259 = vector.broadcast %1258 : vector<16x1xf32> to vector<16x8xf32>
    %1260 = arith.subf %1256, %1259 : vector<16x8xf32>
    %1261 = math.exp %1260 : vector<16x8xf32>
    %cst_434 = arith.constant dense<0.000000e+00> : vector<16xf32>
    %1262 = vector.multi_reduction <add>, %1261, %cst_434 [1] : vector<16x8xf32> to vector<16xf32>
    %1263 = vector.shape_cast %1262 : vector<16xf32> to vector<16x1xf32>
    %1264 = tpu.reciprocal %1263 {approx = true} : vector<16x1xf32> -> vector<16x1xf32>
    %1265 = vector.broadcast %1264 : vector<16x1xf32> to vector<16x8xf32>
    %1266 = arith.mulf %1261, %1265 : vector<16x8xf32>
    %1267 = vector.extract_strided_slice %1249 {offsets = [0, 0], sizes = [8, 8], strides = [1, 1]} : vector<8x32xf32> to vector<8x8xf32>
    %cst_435 = arith.constant dense<0.000000e+00> : vector<16x8xf32>
    %1268 = tpu.matmul %1266, %1267, %cst_435 {dimension_numbers = #tpu.dot_dimension_numbers<[1], [0], [0], [1], [0, 0, 1, 1], [], []>} : vector<16x8xf32>, vector<8x8xf32>, vector<16x8xf32> -> vector<16x8xf32>
    %1269 = vector.extract_strided_slice %1247 {offsets = [0, 8], sizes = [16, 8], strides = [1, 1]} : vector<16x32xf32> to vector<16x8xf32>
    %1270 = vector.extract_strided_slice %1248 {offsets = [0, 8], sizes = [8, 8], strides = [1, 1]} : vector<8x32xf32> to vector<8x8xf32>
    %cst_436 = arith.constant dense<0.000000e+00> : vector<16x8xf32>
    %1271 = tpu.matmul %1269, %1270, %cst_436 {dimension_numbers = #tpu.dot_dimension_numbers<[1], [1], [0], [0], [0, 0, 1, 0], [], []>} : vector<16x8xf32>, vector<8x8xf32>, vector<16x8xf32> -> vector<16x8xf32>
    %cst_437 = arith.constant 0.353553385 : f32
    %1272 = vector.broadcast %cst_437 : f32 to vector<16x8xf32>
    %1273 = arith.mulf %1271, %1272 : vector<16x8xf32>
    %1274 = vector.broadcast %25 : vector<1x8xf32> to vector<16x8xf32>
    %1275 = arith.addf %1273, %1274 : vector<16x8xf32>
    %cst_438 = arith.constant dense<0xFF800000> : vector<16xf32>
    %1276 = vector.multi_reduction <maximumf>, %1275, %cst_438 [1] : vector<16x8xf32> to vector<16xf32>
    %1277 = vector.shape_cast %1276 : vector<16xf32> to vector<16x1xf32>
    %1278 = vector.broadcast %1277 : vector<16x1xf32> to vector<16x8xf32>
    %1279 = arith.subf %1275, %1278 : vector<16x8xf32>
    %1280 = math.exp %1279 : vector<16x8xf32>
    %cst_439 = arith.constant dense<0.000000e+00> : vector<16xf32>
    %1281 = vector.multi_reduction <add>, %1280, %cst_439 [1] : vector<16x8xf32> to vector<16xf32>
    %1282 = vector.shape_cast %1281 : vector<16xf32> to vector<16x1xf32>
    %1283 = tpu.reciprocal %1282 {approx = true} : vector<16x1xf32> -> vector<16x1xf32>
    %1284 = vector.broadcast %1283 : vector<16x1xf32> to vector<16x8xf32>
    %1285 = arith.mulf %1280, %1284 : vector<16x8xf32>
    %1286 = vector.extract_strided_slice %1249 {offsets = [0, 8], sizes = [8, 8], strides = [1, 1]} : vector<8x32xf32> to vector<8x8xf32>
    %cst_440 = arith.constant dense<0.000000e+00> : vector<16x8xf32>
    %1287 = tpu.matmul %1285, %1286, %cst_440 {dimension_numbers = #tpu.dot_dimension_numbers<[1], [0], [0], [1], [0, 0, 1, 1], [], []>} : vector<16x8xf32>, vector<8x8xf32>, vector<16x8xf32> -> vector<16x8xf32>
    %1288 = vector.extract_strided_slice %1247 {offsets = [0, 16], sizes = [16, 8], strides = [1, 1]} : vector<16x32xf32> to vector<16x8xf32>
    %1289 = vector.extract_strided_slice %1248 {offsets = [0, 16], sizes = [8, 8], strides = [1, 1]} : vector<8x32xf32> to vector<8x8xf32>
    %cst_441 = arith.constant dense<0.000000e+00> : vector<16x8xf32>
    %1290 = tpu.matmul %1288, %1289, %cst_441 {dimension_numbers = #tpu.dot_dimension_numbers<[1], [1], [0], [0], [0, 0, 1, 0], [], []>} : vector<16x8xf32>, vector<8x8xf32>, vector<16x8xf32> -> vector<16x8xf32>
    %cst_442 = arith.constant 0.353553385 : f32
    %1291 = vector.broadcast %cst_442 : f32 to vector<16x8xf32>
    %1292 = arith.mulf %1290, %1291 : vector<16x8xf32>
    %1293 = vector.broadcast %25 : vector<1x8xf32> to vector<16x8xf32>
    %1294 = arith.addf %1292, %1293 : vector<16x8xf32>
    %cst_443 = arith.constant dense<0xFF800000> : vector<16xf32>
    %1295 = vector.multi_reduction <maximumf>, %1294, %cst_443 [1] : vector<16x8xf32> to vector<16xf32>
    %1296 = vector.shape_cast %1295 : vector<16xf32> to vector<16x1xf32>
    %1297 = vector.broadcast %1296 : vector<16x1xf32> to vector<16x8xf32>
    %1298 = arith.subf %1294, %1297 : vector<16x8xf32>
    %1299 = math.exp %1298 : vector<16x8xf32>
    %cst_444 = arith.constant dense<0.000000e+00> : vector<16xf32>
    %1300 = vector.multi_reduction <add>, %1299, %cst_444 [1] : vector<16x8xf32> to vector<16xf32>
    %1301 = vector.shape_cast %1300 : vector<16xf32> to vector<16x1xf32>
    %1302 = tpu.reciprocal %1301 {approx = true} : vector<16x1xf32> -> vector<16x1xf32>
    %1303 = vector.broadcast %1302 : vector<16x1xf32> to vector<16x8xf32>
    %1304 = arith.mulf %1299, %1303 : vector<16x8xf32>
    %1305 = vector.extract_strided_slice %1249 {offsets = [0, 16], sizes = [8, 8], strides = [1, 1]} : vector<8x32xf32> to vector<8x8xf32>
    %cst_445 = arith.constant dense<0.000000e+00> : vector<16x8xf32>
    %1306 = tpu.matmul %1304, %1305, %cst_445 {dimension_numbers = #tpu.dot_dimension_numbers<[1], [0], [0], [1], [0, 0, 1, 1], [], []>} : vector<16x8xf32>, vector<8x8xf32>, vector<16x8xf32> -> vector<16x8xf32>
    %1307 = vector.extract_strided_slice %1247 {offsets = [0, 24], sizes = [16, 8], strides = [1, 1]} : vector<16x32xf32> to vector<16x8xf32>
    %1308 = vector.extract_strided_slice %1248 {offsets = [0, 24], sizes = [8, 8], strides = [1, 1]} : vector<8x32xf32> to vector<8x8xf32>
    %cst_446 = arith.constant dense<0.000000e+00> : vector<16x8xf32>
    %1309 = tpu.matmul %1307, %1308, %cst_446 {dimension_numbers = #tpu.dot_dimension_numbers<[1], [1], [0], [0], [0, 0, 1, 0], [], []>} : vector<16x8xf32>, vector<8x8xf32>, vector<16x8xf32> -> vector<16x8xf32>
    %cst_447 = arith.constant 0.353553385 : f32
    %1310 = vector.broadcast %cst_447 : f32 to vector<16x8xf32>
    %1311 = arith.mulf %1309, %1310 : vector<16x8xf32>
    %1312 = vector.broadcast %25 : vector<1x8xf32> to vector<16x8xf32>
    %1313 = arith.addf %1311, %1312 : vector<16x8xf32>
    %cst_448 = arith.constant dense<0xFF800000> : vector<16xf32>
    %1314 = vector.multi_reduction <maximumf>, %1313, %cst_448 [1] : vector<16x8xf32> to vector<16xf32>
    %1315 = vector.shape_cast %1314 : vector<16xf32> to vector<16x1xf32>
    %1316 = vector.broadcast %1315 : vector<16x1xf32> to vector<16x8xf32>
    %1317 = arith.subf %1313, %1316 : vector<16x8xf32>
    %1318 = math.exp %1317 : vector<16x8xf32>
    %cst_449 = arith.constant dense<0.000000e+00> : vector<16xf32>
    %1319 = vector.multi_reduction <add>, %1318, %cst_449 [1] : vector<16x8xf32> to vector<16xf32>
    %1320 = vector.shape_cast %1319 : vector<16xf32> to vector<16x1xf32>
    %1321 = tpu.reciprocal %1320 {approx = true} : vector<16x1xf32> -> vector<16x1xf32>
    %1322 = vector.broadcast %1321 : vector<16x1xf32> to vector<16x8xf32>
    %1323 = arith.mulf %1318, %1322 : vector<16x8xf32>
    %1324 = vector.extract_strided_slice %1249 {offsets = [0, 24], sizes = [8, 8], strides = [1, 1]} : vector<8x32xf32> to vector<8x8xf32>
    %cst_450 = arith.constant dense<0.000000e+00> : vector<16x8xf32>
    %1325 = tpu.matmul %1323, %1324, %cst_450 {dimension_numbers = #tpu.dot_dimension_numbers<[1], [0], [0], [1], [0, 0, 1, 1], [], []>} : vector<16x8xf32>, vector<8x8xf32>, vector<16x8xf32> -> vector<16x8xf32>
    %1326 = tpu.concatenate %1268, %1287, %1306, %1325 in 1 : vector<16x8xf32>, vector<16x8xf32>, vector<16x8xf32>, vector<16x8xf32> -> vector<16x32xf32>
    %1327 = tpu.concatenate %1246, %1326 in 0 : vector<16x32xf32>, vector<16x32xf32> -> vector<32x32xf32>
    %cst_451 = arith.constant dense<0.000000e+00> : vector<32x32xf32>
    %1328 = tpu.matmul %1327, %1152, %cst_451 {dimension_numbers = #tpu.dot_dimension_numbers<[1], [0], [0], [1], [0, 0, 1, 1], [], []>} : vector<32x32xf32>, vector<32x32xf32>, vector<32x32xf32> -> vector<32x32xf32>
    %1329 = vector.broadcast %1154 : vector<1x32xf32> to vector<32x32xf32>
    %1330 = arith.addf %1328, %1329 : vector<32x32xf32>
    %1331 = arith.addf %1146, %1330 : vector<32x32xf32>
    %c1_452 = arith.constant 1 : index
    %c0_453 = arith.constant 0 : index
    %c0_454 = arith.constant 0 : index
    %1332 = vector.load %arg13[%c1_452, %c0_453, %c0_454] : memref<2x2x32xf32, #tpu.memory_space<vmem>>, vector<1x2x32xf32>
    %1333 = vector.shape_cast %1332 : vector<1x2x32xf32> to vector<2x32xf32>
    %cst_455 = arith.constant dense<0.000000e+00> : vector<32xf32>
    %1334 = vector.multi_reduction <add>, %1331, %cst_455 [1] : vector<32x32xf32> to vector<32xf32>
    %1335 = vector.shape_cast %1334 : vector<32xf32> to vector<32x1xf32>
    %cst_456 = arith.constant 3.200000e+01 : f32
    %1336 = vector.broadcast %cst_456 : f32 to vector<32x1xf32>
    %1337 = arith.divf %1335, %1336 : vector<32x1xf32>
    %1338 = vector.broadcast %1337 : vector<32x1xf32> to vector<32x32xf32>
    %1339 = arith.subf %1331, %1338 : vector<32x32xf32>
    %1340 = arith.mulf %1339, %1339 : vector<32x32xf32>
    %cst_457 = arith.constant dense<0.000000e+00> : vector<32xf32>
    %1341 = vector.multi_reduction <add>, %1340, %cst_457 [1] : vector<32x32xf32> to vector<32xf32>
    %1342 = vector.shape_cast %1341 : vector<32xf32> to vector<32x1xf32>
    %cst_458 = arith.constant 3.200000e+01 : f32
    %1343 = vector.broadcast %cst_458 : f32 to vector<32x1xf32>
    %1344 = arith.divf %1342, %1343 : vector<32x1xf32>
    %1345 = vector.broadcast %1337 : vector<32x1xf32> to vector<32x32xf32>
    %1346 = arith.subf %1331, %1345 : vector<32x32xf32>
    %cst_459 = arith.constant 9.99999974E-6 : f32
    %1347 = vector.broadcast %cst_459 : f32 to vector<32x1xf32>
    %1348 = arith.addf %1344, %1347 : vector<32x1xf32>
    %1349 = math.rsqrt %1348 : vector<32x1xf32>
    %1350 = vector.broadcast %1349 : vector<32x1xf32> to vector<32x32xf32>
    %1351 = arith.mulf %1346, %1350 : vector<32x32xf32>
    %1352 = vector.extract_strided_slice %1333 {offsets = [0, 0], sizes = [1, 32], strides = [1, 1]} : vector<2x32xf32> to vector<1x32xf32>
    %1353 = vector.broadcast %1352 : vector<1x32xf32> to vector<32x32xf32>
    %1354 = arith.mulf %1351, %1353 : vector<32x32xf32>
    %1355 = vector.extract_strided_slice %1333 {offsets = [1, 0], sizes = [1, 32], strides = [1, 1]} : vector<2x32xf32> to vector<1x32xf32>
    %1356 = vector.broadcast %1355 : vector<1x32xf32> to vector<32x32xf32>
    %1357 = arith.addf %1354, %1356 : vector<32x32xf32>
    %c1_460 = arith.constant 1 : index
    %c0_461 = arith.constant 0 : index
    %c0_462 = arith.constant 0 : index
    %1358 = vector.load %arg6[%c1_460, %c0_461, %c0_462] : memref<2x32x64xf32, #tpu.memory_space<vmem>>, vector<1x32x64xf32>
    %1359 = vector.shape_cast %1358 : vector<1x32x64xf32> to vector<32x64xf32>
    %c1_463 = arith.constant 1 : index
    %c0_464 = arith.constant 0 : index
    %c0_465 = arith.constant 0 : index
    %1360 = vector.load %arg4[%c1_463, %c0_464, %c0_465] : memref<2x1x64xf32, #tpu.memory_space<vmem>>, vector<1x1x64xf32>
    %1361 = vector.shape_cast %1360 : vector<1x1x64xf32> to vector<1x64xf32>
    %cst_466 = arith.constant dense<0.000000e+00> : vector<32x64xf32>
    %1362 = tpu.matmul %1357, %1359, %cst_466 {dimension_numbers = #tpu.dot_dimension_numbers<[1], [0], [0], [1], [0, 0, 1, 1], [], []>} : vector<32x32xf32>, vector<32x64xf32>, vector<32x64xf32> -> vector<32x64xf32>
    %1363 = vector.broadcast %1361 : vector<1x64xf32> to vector<32x64xf32>
    %1364 = arith.addf %1362, %1363 : vector<32x64xf32>
    %cst_467 = arith.constant 0.000000e+00 : f32
    %1365 = vector.broadcast %cst_467 : f32 to vector<32x64xf32>
    %1366 = arith.maximumf %1364, %1365 : vector<32x64xf32>
    %c1_468 = arith.constant 1 : index
    %c0_469 = arith.constant 0 : index
    %c0_470 = arith.constant 0 : index
    %1367 = vector.load %arg7[%c1_468, %c0_469, %c0_470] : memref<2x64x32xf32, #tpu.memory_space<vmem>>, vector<1x64x32xf32>
    %1368 = vector.shape_cast %1367 : vector<1x64x32xf32> to vector<64x32xf32>
    %c1_471 = arith.constant 1 : index
    %c0_472 = arith.constant 0 : index
    %c0_473 = arith.constant 0 : index
    %1369 = vector.load %arg5[%c1_471, %c0_472, %c0_473] : memref<2x1x32xf32, #tpu.memory_space<vmem>>, vector<1x1x32xf32>
    %1370 = vector.shape_cast %1369 : vector<1x1x32xf32> to vector<1x32xf32>
    %cst_474 = arith.constant dense<0.000000e+00> : vector<32x32xf32>
    %1371 = tpu.matmul %1366, %1368, %cst_474 {dimension_numbers = #tpu.dot_dimension_numbers<[1], [0], [0], [1], [0, 0, 1, 1], [], []>} : vector<32x64xf32>, vector<64x32xf32>, vector<32x32xf32> -> vector<32x32xf32>
    %1372 = vector.broadcast %1370 : vector<1x32xf32> to vector<32x32xf32>
    %1373 = arith.addf %1371, %1372 : vector<32x32xf32>
    %1374 = arith.addf %1357, %1373 : vector<32x32xf32>
    %c1_475 = arith.constant 1 : index
    %c0_476 = arith.constant 0 : index
    %c0_477 = arith.constant 0 : index
    %1375 = vector.load %arg14[%c1_475, %c0_476, %c0_477] : memref<2x2x32xf32, #tpu.memory_space<vmem>>, vector<1x2x32xf32>
    %1376 = vector.shape_cast %1375 : vector<1x2x32xf32> to vector<2x32xf32>
    %cst_478 = arith.constant dense<0.000000e+00> : vector<32xf32>
    %1377 = vector.multi_reduction <add>, %1374, %cst_478 [1] : vector<32x32xf32> to vector<32xf32>
    %1378 = vector.shape_cast %1377 : vector<32xf32> to vector<32x1xf32>
    %cst_479 = arith.constant 3.200000e+01 : f32
    %1379 = vector.broadcast %cst_479 : f32 to vector<32x1xf32>
    %1380 = arith.divf %1378, %1379 : vector<32x1xf32>
    %1381 = vector.broadcast %1380 : vector<32x1xf32> to vector<32x32xf32>
    %1382 = arith.subf %1374, %1381 : vector<32x32xf32>
    %1383 = arith.mulf %1382, %1382 : vector<32x32xf32>
    %cst_480 = arith.constant dense<0.000000e+00> : vector<32xf32>
    %1384 = vector.multi_reduction <add>, %1383, %cst_480 [1] : vector<32x32xf32> to vector<32xf32>
    %1385 = vector.shape_cast %1384 : vector<32xf32> to vector<32x1xf32>
    %cst_481 = arith.constant 3.200000e+01 : f32
    %1386 = vector.broadcast %cst_481 : f32 to vector<32x1xf32>
    %1387 = arith.divf %1385, %1386 : vector<32x1xf32>
    %1388 = vector.broadcast %1380 : vector<32x1xf32> to vector<32x32xf32>
    %1389 = arith.subf %1374, %1388 : vector<32x32xf32>
    %cst_482 = arith.constant 9.99999974E-6 : f32
    %1390 = vector.broadcast %cst_482 : f32 to vector<32x1xf32>
    %1391 = arith.addf %1387, %1390 : vector<32x1xf32>
    %1392 = math.rsqrt %1391 : vector<32x1xf32>
    %1393 = vector.broadcast %1392 : vector<32x1xf32> to vector<32x32xf32>
    %1394 = arith.mulf %1389, %1393 : vector<32x32xf32>
    %1395 = vector.extract_strided_slice %1376 {offsets = [0, 0], sizes = [1, 32], strides = [1, 1]} : vector<2x32xf32> to vector<1x32xf32>
    %1396 = vector.broadcast %1395 : vector<1x32xf32> to vector<32x32xf32>
    %1397 = arith.mulf %1394, %1396 : vector<32x32xf32>
    %1398 = vector.extract_strided_slice %1376 {offsets = [1, 0], sizes = [1, 32], strides = [1, 1]} : vector<2x32xf32> to vector<1x32xf32>
    %1399 = vector.broadcast %1398 : vector<1x32xf32> to vector<32x32xf32>
    %1400 = arith.addf %1397, %1399 : vector<32x32xf32>
    %c0_483 = arith.constant 0 : index
    %c0_484 = arith.constant 0 : index
    %1401 = vector.load %arg34[%c0_483, %c0_484] : memref<32x64xf32, #tpu.memory_space<vmem>>, vector<32x64xf32>
    %c0_485 = arith.constant 0 : index
    %c0_486 = arith.constant 0 : index
    %1402 = vector.load %arg30[%c0_485, %c0_486] : memref<1x64xf32, #tpu.memory_space<vmem>>, vector<1x64xf32>
    %c0_487 = arith.constant 0 : index
    %c0_488 = arith.constant 0 : index
    %1403 = vector.load %arg35[%c0_487, %c0_488] : memref<64x1xf32, #tpu.memory_space<vmem>>, vector<64x1xf32>
    %c0_489 = arith.constant 0 : index
    %c0_490 = arith.constant 0 : index
    %1404 = vector.load %arg31[%c0_489, %c0_490] : memref<1x1xf32, #tpu.memory_space<vmem>>, vector<1x1xf32>
    %cst_491 = arith.constant dense<0.000000e+00> : vector<16x64xf32>
    %1405 = tpu.matmul %514, %1401, %cst_491 {dimension_numbers = #tpu.dot_dimension_numbers<[1], [0], [0], [1], [0, 0, 1, 1], [], []>} : vector<16x32xf32>, vector<32x64xf32>, vector<16x64xf32> -> vector<16x64xf32>
    %1406 = vector.broadcast %1402 : vector<1x64xf32> to vector<16x64xf32>
    %1407 = arith.addf %1405, %1406 : vector<16x64xf32>
    %cst_492 = arith.constant 0.000000e+00 : f32
    %1408 = vector.broadcast %cst_492 : f32 to vector<16x64xf32>
    %1409 = arith.maximumf %1407, %1408 : vector<16x64xf32>
    %cst_493 = arith.constant dense<0.000000e+00> : vector<16x1xf32>
    %1410 = tpu.matmul %1409, %1403, %cst_493 {dimension_numbers = #tpu.dot_dimension_numbers<[1], [0], [0], [1], [0, 0, 1, 1], [], []>} : vector<16x64xf32>, vector<64x1xf32>, vector<16x1xf32> -> vector<16x1xf32>
    %1411 = vector.broadcast %1404 : vector<1x1xf32> to vector<16x1xf32>
    %1412 = arith.addf %1410, %1411 : vector<16x1xf32>
    %1413 = vector.extract_strided_slice %1412 {offsets = [0, 0], sizes = [8, 1], strides = [1, 1]} : vector<16x1xf32> to vector<8x1xf32>
    %1414 = arith.addf %1413, %26 : vector<8x1xf32>
    %cst_494 = arith.constant dense<0xFF800000> : vector<1xf32>
    %1415 = vector.multi_reduction <maximumf>, %1414, %cst_494 [0] : vector<8x1xf32> to vector<1xf32>
    %1416 = vector.shape_cast %1415 : vector<1xf32> to vector<1x1xf32>
    %1417 = vector.broadcast %1416 : vector<1x1xf32> to vector<8x1xf32>
    %1418 = arith.subf %1414, %1417 : vector<8x1xf32>
    %1419 = math.exp %1418 : vector<8x1xf32>
    %cst_495 = arith.constant dense<0.000000e+00> : vector<1xf32>
    %1420 = vector.multi_reduction <add>, %1419, %cst_495 [0] : vector<8x1xf32> to vector<1xf32>
    %1421 = vector.shape_cast %1420 : vector<1xf32> to vector<1x1xf32>
    %1422 = tpu.reciprocal %1421 {approx = true} : vector<1x1xf32> -> vector<1x1xf32>
    %1423 = vector.broadcast %1422 : vector<1x1xf32> to vector<8x1xf32>
    %1424 = arith.mulf %1419, %1423 : vector<8x1xf32>
    %1425 = vector.extract_strided_slice %514 {offsets = [0, 0], sizes = [8, 32], strides = [1, 1]} : vector<16x32xf32> to vector<8x32xf32>
    %1426 = vector.broadcast %1424 : vector<8x1xf32> to vector<8x32xf32>
    %1427 = arith.mulf %1425, %1426 : vector<8x32xf32>
    %cst_496 = arith.constant dense<0.000000e+00> : vector<32xf32>
    %1428 = vector.multi_reduction <add>, %1427, %cst_496 [0] : vector<8x32xf32> to vector<32xf32>
    %1429 = vector.shape_cast %1428 : vector<32xf32> to vector<1x32xf32>
    %1430 = vector.extract_strided_slice %1412 {offsets = [8, 0], sizes = [8, 1], strides = [1, 1]} : vector<16x1xf32> to vector<8x1xf32>
    %1431 = arith.addf %1430, %27 : vector<8x1xf32>
    %cst_497 = arith.constant dense<0xFF800000> : vector<1xf32>
    %1432 = vector.multi_reduction <maximumf>, %1431, %cst_497 [0] : vector<8x1xf32> to vector<1xf32>
    %1433 = vector.shape_cast %1432 : vector<1xf32> to vector<1x1xf32>
    %1434 = vector.broadcast %1433 : vector<1x1xf32> to vector<8x1xf32>
    %1435 = arith.subf %1431, %1434 : vector<8x1xf32>
    %1436 = math.exp %1435 : vector<8x1xf32>
    %cst_498 = arith.constant dense<0.000000e+00> : vector<1xf32>
    %1437 = vector.multi_reduction <add>, %1436, %cst_498 [0] : vector<8x1xf32> to vector<1xf32>
    %1438 = vector.shape_cast %1437 : vector<1xf32> to vector<1x1xf32>
    %1439 = tpu.reciprocal %1438 {approx = true} : vector<1x1xf32> -> vector<1x1xf32>
    %1440 = vector.broadcast %1439 : vector<1x1xf32> to vector<8x1xf32>
    %1441 = arith.mulf %1436, %1440 : vector<8x1xf32>
    %1442 = vector.extract_strided_slice %514 {offsets = [8, 0], sizes = [8, 32], strides = [1, 1]} : vector<16x32xf32> to vector<8x32xf32>
    %1443 = vector.broadcast %1441 : vector<8x1xf32> to vector<8x32xf32>
    %1444 = arith.mulf %1442, %1443 : vector<8x32xf32>
    %cst_499 = arith.constant dense<0.000000e+00> : vector<32xf32>
    %1445 = vector.multi_reduction <add>, %1444, %cst_499 [0] : vector<8x32xf32> to vector<32xf32>
    %1446 = vector.shape_cast %1445 : vector<32xf32> to vector<1x32xf32>
    %1447 = tpu.concatenate %1429, %1446 in 0 : vector<1x32xf32>, vector<1x32xf32> -> vector<2x32xf32>
    %c0_500 = arith.constant 0 : index
    %c0_501 = arith.constant 0 : index
    %1448 = vector.load %arg40[%c0_500, %c0_501] : memref<32x64xf32, #tpu.memory_space<vmem>>, vector<32x64xf32>
    %c0_502 = arith.constant 0 : index
    %c0_503 = arith.constant 0 : index
    %1449 = vector.load %arg36[%c0_502, %c0_503] : memref<1x64xf32, #tpu.memory_space<vmem>>, vector<1x64xf32>
    %c0_504 = arith.constant 0 : index
    %c0_505 = arith.constant 0 : index
    %1450 = vector.load %arg41[%c0_504, %c0_505] : memref<64x1xf32, #tpu.memory_space<vmem>>, vector<64x1xf32>
    %c0_506 = arith.constant 0 : index
    %c0_507 = arith.constant 0 : index
    %1451 = vector.load %arg37[%c0_506, %c0_507] : memref<1x1xf32, #tpu.memory_space<vmem>>, vector<1x1xf32>
    %cst_508 = arith.constant dense<0.000000e+00> : vector<32x64xf32>
    %1452 = tpu.matmul %1400, %1448, %cst_508 {dimension_numbers = #tpu.dot_dimension_numbers<[1], [0], [0], [1], [0, 0, 1, 1], [], []>} : vector<32x32xf32>, vector<32x64xf32>, vector<32x64xf32> -> vector<32x64xf32>
    %1453 = vector.broadcast %1449 : vector<1x64xf32> to vector<32x64xf32>
    %1454 = arith.addf %1452, %1453 : vector<32x64xf32>
    %cst_509 = arith.constant 0.000000e+00 : f32
    %1455 = vector.broadcast %cst_509 : f32 to vector<32x64xf32>
    %1456 = arith.maximumf %1454, %1455 : vector<32x64xf32>
    %cst_510 = arith.constant dense<0.000000e+00> : vector<32x1xf32>
    %1457 = tpu.matmul %1456, %1450, %cst_510 {dimension_numbers = #tpu.dot_dimension_numbers<[1], [0], [0], [1], [0, 0, 1, 1], [], []>} : vector<32x64xf32>, vector<64x1xf32>, vector<32x1xf32> -> vector<32x1xf32>
    %1458 = vector.broadcast %1451 : vector<1x1xf32> to vector<32x1xf32>
    %1459 = arith.addf %1457, %1458 : vector<32x1xf32>
    %1460 = vector.extract_strided_slice %1459 {offsets = [0, 0], sizes = [16, 1], strides = [1, 1]} : vector<32x1xf32> to vector<16x1xf32>
    %cst_511 = arith.constant dense<0xFF800000> : vector<1xf32>
    %1461 = vector.multi_reduction <maximumf>, %1460, %cst_511 [0] : vector<16x1xf32> to vector<1xf32>
    %1462 = vector.shape_cast %1461 : vector<1xf32> to vector<1x1xf32>
    %1463 = vector.broadcast %1462 : vector<1x1xf32> to vector<16x1xf32>
    %1464 = arith.subf %1460, %1463 : vector<16x1xf32>
    %1465 = math.exp %1464 : vector<16x1xf32>
    %cst_512 = arith.constant dense<0.000000e+00> : vector<1xf32>
    %1466 = vector.multi_reduction <add>, %1465, %cst_512 [0] : vector<16x1xf32> to vector<1xf32>
    %1467 = vector.shape_cast %1466 : vector<1xf32> to vector<1x1xf32>
    %1468 = tpu.reciprocal %1467 {approx = true} : vector<1x1xf32> -> vector<1x1xf32>
    %1469 = vector.broadcast %1468 : vector<1x1xf32> to vector<16x1xf32>
    %1470 = arith.mulf %1465, %1469 : vector<16x1xf32>
    %1471 = vector.extract_strided_slice %1400 {offsets = [0, 0], sizes = [16, 32], strides = [1, 1]} : vector<32x32xf32> to vector<16x32xf32>
    %1472 = vector.broadcast %1470 : vector<16x1xf32> to vector<16x32xf32>
    %1473 = arith.mulf %1471, %1472 : vector<16x32xf32>
    %cst_513 = arith.constant dense<0.000000e+00> : vector<32xf32>
    %1474 = vector.multi_reduction <add>, %1473, %cst_513 [0] : vector<16x32xf32> to vector<32xf32>
    %1475 = vector.shape_cast %1474 : vector<32xf32> to vector<1x32xf32>
    %1476 = vector.extract_strided_slice %1459 {offsets = [16, 0], sizes = [16, 1], strides = [1, 1]} : vector<32x1xf32> to vector<16x1xf32>
    %cst_514 = arith.constant dense<0xFF800000> : vector<1xf32>
    %1477 = vector.multi_reduction <maximumf>, %1476, %cst_514 [0] : vector<16x1xf32> to vector<1xf32>
    %1478 = vector.shape_cast %1477 : vector<1xf32> to vector<1x1xf32>
    %1479 = vector.broadcast %1478 : vector<1x1xf32> to vector<16x1xf32>
    %1480 = arith.subf %1476, %1479 : vector<16x1xf32>
    %1481 = math.exp %1480 : vector<16x1xf32>
    %cst_515 = arith.constant dense<0.000000e+00> : vector<1xf32>
    %1482 = vector.multi_reduction <add>, %1481, %cst_515 [0] : vector<16x1xf32> to vector<1xf32>
    %1483 = vector.shape_cast %1482 : vector<1xf32> to vector<1x1xf32>
    %1484 = tpu.reciprocal %1483 {approx = true} : vector<1x1xf32> -> vector<1x1xf32>
    %1485 = vector.broadcast %1484 : vector<1x1xf32> to vector<16x1xf32>
    %1486 = arith.mulf %1481, %1485 : vector<16x1xf32>
    %1487 = vector.extract_strided_slice %1400 {offsets = [16, 0], sizes = [16, 32], strides = [1, 1]} : vector<32x32xf32> to vector<16x32xf32>
    %1488 = vector.broadcast %1486 : vector<16x1xf32> to vector<16x32xf32>
    %1489 = arith.mulf %1487, %1488 : vector<16x32xf32>
    %cst_516 = arith.constant dense<0.000000e+00> : vector<32xf32>
    %1490 = vector.multi_reduction <add>, %1489, %cst_516 [0] : vector<16x32xf32> to vector<32xf32>
    %1491 = vector.shape_cast %1490 : vector<32xf32> to vector<1x32xf32>
    %1492 = tpu.concatenate %1475, %1491 in 0 : vector<1x32xf32>, vector<1x32xf32> -> vector<2x32xf32>
    %c0_517 = arith.constant 0 : index
    %c0_518 = arith.constant 0 : index
    %1493 = vector.load %arg33[%c0_517, %c0_518] : memref<32x32xf32, #tpu.memory_space<vmem>>, vector<32x32xf32>
    %c0_519 = arith.constant 0 : index
    %c0_520 = arith.constant 0 : index
    %1494 = vector.load %arg32[%c0_519, %c0_520] : memref<1x32xf32, #tpu.memory_space<vmem>>, vector<1x32xf32>
    %cst_521 = arith.constant dense<0.000000e+00> : vector<2x32xf32>
    %1495 = tpu.matmul %1447, %1493, %cst_521 {dimension_numbers = #tpu.dot_dimension_numbers<[1], [0], [0], [1], [0, 0, 1, 1], [], []>} : vector<2x32xf32>, vector<32x32xf32>, vector<2x32xf32> -> vector<2x32xf32>
    %1496 = vector.broadcast %1494 : vector<1x32xf32> to vector<2x32xf32>
    %1497 = arith.addf %1495, %1496 : vector<2x32xf32>
    %c0_522 = arith.constant 0 : index
    %c0_523 = arith.constant 0 : index
    %1498 = vector.load %arg39[%c0_522, %c0_523] : memref<32x32xf32, #tpu.memory_space<vmem>>, vector<32x32xf32>
    %c0_524 = arith.constant 0 : index
    %c0_525 = arith.constant 0 : index
    %1499 = vector.load %arg38[%c0_524, %c0_525] : memref<1x32xf32, #tpu.memory_space<vmem>>, vector<1x32xf32>
    %cst_526 = arith.constant dense<0.000000e+00> : vector<2x32xf32>
    %1500 = tpu.matmul %1492, %1498, %cst_526 {dimension_numbers = #tpu.dot_dimension_numbers<[1], [0], [0], [1], [0, 0, 1, 1], [], []>} : vector<2x32xf32>, vector<32x32xf32>, vector<2x32xf32> -> vector<2x32xf32>
    %1501 = vector.broadcast %1499 : vector<1x32xf32> to vector<2x32xf32>
    %1502 = arith.addf %1500, %1501 : vector<2x32xf32>
    %1503 = arith.addf %1497, %1502 : vector<2x32xf32>
    %c0_527 = arith.constant 0 : index
    %c0_528 = arith.constant 0 : index
    %1504 = vector.load %arg29[%c0_527, %c0_528] : memref<2x32xf32, #tpu.memory_space<vmem>>, vector<2x32xf32>
    %cst_529 = arith.constant dense<0.000000e+00> : vector<2xf32>
    %1505 = vector.multi_reduction <add>, %1503, %cst_529 [1] : vector<2x32xf32> to vector<2xf32>
    %1506 = vector.shape_cast %1505 : vector<2xf32> to vector<2x1xf32>
    %cst_530 = arith.constant 3.200000e+01 : f32
    %1507 = vector.broadcast %cst_530 : f32 to vector<2x1xf32>
    %1508 = arith.divf %1506, %1507 : vector<2x1xf32>
    %1509 = vector.broadcast %1508 : vector<2x1xf32> to vector<2x32xf32>
    %1510 = arith.subf %1503, %1509 : vector<2x32xf32>
    %1511 = arith.mulf %1510, %1510 : vector<2x32xf32>
    %cst_531 = arith.constant dense<0.000000e+00> : vector<2xf32>
    %1512 = vector.multi_reduction <add>, %1511, %cst_531 [1] : vector<2x32xf32> to vector<2xf32>
    %1513 = vector.shape_cast %1512 : vector<2xf32> to vector<2x1xf32>
    %cst_532 = arith.constant 3.200000e+01 : f32
    %1514 = vector.broadcast %cst_532 : f32 to vector<2x1xf32>
    %1515 = arith.divf %1513, %1514 : vector<2x1xf32>
    %1516 = vector.broadcast %1508 : vector<2x1xf32> to vector<2x32xf32>
    %1517 = arith.subf %1503, %1516 : vector<2x32xf32>
    %cst_533 = arith.constant 9.99999974E-6 : f32
    %1518 = vector.broadcast %cst_533 : f32 to vector<2x1xf32>
    %1519 = arith.addf %1515, %1518 : vector<2x1xf32>
    %1520 = math.rsqrt %1519 : vector<2x1xf32>
    %1521 = vector.broadcast %1520 : vector<2x1xf32> to vector<2x32xf32>
    %1522 = arith.mulf %1517, %1521 : vector<2x32xf32>
    %1523 = vector.extract_strided_slice %1504 {offsets = [0, 0], sizes = [1, 32], strides = [1, 1]} : vector<2x32xf32> to vector<1x32xf32>
    %1524 = vector.broadcast %1523 : vector<1x32xf32> to vector<2x32xf32>
    %1525 = arith.mulf %1522, %1524 : vector<2x32xf32>
    %1526 = vector.extract_strided_slice %1504 {offsets = [1, 0], sizes = [1, 32], strides = [1, 1]} : vector<2x32xf32> to vector<1x32xf32>
    %1527 = vector.broadcast %1526 : vector<1x32xf32> to vector<2x32xf32>
    %1528 = arith.addf %1525, %1527 : vector<2x32xf32>
    %c0_534 = arith.constant 0 : index
    %c0_535 = arith.constant 0 : index
    %1529 = vector.load %arg43[%c0_534, %c0_535] : memref<32x10xf32, #tpu.memory_space<vmem>>, vector<32x10xf32>
    %c0_536 = arith.constant 0 : index
    %c0_537 = arith.constant 0 : index
    %1530 = vector.load %arg42[%c0_536, %c0_537] : memref<1x10xf32, #tpu.memory_space<vmem>>, vector<1x10xf32>
    %cst_538 = arith.constant dense<0.000000e+00> : vector<2x10xf32>
    %1531 = tpu.matmul %1528, %1529, %cst_538 {dimension_numbers = #tpu.dot_dimension_numbers<[1], [0], [0], [1], [0, 0, 1, 1], [], []>} : vector<2x32xf32>, vector<32x10xf32>, vector<2x10xf32> -> vector<2x10xf32>
    %1532 = vector.broadcast %1530 : vector<1x10xf32> to vector<2x10xf32>
    %1533 = arith.addf %1531, %1532 : vector<2x10xf32>
    %c0_539 = arith.constant 0 : index
    %c0_540 = arith.constant 0 : index
    %1534 = vector.load %arg46[%c0_539, %c0_540] : memref<2x10xf32, #tpu.memory_space<vmem>>, vector<2x10xf32>
    tpu.vector_store %arg46[%c0_539, %c0_540], %1533 {strides = array<i32>} : memref<2x10xf32, #tpu.memory_space<vmem>>, vector<2x10xf32>,
    return
  }
}

</mosaic_0001>

<llo_original>
// kernel: mcan_forward.1
$region0: #{mcan_forward.1}
  #allocation0 [shape = 'u32[]', space=smem, size = 0x4, offset = 0x4, fixed_abs, tag = 'smem constant byte address 0x4 - core index']
  #allocation1 [shape = 'u32[72,128]{1,0:T(1,128)}', space=vmem, size = 0x9000, scoped, tag = 'internal scratch']
  #allocation2 [shape = 'f32[1,1]{1,0:T(1,128)S(1)}', space=vmem, size = 0x200, scoped, tag = 'scoped memory for mcan_forward.1']
  #allocation3 [shape = 'f32[1,1]{1,0:T(1,128)S(1)}', space=vmem, size = 0x200, scoped, tag = 'scoped memory for mcan_forward.1']
  %s0 = inlined_call_operand.smem [shape: u32[47], index: -1, kind: input, shape index: {}]
  %s1 = sld [smem:[%s0]]
  %s2 = scalar_lea.smem %s0, 1
  %s3 = sld [smem:[%s2]]
  %s4 = scalar_lea.smem %s0, 2
  %s5 = sld [smem:[%s4]]
  %s6 = scalar_lea.smem %s0, 3
  %s7 = sld [smem:[%s6]]
  %s8 = scalar_lea.smem %s0, 4
  %s9 = sld [smem:[%s8]]
  %s10 = scalar_lea.smem %s0, 5
  %s11 = sld [smem:[%s10]]
  %s12 = scalar_lea.smem %s0, 6
  %s13 = sld [smem:[%s12]]
  %s14 = scalar_lea.smem %s0, 7
  %s15 = sld [smem:[%s14]]
  %s16 = scalar_lea.smem %s0, 8
  %s17 = sld [smem:[%s16]]
  %s18 = scalar_lea.smem %s0, 9
  %s19 = sld [smem:[%s18]]
  %s20 = scalar_lea.smem %s0, 10
  %s21 = sld [smem:[%s20]]
  %s22 = scalar_lea.smem %s0, 11
  %s23 = sld [smem:[%s22]]
  %s24 = scalar_lea.smem %s0, 12
  %s25 = sld [smem:[%s24]]
  %s26 = scalar_lea.smem %s0, 13
  %s27 = sld [smem:[%s26]]
  %s28 = scalar_lea.smem %s0, 14
  %s29 = sld [smem:[%s28]]
  %s30 = scalar_lea.smem %s0, 15
  %s31 = sld [smem:[%s30]]
  %s32 = scalar_lea.smem %s0, 16
  %s33 = sld [smem:[%s32]]
  %s34 = scalar_lea.smem %s0, 17
  %s35 = sld [smem:[%s34]]
  %s36 = scalar_lea.smem %s0, 18
  %s37 = sld [smem:[%s36]]
  %s38 = scalar_lea.smem %s0, 19
  %s39 = sld [smem:[%s38]]
  %s40 = scalar_lea.smem %s0, 20
  %s41 = sld [smem:[%s40]]
  %s42 = scalar_lea.smem %s0, 21
  %s43 = sld [smem:[%s42]]
  %s44 = scalar_lea.smem %s0, 22
  %s45 = sld [smem:[%s44]]
  %s46 = scalar_lea.smem %s0, 23
  %s47 = sld [smem:[%s46]]
  %s48 = scalar_lea.smem %s0, 24
  %s49 = sld [smem:[%s48]]
  %s50 = scalar_lea.smem %s0, 25
  %s51 = sld [smem:[%s50]]
  %s52 = scalar_lea.smem %s0, 26
  %s53 = sld [smem:[%s52]]
  %s54 = scalar_lea.smem %s0, 27
  %s55 = sld [smem:[%s54]]
  %s56 = scalar_lea.smem %s0, 28
  %s57 = sld [smem:[%s56]]
  %s58 = scalar_lea.smem %s0, 29
  %s59 = sld [smem:[%s58]]
  %s60 = scalar_lea.smem %s0, 30
  %s61 = sld [smem:[%s60]]
  %s62 = scalar_lea.smem %s0, 31
  %s63 = sld [smem:[%s62]]
  %s64 = scalar_lea.smem %s0, 32
  %s65 = sld [smem:[%s64]]
  %s66 = scalar_lea.smem %s0, 33
  %s67 = sld [smem:[%s66]]
  %s68 = scalar_lea.smem %s0, 34
  %s69 = sld [smem:[%s68]]
  %s70 = scalar_lea.smem %s0, 35
  %s71 = sld [smem:[%s70]]
  %s72 = scalar_lea.smem %s0, 36
  %s73 = sld [smem:[%s72]]
  %s74 = scalar_lea.smem %s0, 37
  %s75 = sld [smem:[%s74]]
  %s76 = scalar_lea.smem %s0, 38
  %s77 = sld [smem:[%s76]]
  %s78 = scalar_lea.smem %s0, 39
  %s79 = sld [smem:[%s78]]
  %s80 = scalar_lea.smem %s0, 40
  %s81 = sld [smem:[%s80]]
  %s82 = scalar_lea.smem %s0, 41
  %s83 = sld [smem:[%s82]]
  %s84 = scalar_lea.smem %s0, 42
  %s85 = sld [smem:[%s84]]
  %s86 = scalar_lea.smem %s0, 43
  %s87 = sld [smem:[%s86]]
  %s88 = scalar_lea.smem %s0, 44
  %s89 = sld [smem:[%s88]]
  %s90 = scalar_lea.smem %s0, 45
  %s91 = sld [smem:[%s90]]
  %s92 = scalar_lea.smem %s0, 46
  %s93 = sld [smem:[%s92]]
  %s94 = sld [smem:[#allocation0]]
  $region206: #{mcan_forward.1} parent=0
    _
  %s96 = ssub.s32 1, %s94
  %s97 = scalar_select 0, %s96, %s94
  %v98 = vstv %s63
  %99 = vst [vmem:[#allocation2] sm:$0x1] %v98
  %v100 = vstv %s75
  %101 = vst [vmem:[#allocation3] sm:$0x1] %v100
  $region1: #{mcan_forward.1} parent=0
    #allocation4 [shape = 'u8[16384]{0}', space=vmem, size = 0x4000, scoped, tag = 'input window, operand 40, single buffered']
    #allocation5 [shape = 's32[1]{0}', space=sflag, size = 0x4, scoped, tag = 'scoped memory for mcan_forward.1']
    #allocation6 [shape = 's32[1]{0}', space=sflag, size = 0x4, scoped, tag = 'scoped memory for mcan_forward.1']
    #allocation7 [shape = 'u8[512]{0}', space=vmem, size = 0x400, scoped, tag = 'input window, operand 42, single buffered']
    #allocation8 [shape = 's32[1]{0}', space=sflag, size = 0x4, scoped, tag = 'scoped memory for mcan_forward.1']
    #allocation9 [shape = 'u8[512]{0}', space=vmem, size = 0x400, scoped, tag = 'input window, operand 44, single buffered']
    #allocation10 [shape = 'u8[1024]{0}', space=vmem, size = 0x400, scoped, tag = 'output window, operand 0, single buffered']
    %102 = vsyncpa [#allocation5], 0
    %103 = vsyncpa [#allocation8], 0
    %104 = vsyncpa [#allocation6], 0
    // Predicated region
    $region2: #{mcan_forward.1} parent=1 // pred_check
      _
    $region3: #{mcan_forward.1} parent=1 // pred_check_branch
      %106 = sbr.rel (0) target = $region5
    $region4: #{mcan_forward.1} parent=1 // pred_region
      _
    $region5: #{mcan_forward.1} parent=1 // pred_fallthru
      _
    // Predicated region
    $region6: #{mcan_forward.1} parent=1 // pred_check
      _
    $region7: #{mcan_forward.1} parent=1 // pred_check_branch
      %108 = sbr.rel (0) target = $region9
    $region8: #{mcan_forward.1} parent=1 // pred_region
      _
    $region9: #{mcan_forward.1} parent=1 // pred_fallthru
      _
    // Predicated region
    $region10: #{mcan_forward.1} parent=1 // pred_check
      _
    $region11: #{mcan_forward.1} parent=1 // pred_check_branch
      %110 = sbr.rel (0) target = $region13
    $region12: #{mcan_forward.1} parent=1 // pred_region
      _
    $region13: #{mcan_forward.1} parent=1 // pred_fallthru
      _
    // Predicated region
    $region14: #{mcan_forward.1} parent=1 // pred_check
      _
    $region15: #{mcan_forward.1} parent=1 // pred_check_branch
      %112 = sbr.rel (0) target = $region17
    $region16: #{mcan_forward.1} parent=1 // pred_region
      _
    $region17: #{mcan_forward.1} parent=1 // pred_fallthru
      _
    // Predicated region
    $region18: #{mcan_forward.1} parent=1 // pred_check
      _
    $region19: #{mcan_forward.1} parent=1 // pred_check_branch
      %114 = sbr.rel (0) target = $region21
    $region20: #{mcan_forward.1} parent=1 // pred_region
      _
    $region21: #{mcan_forward.1} parent=1 // pred_fallthru
      _
    // Predicated region
    $region22: #{mcan_forward.1} parent=1 // pred_check
      _
    $region23: #{mcan_forward.1} parent=1 // pred_check_branch
      %116 = sbr.rel (0) target = $region25
    $region24: #{mcan_forward.1} parent=1 // pred_region
      _
    $region25: #{mcan_forward.1} parent=1 // pred_fallthru
      _
    // Predicated region
    $region26: #{mcan_forward.1} parent=1 // pred_check
      _
    $region27: #{mcan_forward.1} parent=1 // pred_check_branch
      %118 = sbr.rel (0) target = $region29
    $region28: #{mcan_forward.1} parent=1 // pred_region
      _
    $region29: #{mcan_forward.1} parent=1 // pred_fallthru
      _
    // Predicated region
    $region30: #{mcan_forward.1} parent=1 // pred_check
      _
    $region31: #{mcan_forward.1} parent=1 // pred_check_branch
      %120 = sbr.rel (0) target = $region33
    $region32: #{mcan_forward.1} parent=1 // pred_region
      _
    $region33: #{mcan_forward.1} parent=1 // pred_fallthru
      _
    // Predicated region
    $region34: #{mcan_forward.1} parent=1 // pred_check
      _
    $region35: #{mcan_forward.1} parent=1 // pred_check_branch
      %122 = sbr.rel (0) target = $region37
    $region36: #{mcan_forward.1} parent=1 // pred_region
      _
    $region37: #{mcan_forward.1} parent=1 // pred_fallthru
      _
    // Predicated region
    $region38: #{mcan_forward.1} parent=1 // pred_check
      _
    $region39: #{mcan_forward.1} parent=1 // pred_check_branch
      %124 = sbr.rel (0) target = $region41
    $region40: #{mcan_forward.1} parent=1 // pred_region
      _
    $region41: #{mcan_forward.1} parent=1 // pred_fallthru
      _
    // Predicated region
    $region42: #{mcan_forward.1} parent=1 // pred_check
      _
    $region43: #{mcan_forward.1} parent=1 // pred_check_branch
      %126 = sbr.rel (0) target = $region45
    $region44: #{mcan_forward.1} parent=1 // pred_region
      _
    $region45: #{mcan_forward.1} parent=1 // pred_fallthru
      _
    // Predicated region
    $region46: #{mcan_forward.1} parent=1 // pred_check
      _
    $region47: #{mcan_forward.1} parent=1 // pred_check_branch
      %128 = sbr.rel (0) target = $region49
    $region48: #{mcan_forward.1} parent=1 // pred_region
      _
    $region49: #{mcan_forward.1} parent=1 // pred_fallthru
      _
    // Predicated region
    $region50: #{mcan_forward.1} parent=1 // pred_check
      _
    $region51: #{mcan_forward.1} parent=1 // pred_check_branch
      %130 = sbr.rel (0) target = $region53
    $region52: #{mcan_forward.1} parent=1 // pred_region
      _
    $region53: #{mcan_forward.1} parent=1 // pred_fallthru
      _
    // Predicated region
    $region54: #{mcan_forward.1} parent=1 // pred_check
      _
    $region55: #{mcan_forward.1} parent=1 // pred_check_branch
      %132 = sbr.rel (0) target = $region57
    $region56: #{mcan_forward.1} parent=1 // pred_region
      _
    $region57: #{mcan_forward.1} parent=1 // pred_fallthru
      _
    // Predicated region
    $region58: #{mcan_forward.1} parent=1 // pred_check
      _
    $region59: #{mcan_forward.1} parent=1 // pred_check_branch
      %134 = sbr.rel (0) target = $region61
    $region60: #{mcan_forward.1} parent=1 // pred_region
      _
    $region61: #{mcan_forward.1} parent=1 // pred_fallthru
      _
    // Predicated region
    $region62: #{mcan_forward.1} parent=1 // pred_check
      _
    $region63: #{mcan_forward.1} parent=1 // pred_check_branch
      %136 = sbr.rel (0) target = $region65
    $region64: #{mcan_forward.1} parent=1 // pred_region
      _
    $region65: #{mcan_forward.1} parent=1 // pred_fallthru
      _
    // Predicated region
    $region66: #{mcan_forward.1} parent=1 // pred_check
      _
    $region67: #{mcan_forward.1} parent=1 // pred_check_branch
      %138 = sbr.rel (0) target = $region69
    $region68: #{mcan_forward.1} parent=1 // pred_region
      _
    $region69: #{mcan_forward.1} parent=1 // pred_fallthru
      _
    // Predicated region
    $region70: #{mcan_forward.1} parent=1 // pred_check
      _
    $region71: #{mcan_forward.1} parent=1 // pred_check_branch
      %140 = sbr.rel (0) target = $region73
    $region72: #{mcan_forward.1} parent=1 // pred_region
      _
    $region73: #{mcan_forward.1} parent=1 // pred_fallthru
      _
    // Predicated region
    $region74: #{mcan_forward.1} parent=1 // pred_check
      _
    $region75: #{mcan_forward.1} parent=1 // pred_check_branch
      %142 = sbr.rel (0) target = $region77
    $region76: #{mcan_forward.1} parent=1 // pred_region
      _
    $region77: #{mcan_forward.1} parent=1 // pred_fallthru
      _
    // Predicated region
    $region78: #{mcan_forward.1} parent=1 // pred_check
      _
    $region79: #{mcan_forward.1} parent=1 // pred_check_branch
      %144 = sbr.rel (0) target = $region81
    $region80: #{mcan_forward.1} parent=1 // pred_region
      _
    $region81: #{mcan_forward.1} parent=1 // pred_fallthru
      _
    // Predicated region
    $region82: #{mcan_forward.1} parent=1 // pred_check
      _
    $region83: #{mcan_forward.1} parent=1 // pred_check_branch
      %146 = sbr.rel (0) target = $region85
    $region84: #{mcan_forward.1} parent=1 // pred_region
      _
    $region85: #{mcan_forward.1} parent=1 // pred_fallthru
      _
    // Predicated region
    $region86: #{mcan_forward.1} parent=1 // pred_check
      _
    $region87: #{mcan_forward.1} parent=1 // pred_check_branch
      %148 = sbr.rel (0) target = $region89
    $region88: #{mcan_forward.1} parent=1 // pred_region
      _
    $region89: #{mcan_forward.1} parent=1 // pred_fallthru
      _
    // Predicated region
    $region90: #{mcan_forward.1} parent=1 // pred_check
      _
    $region91: #{mcan_forward.1} parent=1 // pred_check_branch
      %150 = sbr.rel (0) target = $region93
    $region92: #{mcan_forward.1} parent=1 // pred_region
      _
    $region93: #{mcan_forward.1} parent=1 // pred_fallthru
      _
    // Predicated region
    $region94: #{mcan_forward.1} parent=1 // pred_check
      _
    $region95: #{mcan_forward.1} parent=1 // pred_check_branch
      %152 = sbr.rel (0) target = $region97
    $region96: #{mcan_forward.1} parent=1 // pred_region
      _
    $region97: #{mcan_forward.1} parent=1 // pred_fallthru
      _
    // Predicated region
    $region98: #{mcan_forward.1} parent=1 // pred_check
      _
    $region99: #{mcan_forward.1} parent=1 // pred_check_branch
      %154 = sbr.rel (0) target = $region101
    $region100: #{mcan_forward.1} parent=1 // pred_region
      _
    $region101: #{mcan_forward.1} parent=1 // pred_fallthru
      _
    // Predicated region
    $region102: #{mcan_forward.1} parent=1 // pred_check
      _
    $region103: #{mcan_forward.1} parent=1 // pred_check_branch
      %156 = sbr.rel (0) target = $region105
    $region104: #{mcan_forward.1} parent=1 // pred_region
      _
    $region105: #{mcan_forward.1} parent=1 // pred_fallthru
      _
    // Predicated region
    $region106: #{mcan_forward.1} parent=1 // pred_check
      _
    $region107: #{mcan_forward.1} parent=1 // pred_check_branch
      %158 = sbr.rel (0) target = $region109
    $region108: #{mcan_forward.1} parent=1 // pred_region
      _
    $region109: #{mcan_forward.1} parent=1 // pred_fallthru
      _
    // Predicated region
    $region110: #{mcan_forward.1} parent=1 // pred_check
      _
    $region111: #{mcan_forward.1} parent=1 // pred_check_branch
      %160 = sbr.rel (0) target = $region113
    $region112: #{mcan_forward.1} parent=1 // pred_region
      _
    $region113: #{mcan_forward.1} parent=1 // pred_fallthru
      _
    // Predicated region
    $region114: #{mcan_forward.1} parent=1 // pred_check
      _
    $region115: #{mcan_forward.1} parent=1 // pred_check_branch
      %162 = sbr.rel (0) target = $region117
    $region116: #{mcan_forward.1} parent=1 // pred_region
      _
    $region117: #{mcan_forward.1} parent=1 // pred_fallthru
      _
    // Predicated region
    $region118: #{mcan_forward.1} parent=1 // pred_check
      _
    $region119: #{mcan_forward.1} parent=1 // pred_check_branch
      %164 = sbr.rel (0) target = $region121
    $region120: #{mcan_forward.1} parent=1 // pred_region
      _
    $region121: #{mcan_forward.1} parent=1 // pred_fallthru
      _
    // Predicated region
    $region122: #{mcan_forward.1} parent=1 // pred_check
      _
    $region123: #{mcan_forward.1} parent=1 // pred_check_branch
      %166 = sbr.rel (0) target = $region125
    $region124: #{mcan_forward.1} parent=1 // pred_region
      _
    $region125: #{mcan_forward.1} parent=1 // pred_fallthru
      _
    // Predicated region
    $region126: #{mcan_forward.1} parent=1 // pred_check
      _
    $region127: #{mcan_forward.1} parent=1 // pred_check_branch
      %168 = sbr.rel (0) target = $region129
    $region128: #{mcan_forward.1} parent=1 // pred_region
      _
    $region129: #{mcan_forward.1} parent=1 // pred_fallthru
      _
    // Predicated region
    $region130: #{mcan_forward.1} parent=1 // pred_check
      _
    $region131: #{mcan_forward.1} parent=1 // pred_check_branch
      %170 = sbr.rel (0) target = $region133
    $region132: #{mcan_forward.1} parent=1 // pred_region
      _
    $region133: #{mcan_forward.1} parent=1 // pred_fallthru
      _
    // Predicated region
    $region134: #{mcan_forward.1} parent=1 // pred_check
      _
    $region135: #{mcan_forward.1} parent=1 // pred_check_branch
      %172 = sbr.rel (0) target = $region137
    $region136: #{mcan_forward.1} parent=1 // pred_region
      _
    $region137: #{mcan_forward.1} parent=1 // pred_fallthru
      _
    // Predicated region
    $region138: #{mcan_forward.1} parent=1 // pred_check
      _
    $region139: #{mcan_forward.1} parent=1 // pred_check_branch
      %174 = sbr.rel (0) target = $region141
    $region140: #{mcan_forward.1} parent=1 // pred_region
      _
    $region141: #{mcan_forward.1} parent=1 // pred_fallthru
      _
    // Predicated region
    $region142: #{mcan_forward.1} parent=1 // pred_check
      _
    $region143: #{mcan_forward.1} parent=1 // pred_check_branch
      %176 = sbr.rel (0) target = $region145
    $region144: #{mcan_forward.1} parent=1 // pred_region
      _
    $region145: #{mcan_forward.1} parent=1 // pred_fallthru
      _
    // Predicated region
    $region146: #{mcan_forward.1} parent=1 // pred_check
      _
    $region147: #{mcan_forward.1} parent=1 // pred_check_branch
      %178 = sbr.rel (0) target = $region149
    $region148: #{mcan_forward.1} parent=1 // pred_region
      _
    $region149: #{mcan_forward.1} parent=1 // pred_fallthru
      _
    // Predicated region
    $region150: #{mcan_forward.1} parent=1 // pred_check
      _
    $region151: #{mcan_forward.1} parent=1 // pred_check_branch
      %180 = sbr.rel (0) target = $region153
    $region152: #{mcan_forward.1} parent=1 // pred_region
      _
    $region153: #{mcan_forward.1} parent=1 // pred_fallthru
      _
    // Predicated region
    $region154: #{mcan_forward.1} parent=1 // pred_check
      _
    $region155: #{mcan_forward.1} parent=1 // pred_check_branch
      %182 = sbr.rel (0) target = $region157
    $region156: #{mcan_forward.1} parent=1 // pred_region
      _
    $region157: #{mcan_forward.1} parent=1 // pred_fallthru
      _
    // Predicated region
    $region158: #{mcan_forward.1} parent=1 // pred_check
      _
    $region159: #{mcan_forward.1} parent=1 // pred_check_branch
      %184 = sbr.rel (0) target = $region161
    $region160: #{mcan_forward.1} parent=1 // pred_region
      _
    $region161: #{mcan_forward.1} parent=1 // pred_fallthru
      _
    // Predicated region
    $region162: #{mcan_forward.1} parent=1 // pred_check
      _
    $region163: #{mcan_forward.1} parent=1 // pred_check_branch
      %186 = sbr.rel (0) target = $region165
    $region164: #{mcan_forward.1} parent=1 // pred_region
      %188 = vsyncadd [#allocation5], 0
      %s189 = sshll.u32 %s81, 4
      %s190 = int_to_ptr.hbm [resolvable:$true] %s189
      %s191 = sshll.u32 [#allocation4], 4
      %s192 = int_to_ptr.vmem [resolvable:$true] %s191
      %197 = dma.hbm_to_vmem [thread:$0]  %s190, 512, %s192, [#allocation5], 128, 128, 8
    $region165: #{mcan_forward.1} parent=1 // pred_fallthru
      _
    // Predicated region
    $region166: #{mcan_forward.1} parent=1 // pred_check
      _
    $region167: #{mcan_forward.1} parent=1 // pred_check_branch
      %199 = sbr.rel (0) target = $region169
    $region168: #{mcan_forward.1} parent=1 // pred_region
      _
    $region169: #{mcan_forward.1} parent=1 // pred_fallthru
      _
    // Predicated region
    $region170: #{mcan_forward.1} parent=1 // pred_check
      _
    $region171: #{mcan_forward.1} parent=1 // pred_check_branch
      %201 = sbr.rel (0) target = $region173
    $region172: #{mcan_forward.1} parent=1 // pred_region
      %203 = vsyncadd [#allocation8], 0
      %s205 = sshll.u32 %s85, 4
      %s206 = int_to_ptr.hbm [resolvable:$true] %s205
      %s207 = sshll.u32 [#allocation7], 4
      %s208 = int_to_ptr.vmem [resolvable:$true] %s207
      %210 = dma.hbm_to_vmem [thread:$0]  %s206, 16, %s208, [#allocation8]
    $region173: #{mcan_forward.1} parent=1 // pred_fallthru
      _
    // Predicated region
    $region174: #{mcan_forward.1} parent=1 // pred_check
      _
    $region175: #{mcan_forward.1} parent=1 // pred_check_branch
      %212 = sbr.rel (0) target = $region177
    $region176: #{mcan_forward.1} parent=1 // pred_region
      _
    $region177: #{mcan_forward.1} parent=1 // pred_fallthru
      _
    // Predicated region
    $region178: #{mcan_forward.1} parent=1 // pred_check
      _
    $region179: #{mcan_forward.1} parent=1 // pred_check_branch
      %214 = sbr.rel (0) target = $region181
    $region180: #{mcan_forward.1} parent=1 // pred_region
      %216 = vsyncadd [#allocation8], 0
      %s218 = sshll.u32 %s89, 4
      %s219 = int_to_ptr.hbm [resolvable:$true] %s218
      %s220 = sshll.u32 [#allocation9], 4
      %s221 = int_to_ptr.vmem [resolvable:$true] %s220
      %223 = dma.hbm_to_vmem [thread:$0]  %s219, 16, %s221, [#allocation8]
    $region181: #{mcan_forward.1} parent=1 // pred_fallthru
      _
    // Predicated region
    $region182: #{mcan_forward.1} parent=1 // pred_check
      _
    $region183: #{mcan_forward.1} parent=1 // pred_check_branch
      %225 = sbr.rel (0) target = $region185
    $region184: #{mcan_forward.1} parent=1 // pred_region
      _
    $region185: #{mcan_forward.1} parent=1 // pred_fallthru
      _
    // Predicated region
    $region186: #{mcan_forward.1} parent=1 // pred_check
      _
    $region187: #{mcan_forward.1} parent=1 // pred_check_branch
      %227 = sbr.rel (0) target = $region189
    $region188: #{mcan_forward.1} parent=1 // pred_region
      %229 = dma.done [#allocation5], 512
    $region189: #{mcan_forward.1} parent=1 // pred_fallthru
      _
    // Predicated region
    $region190: #{mcan_forward.1} parent=1 // pred_check
      _
    $region191: #{mcan_forward.1} parent=1 // pred_check_branch
      %231 = sbr.rel (0) target = $region193
    $region192: #{mcan_forward.1} parent=1 // pred_region
      %233 = dma.done [#allocation8], 16
    $region193: #{mcan_forward.1} parent=1 // pred_fallthru
      _
    // Predicated region
    $region194: #{mcan_forward.1} parent=1 // pred_check
      _
    $region195: #{mcan_forward.1} parent=1 // pred_check_branch
      %235 = sbr.rel (0) target = $region197
    $region196: #{mcan_forward.1} parent=1 // pred_region
      %237 = dma.done [#allocation8], 16
    $region197: #{mcan_forward.1} parent=1 // pred_fallthru
      _
    %v238 = vld [vmem:[%s1] sm:$0x3]
    %vm239 = vcmp.eq.s32.totalorder %v238, 0
    %v240 = vsel %vm239, -1e+09, 0.0
    %v241 = vld [vmem:[%s3] sm:$0xff]
    %vm242 = vcmp.eq.s32.totalorder %v241, 0
    %v243 = vsel %vm242, -1e+09, 0.0
    %v244 = vlaneseq
    %v245 = vshrl.u32 %v244, 7
    %v246 = vlaneseq
    %v247 = vand.u32 %v246, 127
    %vm248 = vcmp.gt.s32.totalorder %v247, %v245
    %v249 = vsel %vm248, -1e+09, 0.0
    %v250 = vperm.slane %v240, 0
    %v251 = vmin.f32 %v249, %v250
    %v252 = vperm.slane %v240, 1
    %v253 = vmin.f32 %v249, %v252
    %v254 = vld [vmem:[%s5] sm:$0xff]
    %v255 = vld [vmem:[%s5 + $0x8] sm:$0xff]
    %v256 = vld [vmem:[%s7] sm:$0xff]
    %v257 = vld [vmem:[%s7 + $0x8] sm:$0xff]
    %v258 = vld [vmem:[%s7 + $0x10] sm:$0xff]
    %v259 = vld [vmem:[%s7 + $0x18] sm:$0xff]
    %v260 = vld [vmem:[%s91] sm:$0xff]
    %v261 = vld [vmem:[%s91 + $0x8] sm:$0xff]
    %v262 = vld [vmem:[%s91 + $0x10] sm:$0xff]
    %v263 = vld [vmem:[%s91 + $0x18] sm:$0xff]
    %v264 = vld [vmem:[%s91 + $0x20] sm:$0xff]
    %v265 = vld [vmem:[%s91 + $0x28] sm:$0xff]
    %v266 = vld [vmem:[#allocation9] sm:$0x1]
    %v268 = vperm.slane %v266, 0
    %vm270 = vcmask 392192
    %v272 = vsel %vm270, %v256, 0
    %v275 = vsel %vm270, %v257, 0
    %v278 = vsel %vm270, %v258, 0
    %v281 = vsel %vm270, %v259, 0
    %283 = vmatpush.msra.mxu0 0.0
    %284 = vmatpush.msra.mxu0 0.0
    %285 = vmatpush.msra.mxu0 0.0
    %286 = vmatpush.msra.mxu0 0.0
    %287 = vmatpush.msra.mxu0 0.0
    %288 = vmatpush.msra.mxu0 0.0
    %289 = vmatpush.msra.mxu0 0.0
    %290 = vmatpush.msra.mxu0 0.0
    %291 = vmatpush.msra.mxu0 0.0
    %292 = vmatpush.msra.mxu0 0.0
    %293 = vmatpush.msra.mxu0 %v265
    %294 = vmatpush.msra.mxu0 %v264
    %295 = vmatpush.msra.mxu0 %v263
    %296 = vmatpush.msra.mxu0 %v262
    %297 = vmatpush.msra.mxu0 %v261
    %298 = vmatpush.msra.mxu0 %v260
    %299 = vmatmul.f32.gmra.mxu0 %v272
    %v300 = vpop.f32.mrf.mxu0
    %v301 = vadd.f32 %v268, %v300
    %302 = vmatmul.f32.gmra.mxu0 %v275
    %v303 = vpop.f32.mrf.mxu0
    %v304 = vadd.f32 %v268, %v303
    %305 = vmatmul.f32.gmra.mxu0 %v278
    %v306 = vpop.f32.mrf.mxu0
    %v307 = vadd.f32 %v268, %v306
    %308 = vmatmul.f32.gmra.mxu0 %v281
    %v309 = vpop.f32.mrf.mxu0
    %v310 = vadd.f32 %v268, %v309
    %311 = vdwg.mxu0
    %v312 = vld [vmem:[%s57] sm:$0xff]
    %v313 = vld [vmem:[%s57 + $0x8] sm:$0xff]
    %v314 = vld [vmem:[%s57 + $0x10] sm:$0xff]
    %v315 = vld [vmem:[%s57 + $0x18] sm:$0xff]
    %v316 = vld [vmem:[%s53] sm:$0x1]
    %v317 = vld [vmem:[%s55] sm:$0xff]
    %v318 = vld [vmem:[%s55 + $0x8] sm:$0xff]
    %v319 = vld [vmem:[%s55 + $0x10] sm:$0xff]
    %v320 = vld [vmem:[%s55 + $0x18] sm:$0xff]
    %v321 = vld [vmem:[%s51] sm:$0x1]
    %v323 = vperm.slane %v316, 0
    %vm325 = vcmask 261120
    %v327 = vsel %vm325, %v254, 0
    %v330 = vsel %vm325, %v255, 0
    %332 = vmatpush.msra.mxu0 0.0
    %333 = vmatpush.msra.mxu0 0.0
    %334 = vmatpush.msra.mxu0 0.0
    %335 = vmatpush.msra.mxu0 0.0
    %336 = vmatpush.msra.mxu0 0.0
    %337 = vmatpush.msra.mxu0 0.0
    %338 = vmatpush.msra.mxu0 0.0
    %339 = vmatpush.msra.mxu0 0.0
    %340 = vmatpush.msra.mxu0 0.0
    %341 = vmatpush.msra.mxu0 0.0
    %342 = vmatpush.msra.mxu0 0.0
    %343 = vmatpush.msra.mxu0 0.0
    %344 = vmatpush.msra.mxu0 %v315
    %345 = vmatpush.msra.mxu0 %v314
    %346 = vmatpush.msra.mxu0 %v313
    %347 = vmatpush.msra.mxu0 %v312
    %348 = vmatmul.f32.gmra.mxu0 %v327
    %v349 = vpop.f32.mrf.mxu0
    %v350 = vadd.f32 %v323, %v349
    %351 = vmatmul.f32.gmra.mxu0 %v330
    %v352 = vpop.f32.mrf.mxu0
    %v353 = vadd.f32 %v323, %v352
    %354 = vdwg.mxu0
    %356 = vrot.lane.b32.xlu0 %v350, 96
    %v357 = vpop.permute.xlu0 %356
    %vm358 = vcmask 64512
    %v359 = vsel %vm358, %v350, 0
    %v361 = vsel %vm358, %v357, 0
    %363 = vmatpush.xpose.msra.mxu0 0.0
    %364 = vmatpush.xpose.msra.mxu0 0.0
    %365 = vmatpush.xpose.msra.mxu0 0.0
    %366 = vmatpush.xpose.msra.mxu0 0.0
    %367 = vmatpush.xpose.msra.mxu0 0.0
    %368 = vmatpush.xpose.msra.mxu0 0.0
    %369 = vmatpush.xpose.msra.mxu0 0.0
    %370 = vmatpush.xpose.msra.mxu0 0.0
    %371 = vmatpush.xpose.msra.mxu0 0.0
    %372 = vmatpush.xpose.msra.mxu0 0.0
    %373 = vmatpush.xpose.msra.mxu0 0.0
    %374 = vmatpush.xpose.msra.mxu0 0.0
    %375 = vmatpush.xpose.msra.mxu0 0.0
    %376 = vmatpush.xpose.msra.mxu0 0.0
    %377 = vmatpush.xpose.msra.mxu0 0.0
    %378 = vmatpush.xpose.msra.mxu0 %v361
    %379 = vmatmul.f32.gmra.mxu0 %v359
    %v380 = vpop.f32.mrf.mxu0
    %v381 = vadd.f32 0.0, %v380
    %382 = vdwg.mxu0
    %v383 = vmul.f32 %v381, 0.35355338
    %v384 = vadd.f32 %v383, %v251
    %v385 = vsel %vm358, %v384, -inf
    %386 = vmax.xlane.f32.xlu0 %v385
    %v387 = vpop.xlane.xlu0 %386
    %v388 = vsub.f32 %v384, %v387
    %v389 = vmul.f32 %v388, 1.442695
    %v390 = vpow.pop %v389
    %v391 = vsel %vm358, %v390, 0.0
    %392 = vadd.xlane.f32.xlu0 %v391
    %v393 = vpop.xlane.xlu0 %392
    %v394 = vrcp.pop %v393
    %v395 = vmul.f32 %v390, %v394
    %396 = vrot.lane.b32.xlu0 %v350, 64
    %v397 = vpop.permute.xlu0 %396
    %v400 = vsel %vm358, %v395, 0
    %402 = vmatpush.msra.mxu0 0.0
    %403 = vmatpush.msra.mxu0 0.0
    %404 = vmatpush.msra.mxu0 0.0
    %405 = vmatpush.msra.mxu0 0.0
    %406 = vmatpush.msra.mxu0 0.0
    %407 = vmatpush.msra.mxu0 0.0
    %408 = vmatpush.msra.mxu0 0.0
    %409 = vmatpush.msra.mxu0 0.0
    %410 = vmatpush.msra.mxu0 0.0
    %411 = vmatpush.msra.mxu0 0.0
    %412 = vmatpush.msra.mxu0 0.0
    %413 = vmatpush.msra.mxu0 0.0
    %414 = vmatpush.msra.mxu0 0.0
    %415 = vmatpush.msra.mxu0 0.0
    %416 = vmatpush.msra.mxu0 0.0
    %417 = vmatpush.msra.mxu0 %v397
    %418 = vmatmul.f32.gmra.mxu0 %v400
    %v419 = vpop.f32.mrf.mxu0
    %v420 = vadd.f32 0.0, %v419
    %421 = vdwg.mxu0
    %422 = vrot.lane.b32.xlu0 %v350, 120
    %v423 = vpop.permute.xlu0 %422
    %424 = vrot.lane.b32.xlu0 %v350, 88
    %v425 = vpop.permute.xlu0 %424
    %v426 = vsel %vm358, %v423, 0
    %v428 = vsel %vm358, %v425, 0
    %430 = vmatpush.xpose.msra.mxu0 0.0
    %431 = vmatpush.xpose.msra.mxu0 0.0
    %432 = vmatpush.xpose.msra.mxu0 0.0
    %433 = vmatpush.xpose.msra.mxu0 0.0
    %434 = vmatpush.xpose.msra.mxu0 0.0
    %435 = vmatpush.xpose.msra.mxu0 0.0
    %436 = vmatpush.xpose.msra.mxu0 0.0
    %437 = vmatpush.xpose.msra.mxu0 0.0
    %438 = vmatpush.xpose.msra.mxu0 0.0
    %439 = vmatpush.xpose.msra.mxu0 0.0
    %440 = vmatpush.xpose.msra.mxu0 0.0
    %441 = vmatpush.xpose.msra.mxu0 0.0
    %442 = vmatpush.xpose.msra.mxu0 0.0
    %443 = vmatpush.xpose.msra.mxu0 0.0
    %444 = vmatpush.xpose.msra.mxu0 0.0
    %445 = vmatpush.xpose.msra.mxu0 %v428
    %446 = vmatmul.f32.gmra.mxu0 %v426
    %v447 = vpop.f32.mrf.mxu0
    %v448 = vadd.f32 0.0, %v447
    %449 = vdwg.mxu0
    %v450 = vmul.f32 %v448, 0.35355338
    %v451 = vadd.f32 %v450, %v251
    %v452 = vsel %vm358, %v451, -inf
    %453 = vmax.xlane.f32.xlu0 %v452
    %v454 = vpop.xlane.xlu0 %453
    %v455 = vsub.f32 %v451, %v454
    %v456 = vmul.f32 %v455, 1.442695
    %v457 = vpow.pop %v456
    %v458 = vsel %vm358, %v457, 0.0
    %459 = vadd.xlane.f32.xlu0 %v458
    %v460 = vpop.xlane.xlu0 %459
    %v461 = vrcp.pop %v460
    %v462 = vmul.f32 %v457, %v461
    %463 = vrot.lane.b32.xlu0 %v350, 56
    %v464 = vpop.permute.xlu0 %463
    %v467 = vsel %vm358, %v462, 0
    %469 = vmatpush.msra.mxu0 0.0
    %470 = vmatpush.msra.mxu0 0.0
    %471 = vmatpush.msra.mxu0 0.0
    %472 = vmatpush.msra.mxu0 0.0
    %473 = vmatpush.msra.mxu0 0.0
    %474 = vmatpush.msra.mxu0 0.0
    %475 = vmatpush.msra.mxu0 0.0
    %476 = vmatpush.msra.mxu0 0.0
    %477 = vmatpush.msra.mxu0 0.0
    %478 = vmatpush.msra.mxu0 0.0
    %479 = vmatpush.msra.mxu0 0.0
    %480 = vmatpush.msra.mxu0 0.0
    %481 = vmatpush.msra.mxu0 0.0
    %482 = vmatpush.msra.mxu0 0.0
    %483 = vmatpush.msra.mxu0 0.0
    %484 = vmatpush.msra.mxu0 %v464
    %485 = vmatmul.f32.gmra.mxu0 %v467
    %v486 = vpop.f32.mrf.mxu0
    %v487 = vadd.f32 0.0, %v486
    %488 = vdwg.mxu0
    %489 = vrot.lane.b32.xlu0 %v350, 112
    %v490 = vpop.permute.xlu0 %489
    %491 = vrot.lane.b32.xlu0 %v350, 80
    %v492 = vpop.permute.xlu0 %491
    %v493 = vsel %vm358, %v490, 0
    %v495 = vsel %vm358, %v492, 0
    %497 = vmatpush.xpose.msra.mxu0 0.0
    %498 = vmatpush.xpose.msra.mxu0 0.0
    %499 = vmatpush.xpose.msra.mxu0 0.0
    %500 = vmatpush.xpose.msra.mxu0 0.0
    %501 = vmatpush.xpose.msra.mxu0 0.0
    %502 = vmatpush.xpose.msra.mxu0 0.0
    %503 = vmatpush.xpose.msra.mxu0 0.0
    %504 = vmatpush.xpose.msra.mxu0 0.0
    %505 = vmatpush.xpose.msra.mxu0 0.0
    %506 = vmatpush.xpose.msra.mxu0 0.0
    %507 = vmatpush.xpose.msra.mxu0 0.0
    %508 = vmatpush.xpose.msra.mxu0 0.0
    %509 = vmatpush.xpose.msra.mxu0 0.0
    %510 = vmatpush.xpose.msra.mxu0 0.0
    %511 = vmatpush.xpose.msra.mxu0 0.0
    %512 = vmatpush.xpose.msra.mxu0 %v495
    %513 = vmatmul.f32.gmra.mxu0 %v493
    %v514 = vpop.f32.mrf.mxu0
    %v515 = vadd.f32 0.0, %v514
    %516 = vdwg.mxu0
    %v517 = vmul.f32 %v515, 0.35355338
    %v518 = vadd.f32 %v517, %v251
    %v519 = vsel %vm358, %v518, -inf
    %520 = vmax.xlane.f32.xlu0 %v519
    %v521 = vpop.xlane.xlu0 %520
    %v522 = vsub.f32 %v518, %v521
    %v523 = vmul.f32 %v522, 1.442695
    %v524 = vpow.pop %v523
    %v525 = vsel %vm358, %v524, 0.0
    %526 = vadd.xlane.f32.xlu0 %v525
    %v527 = vpop.xlane.xlu0 %526
    %v528 = vrcp.pop %v527
    %v529 = vmul.f32 %v524, %v528
    %530 = vrot.lane.b32.xlu0 %v350, 48
    %v531 = vpop.permute.xlu0 %530
    %v534 = vsel %vm358, %v529, 0
    %536 = vmatpush.msra.mxu0 0.0
    %537 = vmatpush.msra.mxu0 0.0
    %538 = vmatpush.msra.mxu0 0.0
    %539 = vmatpush.msra.mxu0 0.0
    %540 = vmatpush.msra.mxu0 0.0
    %541 = vmatpush.msra.mxu0 0.0
    %542 = vmatpush.msra.mxu0 0.0
    %543 = vmatpush.msra.mxu0 0.0
    %544 = vmatpush.msra.mxu0 0.0
    %545 = vmatpush.msra.mxu0 0.0
    %546 = vmatpush.msra.mxu0 0.0
    %547 = vmatpush.msra.mxu0 0.0
    %548 = vmatpush.msra.mxu0 0.0
    %549 = vmatpush.msra.mxu0 0.0
    %550 = vmatpush.msra.mxu0 0.0
    %551 = vmatpush.msra.mxu0 %v531
    %552 = vmatmul.f32.gmra.mxu0 %v534
    %v553 = vpop.f32.mrf.mxu0
    %v554 = vadd.f32 0.0, %v553
    %555 = vdwg.mxu0
    %556 = vrot.lane.b32.xlu0 %v350, 104
    %v557 = vpop.permute.xlu0 %556
    %558 = vrot.lane.b32.xlu0 %v350, 72
    %v559 = vpop.permute.xlu0 %558
    %v560 = vsel %vm358, %v557, 0
    %v562 = vsel %vm358, %v559, 0
    %564 = vmatpush.xpose.msra.mxu0 0.0
    %565 = vmatpush.xpose.msra.mxu0 0.0
    %566 = vmatpush.xpose.msra.mxu0 0.0
    %567 = vmatpush.xpose.msra.mxu0 0.0
    %568 = vmatpush.xpose.msra.mxu0 0.0
    %569 = vmatpush.xpose.msra.mxu0 0.0
    %570 = vmatpush.xpose.msra.mxu0 0.0
    %571 = vmatpush.xpose.msra.mxu0 0.0
    %572 = vmatpush.xpose.msra.mxu0 0.0
    %573 = vmatpush.xpose.msra.mxu0 0.0
    %574 = vmatpush.xpose.msra.mxu0 0.0
    %575 = vmatpush.xpose.msra.mxu0 0.0
    %576 = vmatpush.xpose.msra.mxu0 0.0
    %577 = vmatpush.xpose.msra.mxu0 0.0
    %578 = vmatpush.xpose.msra.mxu0 0.0
    %579 = vmatpush.xpose.msra.mxu0 %v562
    %580 = vmatmul.f32.gmra.mxu0 %v560
    %v581 = vpop.f32.mrf.mxu0
    %v582 = vadd.f32 0.0, %v581
    %583 = vdwg.mxu0
    %v584 = vmul.f32 %v582, 0.35355338
    %v585 = vadd.f32 %v584, %v251
    %v586 = vsel %vm358, %v585, -inf
    %587 = vmax.xlane.f32.xlu0 %v586
    %v588 = vpop.xlane.xlu0 %587
    %v589 = vsub.f32 %v585, %v588
    %v590 = vmul.f32 %v589, 1.442695
    %v591 = vpow.pop %v590
    %v592 = vsel %vm358, %v591, 0.0
    %593 = vadd.xlane.f32.xlu0 %v592
    %v594 = vpop.xlane.xlu0 %593
    %v595 = vrcp.pop %v594
    %v596 = vmul.f32 %v591, %v595
    %597 = vrot.lane.b32.xlu0 %v350, 40
    %v598 = vpop.permute.xlu0 %597
    %v601 = vsel %vm358, %v596, 0
    %603 = vmatpush.msra.mxu0 0.0
    %604 = vmatpush.msra.mxu0 0.0
    %605 = vmatpush.msra.mxu0 0.0
    %606 = vmatpush.msra.mxu0 0.0
    %607 = vmatpush.msra.mxu0 0.0
    %608 = vmatpush.msra.mxu0 0.0
    %609 = vmatpush.msra.mxu0 0.0
    %610 = vmatpush.msra.mxu0 0.0
    %611 = vmatpush.msra.mxu0 0.0
    %612 = vmatpush.msra.mxu0 0.0
    %613 = vmatpush.msra.mxu0 0.0
    %614 = vmatpush.msra.mxu0 0.0
    %615 = vmatpush.msra.mxu0 0.0
    %616 = vmatpush.msra.mxu0 0.0
    %617 = vmatpush.msra.mxu0 0.0
    %618 = vmatpush.msra.mxu0 %v598
    %619 = vmatmul.f32.gmra.mxu0 %v601
    %v620 = vpop.f32.mrf.mxu0
    %v621 = vadd.f32 0.0, %v620
    %622 = vdwg.mxu0
    %624 = vrot.lane.b32.xlu0 %v487, 8
    %v625 = vpop.permute.xlu0 %624
    %628 = vrot.lane.b32.xlu0 %v554, 16
    %v629 = vpop.permute.xlu0 %628
    %632 = vrot.lane.b32.xlu0 %v621, 24
    %v633 = vpop.permute.xlu0 %632
    %v635 = vsel %vm358, %v420, %v625
    %vm636 = vcmask 130048
    %v637 = vsel %vm636, %v635, %v629
    %vm638 = vcmask 195584
    %v639 = vsel %vm638, %v637, %v633
    %641 = vrot.lane.b32.xlu0 %v353, 96
    %v642 = vpop.permute.xlu0 %641
    %v643 = vsel %vm358, %v353, 0
    %v645 = vsel %vm358, %v642, 0
    %647 = vmatpush.xpose.msra.mxu0 0.0
    %648 = vmatpush.xpose.msra.mxu0 0.0
    %649 = vmatpush.xpose.msra.mxu0 0.0
    %650 = vmatpush.xpose.msra.mxu0 0.0
    %651 = vmatpush.xpose.msra.mxu0 0.0
    %652 = vmatpush.xpose.msra.mxu0 0.0
    %653 = vmatpush.xpose.msra.mxu0 0.0
    %654 = vmatpush.xpose.msra.mxu0 0.0
    %655 = vmatpush.xpose.msra.mxu0 0.0
    %656 = vmatpush.xpose.msra.mxu0 0.0
    %657 = vmatpush.xpose.msra.mxu0 0.0
    %658 = vmatpush.xpose.msra.mxu0 0.0
    %659 = vmatpush.xpose.msra.mxu0 0.0
    %660 = vmatpush.xpose.msra.mxu0 0.0
    %661 = vmatpush.xpose.msra.mxu0 0.0
    %662 = vmatpush.xpose.msra.mxu0 %v645
    %663 = vmatmul.f32.gmra.mxu0 %v643
    %v664 = vpop.f32.mrf.mxu0
    %v665 = vadd.f32 0.0, %v664
    %666 = vdwg.mxu0
    %v667 = vmul.f32 %v665, 0.35355338
    %v668 = vadd.f32 %v667, %v253
    %v669 = vsel %vm358, %v668, -inf
    %670 = vmax.xlane.f32.xlu0 %v669
    %v671 = vpop.xlane.xlu0 %670
    %v672 = vsub.f32 %v668, %v671
    %v673 = vmul.f32 %v672, 1.442695
    %v674 = vpow.pop %v673
    %v675 = vsel %vm358, %v674, 0.0
    %676 = vadd.xlane.f32.xlu0 %v675
    %v677 = vpop.xlane.xlu0 %676
    %v678 = vrcp.pop %v677
    %v679 = vmul.f32 %v674, %v678
    %680 = vrot.lane.b32.xlu0 %v353, 64
    %v681 = vpop.permute.xlu0 %680
    %v684 = vsel %vm358, %v679, 0
    %686 = vmatpush.msra.mxu0 0.0
    %687 = vmatpush.msra.mxu0 0.0
    %688 = vmatpush.msra.mxu0 0.0
    %689 = vmatpush.msra.mxu0 0.0
    %690 = vmatpush.msra.mxu0 0.0
    %691 = vmatpush.msra.mxu0 0.0
    %692 = vmatpush.msra.mxu0 0.0
    %693 = vmatpush.msra.mxu0 0.0
    %694 = vmatpush.msra.mxu0 0.0
    %695 = vmatpush.msra.mxu0 0.0
    %696 = vmatpush.msra.mxu0 0.0
    %697 = vmatpush.msra.mxu0 0.0
    %698 = vmatpush.msra.mxu0 0.0
    %699 = vmatpush.msra.mxu0 0.0
    %700 = vmatpush.msra.mxu0 0.0
    %701 = vmatpush.msra.mxu0 %v681
    %702 = vmatmul.f32.gmra.mxu0 %v684
    %v703 = vpop.f32.mrf.mxu0
    %v704 = vadd.f32 0.0, %v703
    %705 = vdwg.mxu0
    %706 = vrot.lane.b32.xlu0 %v353, 120
    %v707 = vpop.permute.xlu0 %706
    %708 = vrot.lane.b32.xlu0 %v353, 88
    %v709 = vpop.permute.xlu0 %708
    %v710 = vsel %vm358, %v707, 0
    %v712 = vsel %vm358, %v709, 0
    %714 = vmatpush.xpose.msra.mxu0 0.0
    %715 = vmatpush.xpose.msra.mxu0 0.0
    %716 = vmatpush.xpose.msra.mxu0 0.0
    %717 = vmatpush.xpose.msra.mxu0 0.0
    %718 = vmatpush.xpose.msra.mxu0 0.0
    %719 = vmatpush.xpose.msra.mxu0 0.0
    %720 = vmatpush.xpose.msra.mxu0 0.0
    %721 = vmatpush.xpose.msra.mxu0 0.0
    %722 = vmatpush.xpose.msra.mxu0 0.0
    %723 = vmatpush.xpose.msra.mxu0 0.0
    %724 = vmatpush.xpose.msra.mxu0 0.0
    %725 = vmatpush.xpose.msra.mxu0 0.0
    %726 = vmatpush.xpose.msra.mxu0 0.0
    %727 = vmatpush.xpose.msra.mxu0 0.0
    %728 = vmatpush.xpose.msra.mxu0 0.0
    %729 = vmatpush.xpose.msra.mxu0 %v712
    %730 = vmatmul.f32.gmra.mxu0 %v710
    %v731 = vpop.f32.mrf.mxu0
    %v732 = vadd.f32 0.0, %v731
    %733 = vdwg.mxu0
    %v734 = vmul.f32 %v732, 0.35355338
    %v735 = vadd.f32 %v734, %v253
    %v736 = vsel %vm358, %v735, -inf
    %737 = vmax.xlane.f32.xlu0 %v736
    %v738 = vpop.xlane.xlu0 %737
    %v739 = vsub.f32 %v735, %v738
    %v740 = vmul.f32 %v739, 1.442695
    %v741 = vpow.pop %v740
    %v742 = vsel %vm358, %v741, 0.0
    %743 = vadd.xlane.f32.xlu0 %v742
    %v744 = vpop.xlane.xlu0 %743
    %v745 = vrcp.pop %v744
    %v746 = vmul.f32 %v741, %v745
    %747 = vrot.lane.b32.xlu0 %v353, 56
    %v748 = vpop.permute.xlu0 %747
    %v751 = vsel %vm358, %v746, 0
    %753 = vmatpush.msra.mxu0 0.0
    %754 = vmatpush.msra.mxu0 0.0
    %755 = vmatpush.msra.mxu0 0.0
    %756 = vmatpush.msra.mxu0 0.0
    %757 = vmatpush.msra.mxu0 0.0
    %758 = vmatpush.msra.mxu0 0.0
    %759 = vmatpush.msra.mxu0 0.0
    %760 = vmatpush.msra.mxu0 0.0
    %761 = vmatpush.msra.mxu0 0.0
    %762 = vmatpush.msra.mxu0 0.0
    %763 = vmatpush.msra.mxu0 0.0
    %764 = vmatpush.msra.mxu0 0.0
    %765 = vmatpush.msra.mxu0 0.0
    %766 = vmatpush.msra.mxu0 0.0
    %767 = vmatpush.msra.mxu0 0.0
    %768 = vmatpush.msra.mxu0 %v748
    %769 = vmatmul.f32.gmra.mxu0 %v751
    %v770 = vpop.f32.mrf.mxu0
    %v771 = vadd.f32 0.0, %v770
    %772 = vdwg.mxu0
    %773 = vrot.lane.b32.xlu0 %v353, 112
    %v774 = vpop.permute.xlu0 %773
    %775 = vrot.lane.b32.xlu0 %v353, 80
    %v776 = vpop.permute.xlu0 %775
    %v777 = vsel %vm358, %v774, 0
    %v779 = vsel %vm358, %v776, 0
    %781 = vmatpush.xpose.msra.mxu0 0.0
    %782 = vmatpush.xpose.msra.mxu0 0.0
    %783 = vmatpush.xpose.msra.mxu0 0.0
    %784 = vmatpush.xpose.msra.mxu0 0.0
    %785 = vmatpush.xpose.msra.mxu0 0.0
    %786 = vmatpush.xpose.msra.mxu0 0.0
    %787 = vmatpush.xpose.msra.mxu0 0.0
    %788 = vmatpush.xpose.msra.mxu0 0.0
    %789 = vmatpush.xpose.msra.mxu0 0.0
    %790 = vmatpush.xpose.msra.mxu0 0.0
    %791 = vmatpush.xpose.msra.mxu0 0.0
    %792 = vmatpush.xpose.msra.mxu0 0.0
    %793 = vmatpush.xpose.msra.mxu0 0.0
    %794 = vmatpush.xpose.msra.mxu0 0.0
    %795 = vmatpush.xpose.msra.mxu0 0.0
    %796 = vmatpush.xpose.msra.mxu0 %v779
    %797 = vmatmul.f32.gmra.mxu0 %v777
    %v798 = vpop.f32.mrf.mxu0
    %v799 = vadd.f32 0.0, %v798
    %800 = vdwg.mxu0
    %v801 = vmul.f32 %v799, 0.35355338
    %v802 = vadd.f32 %v801, %v253
    %v803 = vsel %vm358, %v802, -inf
    %804 = vmax.xlane.f32.xlu0 %v803
    %v805 = vpop.xlane.xlu0 %804
    %v806 = vsub.f32 %v802, %v805
    %v807 = vmul.f32 %v806, 1.442695
    %v808 = vpow.pop %v807
    %v809 = vsel %vm358, %v808, 0.0
    %810 = vadd.xlane.f32.xlu0 %v809
    %v811 = vpop.xlane.xlu0 %810
    %v812 = vrcp.pop %v811
    %v813 = vmul.f32 %v808, %v812
    %814 = vrot.lane.b32.xlu0 %v353, 48
    %v815 = vpop.permute.xlu0 %814
    %v818 = vsel %vm358, %v813, 0
    %820 = vmatpush.msra.mxu0 0.0
    %821 = vmatpush.msra.mxu0 0.0
    %822 = vmatpush.msra.mxu0 0.0
    %823 = vmatpush.msra.mxu0 0.0
    %824 = vmatpush.msra.mxu0 0.0
    %825 = vmatpush.msra.mxu0 0.0
    %826 = vmatpush.msra.mxu0 0.0
    %827 = vmatpush.msra.mxu0 0.0
    %828 = vmatpush.msra.mxu0 0.0
    %829 = vmatpush.msra.mxu0 0.0
    %830 = vmatpush.msra.mxu0 0.0
    %831 = vmatpush.msra.mxu0 0.0
    %832 = vmatpush.msra.mxu0 0.0
    %833 = vmatpush.msra.mxu0 0.0
    %834 = vmatpush.msra.mxu0 0.0
    %835 = vmatpush.msra.mxu0 %v815
    %836 = vmatmul.f32.gmra.mxu0 %v818
    %v837 = vpop.f32.mrf.mxu0
    %v838 = vadd.f32 0.0, %v837
    %839 = vdwg.mxu0
    %840 = vrot.lane.b32.xlu0 %v353, 104
    %v841 = vpop.permute.xlu0 %840
    %842 = vrot.lane.b32.xlu0 %v353, 72
    %v843 = vpop.permute.xlu0 %842
    %v844 = vsel %vm358, %v841, 0
    %v846 = vsel %vm358, %v843, 0
    %848 = vmatpush.xpose.msra.mxu0 0.0
    %849 = vmatpush.xpose.msra.mxu0 0.0
    %850 = vmatpush.xpose.msra.mxu0 0.0
    %851 = vmatpush.xpose.msra.mxu0 0.0
    %852 = vmatpush.xpose.msra.mxu0 0.0
    %853 = vmatpush.xpose.msra.mxu0 0.0
    %854 = vmatpush.xpose.msra.mxu0 0.0
    %855 = vmatpush.xpose.msra.mxu0 0.0
    %856 = vmatpush.xpose.msra.mxu0 0.0
    %857 = vmatpush.xpose.msra.mxu0 0.0
    %858 = vmatpush.xpose.msra.mxu0 0.0
    %859 = vmatpush.xpose.msra.mxu0 0.0
    %860 = vmatpush.xpose.msra.mxu0 0.0
    %861 = vmatpush.xpose.msra.mxu0 0.0
    %862 = vmatpush.xpose.msra.mxu0 0.0
    %863 = vmatpush.xpose.msra.mxu0 %v846
    %864 = vmatmul.f32.gmra.mxu0 %v844
    %v865 = vpop.f32.mrf.mxu0
    %v866 = vadd.f32 0.0, %v865
    %867 = vdwg.mxu0
    %v868 = vmul.f32 %v866, 0.35355338
    %v869 = vadd.f32 %v868, %v253
    %v870 = vsel %vm358, %v869, -inf
    %871 = vmax.xlane.f32.xlu0 %v870
    %v872 = vpop.xlane.xlu0 %871
    %v873 = vsub.f32 %v869, %v872
    %v874 = vmul.f32 %v873, 1.442695
    %v875 = vpow.pop %v874
    %v876 = vsel %vm358, %v875, 0.0
    %877 = vadd.xlane.f32.xlu0 %v876
    %v878 = vpop.xlane.xlu0 %877
    %v879 = vrcp.pop %v878
    %v880 = vmul.f32 %v875, %v879
    %881 = vrot.lane.b32.xlu0 %v353, 40
    %v882 = vpop.permute.xlu0 %881
    %v885 = vsel %vm358, %v880, 0
    %887 = vmatpush.msra.mxu0 0.0
    %888 = vmatpush.msra.mxu0 0.0
    %889 = vmatpush.msra.mxu0 0.0
    %890 = vmatpush.msra.mxu0 0.0
    %891 = vmatpush.msra.mxu0 0.0
    %892 = vmatpush.msra.mxu0 0.0
    %893 = vmatpush.msra.mxu0 0.0
    %894 = vmatpush.msra.mxu0 0.0
    %895 = vmatpush.msra.mxu0 0.0
    %896 = vmatpush.msra.mxu0 0.0
    %897 = vmatpush.msra.mxu0 0.0
    %898 = vmatpush.msra.mxu0 0.0
    %899 = vmatpush.msra.mxu0 0.0
    %900 = vmatpush.msra.mxu0 0.0
    %901 = vmatpush.msra.mxu0 0.0
    %902 = vmatpush.msra.mxu0 %v882
    %903 = vmatmul.f32.gmra.mxu0 %v885
    %v904 = vpop.f32.mrf.mxu0
    %v905 = vadd.f32 0.0, %v904
    %906 = vdwg.mxu0
    %908 = vrot.lane.b32.xlu0 %v771, 8
    %v909 = vpop.permute.xlu0 %908
    %912 = vrot.lane.b32.xlu0 %v838, 16
    %v913 = vpop.permute.xlu0 %912
    %916 = vrot.lane.b32.xlu0 %v905, 24
    %v917 = vpop.permute.xlu0 %916
    %v919 = vsel %vm358, %v704, %v909
    %v920 = vsel %vm636, %v919, %v913
    %v921 = vsel %vm638, %v920, %v917
    %v923 = vperm.slane %v321, 0
    %v926 = vsel %vm325, %v639, 0
    %v929 = vsel %vm325, %v921, 0
    %931 = vmatpush.msra.mxu0 0.0
    %932 = vmatpush.msra.mxu0 0.0
    %933 = vmatpush.msra.mxu0 0.0
    %934 = vmatpush.msra.mxu0 0.0
    %935 = vmatpush.msra.mxu0 0.0
    %936 = vmatpush.msra.mxu0 0.0
    %937 = vmatpush.msra.mxu0 0.0
    %938 = vmatpush.msra.mxu0 0.0
    %939 = vmatpush.msra.mxu0 0.0
    %940 = vmatpush.msra.mxu0 0.0
    %941 = vmatpush.msra.mxu0 0.0
    %942 = vmatpush.msra.mxu0 0.0
    %943 = vmatpush.msra.mxu0 %v320
    %944 = vmatpush.msra.mxu0 %v319
    %945 = vmatpush.msra.mxu0 %v318
    %946 = vmatpush.msra.mxu0 %v317
    %947 = vmatmul.f32.gmra.mxu0 %v926
    %v948 = vpop.f32.mrf.mxu0
    %v949 = vadd.f32 %v923, %v948
    %950 = vmatmul.f32.gmra.mxu0 %v929
    %v951 = vpop.f32.mrf.mxu0
    %v952 = vadd.f32 %v923, %v951
    %953 = vdwg.mxu0
    %v954 = vadd.f32 %v254, %v949
    %v955 = vadd.f32 %v255, %v952
    %v956 = vld [vmem:[%s47] sm:$0x3]
    %v957 = vsel %vm325, %v954, 0.0
    %958 = vadd.xlane.f32.xlu0 %v957
    %v959 = vpop.xlane.xlu0 %958
    %v960 = vsel %vm325, %v955, 0.0
    %961 = vadd.xlane.f32.xlu0 %v960
    %v962 = vpop.xlane.xlu0 %961
    %v963 = vrcp.pop 32.0
    %v964 = vmul.f32 32.0, %v963
    %v965 = vsub.f32 1.0, %v964
    %v966 = vmul.f32 %v963, %v965
    %v967 = vadd.f32 %v963, %v966
    %vm968 = vweird.f32 %v963
    %v969 = vsel %vm968, %v963, %v967
    %v970 = vmul.f32 %v959, %v969
    %v971 = vmul.f32 %v962, %v969
    %v972 = vsub.f32 %v954, %v970
    %v973 = vsub.f32 %v955, %v971
    %v974 = vmul.f32 %v972, %v972
    %v975 = vmul.f32 %v973, %v973
    %v976 = vsel %vm325, %v974, 0.0
    %977 = vadd.xlane.f32.xlu0 %v976
    %v978 = vpop.xlane.xlu0 %977
    %v979 = vsel %vm325, %v975, 0.0
    %980 = vadd.xlane.f32.xlu0 %v979
    %v981 = vpop.xlane.xlu0 %980
    %v982 = vmul.f32 %v978, %v969
    %v983 = vmul.f32 %v981, %v969
    %v984 = vadd.f32 %v982, 1e-05
    %v985 = vadd.f32 %v983, 1e-05
    %v986 = vrsqrt.pop %v984
    %v987 = vmul.f32 %v986, %v984
    %v988 = vmul.f32 %v987, %v986
    %v989 = vmul.f32 0.5, %v988
    %v990 = vsub.f32 1.5, %v989
    %v991 = vmul.f32 %v986, %v990
    %vm992 = vweird.f32 %v984
    %vm993 = vweird.f32 %v986
    %vm994 = vmor %vm992, %vm993
    %v995 = vsel %vm994, %v986, %v991
    %v996 = vrsqrt.pop %v985
    %v997 = vmul.f32 %v996, %v985
    %v998 = vmul.f32 %v997, %v996
    %v999 = vmul.f32 0.5, %v998
    %v1000 = vsub.f32 1.5, %v999
    %v1001 = vmul.f32 %v996, %v1000
    %vm1002 = vweird.f32 %v985
    %vm1003 = vweird.f32 %v996
    %vm1004 = vmor %vm1002, %vm1003
    %v1005 = vsel %vm1004, %v996, %v1001
    %v1006 = vmul.f32 %v972, %v995
    %v1007 = vmul.f32 %v973, %v1005
    %v1008 = vperm.slane %v956, 0
    %v1009 = vmul.f32 %v1006, %v1008
    %v1010 = vmul.f32 %v1007, %v1008
    %v1011 = vperm.slane %v956, 1
    %v1012 = vadd.f32 %v1009, %v1011
    %v1013 = vadd.f32 %v1010, %v1011
    %v1014 = vld [vmem:[%s43] sm:$0xff]
    %v1015 = vld [vmem:[%s43 + $0x8] sm:$0xff]
    %v1016 = vld [vmem:[%s43 + $0x10] sm:$0xff]
    %v1017 = vld [vmem:[%s43 + $0x18] sm:$0xff]
    %v1018 = vld [vmem:[%s39] sm:$0x1]
    %v1020 = vperm.slane %v1018, 0
    %v1023 = vsel %vm325, %v1012, 0
    %v1026 = vsel %vm325, %v1013, 0
    %1028 = vmatpush.msra.mxu0 0.0
    %1029 = vmatpush.msra.mxu0 0.0
    %1030 = vmatpush.msra.mxu0 0.0
    %1031 = vmatpush.msra.mxu0 0.0
    %1032 = vmatpush.msra.mxu0 0.0
    %1033 = vmatpush.msra.mxu0 0.0
    %1034 = vmatpush.msra.mxu0 0.0
    %1035 = vmatpush.msra.mxu0 0.0
    %1036 = vmatpush.msra.mxu0 0.0
    %1037 = vmatpush.msra.mxu0 0.0
    %1038 = vmatpush.msra.mxu0 0.0
    %1039 = vmatpush.msra.mxu0 0.0
    %1040 = vmatpush.msra.mxu0 %v1017
    %1041 = vmatpush.msra.mxu0 %v1016
    %1042 = vmatpush.msra.mxu0 %v1015
    %1043 = vmatpush.msra.mxu0 %v1014
    %1044 = vmatmul.f32.gmra.mxu0 %v1023
    %v1045 = vpop.f32.mrf.mxu0
    %v1046 = vadd.f32 %v1020, %v1045
    %1047 = vmatmul.f32.gmra.mxu0 %v1026
    %v1048 = vpop.f32.mrf.mxu0
    %v1049 = vadd.f32 %v1020, %v1048
    %1050 = vdwg.mxu0
    %v1051 = vmax.f32 %v1046, 0.0
    %v1052 = vmax.f32 %v1049, 0.0
    %v1053 = vld [vmem:[%s45] sm:$0xff]
    %v1054 = vld [vmem:[%s45 + $0x8] sm:$0xff]
    %v1055 = vld [vmem:[%s45 + $0x10] sm:$0xff]
    %v1056 = vld [vmem:[%s45 + $0x18] sm:$0xff]
    %v1057 = vld [vmem:[%s45 + $0x20] sm:$0xff]
    %v1058 = vld [vmem:[%s45 + $0x28] sm:$0xff]
    %v1059 = vld [vmem:[%s45 + $0x30] sm:$0xff]
    %v1060 = vld [vmem:[%s45 + $0x38] sm:$0xff]
    %v1061 = vld [vmem:[%s41] sm:$0x1]
    %v1063 = vperm.slane %v1061, 0
    %vm1065 = vcmask 523264
    %v1067 = vsel %vm1065, %v1051, 0
    %v1070 = vsel %vm1065, %v1052, 0
    %1072 = vmatpush.msra.mxu0 0.0
    %1073 = vmatpush.msra.mxu0 0.0
    %1074 = vmatpush.msra.mxu0 0.0
    %1075 = vmatpush.msra.mxu0 0.0
    %1076 = vmatpush.msra.mxu0 0.0
    %1077 = vmatpush.msra.mxu0 0.0
    %1078 = vmatpush.msra.mxu0 0.0
    %1079 = vmatpush.msra.mxu0 0.0
    %1080 = vmatpush.msra.mxu0 %v1060
    %1081 = vmatpush.msra.mxu0 %v1059
    %1082 = vmatpush.msra.mxu0 %v1058
    %1083 = vmatpush.msra.mxu0 %v1057
    %1084 = vmatpush.msra.mxu0 %v1056
    %1085 = vmatpush.msra.mxu0 %v1055
    %1086 = vmatpush.msra.mxu0 %v1054
    %1087 = vmatpush.msra.mxu0 %v1053
    %1088 = vmatmul.f32.gmra.mxu0 %v1067
    %v1089 = vpop.f32.mrf.mxu0
    %v1090 = vadd.f32 %v1063, %v1089
    %1091 = vmatmul.f32.gmra.mxu0 %v1070
    %v1092 = vpop.f32.mrf.mxu0
    %v1093 = vadd.f32 %v1063, %v1092
    %1094 = vdwg.mxu0
    %v1095 = vadd.f32 %v1012, %v1090
    %v1096 = vadd.f32 %v1013, %v1093
    %v1097 = vld [vmem:[%s49] sm:$0x3]
    %v1098 = vsel %vm325, %v1095, 0.0
    %1099 = vadd.xlane.f32.xlu0 %v1098
    %v1100 = vpop.xlane.xlu0 %1099
    %v1101 = vsel %vm325, %v1096, 0.0
    %1102 = vadd.xlane.f32.xlu0 %v1101
    %v1103 = vpop.xlane.xlu0 %1102
    %v1104 = vmul.f32 %v1100, %v969
    %v1105 = vmul.f32 %v1103, %v969
    %v1106 = vsub.f32 %v1095, %v1104
    %v1107 = vsub.f32 %v1096, %v1105
    %v1108 = vmul.f32 %v1106, %v1106
    %v1109 = vmul.f32 %v1107, %v1107
    %v1110 = vsel %vm325, %v1108, 0.0
    %1111 = vadd.xlane.f32.xlu0 %v1110
    %v1112 = vpop.xlane.xlu0 %1111
    %v1113 = vsel %vm325, %v1109, 0.0
    %1114 = vadd.xlane.f32.xlu0 %v1113
    %v1115 = vpop.xlane.xlu0 %1114
    %v1116 = vmul.f32 %v1112, %v969
    %v1117 = vmul.f32 %v1115, %v969
    %v1118 = vadd.f32 %v1116, 1e-05
    %v1119 = vadd.f32 %v1117, 1e-05
    %v1120 = vrsqrt.pop %v1118
    %v1121 = vmul.f32 %v1120, %v1118
    %v1122 = vmul.f32 %v1121, %v1120
    %v1123 = vmul.f32 0.5, %v1122
    %v1124 = vsub.f32 1.5, %v1123
    %v1125 = vmul.f32 %v1120, %v1124
    %vm1126 = vweird.f32 %v1118
    %vm1127 = vweird.f32 %v1120
    %vm1128 = vmor %vm1126, %vm1127
    %v1129 = vsel %vm1128, %v1120, %v1125
    %v1130 = vrsqrt.pop %v1119
    %v1131 = vmul.f32 %v1130, %v1119
    %v1132 = vmul.f32 %v1131, %v1130
    %v1133 = vmul.f32 0.5, %v1132
    %v1134 = vsub.f32 1.5, %v1133
    %v1135 = vmul.f32 %v1130, %v1134
    %vm1136 = vweird.f32 %v1119
    %vm1137 = vweird.f32 %v1130
    %vm1138 = vmor %vm1136, %vm1137
    %v1139 = vsel %vm1138, %v1130, %v1135
    %v1140 = vmul.f32 %v1106, %v1129
    %v1141 = vmul.f32 %v1107, %v1139
    %v1142 = vperm.slane %v1097, 0
    %v1143 = vmul.f32 %v1140, %v1142
    %v1144 = vmul.f32 %v1141, %v1142
    %v1145 = vperm.slane %v1097, 1
    %v1146 = vadd.f32 %v1143, %v1145
    %v1147 = vadd.f32 %v1144, %v1145
    %s1148 = scalar_lea.vmem %s57, 32
    %v1149 = vld [vmem:[%s1148] sm:$0xff]
    %v1150 = vld [vmem:[%s1148 + $0x8] sm:$0xff]
    %v1151 = vld [vmem:[%s1148 + $0x10] sm:$0xff]
    %v1152 = vld [vmem:[%s1148 + $0x18] sm:$0xff]
    %s1153 = scalar_lea.vmem %s53, 1
    %v1154 = vld [vmem:[%s1153] sm:$0x1]
    %s1155 = scalar_lea.vmem %s55, 32
    %v1156 = vld [vmem:[%s1155] sm:$0xff]
    %v1157 = vld [vmem:[%s1155 + $0x8] sm:$0xff]
    %v1158 = vld [vmem:[%s1155 + $0x10] sm:$0xff]
    %v1159 = vld [vmem:[%s1155 + $0x18] sm:$0xff]
    %s1160 = scalar_lea.vmem %s51, 1
    %v1161 = vld [vmem:[%s1160] sm:$0x1]
    %v1163 = vperm.slane %v1154, 0
    %v1166 = vsel %vm325, %v1146, 0
    %v1169 = vsel %vm325, %v1147, 0
    %1171 = vmatpush.msra.mxu0 0.0
    %1172 = vmatpush.msra.mxu0 0.0
    %1173 = vmatpush.msra.mxu0 0.0
    %1174 = vmatpush.msra.mxu0 0.0
    %1175 = vmatpush.msra.mxu0 0.0
    %1176 = vmatpush.msra.mxu0 0.0
    %1177 = vmatpush.msra.mxu0 0.0
    %1178 = vmatpush.msra.mxu0 0.0
    %1179 = vmatpush.msra.mxu0 0.0
    %1180 = vmatpush.msra.mxu0 0.0
    %1181 = vmatpush.msra.mxu0 0.0
    %1182 = vmatpush.msra.mxu0 0.0
    %1183 = vmatpush.msra.mxu0 %v1152
    %1184 = vmatpush.msra.mxu0 %v1151
    %1185 = vmatpush.msra.mxu0 %v1150
    %1186 = vmatpush.msra.mxu0 %v1149
    %1187 = vmatmul.f32.gmra.mxu0 %v1166
    %v1188 = vpop.f32.mrf.mxu0
    %v1189 = vadd.f32 %v1163, %v1188
    %1190 = vmatmul.f32.gmra.mxu0 %v1169
    %v1191 = vpop.f32.mrf.mxu0
    %v1192 = vadd.f32 %v1163, %v1191
    %1193 = vdwg.mxu0
    %1195 = vrot.lane.b32.xlu0 %v1189, 96
    %v1196 = vpop.permute.xlu0 %1195
    %v1197 = vsel %vm358, %v1189, 0
    %v1199 = vsel %vm358, %v1196, 0
    %1201 = vmatpush.xpose.msra.mxu0 0.0
    %1202 = vmatpush.xpose.msra.mxu0 0.0
    %1203 = vmatpush.xpose.msra.mxu0 0.0
    %1204 = vmatpush.xpose.msra.mxu0 0.0
    %1205 = vmatpush.xpose.msra.mxu0 0.0
    %1206 = vmatpush.xpose.msra.mxu0 0.0
    %1207 = vmatpush.xpose.msra.mxu0 0.0
    %1208 = vmatpush.xpose.msra.mxu0 0.0
    %1209 = vmatpush.xpose.msra.mxu0 0.0
    %1210 = vmatpush.xpose.msra.mxu0 0.0
    %1211 = vmatpush.xpose.msra.mxu0 0.0
    %1212 = vmatpush.xpose.msra.mxu0 0.0
    %1213 = vmatpush.xpose.msra.mxu0 0.0
    %1214 = vmatpush.xpose.msra.mxu0 0.0
    %1215 = vmatpush.xpose.msra.mxu0 0.0
    %1216 = vmatpush.xpose.msra.mxu0 %v1199
    %1217 = vmatmul.f32.gmra.mxu0 %v1197
    %v1218 = vpop.f32.mrf.mxu0
    %v1219 = vadd.f32 0.0, %v1218
    %1220 = vdwg.mxu0
    %v1221 = vmul.f32 %v1219, 0.35355338
    %v1222 = vadd.f32 %v1221, %v251
    %v1223 = vsel %vm358, %v1222, -inf
    %1224 = vmax.xlane.f32.xlu0 %v1223
    %v1225 = vpop.xlane.xlu0 %1224
    %v1226 = vsub.f32 %v1222, %v1225
    %v1227 = vmul.f32 %v1226, 1.442695
    %v1228 = vpow.pop %v1227
    %v1229 = vsel %vm358, %v1228, 0.0
    %1230 = vadd.xlane.f32.xlu0 %v1229
    %v1231 = vpop.xlane.xlu0 %1230
    %v1232 = vrcp.pop %v1231
    %v1233 = vmul.f32 %v1228, %v1232
    %1234 = vrot.lane.b32.xlu0 %v1189, 64
    %v1235 = vpop.permute.xlu0 %1234
    %v1238 = vsel %vm358, %v1233, 0
    %1240 = vmatpush.msra.mxu0 0.0
    %1241 = vmatpush.msra.mxu0 0.0
    %1242 = vmatpush.msra.mxu0 0.0
    %1243 = vmatpush.msra.mxu0 0.0
    %1244 = vmatpush.msra.mxu0 0.0
    %1245 = vmatpush.msra.mxu0 0.0
    %1246 = vmatpush.msra.mxu0 0.0
    %1247 = vmatpush.msra.mxu0 0.0
    %1248 = vmatpush.msra.mxu0 0.0
    %1249 = vmatpush.msra.mxu0 0.0
    %1250 = vmatpush.msra.mxu0 0.0
    %1251 = vmatpush.msra.mxu0 0.0
    %1252 = vmatpush.msra.mxu0 0.0
    %1253 = vmatpush.msra.mxu0 0.0
    %1254 = vmatpush.msra.mxu0 0.0
    %1255 = vmatpush.msra.mxu0 %v1235
    %1256 = vmatmul.f32.gmra.mxu0 %v1238
    %v1257 = vpop.f32.mrf.mxu0
    %v1258 = vadd.f32 0.0, %v1257
    %1259 = vdwg.mxu0
    %1260 = vrot.lane.b32.xlu0 %v1189, 120
    %v1261 = vpop.permute.xlu0 %1260
    %1262 = vrot.lane.b32.xlu0 %v1189, 88
    %v1263 = vpop.permute.xlu0 %1262
    %v1264 = vsel %vm358, %v1261, 0
    %v1266 = vsel %vm358, %v1263, 0
    %1268 = vmatpush.xpose.msra.mxu0 0.0
    %1269 = vmatpush.xpose.msra.mxu0 0.0
    %1270 = vmatpush.xpose.msra.mxu0 0.0
    %1271 = vmatpush.xpose.msra.mxu0 0.0
    %1272 = vmatpush.xpose.msra.mxu0 0.0
    %1273 = vmatpush.xpose.msra.mxu0 0.0
    %1274 = vmatpush.xpose.msra.mxu0 0.0
    %1275 = vmatpush.xpose.msra.mxu0 0.0
    %1276 = vmatpush.xpose.msra.mxu0 0.0
    %1277 = vmatpush.xpose.msra.mxu0 0.0
    %1278 = vmatpush.xpose.msra.mxu0 0.0
    %1279 = vmatpush.xpose.msra.mxu0 0.0
    %1280 = vmatpush.xpose.msra.mxu0 0.0
    %1281 = vmatpush.xpose.msra.mxu0 0.0
    %1282 = vmatpush.xpose.msra.mxu0 0.0
    %1283 = vmatpush.xpose.msra.mxu0 %v1266
    %1284 = vmatmul.f32.gmra.mxu0 %v1264
    %v1285 = vpop.f32.mrf.mxu0
    %v1286 = vadd.f32 0.0, %v1285
    %1287 = vdwg.mxu0
    %v1288 = vmul.f32 %v1286, 0.35355338
    %v1289 = vadd.f32 %v1288, %v251
    %v1290 = vsel %vm358, %v1289, -inf
    %1291 = vmax.xlane.f32.xlu0 %v1290
    %v1292 = vpop.xlane.xlu0 %1291
    %v1293 = vsub.f32 %v1289, %v1292
    %v1294 = vmul.f32 %v1293, 1.442695
    %v1295 = vpow.pop %v1294
    %v1296 = vsel %vm358, %v1295, 0.0
    %1297 = vadd.xlane.f32.xlu0 %v1296
    %v1298 = vpop.xlane.xlu0 %1297
    %v1299 = vrcp.pop %v1298
    %v1300 = vmul.f32 %v1295, %v1299
    %1301 = vrot.lane.b32.xlu0 %v1189, 56
    %v1302 = vpop.permute.xlu0 %1301
    %v1305 = vsel %vm358, %v1300, 0
    %1307 = vmatpush.msra.mxu0 0.0
    %1308 = vmatpush.msra.mxu0 0.0
    %1309 = vmatpush.msra.mxu0 0.0
    %1310 = vmatpush.msra.mxu0 0.0
    %1311 = vmatpush.msra.mxu0 0.0
    %1312 = vmatpush.msra.mxu0 0.0
    %1313 = vmatpush.msra.mxu0 0.0
    %1314 = vmatpush.msra.mxu0 0.0
    %1315 = vmatpush.msra.mxu0 0.0
    %1316 = vmatpush.msra.mxu0 0.0
    %1317 = vmatpush.msra.mxu0 0.0
    %1318 = vmatpush.msra.mxu0 0.0
    %1319 = vmatpush.msra.mxu0 0.0
    %1320 = vmatpush.msra.mxu0 0.0
    %1321 = vmatpush.msra.mxu0 0.0
    %1322 = vmatpush.msra.mxu0 %v1302
    %1323 = vmatmul.f32.gmra.mxu0 %v1305
    %v1324 = vpop.f32.mrf.mxu0
    %v1325 = vadd.f32 0.0, %v1324
    %1326 = vdwg.mxu0
    %1327 = vrot.lane.b32.xlu0 %v1189, 112
    %v1328 = vpop.permute.xlu0 %1327
    %1329 = vrot.lane.b32.xlu0 %v1189, 80
    %v1330 = vpop.permute.xlu0 %1329
    %v1331 = vsel %vm358, %v1328, 0
    %v1333 = vsel %vm358, %v1330, 0
    %1335 = vmatpush.xpose.msra.mxu0 0.0
    %1336 = vmatpush.xpose.msra.mxu0 0.0
    %1337 = vmatpush.xpose.msra.mxu0 0.0
    %1338 = vmatpush.xpose.msra.mxu0 0.0
    %1339 = vmatpush.xpose.msra.mxu0 0.0
    %1340 = vmatpush.xpose.msra.mxu0 0.0
    %1341 = vmatpush.xpose.msra.mxu0 0.0
    %1342 = vmatpush.xpose.msra.mxu0 0.0
    %1343 = vmatpush.xpose.msra.mxu0 0.0
    %1344 = vmatpush.xpose.msra.mxu0 0.0
    %1345 = vmatpush.xpose.msra.mxu0 0.0
    %1346 = vmatpush.xpose.msra.mxu0 0.0
    %1347 = vmatpush.xpose.msra.mxu0 0.0
    %1348 = vmatpush.xpose.msra.mxu0 0.0
    %1349 = vmatpush.xpose.msra.mxu0 0.0
    %1350 = vmatpush.xpose.msra.mxu0 %v1333
    %1351 = vmatmul.f32.gmra.mxu0 %v1331
    %v1352 = vpop.f32.mrf.mxu0
    %v1353 = vadd.f32 0.0, %v1352
    %1354 = vdwg.mxu0
    %v1355 = vmul.f32 %v1353, 0.35355338
    %v1356 = vadd.f32 %v1355, %v251
    %v1357 = vsel %vm358, %v1356, -inf
    %1358 = vmax.xlane.f32.xlu0 %v1357
    %v1359 = vpop.xlane.xlu0 %1358
    %v1360 = vsub.f32 %v1356, %v1359
    %v1361 = vmul.f32 %v1360, 1.442695
    %v1362 = vpow.pop %v1361
    %v1363 = vsel %vm358, %v1362, 0.0
    %1364 = vadd.xlane.f32.xlu0 %v1363
    %v1365 = vpop.xlane.xlu0 %1364
    %v1366 = vrcp.pop %v1365
    %v1367 = vmul.f32 %v1362, %v1366
    %1368 = vrot.lane.b32.xlu0 %v1189, 48
    %v1369 = vpop.permute.xlu0 %1368
    %v1372 = vsel %vm358, %v1367, 0
    %1374 = vmatpush.msra.mxu0 0.0
    %1375 = vmatpush.msra.mxu0 0.0
    %1376 = vmatpush.msra.mxu0 0.0
    %1377 = vmatpush.msra.mxu0 0.0
    %1378 = vmatpush.msra.mxu0 0.0
    %1379 = vmatpush.msra.mxu0 0.0
    %1380 = vmatpush.msra.mxu0 0.0
    %1381 = vmatpush.msra.mxu0 0.0
    %1382 = vmatpush.msra.mxu0 0.0
    %1383 = vmatpush.msra.mxu0 0.0
    %1384 = vmatpush.msra.mxu0 0.0
    %1385 = vmatpush.msra.mxu0 0.0
    %1386 = vmatpush.msra.mxu0 0.0
    %1387 = vmatpush.msra.mxu0 0.0
    %1388 = vmatpush.msra.mxu0 0.0
    %1389 = vmatpush.msra.mxu0 %v1369
    %1390 = vmatmul.f32.gmra.mxu0 %v1372
    %v1391 = vpop.f32.mrf.mxu0
    %v1392 = vadd.f32 0.0, %v1391
    %1393 = vdwg.mxu0
    %1394 = vrot.lane.b32.xlu0 %v1189, 104
    %v1395 = vpop.permute.xlu0 %1394
    %1396 = vrot.lane.b32.xlu0 %v1189, 72
    %v1397 = vpop.permute.xlu0 %1396
    %v1398 = vsel %vm358, %v1395, 0
    %v1400 = vsel %vm358, %v1397, 0
    %1402 = vmatpush.xpose.msra.mxu0 0.0
    %1403 = vmatpush.xpose.msra.mxu0 0.0
    %1404 = vmatpush.xpose.msra.mxu0 0.0
    %1405 = vmatpush.xpose.msra.mxu0 0.0
    %1406 = vmatpush.xpose.msra.mxu0 0.0
    %1407 = vmatpush.xpose.msra.mxu0 0.0
    %1408 = vmatpush.xpose.msra.mxu0 0.0
    %1409 = vmatpush.xpose.msra.mxu0 0.0
    %1410 = vmatpush.xpose.msra.mxu0 0.0
    %1411 = vmatpush.xpose.msra.mxu0 0.0
    %1412 = vmatpush.xpose.msra.mxu0 0.0
    %1413 = vmatpush.xpose.msra.mxu0 0.0
    %1414 = vmatpush.xpose.msra.mxu0 0.0
    %1415 = vmatpush.xpose.msra.mxu0 0.0
    %1416 = vmatpush.xpose.msra.mxu0 0.0
    %1417 = vmatpush.xpose.msra.mxu0 %v1400
    %1418 = vmatmul.f32.gmra.mxu0 %v1398
    %v1419 = vpop.f32.mrf.mxu0
    %v1420 = vadd.f32 0.0, %v1419
    %1421 = vdwg.mxu0
    %v1422 = vmul.f32 %v1420, 0.35355338
    %v1423 = vadd.f32 %v1422, %v251
    %v1424 = vsel %vm358, %v1423, -inf
    %1425 = vmax.xlane.f32.xlu0 %v1424
    %v1426 = vpop.xlane.xlu0 %1425
    %v1427 = vsub.f32 %v1423, %v1426
    %v1428 = vmul.f32 %v1427, 1.442695
    %v1429 = vpow.pop %v1428
    %v1430 = vsel %vm358, %v1429, 0.0
    %1431 = vadd.xlane.f32.xlu0 %v1430
    %v1432 = vpop.xlane.xlu0 %1431
    %v1433 = vrcp.pop %v1432
    %v1434 = vmul.f32 %v1429, %v1433
    %1435 = vrot.lane.b32.xlu0 %v1189, 40
    %v1436 = vpop.permute.xlu0 %1435
    %v1439 = vsel %vm358, %v1434, 0
    %1441 = vmatpush.msra.mxu0 0.0
    %1442 = vmatpush.msra.mxu0 0.0
    %1443 = vmatpush.msra.mxu0 0.0
    %1444 = vmatpush.msra.mxu0 0.0
    %1445 = vmatpush.msra.mxu0 0.0
    %1446 = vmatpush.msra.mxu0 0.0
    %1447 = vmatpush.msra.mxu0 0.0
    %1448 = vmatpush.msra.mxu0 0.0
    %1449 = vmatpush.msra.mxu0 0.0
    %1450 = vmatpush.msra.mxu0 0.0
    %1451 = vmatpush.msra.mxu0 0.0
    %1452 = vmatpush.msra.mxu0 0.0
    %1453 = vmatpush.msra.mxu0 0.0
    %1454 = vmatpush.msra.mxu0 0.0
    %1455 = vmatpush.msra.mxu0 0.0
    %1456 = vmatpush.msra.mxu0 %v1436
    %1457 = vmatmul.f32.gmra.mxu0 %v1439
    %v1458 = vpop.f32.mrf.mxu0
    %v1459 = vadd.f32 0.0, %v1458
    %1460 = vdwg.mxu0
    %1462 = vrot.lane.b32.xlu0 %v1325, 8
    %v1463 = vpop.permute.xlu0 %1462
    %1466 = vrot.lane.b32.xlu0 %v1392, 16
    %v1467 = vpop.permute.xlu0 %1466
    %1470 = vrot.lane.b32.xlu0 %v1459, 24
    %v1471 = vpop.permute.xlu0 %1470
    %v1473 = vsel %vm358, %v1258, %v1463
    %v1474 = vsel %vm636, %v1473, %v1467
    %v1475 = vsel %vm638, %v1474, %v1471
    %1477 = vrot.lane.b32.xlu0 %v1192, 96
    %v1478 = vpop.permute.xlu0 %1477
    %v1479 = vsel %vm358, %v1192, 0
    %v1481 = vsel %vm358, %v1478, 0
    %1483 = vmatpush.xpose.msra.mxu0 0.0
    %1484 = vmatpush.xpose.msra.mxu0 0.0
    %1485 = vmatpush.xpose.msra.mxu0 0.0
    %1486 = vmatpush.xpose.msra.mxu0 0.0
    %1487 = vmatpush.xpose.msra.mxu0 0.0
    %1488 = vmatpush.xpose.msra.mxu0 0.0
    %1489 = vmatpush.xpose.msra.mxu0 0.0
    %1490 = vmatpush.xpose.msra.mxu0 0.0
    %1491 = vmatpush.xpose.msra.mxu0 0.0
    %1492 = vmatpush.xpose.msra.mxu0 0.0
    %1493 = vmatpush.xpose.msra.mxu0 0.0
    %1494 = vmatpush.xpose.msra.mxu0 0.0
    %1495 = vmatpush.xpose.msra.mxu0 0.0
    %1496 = vmatpush.xpose.msra.mxu0 0.0
    %1497 = vmatpush.xpose.msra.mxu0 0.0
    %1498 = vmatpush.xpose.msra.mxu0 %v1481
    %1499 = vmatmul.f32.gmra.mxu0 %v1479
    %v1500 = vpop.f32.mrf.mxu0
    %v1501 = vadd.f32 0.0, %v1500
    %1502 = vdwg.mxu0
    %v1503 = vmul.f32 %v1501, 0.35355338
    %v1504 = vadd.f32 %v1503, %v253
    %v1505 = vsel %vm358, %v1504, -inf
    %1506 = vmax.xlane.f32.xlu0 %v1505
    %v1507 = vpop.xlane.xlu0 %1506
    %v1508 = vsub.f32 %v1504, %v1507
    %v1509 = vmul.f32 %v1508, 1.442695
    %v1510 = vpow.pop %v1509
    %v1511 = vsel %vm358, %v1510, 0.0
    %1512 = vadd.xlane.f32.xlu0 %v1511
    %v1513 = vpop.xlane.xlu0 %1512
    %v1514 = vrcp.pop %v1513
    %v1515 = vmul.f32 %v1510, %v1514
    %1516 = vrot.lane.b32.xlu0 %v1192, 64
    %v1517 = vpop.permute.xlu0 %1516
    %v1520 = vsel %vm358, %v1515, 0
    %1522 = vmatpush.msra.mxu0 0.0
    %1523 = vmatpush.msra.mxu0 0.0
    %1524 = vmatpush.msra.mxu0 0.0
    %1525 = vmatpush.msra.mxu0 0.0
    %1526 = vmatpush.msra.mxu0 0.0
    %1527 = vmatpush.msra.mxu0 0.0
    %1528 = vmatpush.msra.mxu0 0.0
    %1529 = vmatpush.msra.mxu0 0.0
    %1530 = vmatpush.msra.mxu0 0.0
    %1531 = vmatpush.msra.mxu0 0.0
    %1532 = vmatpush.msra.mxu0 0.0
    %1533 = vmatpush.msra.mxu0 0.0
    %1534 = vmatpush.msra.mxu0 0.0
    %1535 = vmatpush.msra.mxu0 0.0
    %1536 = vmatpush.msra.mxu0 0.0
    %1537 = vmatpush.msra.mxu0 %v1517
    %1538 = vmatmul.f32.gmra.mxu0 %v1520
    %v1539 = vpop.f32.mrf.mxu0
    %v1540 = vadd.f32 0.0, %v1539
    %1541 = vdwg.mxu0
    %1542 = vrot.lane.b32.xlu0 %v1192, 120
    %v1543 = vpop.permute.xlu0 %1542
    %1544 = vrot.lane.b32.xlu0 %v1192, 88
    %v1545 = vpop.permute.xlu0 %1544
    %v1546 = vsel %vm358, %v1543, 0
    %v1548 = vsel %vm358, %v1545, 0
    %1550 = vmatpush.xpose.msra.mxu0 0.0
    %1551 = vmatpush.xpose.msra.mxu0 0.0
    %1552 = vmatpush.xpose.msra.mxu0 0.0
    %1553 = vmatpush.xpose.msra.mxu0 0.0
    %1554 = vmatpush.xpose.msra.mxu0 0.0
    %1555 = vmatpush.xpose.msra.mxu0 0.0
    %1556 = vmatpush.xpose.msra.mxu0 0.0
    %1557 = vmatpush.xpose.msra.mxu0 0.0
    %1558 = vmatpush.xpose.msra.mxu0 0.0
    %1559 = vmatpush.xpose.msra.mxu0 0.0
    %1560 = vmatpush.xpose.msra.mxu0 0.0
    %1561 = vmatpush.xpose.msra.mxu0 0.0
    %1562 = vmatpush.xpose.msra.mxu0 0.0
    %1563 = vmatpush.xpose.msra.mxu0 0.0
    %1564 = vmatpush.xpose.msra.mxu0 0.0
    %1565 = vmatpush.xpose.msra.mxu0 %v1548
    %1566 = vmatmul.f32.gmra.mxu0 %v1546
    %v1567 = vpop.f32.mrf.mxu0
    %v1568 = vadd.f32 0.0, %v1567
    %1569 = vdwg.mxu0
    %v1570 = vmul.f32 %v1568, 0.35355338
    %v1571 = vadd.f32 %v1570, %v253
    %v1572 = vsel %vm358, %v1571, -inf
    %1573 = vmax.xlane.f32.xlu0 %v1572
    %v1574 = vpop.xlane.xlu0 %1573
    %v1575 = vsub.f32 %v1571, %v1574
    %v1576 = vmul.f32 %v1575, 1.442695
    %v1577 = vpow.pop %v1576
    %v1578 = vsel %vm358, %v1577, 0.0
    %1579 = vadd.xlane.f32.xlu0 %v1578
    %v1580 = vpop.xlane.xlu0 %1579
    %v1581 = vrcp.pop %v1580
    %v1582 = vmul.f32 %v1577, %v1581
    %1583 = vrot.lane.b32.xlu0 %v1192, 56
    %v1584 = vpop.permute.xlu0 %1583
    %v1587 = vsel %vm358, %v1582, 0
    %1589 = vmatpush.msra.mxu0 0.0
    %1590 = vmatpush.msra.mxu0 0.0
    %1591 = vmatpush.msra.mxu0 0.0
    %1592 = vmatpush.msra.mxu0 0.0
    %1593 = vmatpush.msra.mxu0 0.0
    %1594 = vmatpush.msra.mxu0 0.0
    %1595 = vmatpush.msra.mxu0 0.0
    %1596 = vmatpush.msra.mxu0 0.0
    %1597 = vmatpush.msra.mxu0 0.0
    %1598 = vmatpush.msra.mxu0 0.0
    %1599 = vmatpush.msra.mxu0 0.0
    %1600 = vmatpush.msra.mxu0 0.0
    %1601 = vmatpush.msra.mxu0 0.0
    %1602 = vmatpush.msra.mxu0 0.0
    %1603 = vmatpush.msra.mxu0 0.0
    %1604 = vmatpush.msra.mxu0 %v1584
    %1605 = vmatmul.f32.gmra.mxu0 %v1587
    %v1606 = vpop.f32.mrf.mxu0
    %v1607 = vadd.f32 0.0, %v1606
    %1608 = vdwg.mxu0
    %1609 = vrot.lane.b32.xlu0 %v1192, 112
    %v1610 = vpop.permute.xlu0 %1609
    %1611 = vrot.lane.b32.xlu0 %v1192, 80
    %v1612 = vpop.permute.xlu0 %1611
    %v1613 = vsel %vm358, %v1610, 0
    %v1615 = vsel %vm358, %v1612, 0
    %1617 = vmatpush.xpose.msra.mxu0 0.0
    %1618 = vmatpush.xpose.msra.mxu0 0.0
    %1619 = vmatpush.xpose.msra.mxu0 0.0
    %1620 = vmatpush.xpose.msra.mxu0 0.0
    %1621 = vmatpush.xpose.msra.mxu0 0.0
    %1622 = vmatpush.xpose.msra.mxu0 0.0
    %1623 = vmatpush.xpose.msra.mxu0 0.0
    %1624 = vmatpush.xpose.msra.mxu0 0.0
    %1625 = vmatpush.xpose.msra.mxu0 0.0
    %1626 = vmatpush.xpose.msra.mxu0 0.0
    %1627 = vmatpush.xpose.msra.mxu0 0.0
    %1628 = vmatpush.xpose.msra.mxu0 0.0
    %1629 = vmatpush.xpose.msra.mxu0 0.0
    %1630 = vmatpush.xpose.msra.mxu0 0.0
    %1631 = vmatpush.xpose.msra.mxu0 0.0
    %1632 = vmatpush.xpose.msra.mxu0 %v1615
    %1633 = vmatmul.f32.gmra.mxu0 %v1613
    %v1634 = vpop.f32.mrf.mxu0
    %v1635 = vadd.f32 0.0, %v1634
    %1636 = vdwg.mxu0
    %v1637 = vmul.f32 %v1635, 0.35355338
    %v1638 = vadd.f32 %v1637, %v253
    %v1639 = vsel %vm358, %v1638, -inf
    %1640 = vmax.xlane.f32.xlu0 %v1639
    %v1641 = vpop.xlane.xlu0 %1640
    %v1642 = vsub.f32 %v1638, %v1641
    %v1643 = vmul.f32 %v1642, 1.442695
    %v1644 = vpow.pop %v1643
    %v1645 = vsel %vm358, %v1644, 0.0
    %1646 = vadd.xlane.f32.xlu0 %v1645
    %v1647 = vpop.xlane.xlu0 %1646
    %v1648 = vrcp.pop %v1647
    %v1649 = vmul.f32 %v1644, %v1648
    %1650 = vrot.lane.b32.xlu0 %v1192, 48
    %v1651 = vpop.permute.xlu0 %1650
    %v1654 = vsel %vm358, %v1649, 0
    %1656 = vmatpush.msra.mxu0 0.0
    %1657 = vmatpush.msra.mxu0 0.0
    %1658 = vmatpush.msra.mxu0 0.0
    %1659 = vmatpush.msra.mxu0 0.0
    %1660 = vmatpush.msra.mxu0 0.0
    %1661 = vmatpush.msra.mxu0 0.0
    %1662 = vmatpush.msra.mxu0 0.0
    %1663 = vmatpush.msra.mxu0 0.0
    %1664 = vmatpush.msra.mxu0 0.0
    %1665 = vmatpush.msra.mxu0 0.0
    %1666 = vmatpush.msra.mxu0 0.0
    %1667 = vmatpush.msra.mxu0 0.0
    %1668 = vmatpush.msra.mxu0 0.0
    %1669 = vmatpush.msra.mxu0 0.0
    %1670 = vmatpush.msra.mxu0 0.0
    %1671 = vmatpush.msra.mxu0 %v1651
    %1672 = vmatmul.f32.gmra.mxu0 %v1654
    %v1673 = vpop.f32.mrf.mxu0
    %v1674 = vadd.f32 0.0, %v1673
    %1675 = vdwg.mxu0
    %1676 = vrot.lane.b32.xlu0 %v1192, 104
    %v1677 = vpop.permute.xlu0 %1676
    %1678 = vrot.lane.b32.xlu0 %v1192, 72
    %v1679 = vpop.permute.xlu0 %1678
    %v1680 = vsel %vm358, %v1677, 0
    %v1682 = vsel %vm358, %v1679, 0
    %1684 = vmatpush.xpose.msra.mxu0 0.0
    %1685 = vmatpush.xpose.msra.mxu0 0.0
    %1686 = vmatpush.xpose.msra.mxu0 0.0
    %1687 = vmatpush.xpose.msra.mxu0 0.0
    %1688 = vmatpush.xpose.msra.mxu0 0.0
    %1689 = vmatpush.xpose.msra.mxu0 0.0
    %1690 = vmatpush.xpose.msra.mxu0 0.0
    %1691 = vmatpush.xpose.msra.mxu0 0.0
    %1692 = vmatpush.xpose.msra.mxu0 0.0
    %1693 = vmatpush.xpose.msra.mxu0 0.0
    %1694 = vmatpush.xpose.msra.mxu0 0.0
    %1695 = vmatpush.xpose.msra.mxu0 0.0
    %1696 = vmatpush.xpose.msra.mxu0 0.0
    %1697 = vmatpush.xpose.msra.mxu0 0.0
    %1698 = vmatpush.xpose.msra.mxu0 0.0
    %1699 = vmatpush.xpose.msra.mxu0 %v1682
    %1700 = vmatmul.f32.gmra.mxu0 %v1680
    %v1701 = vpop.f32.mrf.mxu0
    %v1702 = vadd.f32 0.0, %v1701
    %1703 = vdwg.mxu0
    %v1704 = vmul.f32 %v1702, 0.35355338
    %v1705 = vadd.f32 %v1704, %v253
    %v1706 = vsel %vm358, %v1705, -inf
    %1707 = vmax.xlane.f32.xlu0 %v1706
    %v1708 = vpop.xlane.xlu0 %1707
    %v1709 = vsub.f32 %v1705, %v1708
    %v1710 = vmul.f32 %v1709, 1.442695
    %v1711 = vpow.pop %v1710
    %v1712 = vsel %vm358, %v1711, 0.0
    %1713 = vadd.xlane.f32.xlu0 %v1712
    %v1714 = vpop.xlane.xlu0 %1713
    %v1715 = vrcp.pop %v1714
    %v1716 = vmul.f32 %v1711, %v1715
    %1717 = vrot.lane.b32.xlu0 %v1192, 40
    %v1718 = vpop.permute.xlu0 %1717
    %v1721 = vsel %vm358, %v1716, 0
    %1723 = vmatpush.msra.mxu0 0.0
    %1724 = vmatpush.msra.mxu0 0.0
    %1725 = vmatpush.msra.mxu0 0.0
    %1726 = vmatpush.msra.mxu0 0.0
    %1727 = vmatpush.msra.mxu0 0.0
    %1728 = vmatpush.msra.mxu0 0.0
    %1729 = vmatpush.msra.mxu0 0.0
    %1730 = vmatpush.msra.mxu0 0.0
    %1731 = vmatpush.msra.mxu0 0.0
    %1732 = vmatpush.msra.mxu0 0.0
    %1733 = vmatpush.msra.mxu0 0.0
    %1734 = vmatpush.msra.mxu0 0.0
    %1735 = vmatpush.msra.mxu0 0.0
    %1736 = vmatpush.msra.mxu0 0.0
    %1737 = vmatpush.msra.mxu0 0.0
    %1738 = vmatpush.msra.mxu0 %v1718
    %1739 = vmatmul.f32.gmra.mxu0 %v1721
    %v1740 = vpop.f32.mrf.mxu0
    %v1741 = vadd.f32 0.0, %v1740
    %1742 = vdwg.mxu0
    %1744 = vrot.lane.b32.xlu0 %v1607, 8
    %v1745 = vpop.permute.xlu0 %1744
    %1748 = vrot.lane.b32.xlu0 %v1674, 16
    %v1749 = vpop.permute.xlu0 %1748
    %1752 = vrot.lane.b32.xlu0 %v1741, 24
    %v1753 = vpop.permute.xlu0 %1752
    %v1755 = vsel %vm358, %v1540, %v1745
    %v1756 = vsel %vm636, %v1755, %v1749
    %v1757 = vsel %vm638, %v1756, %v1753
    %v1759 = vperm.slane %v1161, 0
    %v1762 = vsel %vm325, %v1475, 0
    %v1765 = vsel %vm325, %v1757, 0
    %1767 = vmatpush.msra.mxu0 0.0
    %1768 = vmatpush.msra.mxu0 0.0
    %1769 = vmatpush.msra.mxu0 0.0
    %1770 = vmatpush.msra.mxu0 0.0
    %1771 = vmatpush.msra.mxu0 0.0
    %1772 = vmatpush.msra.mxu0 0.0
    %1773 = vmatpush.msra.mxu0 0.0
    %1774 = vmatpush.msra.mxu0 0.0
    %1775 = vmatpush.msra.mxu0 0.0
    %1776 = vmatpush.msra.mxu0 0.0
    %1777 = vmatpush.msra.mxu0 0.0
    %1778 = vmatpush.msra.mxu0 0.0
    %1779 = vmatpush.msra.mxu0 %v1159
    %1780 = vmatpush.msra.mxu0 %v1158
    %1781 = vmatpush.msra.mxu0 %v1157
    %1782 = vmatpush.msra.mxu0 %v1156
    %1783 = vmatmul.f32.gmra.mxu0 %v1762
    %v1784 = vpop.f32.mrf.mxu0
    %v1785 = vadd.f32 %v1759, %v1784
    %1786 = vmatmul.f32.gmra.mxu0 %v1765
    %v1787 = vpop.f32.mrf.mxu0
    %v1788 = vadd.f32 %v1759, %v1787
    %1789 = vdwg.mxu0
    %v1790 = vadd.f32 %v1146, %v1785
    %v1791 = vadd.f32 %v1147, %v1788
    %s1792 = scalar_lea.vmem %s47, 2
    %v1793 = vld [vmem:[%s1792] sm:$0x3]
    %v1794 = vsel %vm325, %v1790, 0.0
    %1795 = vadd.xlane.f32.xlu0 %v1794
    %v1796 = vpop.xlane.xlu0 %1795
    %v1797 = vsel %vm325, %v1791, 0.0
    %1798 = vadd.xlane.f32.xlu0 %v1797
    %v1799 = vpop.xlane.xlu0 %1798
    %v1800 = vmul.f32 %v1796, %v969
    %v1801 = vmul.f32 %v1799, %v969
    %v1802 = vsub.f32 %v1790, %v1800
    %v1803 = vsub.f32 %v1791, %v1801
    %v1804 = vmul.f32 %v1802, %v1802
    %v1805 = vmul.f32 %v1803, %v1803
    %v1806 = vsel %vm325, %v1804, 0.0
    %1807 = vadd.xlane.f32.xlu0 %v1806
    %v1808 = vpop.xlane.xlu0 %1807
    %v1809 = vsel %vm325, %v1805, 0.0
    %1810 = vadd.xlane.f32.xlu0 %v1809
    %v1811 = vpop.xlane.xlu0 %1810
    %v1812 = vmul.f32 %v1808, %v969
    %v1813 = vmul.f32 %v1811, %v969
    %v1814 = vadd.f32 %v1812, 1e-05
    %v1815 = vadd.f32 %v1813, 1e-05
    %v1816 = vrsqrt.pop %v1814
    %v1817 = vmul.f32 %v1816, %v1814
    %v1818 = vmul.f32 %v1817, %v1816
    %v1819 = vmul.f32 0.5, %v1818
    %v1820 = vsub.f32 1.5, %v1819
    %v1821 = vmul.f32 %v1816, %v1820
    %vm1822 = vweird.f32 %v1814
    %vm1823 = vweird.f32 %v1816
    %vm1824 = vmor %vm1822, %vm1823
    %v1825 = vsel %vm1824, %v1816, %v1821
    %v1826 = vrsqrt.pop %v1815
    %v1827 = vmul.f32 %v1826, %v1815
    %v1828 = vmul.f32 %v1827, %v1826
    %v1829 = vmul.f32 0.5, %v1828
    %v1830 = vsub.f32 1.5, %v1829
    %v1831 = vmul.f32 %v1826, %v1830
    %vm1832 = vweird.f32 %v1815
    %vm1833 = vweird.f32 %v1826
    %vm1834 = vmor %vm1832, %vm1833
    %v1835 = vsel %vm1834, %v1826, %v1831
    %v1836 = vmul.f32 %v1802, %v1825
    %v1837 = vmul.f32 %v1803, %v1835
    %v1838 = vperm.slane %v1793, 0
    %v1839 = vmul.f32 %v1836, %v1838
    %v1840 = vmul.f32 %v1837, %v1838
    %v1841 = vperm.slane %v1793, 1
    %v1842 = vadd.f32 %v1839, %v1841
    %v1843 = vadd.f32 %v1840, %v1841
    %s1844 = scalar_lea.vmem %s43, 32
    %v1845 = vld [vmem:[%s1844] sm:$0xff]
    %v1846 = vld [vmem:[%s1844 + $0x8] sm:$0xff]
    %v1847 = vld [vmem:[%s1844 + $0x10] sm:$0xff]
    %v1848 = vld [vmem:[%s1844 + $0x18] sm:$0xff]
    %s1849 = scalar_lea.vmem %s39, 1
    %v1850 = vld [vmem:[%s1849] sm:$0x1]
    %v1852 = vperm.slane %v1850, 0
    %v1855 = vsel %vm325, %v1842, 0
    %v1858 = vsel %vm325, %v1843, 0
    %1860 = vmatpush.msra.mxu0 0.0
    %1861 = vmatpush.msra.mxu0 0.0
    %1862 = vmatpush.msra.mxu0 0.0
    %1863 = vmatpush.msra.mxu0 0.0
    %1864 = vmatpush.msra.mxu0 0.0
    %1865 = vmatpush.msra.mxu0 0.0
    %1866 = vmatpush.msra.mxu0 0.0
    %1867 = vmatpush.msra.mxu0 0.0
    %1868 = vmatpush.msra.mxu0 0.0
    %1869 = vmatpush.msra.mxu0 0.0
    %1870 = vmatpush.msra.mxu0 0.0
    %1871 = vmatpush.msra.mxu0 0.0
    %1872 = vmatpush.msra.mxu0 %v1848
    %1873 = vmatpush.msra.mxu0 %v1847
    %1874 = vmatpush.msra.mxu0 %v1846
    %1875 = vmatpush.msra.mxu0 %v1845
    %1876 = vmatmul.f32.gmra.mxu0 %v1855
    %v1877 = vpop.f32.mrf.mxu0
    %v1878 = vadd.f32 %v1852, %v1877
    %1879 = vmatmul.f32.gmra.mxu0 %v1858
    %v1880 = vpop.f32.mrf.mxu0
    %v1881 = vadd.f32 %v1852, %v1880
    %1882 = vdwg.mxu0
    %v1883 = vmax.f32 %v1878, 0.0
    %v1884 = vmax.f32 %v1881, 0.0
    %s1885 = scalar_lea.vmem %s45, 64
    %v1886 = vld [vmem:[%s1885] sm:$0xff]
    %v1887 = vld [vmem:[%s1885 + $0x8] sm:$0xff]
    %v1888 = vld [vmem:[%s1885 + $0x10] sm:$0xff]
    %v1889 = vld [vmem:[%s1885 + $0x18] sm:$0xff]
    %v1890 = vld [vmem:[%s1885 + $0x20] sm:$0xff]
    %v1891 = vld [vmem:[%s1885 + $0x28] sm:$0xff]
    %v1892 = vld [vmem:[%s1885 + $0x30] sm:$0xff]
    %v1893 = vld [vmem:[%s1885 + $0x38] sm:$0xff]
    %s1894 = scalar_lea.vmem %s41, 1
    %v1895 = vld [vmem:[%s1894] sm:$0x1]
    %v1897 = vperm.slane %v1895, 0
    %v1900 = vsel %vm1065, %v1883, 0
    %v1903 = vsel %vm1065, %v1884, 0
    %1905 = vmatpush.msra.mxu0 0.0
    %1906 = vmatpush.msra.mxu0 0.0
    %1907 = vmatpush.msra.mxu0 0.0
    %1908 = vmatpush.msra.mxu0 0.0
    %1909 = vmatpush.msra.mxu0 0.0
    %1910 = vmatpush.msra.mxu0 0.0
    %1911 = vmatpush.msra.mxu0 0.0
    %1912 = vmatpush.msra.mxu0 0.0
    %1913 = vmatpush.msra.mxu0 %v1893
    %1914 = vmatpush.msra.mxu0 %v1892
    %1915 = vmatpush.msra.mxu0 %v1891
    %1916 = vmatpush.msra.mxu0 %v1890
    %1917 = vmatpush.msra.mxu0 %v1889
    %1918 = vmatpush.msra.mxu0 %v1888
    %1919 = vmatpush.msra.mxu0 %v1887
    %1920 = vmatpush.msra.mxu0 %v1886
    %1921 = vmatmul.f32.gmra.mxu0 %v1900
    %v1922 = vpop.f32.mrf.mxu0
    %v1923 = vadd.f32 %v1897, %v1922
    %1924 = vmatmul.f32.gmra.mxu0 %v1903
    %v1925 = vpop.f32.mrf.mxu0
    %v1926 = vadd.f32 %v1897, %v1925
    %1927 = vdwg.mxu0
    %v1928 = vadd.f32 %v1842, %v1923
    %v1929 = vadd.f32 %v1843, %v1926
    %s1930 = scalar_lea.vmem %s49, 2
    %v1931 = vld [vmem:[%s1930] sm:$0x3]
    %v1932 = vsel %vm325, %v1928, 0.0
    %1933 = vadd.xlane.f32.xlu0 %v1932
    %v1934 = vpop.xlane.xlu0 %1933
    %v1935 = vsel %vm325, %v1929, 0.0
    %1936 = vadd.xlane.f32.xlu0 %v1935
    %v1937 = vpop.xlane.xlu0 %1936
    %v1938 = vmul.f32 %v1934, %v969
    %v1939 = vmul.f32 %v1937, %v969
    %v1940 = vsub.f32 %v1928, %v1938
    %v1941 = vsub.f32 %v1929, %v1939
    %v1942 = vmul.f32 %v1940, %v1940
    %v1943 = vmul.f32 %v1941, %v1941
    %v1944 = vsel %vm325, %v1942, 0.0
    %1945 = vadd.xlane.f32.xlu0 %v1944
    %v1946 = vpop.xlane.xlu0 %1945
    %v1947 = vsel %vm325, %v1943, 0.0
    %1948 = vadd.xlane.f32.xlu0 %v1947
    %v1949 = vpop.xlane.xlu0 %1948
    %v1950 = vmul.f32 %v1946, %v969
    %v1951 = vmul.f32 %v1949, %v969
    %v1952 = vadd.f32 %v1950, 1e-05
    %v1953 = vadd.f32 %v1951, 1e-05
    %v1954 = vrsqrt.pop %v1952
    %v1955 = vmul.f32 %v1954, %v1952
    %v1956 = vmul.f32 %v1955, %v1954
    %v1957 = vmul.f32 0.5, %v1956
    %v1958 = vsub.f32 1.5, %v1957
    %v1959 = vmul.f32 %v1954, %v1958
    %vm1960 = vweird.f32 %v1952
    %vm1961 = vweird.f32 %v1954
    %vm1962 = vmor %vm1960, %vm1961
    %v1963 = vsel %vm1962, %v1954, %v1959
    %v1964 = vrsqrt.pop %v1953
    %v1965 = vmul.f32 %v1964, %v1953
    %v1966 = vmul.f32 %v1965, %v1964
    %v1967 = vmul.f32 0.5, %v1966
    %v1968 = vsub.f32 1.5, %v1967
    %v1969 = vmul.f32 %v1964, %v1968
    %vm1970 = vweird.f32 %v1953
    %vm1971 = vweird.f32 %v1964
    %vm1972 = vmor %vm1970, %vm1971
    %v1973 = vsel %vm1972, %v1964, %v1969
    %v1974 = vmul.f32 %v1940, %v1963
    %v1975 = vmul.f32 %v1941, %v1973
    %v1976 = vperm.slane %v1931, 0
    %v1977 = vmul.f32 %v1974, %v1976
    %v1978 = vmul.f32 %v1975, %v1976
    %v1979 = vperm.slane %v1931, 1
    %v1980 = vadd.f32 %v1977, %v1979
    %v1981 = vadd.f32 %v1978, %v1979
    %v1982 = vld [vmem:[%s37] sm:$0xff]
    %v1983 = vld [vmem:[%s37 + $0x8] sm:$0xff]
    %v1984 = vld [vmem:[%s37 + $0x10] sm:$0xff]
    %v1985 = vld [vmem:[%s37 + $0x18] sm:$0xff]
    %v1986 = vld [vmem:[%s33] sm:$0x1]
    %v1987 = vld [vmem:[%s35] sm:$0xff]
    %v1988 = vld [vmem:[%s35 + $0x8] sm:$0xff]
    %v1989 = vld [vmem:[%s35 + $0x10] sm:$0xff]
    %v1990 = vld [vmem:[%s35 + $0x18] sm:$0xff]
    %v1991 = vld [vmem:[%s31] sm:$0x1]
    %v1993 = vperm.slane %v1986, 0
    %v1996 = vsel %vm325, %v301, 0
    %v1999 = vsel %vm325, %v304, 0
    %v2002 = vsel %vm325, %v307, 0
    %v2005 = vsel %vm325, %v310, 0
    %2007 = vmatpush.msra.mxu0 0.0
    %2008 = vmatpush.msra.mxu0 0.0
    %2009 = vmatpush.msra.mxu0 0.0
    %2010 = vmatpush.msra.mxu0 0.0
    %2011 = vmatpush.msra.mxu0 0.0
    %2012 = vmatpush.msra.mxu0 0.0
    %2013 = vmatpush.msra.mxu0 0.0
    %2014 = vmatpush.msra.mxu0 0.0
    %2015 = vmatpush.msra.mxu0 0.0
    %2016 = vmatpush.msra.mxu0 0.0
    %2017 = vmatpush.msra.mxu0 0.0
    %2018 = vmatpush.msra.mxu0 0.0
    %2019 = vmatpush.msra.mxu0 %v1985
    %2020 = vmatpush.msra.mxu0 %v1984
    %2021 = vmatpush.msra.mxu0 %v1983
    %2022 = vmatpush.msra.mxu0 %v1982
    %2023 = vmatmul.f32.gmra.mxu0 %v1996
    %v2024 = vpop.f32.mrf.mxu0
    %v2025 = vadd.f32 %v1993, %v2024
    %2026 = vmatmul.f32.gmra.mxu0 %v1999
    %v2027 = vpop.f32.mrf.mxu0
    %v2028 = vadd.f32 %v1993, %v2027
    %2029 = vmatmul.f32.gmra.mxu0 %v2002
    %v2030 = vpop.f32.mrf.mxu0
    %v2031 = vadd.f32 %v1993, %v2030
    %2032 = vmatmul.f32.gmra.mxu0 %v2005
    %v2033 = vpop.f32.mrf.mxu0
    %v2034 = vadd.f32 %v1993, %v2033
    %2035 = vdwg.mxu0
    %2038 = vrot.lane.b32.xlu0 %v2025, 96
    %v2039 = vpop.permute.xlu0 %2038
    %2040 = vrot.lane.b32.xlu0 %v2028, 96
    %v2041 = vpop.permute.xlu0 %2040
    %v2042 = vsel %vm358, %v2025, 0
    %v2044 = vsel %vm358, %v2028, 0
    %v2046 = vsel %vm358, %v2039, 0
    %v2048 = vsel %vm358, %v2041, 0
    %2050 = vmatpush.xpose.msra.mxu0 0.0
    %2051 = vmatpush.xpose.msra.mxu0 0.0
    %2052 = vmatpush.xpose.msra.mxu0 0.0
    %2053 = vmatpush.xpose.msra.mxu0 0.0
    %2054 = vmatpush.xpose.msra.mxu0 0.0
    %2055 = vmatpush.xpose.msra.mxu0 0.0
    %2056 = vmatpush.xpose.msra.mxu0 0.0
    %2057 = vmatpush.xpose.msra.mxu0 0.0
    %2058 = vmatpush.xpose.msra.mxu0 0.0
    %2059 = vmatpush.xpose.msra.mxu0 0.0
    %2060 = vmatpush.xpose.msra.mxu0 0.0
    %2061 = vmatpush.xpose.msra.mxu0 0.0
    %2062 = vmatpush.xpose.msra.mxu0 0.0
    %2063 = vmatpush.xpose.msra.mxu0 0.0
    %2064 = vmatpush.xpose.msra.mxu0 %v2048
    %2065 = vmatpush.xpose.msra.mxu0 %v2046
    %2066 = vmatmul.f32.gmra.mxu0 %v2042
    %v2067 = vpop.f32.mrf.mxu0
    %v2068 = vadd.f32 0.0, %v2067
    %2069 = vmatmul.f32.gmra.mxu0 %v2044
    %v2070 = vpop.f32.mrf.mxu0
    %v2071 = vadd.f32 0.0, %v2070
    %2072 = vdwg.mxu0
    %v2073 = vmul.f32 %v2068, 0.35355338
    %v2074 = vmul.f32 %v2071, 0.35355338
    %v2075 = vsel %vm636, %v2073, -inf
    %2076 = vmax.xlane.f32.xlu0 %v2075
    %v2077 = vpop.xlane.xlu0 %2076
    %v2078 = vsel %vm636, %v2074, -inf
    %2079 = vmax.xlane.f32.xlu0 %v2078
    %v2080 = vpop.xlane.xlu0 %2079
    %v2081 = vsub.f32 %v2073, %v2077
    %v2082 = vsub.f32 %v2074, %v2080
    %v2083 = vmul.f32 %v2081, 1.442695
    %v2084 = vpow.pop %v2083
    %v2085 = vmul.f32 %v2082, 1.442695
    %v2086 = vpow.pop %v2085
    %v2087 = vsel %vm636, %v2084, 0.0
    %2088 = vadd.xlane.f32.xlu0 %v2087
    %v2089 = vpop.xlane.xlu0 %2088
    %v2090 = vsel %vm636, %v2086, 0.0
    %2091 = vadd.xlane.f32.xlu0 %v2090
    %v2092 = vpop.xlane.xlu0 %2091
    %v2093 = vrcp.pop %v2089
    %v2094 = vrcp.pop %v2092
    %v2095 = vmul.f32 %v2084, %v2093
    %v2096 = vmul.f32 %v2086, %v2094
    %2097 = vrot.lane.b32.xlu0 %v2025, 64
    %v2098 = vpop.permute.xlu0 %2097
    %2099 = vrot.lane.b32.xlu0 %v2028, 64
    %v2100 = vpop.permute.xlu0 %2099
    %v2104 = vsel %vm636, %v2095, 0
    %v2107 = vsel %vm636, %v2096, 0
    %2109 = vmatpush.msra.mxu0 0.0
    %2110 = vmatpush.msra.mxu0 0.0
    %2111 = vmatpush.msra.mxu0 0.0
    %2112 = vmatpush.msra.mxu0 0.0
    %2113 = vmatpush.msra.mxu0 0.0
    %2114 = vmatpush.msra.mxu0 0.0
    %2115 = vmatpush.msra.mxu0 0.0
    %2116 = vmatpush.msra.mxu0 0.0
    %2117 = vmatpush.msra.mxu0 0.0
    %2118 = vmatpush.msra.mxu0 0.0
    %2119 = vmatpush.msra.mxu0 0.0
    %2120 = vmatpush.msra.mxu0 0.0
    %2121 = vmatpush.msra.mxu0 0.0
    %2122 = vmatpush.msra.mxu0 0.0
    %2123 = vmatpush.msra.mxu0 %v2100
    %2124 = vmatpush.msra.mxu0 %v2098
    %2125 = vmatmul.f32.gmra.mxu0 %v2104
    %v2126 = vpop.f32.mrf.mxu0
    %v2127 = vadd.f32 0.0, %v2126
    %2128 = vmatmul.f32.gmra.mxu0 %v2107
    %v2129 = vpop.f32.mrf.mxu0
    %v2130 = vadd.f32 0.0, %v2129
    %2131 = vdwg.mxu0
    %2132 = vrot.lane.b32.xlu0 %v2025, 120
    %v2133 = vpop.permute.xlu0 %2132
    %2134 = vrot.lane.b32.xlu0 %v2028, 120
    %v2135 = vpop.permute.xlu0 %2134
    %2136 = vrot.lane.b32.xlu0 %v2025, 88
    %v2137 = vpop.permute.xlu0 %2136
    %2138 = vrot.lane.b32.xlu0 %v2028, 88
    %v2139 = vpop.permute.xlu0 %2138
    %v2140 = vsel %vm358, %v2133, 0
    %v2142 = vsel %vm358, %v2135, 0
    %v2144 = vsel %vm358, %v2137, 0
    %v2146 = vsel %vm358, %v2139, 0
    %2148 = vmatpush.xpose.msra.mxu0 0.0
    %2149 = vmatpush.xpose.msra.mxu0 0.0
    %2150 = vmatpush.xpose.msra.mxu0 0.0
    %2151 = vmatpush.xpose.msra.mxu0 0.0
    %2152 = vmatpush.xpose.msra.mxu0 0.0
    %2153 = vmatpush.xpose.msra.mxu0 0.0
    %2154 = vmatpush.xpose.msra.mxu0 0.0
    %2155 = vmatpush.xpose.msra.mxu0 0.0
    %2156 = vmatpush.xpose.msra.mxu0 0.0
    %2157 = vmatpush.xpose.msra.mxu0 0.0
    %2158 = vmatpush.xpose.msra.mxu0 0.0
    %2159 = vmatpush.xpose.msra.mxu0 0.0
    %2160 = vmatpush.xpose.msra.mxu0 0.0
    %2161 = vmatpush.xpose.msra.mxu0 0.0
    %2162 = vmatpush.xpose.msra.mxu0 %v2146
    %2163 = vmatpush.xpose.msra.mxu0 %v2144
    %2164 = vmatmul.f32.gmra.mxu0 %v2140
    %v2165 = vpop.f32.mrf.mxu0
    %v2166 = vadd.f32 0.0, %v2165
    %2167 = vmatmul.f32.gmra.mxu0 %v2142
    %v2168 = vpop.f32.mrf.mxu0
    %v2169 = vadd.f32 0.0, %v2168
    %2170 = vdwg.mxu0
    %v2171 = vmul.f32 %v2166, 0.35355338
    %v2172 = vmul.f32 %v2169, 0.35355338
    %v2173 = vsel %vm636, %v2171, -inf
    %2174 = vmax.xlane.f32.xlu0 %v2173
    %v2175 = vpop.xlane.xlu0 %2174
    %v2176 = vsel %vm636, %v2172, -inf
    %2177 = vmax.xlane.f32.xlu0 %v2176
    %v2178 = vpop.xlane.xlu0 %2177
    %v2179 = vsub.f32 %v2171, %v2175
    %v2180 = vsub.f32 %v2172, %v2178
    %v2181 = vmul.f32 %v2179, 1.442695
    %v2182 = vpow.pop %v2181
    %v2183 = vmul.f32 %v2180, 1.442695
    %v2184 = vpow.pop %v2183
    %v2185 = vsel %vm636, %v2182, 0.0
    %2186 = vadd.xlane.f32.xlu0 %v2185
    %v2187 = vpop.xlane.xlu0 %2186
    %v2188 = vsel %vm636, %v2184, 0.0
    %2189 = vadd.xlane.f32.xlu0 %v2188
    %v2190 = vpop.xlane.xlu0 %2189
    %v2191 = vrcp.pop %v2187
    %v2192 = vrcp.pop %v2190
    %v2193 = vmul.f32 %v2182, %v2191
    %v2194 = vmul.f32 %v2184, %v2192
    %2195 = vrot.lane.b32.xlu0 %v2025, 56
    %v2196 = vpop.permute.xlu0 %2195
    %2197 = vrot.lane.b32.xlu0 %v2028, 56
    %v2198 = vpop.permute.xlu0 %2197
    %v2202 = vsel %vm636, %v2193, 0
    %v2205 = vsel %vm636, %v2194, 0
    %2207 = vmatpush.msra.mxu0 0.0
    %2208 = vmatpush.msra.mxu0 0.0
    %2209 = vmatpush.msra.mxu0 0.0
    %2210 = vmatpush.msra.mxu0 0.0
    %2211 = vmatpush.msra.mxu0 0.0
    %2212 = vmatpush.msra.mxu0 0.0
    %2213 = vmatpush.msra.mxu0 0.0
    %2214 = vmatpush.msra.mxu0 0.0
    %2215 = vmatpush.msra.mxu0 0.0
    %2216 = vmatpush.msra.mxu0 0.0
    %2217 = vmatpush.msra.mxu0 0.0
    %2218 = vmatpush.msra.mxu0 0.0
    %2219 = vmatpush.msra.mxu0 0.0
    %2220 = vmatpush.msra.mxu0 0.0
    %2221 = vmatpush.msra.mxu0 %v2198
    %2222 = vmatpush.msra.mxu0 %v2196
    %2223 = vmatmul.f32.gmra.mxu0 %v2202
    %v2224 = vpop.f32.mrf.mxu0
    %v2225 = vadd.f32 0.0, %v2224
    %2226 = vmatmul.f32.gmra.mxu0 %v2205
    %v2227 = vpop.f32.mrf.mxu0
    %v2228 = vadd.f32 0.0, %v2227
    %2229 = vdwg.mxu0
    %2230 = vrot.lane.b32.xlu0 %v2025, 112
    %v2231 = vpop.permute.xlu0 %2230
    %2232 = vrot.lane.b32.xlu0 %v2028, 112
    %v2233 = vpop.permute.xlu0 %2232
    %2234 = vrot.lane.b32.xlu0 %v2025, 80
    %v2235 = vpop.permute.xlu0 %2234
    %2236 = vrot.lane.b32.xlu0 %v2028, 80
    %v2237 = vpop.permute.xlu0 %2236
    %v2238 = vsel %vm358, %v2231, 0
    %v2240 = vsel %vm358, %v2233, 0
    %v2242 = vsel %vm358, %v2235, 0
    %v2244 = vsel %vm358, %v2237, 0
    %2246 = vmatpush.xpose.msra.mxu0 0.0
    %2247 = vmatpush.xpose.msra.mxu0 0.0
    %2248 = vmatpush.xpose.msra.mxu0 0.0
    %2249 = vmatpush.xpose.msra.mxu0 0.0
    %2250 = vmatpush.xpose.msra.mxu0 0.0
    %2251 = vmatpush.xpose.msra.mxu0 0.0
    %2252 = vmatpush.xpose.msra.mxu0 0.0
    %2253 = vmatpush.xpose.msra.mxu0 0.0
    %2254 = vmatpush.xpose.msra.mxu0 0.0
    %2255 = vmatpush.xpose.msra.mxu0 0.0
    %2256 = vmatpush.xpose.msra.mxu0 0.0
    %2257 = vmatpush.xpose.msra.mxu0 0.0
    %2258 = vmatpush.xpose.msra.mxu0 0.0
    %2259 = vmatpush.xpose.msra.mxu0 0.0
    %2260 = vmatpush.xpose.msra.mxu0 %v2244
    %2261 = vmatpush.xpose.msra.mxu0 %v2242
    %2262 = vmatmul.f32.gmra.mxu0 %v2238
    %v2263 = vpop.f32.mrf.mxu0
    %v2264 = vadd.f32 0.0, %v2263
    %2265 = vmatmul.f32.gmra.mxu0 %v2240
    %v2266 = vpop.f32.mrf.mxu0
    %v2267 = vadd.f32 0.0, %v2266
    %2268 = vdwg.mxu0
    %v2269 = vmul.f32 %v2264, 0.35355338
    %v2270 = vmul.f32 %v2267, 0.35355338
    %v2271 = vsel %vm636, %v2269, -inf
    %2272 = vmax.xlane.f32.xlu0 %v2271
    %v2273 = vpop.xlane.xlu0 %2272
    %v2274 = vsel %vm636, %v2270, -inf
    %2275 = vmax.xlane.f32.xlu0 %v2274
    %v2276 = vpop.xlane.xlu0 %2275
    %v2277 = vsub.f32 %v2269, %v2273
    %v2278 = vsub.f32 %v2270, %v2276
    %v2279 = vmul.f32 %v2277, 1.442695
    %v2280 = vpow.pop %v2279
    %v2281 = vmul.f32 %v2278, 1.442695
    %v2282 = vpow.pop %v2281
    %v2283 = vsel %vm636, %v2280, 0.0
    %2284 = vadd.xlane.f32.xlu0 %v2283
    %v2285 = vpop.xlane.xlu0 %2284
    %v2286 = vsel %vm636, %v2282, 0.0
    %2287 = vadd.xlane.f32.xlu0 %v2286
    %v2288 = vpop.xlane.xlu0 %2287
    %v2289 = vrcp.pop %v2285
    %v2290 = vrcp.pop %v2288
    %v2291 = vmul.f32 %v2280, %v2289
    %v2292 = vmul.f32 %v2282, %v2290
    %2293 = vrot.lane.b32.xlu0 %v2025, 48
    %v2294 = vpop.permute.xlu0 %2293
    %2295 = vrot.lane.b32.xlu0 %v2028, 48
    %v2296 = vpop.permute.xlu0 %2295
    %v2300 = vsel %vm636, %v2291, 0
    %v2303 = vsel %vm636, %v2292, 0
    %2305 = vmatpush.msra.mxu0 0.0
    %2306 = vmatpush.msra.mxu0 0.0
    %2307 = vmatpush.msra.mxu0 0.0
    %2308 = vmatpush.msra.mxu0 0.0
    %2309 = vmatpush.msra.mxu0 0.0
    %2310 = vmatpush.msra.mxu0 0.0
    %2311 = vmatpush.msra.mxu0 0.0
    %2312 = vmatpush.msra.mxu0 0.0
    %2313 = vmatpush.msra.mxu0 0.0
    %2314 = vmatpush.msra.mxu0 0.0
    %2315 = vmatpush.msra.mxu0 0.0
    %2316 = vmatpush.msra.mxu0 0.0
    %2317 = vmatpush.msra.mxu0 0.0
    %2318 = vmatpush.msra.mxu0 0.0
    %2319 = vmatpush.msra.mxu0 %v2296
    %2320 = vmatpush.msra.mxu0 %v2294
    %2321 = vmatmul.f32.gmra.mxu0 %v2300
    %v2322 = vpop.f32.mrf.mxu0
    %v2323 = vadd.f32 0.0, %v2322
    %2324 = vmatmul.f32.gmra.mxu0 %v2303
    %v2325 = vpop.f32.mrf.mxu0
    %v2326 = vadd.f32 0.0, %v2325
    %2327 = vdwg.mxu0
    %2328 = vrot.lane.b32.xlu0 %v2025, 104
    %v2329 = vpop.permute.xlu0 %2328
    %2330 = vrot.lane.b32.xlu0 %v2028, 104
    %v2331 = vpop.permute.xlu0 %2330
    %2332 = vrot.lane.b32.xlu0 %v2025, 72
    %v2333 = vpop.permute.xlu0 %2332
    %2334 = vrot.lane.b32.xlu0 %v2028, 72
    %v2335 = vpop.permute.xlu0 %2334
    %v2336 = vsel %vm358, %v2329, 0
    %v2338 = vsel %vm358, %v2331, 0
    %v2340 = vsel %vm358, %v2333, 0
    %v2342 = vsel %vm358, %v2335, 0
    %2344 = vmatpush.xpose.msra.mxu0 0.0
    %2345 = vmatpush.xpose.msra.mxu0 0.0
    %2346 = vmatpush.xpose.msra.mxu0 0.0
    %2347 = vmatpush.xpose.msra.mxu0 0.0
    %2348 = vmatpush.xpose.msra.mxu0 0.0
    %2349 = vmatpush.xpose.msra.mxu0 0.0
    %2350 = vmatpush.xpose.msra.mxu0 0.0
    %2351 = vmatpush.xpose.msra.mxu0 0.0
    %2352 = vmatpush.xpose.msra.mxu0 0.0
    %2353 = vmatpush.xpose.msra.mxu0 0.0
    %2354 = vmatpush.xpose.msra.mxu0 0.0
    %2355 = vmatpush.xpose.msra.mxu0 0.0
    %2356 = vmatpush.xpose.msra.mxu0 0.0
    %2357 = vmatpush.xpose.msra.mxu0 0.0
    %2358 = vmatpush.xpose.msra.mxu0 %v2342
    %2359 = vmatpush.xpose.msra.mxu0 %v2340
    %2360 = vmatmul.f32.gmra.mxu0 %v2336
    %v2361 = vpop.f32.mrf.mxu0
    %v2362 = vadd.f32 0.0, %v2361
    %2363 = vmatmul.f32.gmra.mxu0 %v2338
    %v2364 = vpop.f32.mrf.mxu0
    %v2365 = vadd.f32 0.0, %v2364
    %2366 = vdwg.mxu0
    %v2367 = vmul.f32 %v2362, 0.35355338
    %v2368 = vmul.f32 %v2365, 0.35355338
    %v2369 = vsel %vm636, %v2367, -inf
    %2370 = vmax.xlane.f32.xlu0 %v2369
    %v2371 = vpop.xlane.xlu0 %2370
    %v2372 = vsel %vm636, %v2368, -inf
    %2373 = vmax.xlane.f32.xlu0 %v2372
    %v2374 = vpop.xlane.xlu0 %2373
    %v2375 = vsub.f32 %v2367, %v2371
    %v2376 = vsub.f32 %v2368, %v2374
    %v2377 = vmul.f32 %v2375, 1.442695
    %v2378 = vpow.pop %v2377
    %v2379 = vmul.f32 %v2376, 1.442695
    %v2380 = vpow.pop %v2379
    %v2381 = vsel %vm636, %v2378, 0.0
    %2382 = vadd.xlane.f32.xlu0 %v2381
    %v2383 = vpop.xlane.xlu0 %2382
    %v2384 = vsel %vm636, %v2380, 0.0
    %2385 = vadd.xlane.f32.xlu0 %v2384
    %v2386 = vpop.xlane.xlu0 %2385
    %v2387 = vrcp.pop %v2383
    %v2388 = vrcp.pop %v2386
    %v2389 = vmul.f32 %v2378, %v2387
    %v2390 = vmul.f32 %v2380, %v2388
    %2391 = vrot.lane.b32.xlu0 %v2025, 40
    %v2392 = vpop.permute.xlu0 %2391
    %2393 = vrot.lane.b32.xlu0 %v2028, 40
    %v2394 = vpop.permute.xlu0 %2393
    %v2398 = vsel %vm636, %v2389, 0
    %v2401 = vsel %vm636, %v2390, 0
    %2403 = vmatpush.msra.mxu0 0.0
    %2404 = vmatpush.msra.mxu0 0.0
    %2405 = vmatpush.msra.mxu0 0.0
    %2406 = vmatpush.msra.mxu0 0.0
    %2407 = vmatpush.msra.mxu0 0.0
    %2408 = vmatpush.msra.mxu0 0.0
    %2409 = vmatpush.msra.mxu0 0.0
    %2410 = vmatpush.msra.mxu0 0.0
    %2411 = vmatpush.msra.mxu0 0.0
    %2412 = vmatpush.msra.mxu0 0.0
    %2413 = vmatpush.msra.mxu0 0.0
    %2414 = vmatpush.msra.mxu0 0.0
    %2415 = vmatpush.msra.mxu0 0.0
    %2416 = vmatpush.msra.mxu0 0.0
    %2417 = vmatpush.msra.mxu0 %v2394
    %2418 = vmatpush.msra.mxu0 %v2392
    %2419 = vmatmul.f32.gmra.mxu0 %v2398
    %v2420 = vpop.f32.mrf.mxu0
    %v2421 = vadd.f32 0.0, %v2420
    %2422 = vmatmul.f32.gmra.mxu0 %v2401
    %v2423 = vpop.f32.mrf.mxu0
    %v2424 = vadd.f32 0.0, %v2423
    %2425 = vdwg.mxu0
    %2428 = vrot.lane.b32.xlu0 %v2225, 8
    %v2429 = vpop.permute.xlu0 %2428
    %2430 = vrot.lane.b32.xlu0 %v2228, 8
    %v2431 = vpop.permute.xlu0 %2430
    %2436 = vrot.lane.b32.xlu0 %v2323, 16
    %v2437 = vpop.permute.xlu0 %2436
    %2438 = vrot.lane.b32.xlu0 %v2326, 16
    %v2439 = vpop.permute.xlu0 %2438
    %2444 = vrot.lane.b32.xlu0 %v2421, 24
    %v2445 = vpop.permute.xlu0 %2444
    %2446 = vrot.lane.b32.xlu0 %v2424, 24
    %v2447 = vpop.permute.xlu0 %2446
    %v2450 = vsel %vm358, %v2127, %v2429
    %v2451 = vsel %vm358, %v2130, %v2431
    %v2452 = vsel %vm636, %v2450, %v2437
    %v2453 = vsel %vm636, %v2451, %v2439
    %v2454 = vsel %vm638, %v2452, %v2445
    %v2455 = vsel %vm638, %v2453, %v2447
    %2458 = vrot.lane.b32.xlu0 %v2031, 96
    %v2459 = vpop.permute.xlu0 %2458
    %2460 = vrot.lane.b32.xlu0 %v2034, 96
    %v2461 = vpop.permute.xlu0 %2460
    %v2462 = vsel %vm358, %v2031, 0
    %v2464 = vsel %vm358, %v2034, 0
    %v2466 = vsel %vm358, %v2459, 0
    %v2468 = vsel %vm358, %v2461, 0
    %2470 = vmatpush.xpose.msra.mxu0 0.0
    %2471 = vmatpush.xpose.msra.mxu0 0.0
    %2472 = vmatpush.xpose.msra.mxu0 0.0
    %2473 = vmatpush.xpose.msra.mxu0 0.0
    %2474 = vmatpush.xpose.msra.mxu0 0.0
    %2475 = vmatpush.xpose.msra.mxu0 0.0
    %2476 = vmatpush.xpose.msra.mxu0 0.0
    %2477 = vmatpush.xpose.msra.mxu0 0.0
    %2478 = vmatpush.xpose.msra.mxu0 0.0
    %2479 = vmatpush.xpose.msra.mxu0 0.0
    %2480 = vmatpush.xpose.msra.mxu0 0.0
    %2481 = vmatpush.xpose.msra.mxu0 0.0
    %2482 = vmatpush.xpose.msra.mxu0 0.0
    %2483 = vmatpush.xpose.msra.mxu0 0.0
    %2484 = vmatpush.xpose.msra.mxu0 %v2468
    %2485 = vmatpush.xpose.msra.mxu0 %v2466
    %2486 = vmatmul.f32.gmra.mxu0 %v2462
    %v2487 = vpop.f32.mrf.mxu0
    %v2488 = vadd.f32 0.0, %v2487
    %2489 = vmatmul.f32.gmra.mxu0 %v2464
    %v2490 = vpop.f32.mrf.mxu0
    %v2491 = vadd.f32 0.0, %v2490
    %2492 = vdwg.mxu0
    %v2493 = vmul.f32 %v2488, 0.35355338
    %v2494 = vmul.f32 %v2491, 0.35355338
    %v2495 = vsel %vm636, %v2493, -inf
    %2496 = vmax.xlane.f32.xlu0 %v2495
    %v2497 = vpop.xlane.xlu0 %2496
    %v2498 = vsel %vm636, %v2494, -inf
    %2499 = vmax.xlane.f32.xlu0 %v2498
    %v2500 = vpop.xlane.xlu0 %2499
    %v2501 = vsub.f32 %v2493, %v2497
    %v2502 = vsub.f32 %v2494, %v2500
    %v2503 = vmul.f32 %v2501, 1.442695
    %v2504 = vpow.pop %v2503
    %v2505 = vmul.f32 %v2502, 1.442695
    %v2506 = vpow.pop %v2505
    %v2507 = vsel %vm636, %v2504, 0.0
    %2508 = vadd.xlane.f32.xlu0 %v2507
    %v2509 = vpop.xlane.xlu0 %2508
    %v2510 = vsel %vm636, %v2506, 0.0
    %2511 = vadd.xlane.f32.xlu0 %v2510
    %v2512 = vpop.xlane.xlu0 %2511
    %v2513 = vrcp.pop %v2509
    %v2514 = vrcp.pop %v2512
    %v2515 = vmul.f32 %v2504, %v2513
    %v2516 = vmul.f32 %v2506, %v2514
    %2517 = vrot.lane.b32.xlu0 %v2031, 64
    %v2518 = vpop.permute.xlu0 %2517
    %2519 = vrot.lane.b32.xlu0 %v2034, 64
    %v2520 = vpop.permute.xlu0 %2519
    %v2524 = vsel %vm636, %v2515, 0
    %v2527 = vsel %vm636, %v2516, 0
    %2529 = vmatpush.msra.mxu0 0.0
    %2530 = vmatpush.msra.mxu0 0.0
    %2531 = vmatpush.msra.mxu0 0.0
    %2532 = vmatpush.msra.mxu0 0.0
    %2533 = vmatpush.msra.mxu0 0.0
    %2534 = vmatpush.msra.mxu0 0.0
    %2535 = vmatpush.msra.mxu0 0.0
    %2536 = vmatpush.msra.mxu0 0.0
    %2537 = vmatpush.msra.mxu0 0.0
    %2538 = vmatpush.msra.mxu0 0.0
    %2539 = vmatpush.msra.mxu0 0.0
    %2540 = vmatpush.msra.mxu0 0.0
    %2541 = vmatpush.msra.mxu0 0.0
    %2542 = vmatpush.msra.mxu0 0.0
    %2543 = vmatpush.msra.mxu0 %v2520
    %2544 = vmatpush.msra.mxu0 %v2518
    %2545 = vmatmul.f32.gmra.mxu0 %v2524
    %v2546 = vpop.f32.mrf.mxu0
    %v2547 = vadd.f32 0.0, %v2546
    %2548 = vmatmul.f32.gmra.mxu0 %v2527
    %v2549 = vpop.f32.mrf.mxu0
    %v2550 = vadd.f32 0.0, %v2549
    %2551 = vdwg.mxu0
    %2552 = vrot.lane.b32.xlu0 %v2031, 120
    %v2553 = vpop.permute.xlu0 %2552
    %2554 = vrot.lane.b32.xlu0 %v2034, 120
    %v2555 = vpop.permute.xlu0 %2554
    %2556 = vrot.lane.b32.xlu0 %v2031, 88
    %v2557 = vpop.permute.xlu0 %2556
    %2558 = vrot.lane.b32.xlu0 %v2034, 88
    %v2559 = vpop.permute.xlu0 %2558
    %v2560 = vsel %vm358, %v2553, 0
    %v2562 = vsel %vm358, %v2555, 0
    %v2564 = vsel %vm358, %v2557, 0
    %v2566 = vsel %vm358, %v2559, 0
    %2568 = vmatpush.xpose.msra.mxu0 0.0
    %2569 = vmatpush.xpose.msra.mxu0 0.0
    %2570 = vmatpush.xpose.msra.mxu0 0.0
    %2571 = vmatpush.xpose.msra.mxu0 0.0
    %2572 = vmatpush.xpose.msra.mxu0 0.0
    %2573 = vmatpush.xpose.msra.mxu0 0.0
    %2574 = vmatpush.xpose.msra.mxu0 0.0
    %2575 = vmatpush.xpose.msra.mxu0 0.0
    %2576 = vmatpush.xpose.msra.mxu0 0.0
    %2577 = vmatpush.xpose.msra.mxu0 0.0
    %2578 = vmatpush.xpose.msra.mxu0 0.0
    %2579 = vmatpush.xpose.msra.mxu0 0.0
    %2580 = vmatpush.xpose.msra.mxu0 0.0
    %2581 = vmatpush.xpose.msra.mxu0 0.0
    %2582 = vmatpush.xpose.msra.mxu0 %v2566
    %2583 = vmatpush.xpose.msra.mxu0 %v2564
    %2584 = vmatmul.f32.gmra.mxu0 %v2560
    %v2585 = vpop.f32.mrf.mxu0
    %v2586 = vadd.f32 0.0, %v2585
    %2587 = vmatmul.f32.gmra.mxu0 %v2562
    %v2588 = vpop.f32.mrf.mxu0
    %v2589 = vadd.f32 0.0, %v2588
    %2590 = vdwg.mxu0
    %v2591 = vmul.f32 %v2586, 0.35355338
    %v2592 = vmul.f32 %v2589, 0.35355338
    %v2593 = vsel %vm636, %v2591, -inf
    %2594 = vmax.xlane.f32.xlu0 %v2593
    %v2595 = vpop.xlane.xlu0 %2594
    %v2596 = vsel %vm636, %v2592, -inf
    %2597 = vmax.xlane.f32.xlu0 %v2596
    %v2598 = vpop.xlane.xlu0 %2597
    %v2599 = vsub.f32 %v2591, %v2595
    %v2600 = vsub.f32 %v2592, %v2598
    %v2601 = vmul.f32 %v2599, 1.442695
    %v2602 = vpow.pop %v2601
    %v2603 = vmul.f32 %v2600, 1.442695
    %v2604 = vpow.pop %v2603
    %v2605 = vsel %vm636, %v2602, 0.0
    %2606 = vadd.xlane.f32.xlu0 %v2605
    %v2607 = vpop.xlane.xlu0 %2606
    %v2608 = vsel %vm636, %v2604, 0.0
    %2609 = vadd.xlane.f32.xlu0 %v2608
    %v2610 = vpop.xlane.xlu0 %2609
    %v2611 = vrcp.pop %v2607
    %v2612 = vrcp.pop %v2610
    %v2613 = vmul.f32 %v2602, %v2611
    %v2614 = vmul.f32 %v2604, %v2612
    %2615 = vrot.lane.b32.xlu0 %v2031, 56
    %v2616 = vpop.permute.xlu0 %2615
    %2617 = vrot.lane.b32.xlu0 %v2034, 56
    %v2618 = vpop.permute.xlu0 %2617
    %v2622 = vsel %vm636, %v2613, 0
    %v2625 = vsel %vm636, %v2614, 0
    %2627 = vmatpush.msra.mxu0 0.0
    %2628 = vmatpush.msra.mxu0 0.0
    %2629 = vmatpush.msra.mxu0 0.0
    %2630 = vmatpush.msra.mxu0 0.0
    %2631 = vmatpush.msra.mxu0 0.0
    %2632 = vmatpush.msra.mxu0 0.0
    %2633 = vmatpush.msra.mxu0 0.0
    %2634 = vmatpush.msra.mxu0 0.0
    %2635 = vmatpush.msra.mxu0 0.0
    %2636 = vmatpush.msra.mxu0 0.0
    %2637 = vmatpush.msra.mxu0 0.0
    %2638 = vmatpush.msra.mxu0 0.0
    %2639 = vmatpush.msra.mxu0 0.0
    %2640 = vmatpush.msra.mxu0 0.0
    %2641 = vmatpush.msra.mxu0 %v2618
    %2642 = vmatpush.msra.mxu0 %v2616
    %2643 = vmatmul.f32.gmra.mxu0 %v2622
    %v2644 = vpop.f32.mrf.mxu0
    %v2645 = vadd.f32 0.0, %v2644
    %2646 = vmatmul.f32.gmra.mxu0 %v2625
    %v2647 = vpop.f32.mrf.mxu0
    %v2648 = vadd.f32 0.0, %v2647
    %2649 = vdwg.mxu0
    %2650 = vrot.lane.b32.xlu0 %v2031, 112
    %v2651 = vpop.permute.xlu0 %2650
    %2652 = vrot.lane.b32.xlu0 %v2034, 112
    %v2653 = vpop.permute.xlu0 %2652
    %2654 = vrot.lane.b32.xlu0 %v2031, 80
    %v2655 = vpop.permute.xlu0 %2654
    %2656 = vrot.lane.b32.xlu0 %v2034, 80
    %v2657 = vpop.permute.xlu0 %2656
    %v2658 = vsel %vm358, %v2651, 0
    %v2660 = vsel %vm358, %v2653, 0
    %v2662 = vsel %vm358, %v2655, 0
    %v2664 = vsel %vm358, %v2657, 0
    %2666 = vmatpush.xpose.msra.mxu0 0.0
    %2667 = vmatpush.xpose.msra.mxu0 0.0
    %2668 = vmatpush.xpose.msra.mxu0 0.0
    %2669 = vmatpush.xpose.msra.mxu0 0.0
    %2670 = vmatpush.xpose.msra.mxu0 0.0
    %2671 = vmatpush.xpose.msra.mxu0 0.0
    %2672 = vmatpush.xpose.msra.mxu0 0.0
    %2673 = vmatpush.xpose.msra.mxu0 0.0
    %2674 = vmatpush.xpose.msra.mxu0 0.0
    %2675 = vmatpush.xpose.msra.mxu0 0.0
    %2676 = vmatpush.xpose.msra.mxu0 0.0
    %2677 = vmatpush.xpose.msra.mxu0 0.0
    %2678 = vmatpush.xpose.msra.mxu0 0.0
    %2679 = vmatpush.xpose.msra.mxu0 0.0
    %2680 = vmatpush.xpose.msra.mxu0 %v2664
    %2681 = vmatpush.xpose.msra.mxu0 %v2662
    %2682 = vmatmul.f32.gmra.mxu0 %v2658
    %v2683 = vpop.f32.mrf.mxu0
    %v2684 = vadd.f32 0.0, %v2683
    %2685 = vmatmul.f32.gmra.mxu0 %v2660
    %v2686 = vpop.f32.mrf.mxu0
    %v2687 = vadd.f32 0.0, %v2686
    %2688 = vdwg.mxu0
    %v2689 = vmul.f32 %v2684, 0.35355338
    %v2690 = vmul.f32 %v2687, 0.35355338
    %v2691 = vsel %vm636, %v2689, -inf
    %2692 = vmax.xlane.f32.xlu0 %v2691
    %v2693 = vpop.xlane.xlu0 %2692
    %v2694 = vsel %vm636, %v2690, -inf
    %2695 = vmax.xlane.f32.xlu0 %v2694
    %v2696 = vpop.xlane.xlu0 %2695
    %v2697 = vsub.f32 %v2689, %v2693
    %v2698 = vsub.f32 %v2690, %v2696
    %v2699 = vmul.f32 %v2697, 1.442695
    %v2700 = vpow.pop %v2699
    %v2701 = vmul.f32 %v2698, 1.442695
    %v2702 = vpow.pop %v2701
    %v2703 = vsel %vm636, %v2700, 0.0
    %2704 = vadd.xlane.f32.xlu0 %v2703
    %v2705 = vpop.xlane.xlu0 %2704
    %v2706 = vsel %vm636, %v2702, 0.0
    %2707 = vadd.xlane.f32.xlu0 %v2706
    %v2708 = vpop.xlane.xlu0 %2707
    %v2709 = vrcp.pop %v2705
    %v2710 = vrcp.pop %v2708
    %v2711 = vmul.f32 %v2700, %v2709
    %v2712 = vmul.f32 %v2702, %v2710
    %2713 = vrot.lane.b32.xlu0 %v2031, 48
    %v2714 = vpop.permute.xlu0 %2713
    %2715 = vrot.lane.b32.xlu0 %v2034, 48
    %v2716 = vpop.permute.xlu0 %2715
    %v2720 = vsel %vm636, %v2711, 0
    %v2723 = vsel %vm636, %v2712, 0
    %2725 = vmatpush.msra.mxu0 0.0
    %2726 = vmatpush.msra.mxu0 0.0
    %2727 = vmatpush.msra.mxu0 0.0
    %2728 = vmatpush.msra.mxu0 0.0
    %2729 = vmatpush.msra.mxu0 0.0
    %2730 = vmatpush.msra.mxu0 0.0
    %2731 = vmatpush.msra.mxu0 0.0
    %2732 = vmatpush.msra.mxu0 0.0
    %2733 = vmatpush.msra.mxu0 0.0
    %2734 = vmatpush.msra.mxu0 0.0
    %2735 = vmatpush.msra.mxu0 0.0
    %2736 = vmatpush.msra.mxu0 0.0
    %2737 = vmatpush.msra.mxu0 0.0
    %2738 = vmatpush.msra.mxu0 0.0
    %2739 = vmatpush.msra.mxu0 %v2716
    %2740 = vmatpush.msra.mxu0 %v2714
    %2741 = vmatmul.f32.gmra.mxu0 %v2720
    %v2742 = vpop.f32.mrf.mxu0
    %v2743 = vadd.f32 0.0, %v2742
    %2744 = vmatmul.f32.gmra.mxu0 %v2723
    %v2745 = vpop.f32.mrf.mxu0
    %v2746 = vadd.f32 0.0, %v2745
    %2747 = vdwg.mxu0
    %2748 = vrot.lane.b32.xlu0 %v2031, 104
    %v2749 = vpop.permute.xlu0 %2748
    %2750 = vrot.lane.b32.xlu0 %v2034, 104
    %v2751 = vpop.permute.xlu0 %2750
    %2752 = vrot.lane.b32.xlu0 %v2031, 72
    %v2753 = vpop.permute.xlu0 %2752
    %2754 = vrot.lane.b32.xlu0 %v2034, 72
    %v2755 = vpop.permute.xlu0 %2754
    %v2756 = vsel %vm358, %v2749, 0
    %v2758 = vsel %vm358, %v2751, 0
    %v2760 = vsel %vm358, %v2753, 0
    %v2762 = vsel %vm358, %v2755, 0
    %2764 = vmatpush.xpose.msra.mxu0 0.0
    %2765 = vmatpush.xpose.msra.mxu0 0.0
    %2766 = vmatpush.xpose.msra.mxu0 0.0
    %2767 = vmatpush.xpose.msra.mxu0 0.0
    %2768 = vmatpush.xpose.msra.mxu0 0.0
    %2769 = vmatpush.xpose.msra.mxu0 0.0
    %2770 = vmatpush.xpose.msra.mxu0 0.0
    %2771 = vmatpush.xpose.msra.mxu0 0.0
    %2772 = vmatpush.xpose.msra.mxu0 0.0
    %2773 = vmatpush.xpose.msra.mxu0 0.0
    %2774 = vmatpush.xpose.msra.mxu0 0.0
    %2775 = vmatpush.xpose.msra.mxu0 0.0
    %2776 = vmatpush.xpose.msra.mxu0 0.0
    %2777 = vmatpush.xpose.msra.mxu0 0.0
    %2778 = vmatpush.xpose.msra.mxu0 %v2762
    %2779 = vmatpush.xpose.msra.mxu0 %v2760
    %2780 = vmatmul.f32.gmra.mxu0 %v2756
    %v2781 = vpop.f32.mrf.mxu0
    %v2782 = vadd.f32 0.0, %v2781
    %2783 = vmatmul.f32.gmra.mxu0 %v2758
    %v2784 = vpop.f32.mrf.mxu0
    %v2785 = vadd.f32 0.0, %v2784
    %2786 = vdwg.mxu0
    %v2787 = vmul.f32 %v2782, 0.35355338
    %v2788 = vmul.f32 %v2785, 0.35355338
    %v2789 = vsel %vm636, %v2787, -inf
    %2790 = vmax.xlane.f32.xlu0 %v2789
    %v2791 = vpop.xlane.xlu0 %2790
    %v2792 = vsel %vm636, %v2788, -inf
    %2793 = vmax.xlane.f32.xlu0 %v2792
    %v2794 = vpop.xlane.xlu0 %2793
    %v2795 = vsub.f32 %v2787, %v2791
    %v2796 = vsub.f32 %v2788, %v2794
    %v2797 = vmul.f32 %v2795, 1.442695
    %v2798 = vpow.pop %v2797
    %v2799 = vmul.f32 %v2796, 1.442695
    %v2800 = vpow.pop %v2799
    %v2801 = vsel %vm636, %v2798, 0.0
    %2802 = vadd.xlane.f32.xlu0 %v2801
    %v2803 = vpop.xlane.xlu0 %2802
    %v2804 = vsel %vm636, %v2800, 0.0
    %2805 = vadd.xlane.f32.xlu0 %v2804
    %v2806 = vpop.xlane.xlu0 %2805
    %v2807 = vrcp.pop %v2803
    %v2808 = vrcp.pop %v2806
    %v2809 = vmul.f32 %v2798, %v2807
    %v2810 = vmul.f32 %v2800, %v2808
    %2811 = vrot.lane.b32.xlu0 %v2031, 40
    %v2812 = vpop.permute.xlu0 %2811
    %2813 = vrot.lane.b32.xlu0 %v2034, 40
    %v2814 = vpop.permute.xlu0 %2813
    %v2818 = vsel %vm636, %v2809, 0
    %v2821 = vsel %vm636, %v2810, 0
    %2823 = vmatpush.msra.mxu0 0.0
    %2824 = vmatpush.msra.mxu0 0.0
    %2825 = vmatpush.msra.mxu0 0.0
    %2826 = vmatpush.msra.mxu0 0.0
    %2827 = vmatpush.msra.mxu0 0.0
    %2828 = vmatpush.msra.mxu0 0.0
    %2829 = vmatpush.msra.mxu0 0.0
    %2830 = vmatpush.msra.mxu0 0.0
    %2831 = vmatpush.msra.mxu0 0.0
    %2832 = vmatpush.msra.mxu0 0.0
    %2833 = vmatpush.msra.mxu0 0.0
    %2834 = vmatpush.msra.mxu0 0.0
    %2835 = vmatpush.msra.mxu0 0.0
    %2836 = vmatpush.msra.mxu0 0.0
    %2837 = vmatpush.msra.mxu0 %v2814
    %2838 = vmatpush.msra.mxu0 %v2812
    %2839 = vmatmul.f32.gmra.mxu0 %v2818
    %v2840 = vpop.f32.mrf.mxu0
    %v2841 = vadd.f32 0.0, %v2840
    %2842 = vmatmul.f32.gmra.mxu0 %v2821
    %v2843 = vpop.f32.mrf.mxu0
    %v2844 = vadd.f32 0.0, %v2843
    %2845 = vdwg.mxu0
    %2848 = vrot.lane.b32.xlu0 %v2645, 8
    %v2849 = vpop.permute.xlu0 %2848
    %2850 = vrot.lane.b32.xlu0 %v2648, 8
    %v2851 = vpop.permute.xlu0 %2850
    %2856 = vrot.lane.b32.xlu0 %v2743, 16
    %v2857 = vpop.permute.xlu0 %2856
    %2858 = vrot.lane.b32.xlu0 %v2746, 16
    %v2859 = vpop.permute.xlu0 %2858
    %2864 = vrot.lane.b32.xlu0 %v2841, 24
    %v2865 = vpop.permute.xlu0 %2864
    %2866 = vrot.lane.b32.xlu0 %v2844, 24
    %v2867 = vpop.permute.xlu0 %2866
    %v2870 = vsel %vm358, %v2547, %v2849
    %v2871 = vsel %vm358, %v2550, %v2851
    %v2872 = vsel %vm636, %v2870, %v2857
    %v2873 = vsel %vm636, %v2871, %v2859
    %v2874 = vsel %vm638, %v2872, %v2865
    %v2875 = vsel %vm638, %v2873, %v2867
    %v2877 = vperm.slane %v1991, 0
    %v2880 = vsel %vm325, %v2454, 0
    %v2883 = vsel %vm325, %v2455, 0
    %v2886 = vsel %vm325, %v2874, 0
    %v2889 = vsel %vm325, %v2875, 0
    %2891 = vmatpush.msra.mxu0 0.0
    %2892 = vmatpush.msra.mxu0 0.0
    %2893 = vmatpush.msra.mxu0 0.0
    %2894 = vmatpush.msra.mxu0 0.0
    %2895 = vmatpush.msra.mxu0 0.0
    %2896 = vmatpush.msra.mxu0 0.0
    %2897 = vmatpush.msra.mxu0 0.0
    %2898 = vmatpush.msra.mxu0 0.0
    %2899 = vmatpush.msra.mxu0 0.0
    %2900 = vmatpush.msra.mxu0 0.0
    %2901 = vmatpush.msra.mxu0 0.0
    %2902 = vmatpush.msra.mxu0 0.0
    %2903 = vmatpush.msra.mxu0 %v1990
    %2904 = vmatpush.msra.mxu0 %v1989
    %2905 = vmatpush.msra.mxu0 %v1988
    %2906 = vmatpush.msra.mxu0 %v1987
    %2907 = vmatmul.f32.gmra.mxu0 %v2880
    %v2908 = vpop.f32.mrf.mxu0
    %v2909 = vadd.f32 %v2877, %v2908
    %2910 = vmatmul.f32.gmra.mxu0 %v2883
    %v2911 = vpop.f32.mrf.mxu0
    %v2912 = vadd.f32 %v2877, %v2911
    %2913 = vmatmul.f32.gmra.mxu0 %v2886
    %v2914 = vpop.f32.mrf.mxu0
    %v2915 = vadd.f32 %v2877, %v2914
    %2916 = vmatmul.f32.gmra.mxu0 %v2889
    %v2917 = vpop.f32.mrf.mxu0
    %v2918 = vadd.f32 %v2877, %v2917
    %2919 = vdwg.mxu0
    %v2920 = vadd.f32 %v301, %v2909
    %v2921 = vadd.f32 %v304, %v2912
    %v2922 = vadd.f32 %v307, %v2915
    %v2923 = vadd.f32 %v310, %v2918
    %v2924 = vld [vmem:[%s25] sm:$0x3]
    %v2925 = vsel %vm325, %v2920, 0.0
    %2926 = vadd.xlane.f32.xlu0 %v2925
    %v2927 = vpop.xlane.xlu0 %2926
    %v2928 = vsel %vm325, %v2921, 0.0
    %2929 = vadd.xlane.f32.xlu0 %v2928
    %v2930 = vpop.xlane.xlu0 %2929
    %v2931 = vsel %vm325, %v2922, 0.0
    %2932 = vadd.xlane.f32.xlu0 %v2931
    %v2933 = vpop.xlane.xlu0 %2932
    %v2934 = vsel %vm325, %v2923, 0.0
    %2935 = vadd.xlane.f32.xlu0 %v2934
    %v2936 = vpop.xlane.xlu0 %2935
    %v2937 = vmul.f32 %v2927, %v969
    %v2938 = vmul.f32 %v2930, %v969
    %v2939 = vmul.f32 %v2933, %v969
    %v2940 = vmul.f32 %v2936, %v969
    %v2941 = vsub.f32 %v2920, %v2937
    %v2942 = vsub.f32 %v2921, %v2938
    %v2943 = vsub.f32 %v2922, %v2939
    %v2944 = vsub.f32 %v2923, %v2940
    %v2945 = vmul.f32 %v2941, %v2941
    %v2946 = vmul.f32 %v2942, %v2942
    %v2947 = vmul.f32 %v2943, %v2943
    %v2948 = vmul.f32 %v2944, %v2944
    %v2949 = vsel %vm325, %v2945, 0.0
    %2950 = vadd.xlane.f32.xlu0 %v2949
    %v2951 = vpop.xlane.xlu0 %2950
    %v2952 = vsel %vm325, %v2946, 0.0
    %2953 = vadd.xlane.f32.xlu0 %v2952
    %v2954 = vpop.xlane.xlu0 %2953
    %v2955 = vsel %vm325, %v2947, 0.0
    %2956 = vadd.xlane.f32.xlu0 %v2955
    %v2957 = vpop.xlane.xlu0 %2956
    %v2958 = vsel %vm325, %v2948, 0.0
    %2959 = vadd.xlane.f32.xlu0 %v2958
    %v2960 = vpop.xlane.xlu0 %2959
    %v2961 = vmul.f32 %v2951, %v969
    %v2962 = vmul.f32 %v2954, %v969
    %v2963 = vmul.f32 %v2957, %v969
    %v2964 = vmul.f32 %v2960, %v969
    %v2965 = vadd.f32 %v2961, 1e-05
    %v2966 = vadd.f32 %v2962, 1e-05
    %v2967 = vadd.f32 %v2963, 1e-05
    %v2968 = vadd.f32 %v2964, 1e-05
    %v2969 = vrsqrt.pop %v2965
    %v2970 = vmul.f32 %v2969, %v2965
    %v2971 = vmul.f32 %v2970, %v2969
    %v2972 = vmul.f32 0.5, %v2971
    %v2973 = vsub.f32 1.5, %v2972
    %v2974 = vmul.f32 %v2969, %v2973
    %vm2975 = vweird.f32 %v2965
    %vm2976 = vweird.f32 %v2969
    %vm2977 = vmor %vm2975, %vm2976
    %v2978 = vsel %vm2977, %v2969, %v2974
    %v2979 = vrsqrt.pop %v2966
    %v2980 = vmul.f32 %v2979, %v2966
    %v2981 = vmul.f32 %v2980, %v2979
    %v2982 = vmul.f32 0.5, %v2981
    %v2983 = vsub.f32 1.5, %v2982
    %v2984 = vmul.f32 %v2979, %v2983
    %vm2985 = vweird.f32 %v2966
    %vm2986 = vweird.f32 %v2979
    %vm2987 = vmor %vm2985, %vm2986
    %v2988 = vsel %vm2987, %v2979, %v2984
    %v2989 = vrsqrt.pop %v2967
    %v2990 = vmul.f32 %v2989, %v2967
    %v2991 = vmul.f32 %v2990, %v2989
    %v2992 = vmul.f32 0.5, %v2991
    %v2993 = vsub.f32 1.5, %v2992
    %v2994 = vmul.f32 %v2989, %v2993
    %vm2995 = vweird.f32 %v2967
    %vm2996 = vweird.f32 %v2989
    %vm2997 = vmor %vm2995, %vm2996
    %v2998 = vsel %vm2997, %v2989, %v2994
    %v2999 = vrsqrt.pop %v2968
    %v3000 = vmul.f32 %v2999, %v2968
    %v3001 = vmul.f32 %v3000, %v2999
    %v3002 = vmul.f32 0.5, %v3001
    %v3003 = vsub.f32 1.5, %v3002
    %v3004 = vmul.f32 %v2999, %v3003
    %vm3005 = vweird.f32 %v2968
    %vm3006 = vweird.f32 %v2999
    %vm3007 = vmor %vm3005, %vm3006
    %v3008 = vsel %vm3007, %v2999, %v3004
    %v3009 = vmul.f32 %v2941, %v2978
    %v3010 = vmul.f32 %v2942, %v2988
    %v3011 = vmul.f32 %v2943, %v2998
    %v3012 = vmul.f32 %v2944, %v3008
    %v3013 = vperm.slane %v2924, 0
    %v3014 = vmul.f32 %v3009, %v3013
    %v3015 = vmul.f32 %v3010, %v3013
    %v3016 = vmul.f32 %v3011, %v3013
    %v3017 = vmul.f32 %v3012, %v3013
    %v3018 = vperm.slane %v2924, 1
    %v3019 = vadd.f32 %v3014, %v3018
    %v3020 = vadd.f32 %v3015, %v3018
    %v3021 = vadd.f32 %v3016, %v3018
    %v3022 = vadd.f32 %v3017, %v3018
    %v3023 = vld [vmem:[%s23] sm:$0xff]
    %v3024 = vld [vmem:[%s23 + $0x8] sm:$0xff]
    %v3025 = vld [vmem:[%s23 + $0x10] sm:$0xff]
    %v3026 = vld [vmem:[%s23 + $0x18] sm:$0xff]
    %v3027 = vld [vmem:[%s19] sm:$0x1]
    %v3028 = vld [vmem:[%s21] sm:$0xff]
    %v3029 = vld [vmem:[%s21 + $0x8] sm:$0xff]
    %v3030 = vld [vmem:[%s21 + $0x10] sm:$0xff]
    %v3031 = vld [vmem:[%s21 + $0x18] sm:$0xff]
    %v3032 = vld [vmem:[%s17] sm:$0x1]
    %v3034 = vperm.slane %v3027, 0
    %v3037 = vsel %vm325, %v3019, 0
    %v3040 = vsel %vm325, %v3020, 0
    %v3043 = vsel %vm325, %v3021, 0
    %v3046 = vsel %vm325, %v3022, 0
    %3048 = vmatpush.msra.mxu0 0.0
    %3049 = vmatpush.msra.mxu0 0.0
    %3050 = vmatpush.msra.mxu0 0.0
    %3051 = vmatpush.msra.mxu0 0.0
    %3052 = vmatpush.msra.mxu0 0.0
    %3053 = vmatpush.msra.mxu0 0.0
    %3054 = vmatpush.msra.mxu0 0.0
    %3055 = vmatpush.msra.mxu0 0.0
    %3056 = vmatpush.msra.mxu0 0.0
    %3057 = vmatpush.msra.mxu0 0.0
    %3058 = vmatpush.msra.mxu0 0.0
    %3059 = vmatpush.msra.mxu0 0.0
    %3060 = vmatpush.msra.mxu0 %v3026
    %3061 = vmatpush.msra.mxu0 %v3025
    %3062 = vmatpush.msra.mxu0 %v3024
    %3063 = vmatpush.msra.mxu0 %v3023
    %3064 = vmatmul.f32.gmra.mxu0 %v3037
    %v3065 = vpop.f32.mrf.mxu0
    %v3066 = vadd.f32 %v3034, %v3065
    %3067 = vmatmul.f32.gmra.mxu0 %v3040
    %v3068 = vpop.f32.mrf.mxu0
    %v3069 = vadd.f32 %v3034, %v3068
    %3070 = vmatmul.f32.gmra.mxu0 %v3043
    %v3071 = vpop.f32.mrf.mxu0
    %v3072 = vadd.f32 %v3034, %v3071
    %3073 = vmatmul.f32.gmra.mxu0 %v3046
    %v3074 = vpop.f32.mrf.mxu0
    %v3075 = vadd.f32 %v3034, %v3074
    %3076 = vdwg.mxu0
    %3081 = vrot.lane.b32.xlu0 %v3023, 96
    %v3082 = vpop.permute.xlu0 %3081
    %3083 = vrot.lane.b32.xlu0 %v3024, 96
    %v3084 = vpop.permute.xlu0 %3083
    %3085 = vrot.lane.b32.xlu0 %v3025, 96
    %v3086 = vpop.permute.xlu0 %3085
    %3087 = vrot.lane.b32.xlu0 %v3026, 96
    %v3088 = vpop.permute.xlu0 %3087
    %3093 = vrot.lane.b32.xlu0 %v3034, 96
    %v3094 = vpop.permute.xlu0 %3093
    %v3097 = vsel %vm325, %v1980, 0
    %v3100 = vsel %vm325, %v1981, 0
    %3102 = vmatpush.msra.mxu0 0.0
    %3103 = vmatpush.msra.mxu0 0.0
    %3104 = vmatpush.msra.mxu0 0.0
    %3105 = vmatpush.msra.mxu0 0.0
    %3106 = vmatpush.msra.mxu0 0.0
    %3107 = vmatpush.msra.mxu0 0.0
    %3108 = vmatpush.msra.mxu0 0.0
    %3109 = vmatpush.msra.mxu0 0.0
    %3110 = vmatpush.msra.mxu0 0.0
    %3111 = vmatpush.msra.mxu0 0.0
    %3112 = vmatpush.msra.mxu0 0.0
    %3113 = vmatpush.msra.mxu0 0.0
    %3114 = vmatpush.msra.mxu0 %v3088
    %3115 = vmatpush.msra.mxu0 %v3086
    %3116 = vmatpush.msra.mxu0 %v3084
    %3117 = vmatpush.msra.mxu0 %v3082
    %3118 = vmatmul.f32.gmra.mxu0 %v3097
    %v3119 = vpop.f32.mrf.mxu0
    %v3120 = vadd.f32 %v3094, %v3119
    %3121 = vmatmul.f32.gmra.mxu0 %v3100
    %v3122 = vpop.f32.mrf.mxu0
    %v3123 = vadd.f32 %v3094, %v3122
    %3124 = vdwg.mxu0
    %v3126 = vsel %vm358, %v3066, 0
    %v3129 = vsel %vm358, %v3069, 0
    %v3132 = vsel %vm358, %v3120, 0
    %3134 = vmatpush.xpose.msra.mxu0 0.0
    %3135 = vmatpush.xpose.msra.mxu0 0.0
    %3136 = vmatpush.xpose.msra.mxu0 0.0
    %3137 = vmatpush.xpose.msra.mxu0 0.0
    %3138 = vmatpush.xpose.msra.mxu0 0.0
    %3139 = vmatpush.xpose.msra.mxu0 0.0
    %3140 = vmatpush.xpose.msra.mxu0 0.0
    %3141 = vmatpush.xpose.msra.mxu0 0.0
    %3142 = vmatpush.xpose.msra.mxu0 0.0
    %3143 = vmatpush.xpose.msra.mxu0 0.0
    %3144 = vmatpush.xpose.msra.mxu0 0.0
    %3145 = vmatpush.xpose.msra.mxu0 0.0
    %3146 = vmatpush.xpose.msra.mxu0 0.0
    %3147 = vmatpush.xpose.msra.mxu0 0.0
    %3148 = vmatpush.xpose.msra.mxu0 0.0
    %3149 = vmatpush.xpose.msra.mxu0 %v3132
    %3150 = vmatmul.f32.gmra.mxu0 %v3126
    %v3151 = vpop.f32.mrf.mxu0
    %v3152 = vadd.f32 0.0, %v3151
    %3153 = vmatmul.f32.gmra.mxu0 %v3129
    %v3154 = vpop.f32.mrf.mxu0
    %v3155 = vadd.f32 0.0, %v3154
    %3156 = vdwg.mxu0
    %v3157 = vmul.f32 %v3152, 0.35355338
    %v3158 = vmul.f32 %v3155, 0.35355338
    %v3159 = vadd.f32 %v3157, %v250
    %v3160 = vadd.f32 %v3158, %v250
    %v3161 = vsel %vm358, %v3159, -inf
    %3162 = vmax.xlane.f32.xlu0 %v3161
    %v3163 = vpop.xlane.xlu0 %3162
    %v3164 = vsel %vm358, %v3160, -inf
    %3165 = vmax.xlane.f32.xlu0 %v3164
    %v3166 = vpop.xlane.xlu0 %3165
    %v3167 = vsub.f32 %v3159, %v3163
    %v3168 = vsub.f32 %v3160, %v3166
    %v3169 = vmul.f32 %v3167, 1.442695
    %v3170 = vpow.pop %v3169
    %v3171 = vmul.f32 %v3168, 1.442695
    %v3172 = vpow.pop %v3171
    %v3173 = vsel %vm358, %v3170, 0.0
    %3174 = vadd.xlane.f32.xlu0 %v3173
    %v3175 = vpop.xlane.xlu0 %3174
    %v3176 = vsel %vm358, %v3172, 0.0
    %3177 = vadd.xlane.f32.xlu0 %v3176
    %v3178 = vpop.xlane.xlu0 %3177
    %v3179 = vrcp.pop %v3175
    %v3180 = vrcp.pop %v3178
    %v3181 = vmul.f32 %v3170, %v3179
    %v3182 = vmul.f32 %v3172, %v3180
    %3183 = vrot.lane.b32.xlu0 %v3120, 96
    %v3184 = vpop.permute.xlu0 %3183
    %v3187 = vsel %vm358, %v3181, 0
    %v3190 = vsel %vm358, %v3182, 0
    %3192 = vmatpush.msra.mxu0 0.0
    %3193 = vmatpush.msra.mxu0 0.0
    %3194 = vmatpush.msra.mxu0 0.0
    %3195 = vmatpush.msra.mxu0 0.0
    %3196 = vmatpush.msra.mxu0 0.0
    %3197 = vmatpush.msra.mxu0 0.0
    %3198 = vmatpush.msra.mxu0 0.0
    %3199 = vmatpush.msra.mxu0 0.0
    %3200 = vmatpush.msra.mxu0 0.0
    %3201 = vmatpush.msra.mxu0 0.0
    %3202 = vmatpush.msra.mxu0 0.0
    %3203 = vmatpush.msra.mxu0 0.0
    %3204 = vmatpush.msra.mxu0 0.0
    %3205 = vmatpush.msra.mxu0 0.0
    %3206 = vmatpush.msra.mxu0 0.0
    %3207 = vmatpush.msra.mxu0 %v3184
    %3208 = vmatmul.f32.gmra.mxu0 %v3187
    %v3209 = vpop.f32.mrf.mxu0
    %v3210 = vadd.f32 0.0, %v3209
    %3211 = vmatmul.f32.gmra.mxu0 %v3190
    %v3212 = vpop.f32.mrf.mxu0
    %v3213 = vadd.f32 0.0, %v3212
    %3214 = vdwg.mxu0
    %3215 = vrot.lane.b32.xlu0 %v3066, 120
    %v3216 = vpop.permute.xlu0 %3215
    %3217 = vrot.lane.b32.xlu0 %v3069, 120
    %v3218 = vpop.permute.xlu0 %3217
    %3219 = vrot.lane.b32.xlu0 %v3120, 120
    %v3220 = vpop.permute.xlu0 %3219
    %v3221 = vsel %vm358, %v3216, 0
    %v3223 = vsel %vm358, %v3218, 0
    %v3225 = vsel %vm358, %v3220, 0
    %3227 = vmatpush.xpose.msra.mxu0 0.0
    %3228 = vmatpush.xpose.msra.mxu0 0.0
    %3229 = vmatpush.xpose.msra.mxu0 0.0
    %3230 = vmatpush.xpose.msra.mxu0 0.0
    %3231 = vmatpush.xpose.msra.mxu0 0.0
    %3232 = vmatpush.xpose.msra.mxu0 0.0
    %3233 = vmatpush.xpose.msra.mxu0 0.0
    %3234 = vmatpush.xpose.msra.mxu0 0.0
    %3235 = vmatpush.xpose.msra.mxu0 0.0
    %3236 = vmatpush.xpose.msra.mxu0 0.0
    %3237 = vmatpush.xpose.msra.mxu0 0.0
    %3238 = vmatpush.xpose.msra.mxu0 0.0
    %3239 = vmatpush.xpose.msra.mxu0 0.0
    %3240 = vmatpush.xpose.msra.mxu0 0.0
    %3241 = vmatpush.xpose.msra.mxu0 0.0
    %3242 = vmatpush.xpose.msra.mxu0 %v3225
    %3243 = vmatmul.f32.gmra.mxu0 %v3221
    %v3244 = vpop.f32.mrf.mxu0
    %v3245 = vadd.f32 0.0, %v3244
    %3246 = vmatmul.f32.gmra.mxu0 %v3223
    %v3247 = vpop.f32.mrf.mxu0
    %v3248 = vadd.f32 0.0, %v3247
    %3249 = vdwg.mxu0
    %v3250 = vmul.f32 %v3245, 0.35355338
    %v3251 = vmul.f32 %v3248, 0.35355338
    %v3252 = vadd.f32 %v3250, %v250
    %v3253 = vadd.f32 %v3251, %v250
    %v3254 = vsel %vm358, %v3252, -inf
    %3255 = vmax.xlane.f32.xlu0 %v3254
    %v3256 = vpop.xlane.xlu0 %3255
    %v3257 = vsel %vm358, %v3253, -inf
    %3258 = vmax.xlane.f32.xlu0 %v3257
    %v3259 = vpop.xlane.xlu0 %3258
    %v3260 = vsub.f32 %v3252, %v3256
    %v3261 = vsub.f32 %v3253, %v3259
    %v3262 = vmul.f32 %v3260, 1.442695
    %v3263 = vpow.pop %v3262
    %v3264 = vmul.f32 %v3261, 1.442695
    %v3265 = vpow.pop %v3264
    %v3266 = vsel %vm358, %v3263, 0.0
    %3267 = vadd.xlane.f32.xlu0 %v3266
    %v3268 = vpop.xlane.xlu0 %3267
    %v3269 = vsel %vm358, %v3265, 0.0
    %3270 = vadd.xlane.f32.xlu0 %v3269
    %v3271 = vpop.xlane.xlu0 %3270
    %v3272 = vrcp.pop %v3268
    %v3273 = vrcp.pop %v3271
    %v3274 = vmul.f32 %v3263, %v3272
    %v3275 = vmul.f32 %v3265, %v3273
    %3276 = vrot.lane.b32.xlu0 %v3120, 88
    %v3277 = vpop.permute.xlu0 %3276
    %v3280 = vsel %vm358, %v3274, 0
    %v3283 = vsel %vm358, %v3275, 0
    %3285 = vmatpush.msra.mxu0 0.0
    %3286 = vmatpush.msra.mxu0 0.0
    %3287 = vmatpush.msra.mxu0 0.0
    %3288 = vmatpush.msra.mxu0 0.0
    %3289 = vmatpush.msra.mxu0 0.0
    %3290 = vmatpush.msra.mxu0 0.0
    %3291 = vmatpush.msra.mxu0 0.0
    %3292 = vmatpush.msra.mxu0 0.0
    %3293 = vmatpush.msra.mxu0 0.0
    %3294 = vmatpush.msra.mxu0 0.0
    %3295 = vmatpush.msra.mxu0 0.0
    %3296 = vmatpush.msra.mxu0 0.0
    %3297 = vmatpush.msra.mxu0 0.0
    %3298 = vmatpush.msra.mxu0 0.0
    %3299 = vmatpush.msra.mxu0 0.0
    %3300 = vmatpush.msra.mxu0 %v3277
    %3301 = vmatmul.f32.gmra.mxu0 %v3280
    %v3302 = vpop.f32.mrf.mxu0
    %v3303 = vadd.f32 0.0, %v3302
    %3304 = vmatmul.f32.gmra.mxu0 %v3283
    %v3305 = vpop.f32.mrf.mxu0
    %v3306 = vadd.f32 0.0, %v3305
    %3307 = vdwg.mxu0
    %3308 = vrot.lane.b32.xlu0 %v3066, 112
    %v3309 = vpop.permute.xlu0 %3308
    %3310 = vrot.lane.b32.xlu0 %v3069, 112
    %v3311 = vpop.permute.xlu0 %3310
    %3312 = vrot.lane.b32.xlu0 %v3120, 112
    %v3313 = vpop.permute.xlu0 %3312
    %v3314 = vsel %vm358, %v3309, 0
    %v3316 = vsel %vm358, %v3311, 0
    %v3318 = vsel %vm358, %v3313, 0
    %3320 = vmatpush.xpose.msra.mxu0 0.0
    %3321 = vmatpush.xpose.msra.mxu0 0.0
    %3322 = vmatpush.xpose.msra.mxu0 0.0
    %3323 = vmatpush.xpose.msra.mxu0 0.0
    %3324 = vmatpush.xpose.msra.mxu0 0.0
    %3325 = vmatpush.xpose.msra.mxu0 0.0
    %3326 = vmatpush.xpose.msra.mxu0 0.0
    %3327 = vmatpush.xpose.msra.mxu0 0.0
    %3328 = vmatpush.xpose.msra.mxu0 0.0
    %3329 = vmatpush.xpose.msra.mxu0 0.0
    %3330 = vmatpush.xpose.msra.mxu0 0.0
    %3331 = vmatpush.xpose.msra.mxu0 0.0
    %3332 = vmatpush.xpose.msra.mxu0 0.0
    %3333 = vmatpush.xpose.msra.mxu0 0.0
    %3334 = vmatpush.xpose.msra.mxu0 0.0
    %3335 = vmatpush.xpose.msra.mxu0 %v3318
    %3336 = vmatmul.f32.gmra.mxu0 %v3314
    %v3337 = vpop.f32.mrf.mxu0
    %v3338 = vadd.f32 0.0, %v3337
    %3339 = vmatmul.f32.gmra.mxu0 %v3316
    %v3340 = vpop.f32.mrf.mxu0
    %v3341 = vadd.f32 0.0, %v3340
    %3342 = vdwg.mxu0
    %v3343 = vmul.f32 %v3338, 0.35355338
    %v3344 = vmul.f32 %v3341, 0.35355338
    %v3345 = vadd.f32 %v3343, %v250
    %v3346 = vadd.f32 %v3344, %v250
    %v3347 = vsel %vm358, %v3345, -inf
    %3348 = vmax.xlane.f32.xlu0 %v3347
    %v3349 = vpop.xlane.xlu0 %3348
    %v3350 = vsel %vm358, %v3346, -inf
    %3351 = vmax.xlane.f32.xlu0 %v3350
    %v3352 = vpop.xlane.xlu0 %3351
    %v3353 = vsub.f32 %v3345, %v3349
    %v3354 = vsub.f32 %v3346, %v3352
    %v3355 = vmul.f32 %v3353, 1.442695
    %v3356 = vpow.pop %v3355
    %v3357 = vmul.f32 %v3354, 1.442695
    %v3358 = vpow.pop %v3357
    %v3359 = vsel %vm358, %v3356, 0.0
    %3360 = vadd.xlane.f32.xlu0 %v3359
    %v3361 = vpop.xlane.xlu0 %3360
    %v3362 = vsel %vm358, %v3358, 0.0
    %3363 = vadd.xlane.f32.xlu0 %v3362
    %v3364 = vpop.xlane.xlu0 %3363
    %v3365 = vrcp.pop %v3361
    %v3366 = vrcp.pop %v3364
    %v3367 = vmul.f32 %v3356, %v3365
    %v3368 = vmul.f32 %v3358, %v3366
    %3369 = vrot.lane.b32.xlu0 %v3120, 80
    %v3370 = vpop.permute.xlu0 %3369
    %v3373 = vsel %vm358, %v3367, 0
    %v3376 = vsel %vm358, %v3368, 0
    %3378 = vmatpush.msra.mxu0 0.0
    %3379 = vmatpush.msra.mxu0 0.0
    %3380 = vmatpush.msra.mxu0 0.0
    %3381 = vmatpush.msra.mxu0 0.0
    %3382 = vmatpush.msra.mxu0 0.0
    %3383 = vmatpush.msra.mxu0 0.0
    %3384 = vmatpush.msra.mxu0 0.0
    %3385 = vmatpush.msra.mxu0 0.0
    %3386 = vmatpush.msra.mxu0 0.0
    %3387 = vmatpush.msra.mxu0 0.0
    %3388 = vmatpush.msra.mxu0 0.0
    %3389 = vmatpush.msra.mxu0 0.0
    %3390 = vmatpush.msra.mxu0 0.0
    %3391 = vmatpush.msra.mxu0 0.0
    %3392 = vmatpush.msra.mxu0 0.0
    %3393 = vmatpush.msra.mxu0 %v3370
    %3394 = vmatmul.f32.gmra.mxu0 %v3373
    %v3395 = vpop.f32.mrf.mxu0
    %v3396 = vadd.f32 0.0, %v3395
    %3397 = vmatmul.f32.gmra.mxu0 %v3376
    %v3398 = vpop.f32.mrf.mxu0
    %v3399 = vadd.f32 0.0, %v3398
    %3400 = vdwg.mxu0
    %3401 = vrot.lane.b32.xlu0 %v3066, 104
    %v3402 = vpop.permute.xlu0 %3401
    %3403 = vrot.lane.b32.xlu0 %v3069, 104
    %v3404 = vpop.permute.xlu0 %3403
    %3405 = vrot.lane.b32.xlu0 %v3120, 104
    %v3406 = vpop.permute.xlu0 %3405
    %v3407 = vsel %vm358, %v3402, 0
    %v3409 = vsel %vm358, %v3404, 0
    %v3411 = vsel %vm358, %v3406, 0
    %3413 = vmatpush.xpose.msra.mxu0 0.0
    %3414 = vmatpush.xpose.msra.mxu0 0.0
    %3415 = vmatpush.xpose.msra.mxu0 0.0
    %3416 = vmatpush.xpose.msra.mxu0 0.0
    %3417 = vmatpush.xpose.msra.mxu0 0.0
    %3418 = vmatpush.xpose.msra.mxu0 0.0
    %3419 = vmatpush.xpose.msra.mxu0 0.0
    %3420 = vmatpush.xpose.msra.mxu0 0.0
    %3421 = vmatpush.xpose.msra.mxu0 0.0
    %3422 = vmatpush.xpose.msra.mxu0 0.0
    %3423 = vmatpush.xpose.msra.mxu0 0.0
    %3424 = vmatpush.xpose.msra.mxu0 0.0
    %3425 = vmatpush.xpose.msra.mxu0 0.0
    %3426 = vmatpush.xpose.msra.mxu0 0.0
    %3427 = vmatpush.xpose.msra.mxu0 0.0
    %3428 = vmatpush.xpose.msra.mxu0 %v3411
    %3429 = vmatmul.f32.gmra.mxu0 %v3407
    %v3430 = vpop.f32.mrf.mxu0
    %v3431 = vadd.f32 0.0, %v3430
    %3432 = vmatmul.f32.gmra.mxu0 %v3409
    %v3433 = vpop.f32.mrf.mxu0
    %v3434 = vadd.f32 0.0, %v3433
    %3435 = vdwg.mxu0
    %v3436 = vmul.f32 %v3431, 0.35355338
    %v3437 = vmul.f32 %v3434, 0.35355338
    %v3438 = vadd.f32 %v3436, %v250
    %v3439 = vadd.f32 %v3437, %v250
    %v3440 = vsel %vm358, %v3438, -inf
    %3441 = vmax.xlane.f32.xlu0 %v3440
    %v3442 = vpop.xlane.xlu0 %3441
    %v3443 = vsel %vm358, %v3439, -inf
    %3444 = vmax.xlane.f32.xlu0 %v3443
    %v3445 = vpop.xlane.xlu0 %3444
    %v3446 = vsub.f32 %v3438, %v3442
    %v3447 = vsub.f32 %v3439, %v3445
    %v3448 = vmul.f32 %v3446, 1.442695
    %v3449 = vpow.pop %v3448
    %v3450 = vmul.f32 %v3447, 1.442695
    %v3451 = vpow.pop %v3450
    %v3452 = vsel %vm358, %v3449, 0.0
    %3453 = vadd.xlane.f32.xlu0 %v3452
    %v3454 = vpop.xlane.xlu0 %3453
    %v3455 = vsel %vm358, %v3451, 0.0
    %3456 = vadd.xlane.f32.xlu0 %v3455
    %v3457 = vpop.xlane.xlu0 %3456
    %v3458 = vrcp.pop %v3454
    %v3459 = vrcp.pop %v3457
    %v3460 = vmul.f32 %v3449, %v3458
    %v3461 = vmul.f32 %v3451, %v3459
    %3462 = vrot.lane.b32.xlu0 %v3120, 72
    %v3463 = vpop.permute.xlu0 %3462
    %v3466 = vsel %vm358, %v3460, 0
    %v3469 = vsel %vm358, %v3461, 0
    %3471 = vmatpush.msra.mxu0 0.0
    %3472 = vmatpush.msra.mxu0 0.0
    %3473 = vmatpush.msra.mxu0 0.0
    %3474 = vmatpush.msra.mxu0 0.0
    %3475 = vmatpush.msra.mxu0 0.0
    %3476 = vmatpush.msra.mxu0 0.0
    %3477 = vmatpush.msra.mxu0 0.0
    %3478 = vmatpush.msra.mxu0 0.0
    %3479 = vmatpush.msra.mxu0 0.0
    %3480 = vmatpush.msra.mxu0 0.0
    %3481 = vmatpush.msra.mxu0 0.0
    %3482 = vmatpush.msra.mxu0 0.0
    %3483 = vmatpush.msra.mxu0 0.0
    %3484 = vmatpush.msra.mxu0 0.0
    %3485 = vmatpush.msra.mxu0 0.0
    %3486 = vmatpush.msra.mxu0 %v3463
    %3487 = vmatmul.f32.gmra.mxu0 %v3466
    %v3488 = vpop.f32.mrf.mxu0
    %v3489 = vadd.f32 0.0, %v3488
    %3490 = vmatmul.f32.gmra.mxu0 %v3469
    %v3491 = vpop.f32.mrf.mxu0
    %v3492 = vadd.f32 0.0, %v3491
    %3493 = vdwg.mxu0
    %3496 = vrot.lane.b32.xlu0 %v3303, 8
    %v3497 = vpop.permute.xlu0 %3496
    %3498 = vrot.lane.b32.xlu0 %v3306, 8
    %v3499 = vpop.permute.xlu0 %3498
    %3504 = vrot.lane.b32.xlu0 %v3396, 16
    %v3505 = vpop.permute.xlu0 %3504
    %3506 = vrot.lane.b32.xlu0 %v3399, 16
    %v3507 = vpop.permute.xlu0 %3506
    %3512 = vrot.lane.b32.xlu0 %v3489, 24
    %v3513 = vpop.permute.xlu0 %3512
    %3514 = vrot.lane.b32.xlu0 %v3492, 24
    %v3515 = vpop.permute.xlu0 %3514
    %v3518 = vsel %vm358, %v3210, %v3497
    %v3519 = vsel %vm358, %v3213, %v3499
    %v3520 = vsel %vm636, %v3518, %v3505
    %v3521 = vsel %vm636, %v3519, %v3507
    %v3522 = vsel %vm638, %v3520, %v3513
    %v3523 = vsel %vm638, %v3521, %v3515
    %v3525 = vsel %vm358, %v3072, 0
    %v3528 = vsel %vm358, %v3075, 0
    %v3531 = vsel %vm358, %v3123, 0
    %3533 = vmatpush.xpose.msra.mxu0 0.0
    %3534 = vmatpush.xpose.msra.mxu0 0.0
    %3535 = vmatpush.xpose.msra.mxu0 0.0
    %3536 = vmatpush.xpose.msra.mxu0 0.0
    %3537 = vmatpush.xpose.msra.mxu0 0.0
    %3538 = vmatpush.xpose.msra.mxu0 0.0
    %3539 = vmatpush.xpose.msra.mxu0 0.0
    %3540 = vmatpush.xpose.msra.mxu0 0.0
    %3541 = vmatpush.xpose.msra.mxu0 0.0
    %3542 = vmatpush.xpose.msra.mxu0 0.0
    %3543 = vmatpush.xpose.msra.mxu0 0.0
    %3544 = vmatpush.xpose.msra.mxu0 0.0
    %3545 = vmatpush.xpose.msra.mxu0 0.0
    %3546 = vmatpush.xpose.msra.mxu0 0.0
    %3547 = vmatpush.xpose.msra.mxu0 0.0
    %3548 = vmatpush.xpose.msra.mxu0 %v3531
    %3549 = vmatmul.f32.gmra.mxu0 %v3525
    %v3550 = vpop.f32.mrf.mxu0
    %v3551 = vadd.f32 0.0, %v3550
    %3552 = vmatmul.f32.gmra.mxu0 %v3528
    %v3553 = vpop.f32.mrf.mxu0
    %v3554 = vadd.f32 0.0, %v3553
    %3555 = vdwg.mxu0
    %v3556 = vmul.f32 %v3551, 0.35355338
    %v3557 = vmul.f32 %v3554, 0.35355338
    %v3558 = vadd.f32 %v3556, %v252
    %v3559 = vadd.f32 %v3557, %v252
    %v3560 = vsel %vm358, %v3558, -inf
    %3561 = vmax.xlane.f32.xlu0 %v3560
    %v3562 = vpop.xlane.xlu0 %3561
    %v3563 = vsel %vm358, %v3559, -inf
    %3564 = vmax.xlane.f32.xlu0 %v3563
    %v3565 = vpop.xlane.xlu0 %3564
    %v3566 = vsub.f32 %v3558, %v3562
    %v3567 = vsub.f32 %v3559, %v3565
    %v3568 = vmul.f32 %v3566, 1.442695
    %v3569 = vpow.pop %v3568
    %v3570 = vmul.f32 %v3567, 1.442695
    %v3571 = vpow.pop %v3570
    %v3572 = vsel %vm358, %v3569, 0.0
    %3573 = vadd.xlane.f32.xlu0 %v3572
    %v3574 = vpop.xlane.xlu0 %3573
    %v3575 = vsel %vm358, %v3571, 0.0
    %3576 = vadd.xlane.f32.xlu0 %v3575
    %v3577 = vpop.xlane.xlu0 %3576
    %v3578 = vrcp.pop %v3574
    %v3579 = vrcp.pop %v3577
    %v3580 = vmul.f32 %v3569, %v3578
    %v3581 = vmul.f32 %v3571, %v3579
    %3582 = vrot.lane.b32.xlu0 %v3123, 96
    %v3583 = vpop.permute.xlu0 %3582
    %v3586 = vsel %vm358, %v3580, 0
    %v3589 = vsel %vm358, %v3581, 0
    %3591 = vmatpush.msra.mxu0 0.0
    %3592 = vmatpush.msra.mxu0 0.0
    %3593 = vmatpush.msra.mxu0 0.0
    %3594 = vmatpush.msra.mxu0 0.0
    %3595 = vmatpush.msra.mxu0 0.0
    %3596 = vmatpush.msra.mxu0 0.0
    %3597 = vmatpush.msra.mxu0 0.0
    %3598 = vmatpush.msra.mxu0 0.0
    %3599 = vmatpush.msra.mxu0 0.0
    %3600 = vmatpush.msra.mxu0 0.0
    %3601 = vmatpush.msra.mxu0 0.0
    %3602 = vmatpush.msra.mxu0 0.0
    %3603 = vmatpush.msra.mxu0 0.0
    %3604 = vmatpush.msra.mxu0 0.0
    %3605 = vmatpush.msra.mxu0 0.0
    %3606 = vmatpush.msra.mxu0 %v3583
    %3607 = vmatmul.f32.gmra.mxu0 %v3586
    %v3608 = vpop.f32.mrf.mxu0
    %v3609 = vadd.f32 0.0, %v3608
    %3610 = vmatmul.f32.gmra.mxu0 %v3589
    %v3611 = vpop.f32.mrf.mxu0
    %v3612 = vadd.f32 0.0, %v3611
    %3613 = vdwg.mxu0
    %3614 = vrot.lane.b32.xlu0 %v3072, 120
    %v3615 = vpop.permute.xlu0 %3614
    %3616 = vrot.lane.b32.xlu0 %v3075, 120
    %v3617 = vpop.permute.xlu0 %3616
    %3618 = vrot.lane.b32.xlu0 %v3123, 120
    %v3619 = vpop.permute.xlu0 %3618
    %v3620 = vsel %vm358, %v3615, 0
    %v3622 = vsel %vm358, %v3617, 0
    %v3624 = vsel %vm358, %v3619, 0
    %3626 = vmatpush.xpose.msra.mxu0 0.0
    %3627 = vmatpush.xpose.msra.mxu0 0.0
    %3628 = vmatpush.xpose.msra.mxu0 0.0
    %3629 = vmatpush.xpose.msra.mxu0 0.0
    %3630 = vmatpush.xpose.msra.mxu0 0.0
    %3631 = vmatpush.xpose.msra.mxu0 0.0
    %3632 = vmatpush.xpose.msra.mxu0 0.0
    %3633 = vmatpush.xpose.msra.mxu0 0.0
    %3634 = vmatpush.xpose.msra.mxu0 0.0
    %3635 = vmatpush.xpose.msra.mxu0 0.0
    %3636 = vmatpush.xpose.msra.mxu0 0.0
    %3637 = vmatpush.xpose.msra.mxu0 0.0
    %3638 = vmatpush.xpose.msra.mxu0 0.0
    %3639 = vmatpush.xpose.msra.mxu0 0.0
    %3640 = vmatpush.xpose.msra.mxu0 0.0
    %3641 = vmatpush.xpose.msra.mxu0 %v3624
    %3642 = vmatmul.f32.gmra.mxu0 %v3620
    %v3643 = vpop.f32.mrf.mxu0
    %v3644 = vadd.f32 0.0, %v3643
    %3645 = vmatmul.f32.gmra.mxu0 %v3622
    %v3646 = vpop.f32.mrf.mxu0
    %v3647 = vadd.f32 0.0, %v3646
    %3648 = vdwg.mxu0
    %v3649 = vmul.f32 %v3644, 0.35355338
    %v3650 = vmul.f32 %v3647, 0.35355338
    %v3651 = vadd.f32 %v3649, %v252
    %v3652 = vadd.f32 %v3650, %v252
    %v3653 = vsel %vm358, %v3651, -inf
    %3654 = vmax.xlane.f32.xlu0 %v3653
    %v3655 = vpop.xlane.xlu0 %3654
    %v3656 = vsel %vm358, %v3652, -inf
    %3657 = vmax.xlane.f32.xlu0 %v3656
    %v3658 = vpop.xlane.xlu0 %3657
    %v3659 = vsub.f32 %v3651, %v3655
    %v3660 = vsub.f32 %v3652, %v3658
    %v3661 = vmul.f32 %v3659, 1.442695
    %v3662 = vpow.pop %v3661
    %v3663 = vmul.f32 %v3660, 1.442695
    %v3664 = vpow.pop %v3663
    %v3665 = vsel %vm358, %v3662, 0.0
    %3666 = vadd.xlane.f32.xlu0 %v3665
    %v3667 = vpop.xlane.xlu0 %3666
    %v3668 = vsel %vm358, %v3664, 0.0
    %3669 = vadd.xlane.f32.xlu0 %v3668
    %v3670 = vpop.xlane.xlu0 %3669
    %v3671 = vrcp.pop %v3667
    %v3672 = vrcp.pop %v3670
    %v3673 = vmul.f32 %v3662, %v3671
    %v3674 = vmul.f32 %v3664, %v3672
    %3675 = vrot.lane.b32.xlu0 %v3123, 88
    %v3676 = vpop.permute.xlu0 %3675
    %v3679 = vsel %vm358, %v3673, 0
    %v3682 = vsel %vm358, %v3674, 0
    %3684 = vmatpush.msra.mxu0 0.0
    %3685 = vmatpush.msra.mxu0 0.0
    %3686 = vmatpush.msra.mxu0 0.0
    %3687 = vmatpush.msra.mxu0 0.0
    %3688 = vmatpush.msra.mxu0 0.0
    %3689 = vmatpush.msra.mxu0 0.0
    %3690 = vmatpush.msra.mxu0 0.0
    %3691 = vmatpush.msra.mxu0 0.0
    %3692 = vmatpush.msra.mxu0 0.0
    %3693 = vmatpush.msra.mxu0 0.0
    %3694 = vmatpush.msra.mxu0 0.0
    %3695 = vmatpush.msra.mxu0 0.0
    %3696 = vmatpush.msra.mxu0 0.0
    %3697 = vmatpush.msra.mxu0 0.0
    %3698 = vmatpush.msra.mxu0 0.0
    %3699 = vmatpush.msra.mxu0 %v3676
    %3700 = vmatmul.f32.gmra.mxu0 %v3679
    %v3701 = vpop.f32.mrf.mxu0
    %v3702 = vadd.f32 0.0, %v3701
    %3703 = vmatmul.f32.gmra.mxu0 %v3682
    %v3704 = vpop.f32.mrf.mxu0
    %v3705 = vadd.f32 0.0, %v3704
    %3706 = vdwg.mxu0
    %3707 = vrot.lane.b32.xlu0 %v3072, 112
    %v3708 = vpop.permute.xlu0 %3707
    %3709 = vrot.lane.b32.xlu0 %v3075, 112
    %v3710 = vpop.permute.xlu0 %3709
    %3711 = vrot.lane.b32.xlu0 %v3123, 112
    %v3712 = vpop.permute.xlu0 %3711
    %v3713 = vsel %vm358, %v3708, 0
    %v3715 = vsel %vm358, %v3710, 0
    %v3717 = vsel %vm358, %v3712, 0
    %3719 = vmatpush.xpose.msra.mxu0 0.0
    %3720 = vmatpush.xpose.msra.mxu0 0.0
    %3721 = vmatpush.xpose.msra.mxu0 0.0
    %3722 = vmatpush.xpose.msra.mxu0 0.0
    %3723 = vmatpush.xpose.msra.mxu0 0.0
    %3724 = vmatpush.xpose.msra.mxu0 0.0
    %3725 = vmatpush.xpose.msra.mxu0 0.0
    %3726 = vmatpush.xpose.msra.mxu0 0.0
    %3727 = vmatpush.xpose.msra.mxu0 0.0
    %3728 = vmatpush.xpose.msra.mxu0 0.0
    %3729 = vmatpush.xpose.msra.mxu0 0.0
    %3730 = vmatpush.xpose.msra.mxu0 0.0
    %3731 = vmatpush.xpose.msra.mxu0 0.0
    %3732 = vmatpush.xpose.msra.mxu0 0.0
    %3733 = vmatpush.xpose.msra.mxu0 0.0
    %3734 = vmatpush.xpose.msra.mxu0 %v3717
    %3735 = vmatmul.f32.gmra.mxu0 %v3713
    %v3736 = vpop.f32.mrf.mxu0
    %v3737 = vadd.f32 0.0, %v3736
    %3738 = vmatmul.f32.gmra.mxu0 %v3715
    %v3739 = vpop.f32.mrf.mxu0
    %v3740 = vadd.f32 0.0, %v3739
    %3741 = vdwg.mxu0
    %v3742 = vmul.f32 %v3737, 0.35355338
    %v3743 = vmul.f32 %v3740, 0.35355338
    %v3744 = vadd.f32 %v3742, %v252
    %v3745 = vadd.f32 %v3743, %v252
    %v3746 = vsel %vm358, %v3744, -inf
    %3747 = vmax.xlane.f32.xlu0 %v3746
    %v3748 = vpop.xlane.xlu0 %3747
    %v3749 = vsel %vm358, %v3745, -inf
    %3750 = vmax.xlane.f32.xlu0 %v3749
    %v3751 = vpop.xlane.xlu0 %3750
    %v3752 = vsub.f32 %v3744, %v3748
    %v3753 = vsub.f32 %v3745, %v3751
    %v3754 = vmul.f32 %v3752, 1.442695
    %v3755 = vpow.pop %v3754
    %v3756 = vmul.f32 %v3753, 1.442695
    %v3757 = vpow.pop %v3756
    %v3758 = vsel %vm358, %v3755, 0.0
    %3759 = vadd.xlane.f32.xlu0 %v3758
    %v3760 = vpop.xlane.xlu0 %3759
    %v3761 = vsel %vm358, %v3757, 0.0
    %3762 = vadd.xlane.f32.xlu0 %v3761
    %v3763 = vpop.xlane.xlu0 %3762
    %v3764 = vrcp.pop %v3760
    %v3765 = vrcp.pop %v3763
    %v3766 = vmul.f32 %v3755, %v3764
    %v3767 = vmul.f32 %v3757, %v3765
    %3768 = vrot.lane.b32.xlu0 %v3123, 80
    %v3769 = vpop.permute.xlu0 %3768
    %v3772 = vsel %vm358, %v3766, 0
    %v3775 = vsel %vm358, %v3767, 0
    %3777 = vmatpush.msra.mxu0 0.0
    %3778 = vmatpush.msra.mxu0 0.0
    %3779 = vmatpush.msra.mxu0 0.0
    %3780 = vmatpush.msra.mxu0 0.0
    %3781 = vmatpush.msra.mxu0 0.0
    %3782 = vmatpush.msra.mxu0 0.0
    %3783 = vmatpush.msra.mxu0 0.0
    %3784 = vmatpush.msra.mxu0 0.0
    %3785 = vmatpush.msra.mxu0 0.0
    %3786 = vmatpush.msra.mxu0 0.0
    %3787 = vmatpush.msra.mxu0 0.0
    %3788 = vmatpush.msra.mxu0 0.0
    %3789 = vmatpush.msra.mxu0 0.0
    %3790 = vmatpush.msra.mxu0 0.0
    %3791 = vmatpush.msra.mxu0 0.0
    %3792 = vmatpush.msra.mxu0 %v3769
    %3793 = vmatmul.f32.gmra.mxu0 %v3772
    %v3794 = vpop.f32.mrf.mxu0
    %v3795 = vadd.f32 0.0, %v3794
    %3796 = vmatmul.f32.gmra.mxu0 %v3775
    %v3797 = vpop.f32.mrf.mxu0
    %v3798 = vadd.f32 0.0, %v3797
    %3799 = vdwg.mxu0
    %3800 = vrot.lane.b32.xlu0 %v3072, 104
    %v3801 = vpop.permute.xlu0 %3800
    %3802 = vrot.lane.b32.xlu0 %v3075, 104
    %v3803 = vpop.permute.xlu0 %3802
    %3804 = vrot.lane.b32.xlu0 %v3123, 104
    %v3805 = vpop.permute.xlu0 %3804
    %v3806 = vsel %vm358, %v3801, 0
    %v3808 = vsel %vm358, %v3803, 0
    %v3810 = vsel %vm358, %v3805, 0
    %3812 = vmatpush.xpose.msra.mxu0 0.0
    %3813 = vmatpush.xpose.msra.mxu0 0.0
    %3814 = vmatpush.xpose.msra.mxu0 0.0
    %3815 = vmatpush.xpose.msra.mxu0 0.0
    %3816 = vmatpush.xpose.msra.mxu0 0.0
    %3817 = vmatpush.xpose.msra.mxu0 0.0
    %3818 = vmatpush.xpose.msra.mxu0 0.0
    %3819 = vmatpush.xpose.msra.mxu0 0.0
    %3820 = vmatpush.xpose.msra.mxu0 0.0
    %3821 = vmatpush.xpose.msra.mxu0 0.0
    %3822 = vmatpush.xpose.msra.mxu0 0.0
    %3823 = vmatpush.xpose.msra.mxu0 0.0
    %3824 = vmatpush.xpose.msra.mxu0 0.0
    %3825 = vmatpush.xpose.msra.mxu0 0.0
    %3826 = vmatpush.xpose.msra.mxu0 0.0
    %3827 = vmatpush.xpose.msra.mxu0 %v3810
    %3828 = vmatmul.f32.gmra.mxu0 %v3806
    %v3829 = vpop.f32.mrf.mxu0
    %v3830 = vadd.f32 0.0, %v3829
    %3831 = vmatmul.f32.gmra.mxu0 %v3808
    %v3832 = vpop.f32.mrf.mxu0
    %v3833 = vadd.f32 0.0, %v3832
    %3834 = vdwg.mxu0
    %v3835 = vmul.f32 %v3830, 0.35355338
    %v3836 = vmul.f32 %v3833, 0.35355338
    %v3837 = vadd.f32 %v3835, %v252
    %v3838 = vadd.f32 %v3836, %v252
    %v3839 = vsel %vm358, %v3837, -inf
    %3840 = vmax.xlane.f32.xlu0 %v3839
    %v3841 = vpop.xlane.xlu0 %3840
    %v3842 = vsel %vm358, %v3838, -inf
    %3843 = vmax.xlane.f32.xlu0 %v3842
    %v3844 = vpop.xlane.xlu0 %3843
    %v3845 = vsub.f32 %v3837, %v3841
    %v3846 = vsub.f32 %v3838, %v3844
    %v3847 = vmul.f32 %v3845, 1.442695
    %v3848 = vpow.pop %v3847
    %v3849 = vmul.f32 %v3846, 1.442695
    %v3850 = vpow.pop %v3849
    %v3851 = vsel %vm358, %v3848, 0.0
    %3852 = vadd.xlane.f32.xlu0 %v3851
    %v3853 = vpop.xlane.xlu0 %3852
    %v3854 = vsel %vm358, %v3850, 0.0
    %3855 = vadd.xlane.f32.xlu0 %v3854
    %v3856 = vpop.xlane.xlu0 %3855
    %v3857 = vrcp.pop %v3853
    %v3858 = vrcp.pop %v3856
    %v3859 = vmul.f32 %v3848, %v3857
    %v3860 = vmul.f32 %v3850, %v3858
    %3861 = vrot.lane.b32.xlu0 %v3123, 72
    %v3862 = vpop.permute.xlu0 %3861
    %v3865 = vsel %vm358, %v3859, 0
    %v3868 = vsel %vm358, %v3860, 0
    %3870 = vmatpush.msra.mxu0 0.0
    %3871 = vmatpush.msra.mxu0 0.0
    %3872 = vmatpush.msra.mxu0 0.0
    %3873 = vmatpush.msra.mxu0 0.0
    %3874 = vmatpush.msra.mxu0 0.0
    %3875 = vmatpush.msra.mxu0 0.0
    %3876 = vmatpush.msra.mxu0 0.0
    %3877 = vmatpush.msra.mxu0 0.0
    %3878 = vmatpush.msra.mxu0 0.0
    %3879 = vmatpush.msra.mxu0 0.0
    %3880 = vmatpush.msra.mxu0 0.0
    %3881 = vmatpush.msra.mxu0 0.0
    %3882 = vmatpush.msra.mxu0 0.0
    %3883 = vmatpush.msra.mxu0 0.0
    %3884 = vmatpush.msra.mxu0 0.0
    %3885 = vmatpush.msra.mxu0 %v3862
    %3886 = vmatmul.f32.gmra.mxu0 %v3865
    %v3887 = vpop.f32.mrf.mxu0
    %v3888 = vadd.f32 0.0, %v3887
    %3889 = vmatmul.f32.gmra.mxu0 %v3868
    %v3890 = vpop.f32.mrf.mxu0
    %v3891 = vadd.f32 0.0, %v3890
    %3892 = vdwg.mxu0
    %3895 = vrot.lane.b32.xlu0 %v3702, 8
    %v3896 = vpop.permute.xlu0 %3895
    %3897 = vrot.lane.b32.xlu0 %v3705, 8
    %v3898 = vpop.permute.xlu0 %3897
    %3903 = vrot.lane.b32.xlu0 %v3795, 16
    %v3904 = vpop.permute.xlu0 %3903
    %3905 = vrot.lane.b32.xlu0 %v3798, 16
    %v3906 = vpop.permute.xlu0 %3905
    %3911 = vrot.lane.b32.xlu0 %v3888, 24
    %v3912 = vpop.permute.xlu0 %3911
    %3913 = vrot.lane.b32.xlu0 %v3891, 24
    %v3914 = vpop.permute.xlu0 %3913
    %v3917 = vsel %vm358, %v3609, %v3896
    %v3918 = vsel %vm358, %v3612, %v3898
    %v3919 = vsel %vm636, %v3917, %v3904
    %v3920 = vsel %vm636, %v3918, %v3906
    %v3921 = vsel %vm638, %v3919, %v3912
    %v3922 = vsel %vm638, %v3920, %v3914
    %v3924 = vperm.slane %v3032, 0
    %v3927 = vsel %vm325, %v3522, 0
    %v3930 = vsel %vm325, %v3523, 0
    %v3933 = vsel %vm325, %v3921, 0
    %v3936 = vsel %vm325, %v3922, 0
    %3938 = vmatpush.msra.mxu0 0.0
    %3939 = vmatpush.msra.mxu0 0.0
    %3940 = vmatpush.msra.mxu0 0.0
    %3941 = vmatpush.msra.mxu0 0.0
    %3942 = vmatpush.msra.mxu0 0.0
    %3943 = vmatpush.msra.mxu0 0.0
    %3944 = vmatpush.msra.mxu0 0.0
    %3945 = vmatpush.msra.mxu0 0.0
    %3946 = vmatpush.msra.mxu0 0.0
    %3947 = vmatpush.msra.mxu0 0.0
    %3948 = vmatpush.msra.mxu0 0.0
    %3949 = vmatpush.msra.mxu0 0.0
    %3950 = vmatpush.msra.mxu0 %v3031
    %3951 = vmatpush.msra.mxu0 %v3030
    %3952 = vmatpush.msra.mxu0 %v3029
    %3953 = vmatpush.msra.mxu0 %v3028
    %3954 = vmatmul.f32.gmra.mxu0 %v3927
    %v3955 = vpop.f32.mrf.mxu0
    %v3956 = vadd.f32 %v3924, %v3955
    %3957 = vmatmul.f32.gmra.mxu0 %v3930
    %v3958 = vpop.f32.mrf.mxu0
    %v3959 = vadd.f32 %v3924, %v3958
    %3960 = vmatmul.f32.gmra.mxu0 %v3933
    %v3961 = vpop.f32.mrf.mxu0
    %v3962 = vadd.f32 %v3924, %v3961
    %3963 = vmatmul.f32.gmra.mxu0 %v3936
    %v3964 = vpop.f32.mrf.mxu0
    %v3965 = vadd.f32 %v3924, %v3964
    %3966 = vdwg.mxu0
    %v3967 = vadd.f32 %v3019, %v3956
    %v3968 = vadd.f32 %v3020, %v3959
    %v3969 = vadd.f32 %v3021, %v3962
    %v3970 = vadd.f32 %v3022, %v3965
    %v3971 = vld [vmem:[%s27] sm:$0x3]
    %v3972 = vsel %vm325, %v3967, 0.0
    %3973 = vadd.xlane.f32.xlu0 %v3972
    %v3974 = vpop.xlane.xlu0 %3973
    %v3975 = vsel %vm325, %v3968, 0.0
    %3976 = vadd.xlane.f32.xlu0 %v3975
    %v3977 = vpop.xlane.xlu0 %3976
    %v3978 = vsel %vm325, %v3969, 0.0
    %3979 = vadd.xlane.f32.xlu0 %v3978
    %v3980 = vpop.xlane.xlu0 %3979
    %v3981 = vsel %vm325, %v3970, 0.0
    %3982 = vadd.xlane.f32.xlu0 %v3981
    %v3983 = vpop.xlane.xlu0 %3982
    %v3984 = vmul.f32 %v3974, %v969
    %v3985 = vmul.f32 %v3977, %v969
    %v3986 = vmul.f32 %v3980, %v969
    %v3987 = vmul.f32 %v3983, %v969
    %v3988 = vsub.f32 %v3967, %v3984
    %v3989 = vsub.f32 %v3968, %v3985
    %v3990 = vsub.f32 %v3969, %v3986
    %v3991 = vsub.f32 %v3970, %v3987
    %v3992 = vmul.f32 %v3988, %v3988
    %v3993 = vmul.f32 %v3989, %v3989
    %v3994 = vmul.f32 %v3990, %v3990
    %v3995 = vmul.f32 %v3991, %v3991
    %v3996 = vsel %vm325, %v3992, 0.0
    %3997 = vadd.xlane.f32.xlu0 %v3996
    %v3998 = vpop.xlane.xlu0 %3997
    %v3999 = vsel %vm325, %v3993, 0.0
    %4000 = vadd.xlane.f32.xlu0 %v3999
    %v4001 = vpop.xlane.xlu0 %4000
    %v4002 = vsel %vm325, %v3994, 0.0
    %4003 = vadd.xlane.f32.xlu0 %v4002
    %v4004 = vpop.xlane.xlu0 %4003
    %v4005 = vsel %vm325, %v3995, 0.0
    %4006 = vadd.xlane.f32.xlu0 %v4005
    %v4007 = vpop.xlane.xlu0 %4006
    %v4008 = vmul.f32 %v3998, %v969
    %v4009 = vmul.f32 %v4001, %v969
    %v4010 = vmul.f32 %v4004, %v969
    %v4011 = vmul.f32 %v4007, %v969
    %v4012 = vadd.f32 %v4008, 1e-05
    %v4013 = vadd.f32 %v4009, 1e-05
    %v4014 = vadd.f32 %v4010, 1e-05
    %v4015 = vadd.f32 %v4011, 1e-05
    %v4016 = vrsqrt.pop %v4012
    %v4017 = vmul.f32 %v4016, %v4012
    %v4018 = vmul.f32 %v4017, %v4016
    %v4019 = vmul.f32 0.5, %v4018
    %v4020 = vsub.f32 1.5, %v4019
    %v4021 = vmul.f32 %v4016, %v4020
    %vm4022 = vweird.f32 %v4012
    %vm4023 = vweird.f32 %v4016
    %vm4024 = vmor %vm4022, %vm4023
    %v4025 = vsel %vm4024, %v4016, %v4021
    %v4026 = vrsqrt.pop %v4013
    %v4027 = vmul.f32 %v4026, %v4013
    %v4028 = vmul.f32 %v4027, %v4026
    %v4029 = vmul.f32 0.5, %v4028
    %v4030 = vsub.f32 1.5, %v4029
    %v4031 = vmul.f32 %v4026, %v4030
    %vm4032 = vweird.f32 %v4013
    %vm4033 = vweird.f32 %v4026
    %vm4034 = vmor %vm4032, %vm4033
    %v4035 = vsel %vm4034, %v4026, %v4031
    %v4036 = vrsqrt.pop %v4014
    %v4037 = vmul.f32 %v4036, %v4014
    %v4038 = vmul.f32 %v4037, %v4036
    %v4039 = vmul.f32 0.5, %v4038
    %v4040 = vsub.f32 1.5, %v4039
    %v4041 = vmul.f32 %v4036, %v4040
    %vm4042 = vweird.f32 %v4014
    %vm4043 = vweird.f32 %v4036
    %vm4044 = vmor %vm4042, %vm4043
    %v4045 = vsel %vm4044, %v4036, %v4041
    %v4046 = vrsqrt.pop %v4015
    %v4047 = vmul.f32 %v4046, %v4015
    %v4048 = vmul.f32 %v4047, %v4046
    %v4049 = vmul.f32 0.5, %v4048
    %v4050 = vsub.f32 1.5, %v4049
    %v4051 = vmul.f32 %v4046, %v4050
    %vm4052 = vweird.f32 %v4015
    %vm4053 = vweird.f32 %v4046
    %vm4054 = vmor %vm4052, %vm4053
    %v4055 = vsel %vm4054, %v4046, %v4051
    %v4056 = vmul.f32 %v3988, %v4025
    %v4057 = vmul.f32 %v3989, %v4035
    %v4058 = vmul.f32 %v3990, %v4045
    %v4059 = vmul.f32 %v3991, %v4055
    %v4060 = vperm.slane %v3971, 0
    %v4061 = vmul.f32 %v4056, %v4060
    %v4062 = vmul.f32 %v4057, %v4060
    %v4063 = vmul.f32 %v4058, %v4060
    %v4064 = vmul.f32 %v4059, %v4060
    %v4065 = vperm.slane %v3971, 1
    %v4066 = vadd.f32 %v4061, %v4065
    %v4067 = vadd.f32 %v4062, %v4065
    %v4068 = vadd.f32 %v4063, %v4065
    %v4069 = vadd.f32 %v4064, %v4065
    %v4070 = vld [vmem:[%s13] sm:$0xff]
    %v4071 = vld [vmem:[%s13 + $0x8] sm:$0xff]
    %v4072 = vld [vmem:[%s13 + $0x10] sm:$0xff]
    %v4073 = vld [vmem:[%s13 + $0x18] sm:$0xff]
    %v4074 = vld [vmem:[%s9] sm:$0x1]
    %v4076 = vperm.slane %v4074, 0
    %v4079 = vsel %vm325, %v4066, 0
    %v4082 = vsel %vm325, %v4067, 0
    %v4085 = vsel %vm325, %v4068, 0
    %v4088 = vsel %vm325, %v4069, 0
    %4090 = vmatpush.msra.mxu0 0.0
    %4091 = vmatpush.msra.mxu0 0.0
    %4092 = vmatpush.msra.mxu0 0.0
    %4093 = vmatpush.msra.mxu0 0.0
    %4094 = vmatpush.msra.mxu0 0.0
    %4095 = vmatpush.msra.mxu0 0.0
    %4096 = vmatpush.msra.mxu0 0.0
    %4097 = vmatpush.msra.mxu0 0.0
    %4098 = vmatpush.msra.mxu0 0.0
    %4099 = vmatpush.msra.mxu0 0.0
    %4100 = vmatpush.msra.mxu0 0.0
    %4101 = vmatpush.msra.mxu0 0.0
    %4102 = vmatpush.msra.mxu0 %v4073
    %4103 = vmatpush.msra.mxu0 %v4072
    %4104 = vmatpush.msra.mxu0 %v4071
    %4105 = vmatpush.msra.mxu0 %v4070
    %4106 = vmatmul.f32.gmra.mxu0 %v4079
    %v4107 = vpop.f32.mrf.mxu0
    %v4108 = vadd.f32 %v4076, %v4107
    %4109 = vmatmul.f32.gmra.mxu0 %v4082
    %v4110 = vpop.f32.mrf.mxu0
    %v4111 = vadd.f32 %v4076, %v4110
    %4112 = vmatmul.f32.gmra.mxu0 %v4085
    %v4113 = vpop.f32.mrf.mxu0
    %v4114 = vadd.f32 %v4076, %v4113
    %4115 = vmatmul.f32.gmra.mxu0 %v4088
    %v4116 = vpop.f32.mrf.mxu0
    %v4117 = vadd.f32 %v4076, %v4116
    %4118 = vdwg.mxu0
    %v4119 = vmax.f32 %v4108, 0.0
    %v4120 = vmax.f32 %v4111, 0.0
    %v4121 = vmax.f32 %v4114, 0.0
    %v4122 = vmax.f32 %v4117, 0.0
    %v4123 = vld [vmem:[%s15] sm:$0xff]
    %v4124 = vld [vmem:[%s15 + $0x8] sm:$0xff]
    %v4125 = vld [vmem:[%s15 + $0x10] sm:$0xff]
    %v4126 = vld [vmem:[%s15 + $0x18] sm:$0xff]
    %v4127 = vld [vmem:[%s15 + $0x20] sm:$0xff]
    %v4128 = vld [vmem:[%s15 + $0x28] sm:$0xff]
    %v4129 = vld [vmem:[%s15 + $0x30] sm:$0xff]
    %v4130 = vld [vmem:[%s15 + $0x38] sm:$0xff]
    %v4131 = vld [vmem:[%s11] sm:$0x1]
    %v4133 = vperm.slane %v4131, 0
    %v4136 = vsel %vm1065, %v4119, 0
    %v4139 = vsel %vm1065, %v4120, 0
    %v4142 = vsel %vm1065, %v4121, 0
    %v4145 = vsel %vm1065, %v4122, 0
    %4147 = vmatpush.msra.mxu0 0.0
    %4148 = vmatpush.msra.mxu0 0.0
    %4149 = vmatpush.msra.mxu0 0.0
    %4150 = vmatpush.msra.mxu0 0.0
    %4151 = vmatpush.msra.mxu0 0.0
    %4152 = vmatpush.msra.mxu0 0.0
    %4153 = vmatpush.msra.mxu0 0.0
    %4154 = vmatpush.msra.mxu0 0.0
    %4155 = vmatpush.msra.mxu0 %v4130
    %4156 = vmatpush.msra.mxu0 %v4129
    %4157 = vmatpush.msra.mxu0 %v4128
    %4158 = vmatpush.msra.mxu0 %v4127
    %4159 = vmatpush.msra.mxu0 %v4126
    %4160 = vmatpush.msra.mxu0 %v4125
    %4161 = vmatpush.msra.mxu0 %v4124
    %4162 = vmatpush.msra.mxu0 %v4123
    %4163 = vmatmul.f32.gmra.mxu0 %v4136
    %v4164 = vpop.f32.mrf.mxu0
    %v4165 = vadd.f32 %v4133, %v4164
    %4166 = vmatmul.f32.gmra.mxu0 %v4139
    %v4167 = vpop.f32.mrf.mxu0
    %v4168 = vadd.f32 %v4133, %v4167
    %4169 = vmatmul.f32.gmra.mxu0 %v4142
    %v4170 = vpop.f32.mrf.mxu0
    %v4171 = vadd.f32 %v4133, %v4170
    %4172 = vmatmul.f32.gmra.mxu0 %v4145
    %v4173 = vpop.f32.mrf.mxu0
    %v4174 = vadd.f32 %v4133, %v4173
    %4175 = vdwg.mxu0
    %v4176 = vadd.f32 %v4066, %v4165
    %v4177 = vadd.f32 %v4067, %v4168
    %v4178 = vadd.f32 %v4068, %v4171
    %v4179 = vadd.f32 %v4069, %v4174
    %v4180 = vld [vmem:[%s29] sm:$0x3]
    %v4181 = vsel %vm325, %v4176, 0.0
    %4182 = vadd.xlane.f32.xlu0 %v4181
    %v4183 = vpop.xlane.xlu0 %4182
    %v4184 = vsel %vm325, %v4177, 0.0
    %4185 = vadd.xlane.f32.xlu0 %v4184
    %v4186 = vpop.xlane.xlu0 %4185
    %v4187 = vsel %vm325, %v4178, 0.0
    %4188 = vadd.xlane.f32.xlu0 %v4187
    %v4189 = vpop.xlane.xlu0 %4188
    %v4190 = vsel %vm325, %v4179, 0.0
    %4191 = vadd.xlane.f32.xlu0 %v4190
    %v4192 = vpop.xlane.xlu0 %4191
    %v4193 = vmul.f32 %v4183, %v969
    %v4194 = vmul.f32 %v4186, %v969
    %v4195 = vmul.f32 %v4189, %v969
    %v4196 = vmul.f32 %v4192, %v969
    %v4197 = vsub.f32 %v4176, %v4193
    %v4198 = vsub.f32 %v4177, %v4194
    %v4199 = vsub.f32 %v4178, %v4195
    %v4200 = vsub.f32 %v4179, %v4196
    %v4201 = vmul.f32 %v4197, %v4197
    %v4202 = vmul.f32 %v4198, %v4198
    %v4203 = vmul.f32 %v4199, %v4199
    %v4204 = vmul.f32 %v4200, %v4200
    %v4205 = vsel %vm325, %v4201, 0.0
    %4206 = vadd.xlane.f32.xlu0 %v4205
    %v4207 = vpop.xlane.xlu0 %4206
    %v4208 = vsel %vm325, %v4202, 0.0
    %4209 = vadd.xlane.f32.xlu0 %v4208
    %v4210 = vpop.xlane.xlu0 %4209
    %v4211 = vsel %vm325, %v4203, 0.0
    %4212 = vadd.xlane.f32.xlu0 %v4211
    %v4213 = vpop.xlane.xlu0 %4212
    %v4214 = vsel %vm325, %v4204, 0.0
    %4215 = vadd.xlane.f32.xlu0 %v4214
    %v4216 = vpop.xlane.xlu0 %4215
    %v4217 = vmul.f32 %v4207, %v969
    %v4218 = vmul.f32 %v4210, %v969
    %v4219 = vmul.f32 %v4213, %v969
    %v4220 = vmul.f32 %v4216, %v969
    %v4221 = vadd.f32 %v4217, 1e-05
    %v4222 = vadd.f32 %v4218, 1e-05
    %v4223 = vadd.f32 %v4219, 1e-05
    %v4224 = vadd.f32 %v4220, 1e-05
    %v4225 = vrsqrt.pop %v4221
    %v4226 = vmul.f32 %v4225, %v4221
    %v4227 = vmul.f32 %v4226, %v4225
    %v4228 = vmul.f32 0.5, %v4227
    %v4229 = vsub.f32 1.5, %v4228
    %v4230 = vmul.f32 %v4225, %v4229
    %vm4231 = vweird.f32 %v4221
    %vm4232 = vweird.f32 %v4225
    %vm4233 = vmor %vm4231, %vm4232
    %v4234 = vsel %vm4233, %v4225, %v4230
    %v4235 = vrsqrt.pop %v4222
    %v4236 = vmul.f32 %v4235, %v4222
    %v4237 = vmul.f32 %v4236, %v4235
    %v4238 = vmul.f32 0.5, %v4237
    %v4239 = vsub.f32 1.5, %v4238
    %v4240 = vmul.f32 %v4235, %v4239
    %vm4241 = vweird.f32 %v4222
    %vm4242 = vweird.f32 %v4235
    %vm4243 = vmor %vm4241, %vm4242
    %v4244 = vsel %vm4243, %v4235, %v4240
    %v4245 = vrsqrt.pop %v4223
    %v4246 = vmul.f32 %v4245, %v4223
    %v4247 = vmul.f32 %v4246, %v4245
    %v4248 = vmul.f32 0.5, %v4247
    %v4249 = vsub.f32 1.5, %v4248
    %v4250 = vmul.f32 %v4245, %v4249
    %vm4251 = vweird.f32 %v4223
    %vm4252 = vweird.f32 %v4245
    %vm4253 = vmor %vm4251, %vm4252
    %v4254 = vsel %vm4253, %v4245, %v4250
    %v4255 = vrsqrt.pop %v4224
    %v4256 = vmul.f32 %v4255, %v4224
    %v4257 = vmul.f32 %v4256, %v4255
    %v4258 = vmul.f32 0.5, %v4257
    %v4259 = vsub.f32 1.5, %v4258
    %v4260 = vmul.f32 %v4255, %v4259
    %vm4261 = vweird.f32 %v4224
    %vm4262 = vweird.f32 %v4255
    %vm4263 = vmor %vm4261, %vm4262
    %v4264 = vsel %vm4263, %v4255, %v4260
    %v4265 = vmul.f32 %v4197, %v4234
    %v4266 = vmul.f32 %v4198, %v4244
    %v4267 = vmul.f32 %v4199, %v4254
    %v4268 = vmul.f32 %v4200, %v4264
    %v4269 = vperm.slane %v4180, 0
    %v4270 = vmul.f32 %v4265, %v4269
    %v4271 = vmul.f32 %v4266, %v4269
    %v4272 = vmul.f32 %v4267, %v4269
    %v4273 = vmul.f32 %v4268, %v4269
    %v4274 = vperm.slane %v4180, 1
    %v4275 = vadd.f32 %v4270, %v4274
    %v4276 = vadd.f32 %v4271, %v4274
    %v4277 = vadd.f32 %v4272, %v4274
    %v4278 = vadd.f32 %v4273, %v4274
    %s4279 = scalar_lea.vmem %s37, 32
    %v4280 = vld [vmem:[%s4279] sm:$0xff]
    %v4281 = vld [vmem:[%s4279 + $0x8] sm:$0xff]
    %v4282 = vld [vmem:[%s4279 + $0x10] sm:$0xff]
    %v4283 = vld [vmem:[%s4279 + $0x18] sm:$0xff]
    %s4284 = scalar_lea.vmem %s33, 1
    %v4285 = vld [vmem:[%s4284] sm:$0x1]
    %s4286 = scalar_lea.vmem %s35, 32
    %v4287 = vld [vmem:[%s4286] sm:$0xff]
    %v4288 = vld [vmem:[%s4286 + $0x8] sm:$0xff]
    %v4289 = vld [vmem:[%s4286 + $0x10] sm:$0xff]
    %v4290 = vld [vmem:[%s4286 + $0x18] sm:$0xff]
    %s4291 = scalar_lea.vmem %s31, 1
    %v4292 = vld [vmem:[%s4291] sm:$0x1]
    %v4294 = vperm.slane %v4285, 0
    %v4297 = vsel %vm325, %v4275, 0
    %v4300 = vsel %vm325, %v4276, 0
    %v4303 = vsel %vm325, %v4277, 0
    %v4306 = vsel %vm325, %v4278, 0
    %4308 = vmatpush.msra.mxu0 0.0
    %4309 = vmatpush.msra.mxu0 0.0
    %4310 = vmatpush.msra.mxu0 0.0
    %4311 = vmatpush.msra.mxu0 0.0
    %4312 = vmatpush.msra.mxu0 0.0
    %4313 = vmatpush.msra.mxu0 0.0
    %4314 = vmatpush.msra.mxu0 0.0
    %4315 = vmatpush.msra.mxu0 0.0
    %4316 = vmatpush.msra.mxu0 0.0
    %4317 = vmatpush.msra.mxu0 0.0
    %4318 = vmatpush.msra.mxu0 0.0
    %4319 = vmatpush.msra.mxu0 0.0
    %4320 = vmatpush.msra.mxu0 %v4283
    %4321 = vmatpush.msra.mxu0 %v4282
    %4322 = vmatpush.msra.mxu0 %v4281
    %4323 = vmatpush.msra.mxu0 %v4280
    %4324 = vmatmul.f32.gmra.mxu0 %v4297
    %v4325 = vpop.f32.mrf.mxu0
    %v4326 = vadd.f32 %v4294, %v4325
    %4327 = vmatmul.f32.gmra.mxu0 %v4300
    %v4328 = vpop.f32.mrf.mxu0
    %v4329 = vadd.f32 %v4294, %v4328
    %4330 = vmatmul.f32.gmra.mxu0 %v4303
    %v4331 = vpop.f32.mrf.mxu0
    %v4332 = vadd.f32 %v4294, %v4331
    %4333 = vmatmul.f32.gmra.mxu0 %v4306
    %v4334 = vpop.f32.mrf.mxu0
    %v4335 = vadd.f32 %v4294, %v4334
    %4336 = vdwg.mxu0
    %4339 = vrot.lane.b32.xlu0 %v4326, 96
    %v4340 = vpop.permute.xlu0 %4339
    %4341 = vrot.lane.b32.xlu0 %v4329, 96
    %v4342 = vpop.permute.xlu0 %4341
    %v4343 = vsel %vm358, %v4326, 0
    %v4345 = vsel %vm358, %v4329, 0
    %v4347 = vsel %vm358, %v4340, 0
    %v4349 = vsel %vm358, %v4342, 0
    %4351 = vmatpush.xpose.msra.mxu0 0.0
    %4352 = vmatpush.xpose.msra.mxu0 0.0
    %4353 = vmatpush.xpose.msra.mxu0 0.0
    %4354 = vmatpush.xpose.msra.mxu0 0.0
    %4355 = vmatpush.xpose.msra.mxu0 0.0
    %4356 = vmatpush.xpose.msra.mxu0 0.0
    %4357 = vmatpush.xpose.msra.mxu0 0.0
    %4358 = vmatpush.xpose.msra.mxu0 0.0
    %4359 = vmatpush.xpose.msra.mxu0 0.0
    %4360 = vmatpush.xpose.msra.mxu0 0.0
    %4361 = vmatpush.xpose.msra.mxu0 0.0
    %4362 = vmatpush.xpose.msra.mxu0 0.0
    %4363 = vmatpush.xpose.msra.mxu0 0.0
    %4364 = vmatpush.xpose.msra.mxu0 0.0
    %4365 = vmatpush.xpose.msra.mxu0 %v4349
    %4366 = vmatpush.xpose.msra.mxu0 %v4347
    %4367 = vmatmul.f32.gmra.mxu0 %v4343
    %v4368 = vpop.f32.mrf.mxu0
    %v4369 = vadd.f32 0.0, %v4368
    %4370 = vmatmul.f32.gmra.mxu0 %v4345
    %v4371 = vpop.f32.mrf.mxu0
    %v4372 = vadd.f32 0.0, %v4371
    %4373 = vdwg.mxu0
    %v4374 = vmul.f32 %v4369, 0.35355338
    %v4375 = vmul.f32 %v4372, 0.35355338
    %v4376 = vsel %vm636, %v4374, -inf
    %4377 = vmax.xlane.f32.xlu0 %v4376
    %v4378 = vpop.xlane.xlu0 %4377
    %v4379 = vsel %vm636, %v4375, -inf
    %4380 = vmax.xlane.f32.xlu0 %v4379
    %v4381 = vpop.xlane.xlu0 %4380
    %v4382 = vsub.f32 %v4374, %v4378
    %v4383 = vsub.f32 %v4375, %v4381
    %v4384 = vmul.f32 %v4382, 1.442695
    %v4385 = vpow.pop %v4384
    %v4386 = vmul.f32 %v4383, 1.442695
    %v4387 = vpow.pop %v4386
    %v4388 = vsel %vm636, %v4385, 0.0
    %4389 = vadd.xlane.f32.xlu0 %v4388
    %v4390 = vpop.xlane.xlu0 %4389
    %v4391 = vsel %vm636, %v4387, 0.0
    %4392 = vadd.xlane.f32.xlu0 %v4391
    %v4393 = vpop.xlane.xlu0 %4392
    %v4394 = vrcp.pop %v4390
    %v4395 = vrcp.pop %v4393
    %v4396 = vmul.f32 %v4385, %v4394
    %v4397 = vmul.f32 %v4387, %v4395
    %4398 = vrot.lane.b32.xlu0 %v4326, 64
    %v4399 = vpop.permute.xlu0 %4398
    %4400 = vrot.lane.b32.xlu0 %v4329, 64
    %v4401 = vpop.permute.xlu0 %4400
    %v4405 = vsel %vm636, %v4396, 0
    %v4408 = vsel %vm636, %v4397, 0
    %4410 = vmatpush.msra.mxu0 0.0
    %4411 = vmatpush.msra.mxu0 0.0
    %4412 = vmatpush.msra.mxu0 0.0
    %4413 = vmatpush.msra.mxu0 0.0
    %4414 = vmatpush.msra.mxu0 0.0
    %4415 = vmatpush.msra.mxu0 0.0
    %4416 = vmatpush.msra.mxu0 0.0
    %4417 = vmatpush.msra.mxu0 0.0
    %4418 = vmatpush.msra.mxu0 0.0
    %4419 = vmatpush.msra.mxu0 0.0
    %4420 = vmatpush.msra.mxu0 0.0
    %4421 = vmatpush.msra.mxu0 0.0
    %4422 = vmatpush.msra.mxu0 0.0
    %4423 = vmatpush.msra.mxu0 0.0
    %4424 = vmatpush.msra.mxu0 %v4401
    %4425 = vmatpush.msra.mxu0 %v4399
    %4426 = vmatmul.f32.gmra.mxu0 %v4405
    %v4427 = vpop.f32.mrf.mxu0
    %v4428 = vadd.f32 0.0, %v4427
    %4429 = vmatmul.f32.gmra.mxu0 %v4408
    %v4430 = vpop.f32.mrf.mxu0
    %v4431 = vadd.f32 0.0, %v4430
    %4432 = vdwg.mxu0
    %4433 = vrot.lane.b32.xlu0 %v4326, 120
    %v4434 = vpop.permute.xlu0 %4433
    %4435 = vrot.lane.b32.xlu0 %v4329, 120
    %v4436 = vpop.permute.xlu0 %4435
    %4437 = vrot.lane.b32.xlu0 %v4326, 88
    %v4438 = vpop.permute.xlu0 %4437
    %4439 = vrot.lane.b32.xlu0 %v4329, 88
    %v4440 = vpop.permute.xlu0 %4439
    %v4441 = vsel %vm358, %v4434, 0
    %v4443 = vsel %vm358, %v4436, 0
    %v4445 = vsel %vm358, %v4438, 0
    %v4447 = vsel %vm358, %v4440, 0
    %4449 = vmatpush.xpose.msra.mxu0 0.0
    %4450 = vmatpush.xpose.msra.mxu0 0.0
    %4451 = vmatpush.xpose.msra.mxu0 0.0
    %4452 = vmatpush.xpose.msra.mxu0 0.0
    %4453 = vmatpush.xpose.msra.mxu0 0.0
    %4454 = vmatpush.xpose.msra.mxu0 0.0
    %4455 = vmatpush.xpose.msra.mxu0 0.0
    %4456 = vmatpush.xpose.msra.mxu0 0.0
    %4457 = vmatpush.xpose.msra.mxu0 0.0
    %4458 = vmatpush.xpose.msra.mxu0 0.0
    %4459 = vmatpush.xpose.msra.mxu0 0.0
    %4460 = vmatpush.xpose.msra.mxu0 0.0
    %4461 = vmatpush.xpose.msra.mxu0 0.0
    %4462 = vmatpush.xpose.msra.mxu0 0.0
    %4463 = vmatpush.xpose.msra.mxu0 %v4447
    %4464 = vmatpush.xpose.msra.mxu0 %v4445
    %4465 = vmatmul.f32.gmra.mxu0 %v4441
    %v4466 = vpop.f32.mrf.mxu0
    %v4467 = vadd.f32 0.0, %v4466
    %4468 = vmatmul.f32.gmra.mxu0 %v4443
    %v4469 = vpop.f32.mrf.mxu0
    %v4470 = vadd.f32 0.0, %v4469
    %4471 = vdwg.mxu0
    %v4472 = vmul.f32 %v4467, 0.35355338
    %v4473 = vmul.f32 %v4470, 0.35355338
    %v4474 = vsel %vm636, %v4472, -inf
    %4475 = vmax.xlane.f32.xlu0 %v4474
    %v4476 = vpop.xlane.xlu0 %4475
    %v4477 = vsel %vm636, %v4473, -inf
    %4478 = vmax.xlane.f32.xlu0 %v4477
    %v4479 = vpop.xlane.xlu0 %4478
    %v4480 = vsub.f32 %v4472, %v4476
    %v4481 = vsub.f32 %v4473, %v4479
    %v4482 = vmul.f32 %v4480, 1.442695
    %v4483 = vpow.pop %v4482
    %v4484 = vmul.f32 %v4481, 1.442695
    %v4485 = vpow.pop %v4484
    %v4486 = vsel %vm636, %v4483, 0.0
    %4487 = vadd.xlane.f32.xlu0 %v4486
    %v4488 = vpop.xlane.xlu0 %4487
    %v4489 = vsel %vm636, %v4485, 0.0
    %4490 = vadd.xlane.f32.xlu0 %v4489
    %v4491 = vpop.xlane.xlu0 %4490
    %v4492 = vrcp.pop %v4488
    %v4493 = vrcp.pop %v4491
    %v4494 = vmul.f32 %v4483, %v4492
    %v4495 = vmul.f32 %v4485, %v4493
    %4496 = vrot.lane.b32.xlu0 %v4326, 56
    %v4497 = vpop.permute.xlu0 %4496
    %4498 = vrot.lane.b32.xlu0 %v4329, 56
    %v4499 = vpop.permute.xlu0 %4498
    %v4503 = vsel %vm636, %v4494, 0
    %v4506 = vsel %vm636, %v4495, 0
    %4508 = vmatpush.msra.mxu0 0.0
    %4509 = vmatpush.msra.mxu0 0.0
    %4510 = vmatpush.msra.mxu0 0.0
    %4511 = vmatpush.msra.mxu0 0.0
    %4512 = vmatpush.msra.mxu0 0.0
    %4513 = vmatpush.msra.mxu0 0.0
    %4514 = vmatpush.msra.mxu0 0.0
    %4515 = vmatpush.msra.mxu0 0.0
    %4516 = vmatpush.msra.mxu0 0.0
    %4517 = vmatpush.msra.mxu0 0.0
    %4518 = vmatpush.msra.mxu0 0.0
    %4519 = vmatpush.msra.mxu0 0.0
    %4520 = vmatpush.msra.mxu0 0.0
    %4521 = vmatpush.msra.mxu0 0.0
    %4522 = vmatpush.msra.mxu0 %v4499
    %4523 = vmatpush.msra.mxu0 %v4497
    %4524 = vmatmul.f32.gmra.mxu0 %v4503
    %v4525 = vpop.f32.mrf.mxu0
    %v4526 = vadd.f32 0.0, %v4525
    %4527 = vmatmul.f32.gmra.mxu0 %v4506
    %v4528 = vpop.f32.mrf.mxu0
    %v4529 = vadd.f32 0.0, %v4528
    %4530 = vdwg.mxu0
    %4531 = vrot.lane.b32.xlu0 %v4326, 112
    %v4532 = vpop.permute.xlu0 %4531
    %4533 = vrot.lane.b32.xlu0 %v4329, 112
    %v4534 = vpop.permute.xlu0 %4533
    %4535 = vrot.lane.b32.xlu0 %v4326, 80
    %v4536 = vpop.permute.xlu0 %4535
    %4537 = vrot.lane.b32.xlu0 %v4329, 80
    %v4538 = vpop.permute.xlu0 %4537
    %v4539 = vsel %vm358, %v4532, 0
    %v4541 = vsel %vm358, %v4534, 0
    %v4543 = vsel %vm358, %v4536, 0
    %v4545 = vsel %vm358, %v4538, 0
    %4547 = vmatpush.xpose.msra.mxu0 0.0
    %4548 = vmatpush.xpose.msra.mxu0 0.0
    %4549 = vmatpush.xpose.msra.mxu0 0.0
    %4550 = vmatpush.xpose.msra.mxu0 0.0
    %4551 = vmatpush.xpose.msra.mxu0 0.0
    %4552 = vmatpush.xpose.msra.mxu0 0.0
    %4553 = vmatpush.xpose.msra.mxu0 0.0
    %4554 = vmatpush.xpose.msra.mxu0 0.0
    %4555 = vmatpush.xpose.msra.mxu0 0.0
    %4556 = vmatpush.xpose.msra.mxu0 0.0
    %4557 = vmatpush.xpose.msra.mxu0 0.0
    %4558 = vmatpush.xpose.msra.mxu0 0.0
    %4559 = vmatpush.xpose.msra.mxu0 0.0
    %4560 = vmatpush.xpose.msra.mxu0 0.0
    %4561 = vmatpush.xpose.msra.mxu0 %v4545
    %4562 = vmatpush.xpose.msra.mxu0 %v4543
    %4563 = vmatmul.f32.gmra.mxu0 %v4539
    %v4564 = vpop.f32.mrf.mxu0
    %v4565 = vadd.f32 0.0, %v4564
    %4566 = vmatmul.f32.gmra.mxu0 %v4541
    %v4567 = vpop.f32.mrf.mxu0
    %v4568 = vadd.f32 0.0, %v4567
    %4569 = vdwg.mxu0
    %v4570 = vmul.f32 %v4565, 0.35355338
    %v4571 = vmul.f32 %v4568, 0.35355338
    %v4572 = vsel %vm636, %v4570, -inf
    %4573 = vmax.xlane.f32.xlu0 %v4572
    %v4574 = vpop.xlane.xlu0 %4573
    %v4575 = vsel %vm636, %v4571, -inf
    %4576 = vmax.xlane.f32.xlu0 %v4575
    %v4577 = vpop.xlane.xlu0 %4576
    %v4578 = vsub.f32 %v4570, %v4574
    %v4579 = vsub.f32 %v4571, %v4577
    %v4580 = vmul.f32 %v4578, 1.442695
    %v4581 = vpow.pop %v4580
    %v4582 = vmul.f32 %v4579, 1.442695
    %v4583 = vpow.pop %v4582
    %v4584 = vsel %vm636, %v4581, 0.0
    %4585 = vadd.xlane.f32.xlu0 %v4584
    %v4586 = vpop.xlane.xlu0 %4585
    %v4587 = vsel %vm636, %v4583, 0.0
    %4588 = vadd.xlane.f32.xlu0 %v4587
    %v4589 = vpop.xlane.xlu0 %4588
    %v4590 = vrcp.pop %v4586
    %v4591 = vrcp.pop %v4589
    %v4592 = vmul.f32 %v4581, %v4590
    %v4593 = vmul.f32 %v4583, %v4591
    %4594 = vrot.lane.b32.xlu0 %v4326, 48
    %v4595 = vpop.permute.xlu0 %4594
    %4596 = vrot.lane.b32.xlu0 %v4329, 48
    %v4597 = vpop.permute.xlu0 %4596
    %v4601 = vsel %vm636, %v4592, 0
    %v4604 = vsel %vm636, %v4593, 0
    %4606 = vmatpush.msra.mxu0 0.0
    %4607 = vmatpush.msra.mxu0 0.0
    %4608 = vmatpush.msra.mxu0 0.0
    %4609 = vmatpush.msra.mxu0 0.0
    %4610 = vmatpush.msra.mxu0 0.0
    %4611 = vmatpush.msra.mxu0 0.0
    %4612 = vmatpush.msra.mxu0 0.0
    %4613 = vmatpush.msra.mxu0 0.0
    %4614 = vmatpush.msra.mxu0 0.0
    %4615 = vmatpush.msra.mxu0 0.0
    %4616 = vmatpush.msra.mxu0 0.0
    %4617 = vmatpush.msra.mxu0 0.0
    %4618 = vmatpush.msra.mxu0 0.0
    %4619 = vmatpush.msra.mxu0 0.0
    %4620 = vmatpush.msra.mxu0 %v4597
    %4621 = vmatpush.msra.mxu0 %v4595
    %4622 = vmatmul.f32.gmra.mxu0 %v4601
    %v4623 = vpop.f32.mrf.mxu0
    %v4624 = vadd.f32 0.0, %v4623
    %4625 = vmatmul.f32.gmra.mxu0 %v4604
    %v4626 = vpop.f32.mrf.mxu0
    %v4627 = vadd.f32 0.0, %v4626
    %4628 = vdwg.mxu0
    %4629 = vrot.lane.b32.xlu0 %v4326, 104
    %v4630 = vpop.permute.xlu0 %4629
    %4631 = vrot.lane.b32.xlu0 %v4329, 104
    %v4632 = vpop.permute.xlu0 %4631
    %4633 = vrot.lane.b32.xlu0 %v4326, 72
    %v4634 = vpop.permute.xlu0 %4633
    %4635 = vrot.lane.b32.xlu0 %v4329, 72
    %v4636 = vpop.permute.xlu0 %4635
    %v4637 = vsel %vm358, %v4630, 0
    %v4639 = vsel %vm358, %v4632, 0
    %v4641 = vsel %vm358, %v4634, 0
    %v4643 = vsel %vm358, %v4636, 0
    %4645 = vmatpush.xpose.msra.mxu0 0.0
    %4646 = vmatpush.xpose.msra.mxu0 0.0
    %4647 = vmatpush.xpose.msra.mxu0 0.0
    %4648 = vmatpush.xpose.msra.mxu0 0.0
    %4649 = vmatpush.xpose.msra.mxu0 0.0
    %4650 = vmatpush.xpose.msra.mxu0 0.0
    %4651 = vmatpush.xpose.msra.mxu0 0.0
    %4652 = vmatpush.xpose.msra.mxu0 0.0
    %4653 = vmatpush.xpose.msra.mxu0 0.0
    %4654 = vmatpush.xpose.msra.mxu0 0.0
    %4655 = vmatpush.xpose.msra.mxu0 0.0
    %4656 = vmatpush.xpose.msra.mxu0 0.0
    %4657 = vmatpush.xpose.msra.mxu0 0.0
    %4658 = vmatpush.xpose.msra.mxu0 0.0
    %4659 = vmatpush.xpose.msra.mxu0 %v4643
    %4660 = vmatpush.xpose.msra.mxu0 %v4641
    %4661 = vmatmul.f32.gmra.mxu0 %v4637
    %v4662 = vpop.f32.mrf.mxu0
    %v4663 = vadd.f32 0.0, %v4662
    %4664 = vmatmul.f32.gmra.mxu0 %v4639
    %v4665 = vpop.f32.mrf.mxu0
    %v4666 = vadd.f32 0.0, %v4665
    %4667 = vdwg.mxu0
    %v4668 = vmul.f32 %v4663, 0.35355338
    %v4669 = vmul.f32 %v4666, 0.35355338
    %v4670 = vsel %vm636, %v4668, -inf
    %4671 = vmax.xlane.f32.xlu0 %v4670
    %v4672 = vpop.xlane.xlu0 %4671
    %v4673 = vsel %vm636, %v4669, -inf
    %4674 = vmax.xlane.f32.xlu0 %v4673
    %v4675 = vpop.xlane.xlu0 %4674
    %v4676 = vsub.f32 %v4668, %v4672
    %v4677 = vsub.f32 %v4669, %v4675
    %v4678 = vmul.f32 %v4676, 1.442695
    %v4679 = vpow.pop %v4678
    %v4680 = vmul.f32 %v4677, 1.442695
    %v4681 = vpow.pop %v4680
    %v4682 = vsel %vm636, %v4679, 0.0
    %4683 = vadd.xlane.f32.xlu0 %v4682
    %v4684 = vpop.xlane.xlu0 %4683
    %v4685 = vsel %vm636, %v4681, 0.0
    %4686 = vadd.xlane.f32.xlu0 %v4685
    %v4687 = vpop.xlane.xlu0 %4686
    %v4688 = vrcp.pop %v4684
    %v4689 = vrcp.pop %v4687
    %v4690 = vmul.f32 %v4679, %v4688
    %v4691 = vmul.f32 %v4681, %v4689
    %4692 = vrot.lane.b32.xlu0 %v4326, 40
    %v4693 = vpop.permute.xlu0 %4692
    %4694 = vrot.lane.b32.xlu0 %v4329, 40
    %v4695 = vpop.permute.xlu0 %4694
    %v4699 = vsel %vm636, %v4690, 0
    %v4702 = vsel %vm636, %v4691, 0
    %4704 = vmatpush.msra.mxu0 0.0
    %4705 = vmatpush.msra.mxu0 0.0
    %4706 = vmatpush.msra.mxu0 0.0
    %4707 = vmatpush.msra.mxu0 0.0
    %4708 = vmatpush.msra.mxu0 0.0
    %4709 = vmatpush.msra.mxu0 0.0
    %4710 = vmatpush.msra.mxu0 0.0
    %4711 = vmatpush.msra.mxu0 0.0
    %4712 = vmatpush.msra.mxu0 0.0
    %4713 = vmatpush.msra.mxu0 0.0
    %4714 = vmatpush.msra.mxu0 0.0
    %4715 = vmatpush.msra.mxu0 0.0
    %4716 = vmatpush.msra.mxu0 0.0
    %4717 = vmatpush.msra.mxu0 0.0
    %4718 = vmatpush.msra.mxu0 %v4695
    %4719 = vmatpush.msra.mxu0 %v4693
    %4720 = vmatmul.f32.gmra.mxu0 %v4699
    %v4721 = vpop.f32.mrf.mxu0
    %v4722 = vadd.f32 0.0, %v4721
    %4723 = vmatmul.f32.gmra.mxu0 %v4702
    %v4724 = vpop.f32.mrf.mxu0
    %v4725 = vadd.f32 0.0, %v4724
    %4726 = vdwg.mxu0
    %4729 = vrot.lane.b32.xlu0 %v4526, 8
    %v4730 = vpop.permute.xlu0 %4729
    %4731 = vrot.lane.b32.xlu0 %v4529, 8
    %v4732 = vpop.permute.xlu0 %4731
    %4737 = vrot.lane.b32.xlu0 %v4624, 16
    %v4738 = vpop.permute.xlu0 %4737
    %4739 = vrot.lane.b32.xlu0 %v4627, 16
    %v4740 = vpop.permute.xlu0 %4739
    %4745 = vrot.lane.b32.xlu0 %v4722, 24
    %v4746 = vpop.permute.xlu0 %4745
    %4747 = vrot.lane.b32.xlu0 %v4725, 24
    %v4748 = vpop.permute.xlu0 %4747
    %v4751 = vsel %vm358, %v4428, %v4730
    %v4752 = vsel %vm358, %v4431, %v4732
    %v4753 = vsel %vm636, %v4751, %v4738
    %v4754 = vsel %vm636, %v4752, %v4740
    %v4755 = vsel %vm638, %v4753, %v4746
    %v4756 = vsel %vm638, %v4754, %v4748
    %4759 = vrot.lane.b32.xlu0 %v4332, 96
    %v4760 = vpop.permute.xlu0 %4759
    %4761 = vrot.lane.b32.xlu0 %v4335, 96
    %v4762 = vpop.permute.xlu0 %4761
    %v4763 = vsel %vm358, %v4332, 0
    %v4765 = vsel %vm358, %v4335, 0
    %v4767 = vsel %vm358, %v4760, 0
    %v4769 = vsel %vm358, %v4762, 0
    %4771 = vmatpush.xpose.msra.mxu0 0.0
    %4772 = vmatpush.xpose.msra.mxu0 0.0
    %4773 = vmatpush.xpose.msra.mxu0 0.0
    %4774 = vmatpush.xpose.msra.mxu0 0.0
    %4775 = vmatpush.xpose.msra.mxu0 0.0
    %4776 = vmatpush.xpose.msra.mxu0 0.0
    %4777 = vmatpush.xpose.msra.mxu0 0.0
    %4778 = vmatpush.xpose.msra.mxu0 0.0
    %4779 = vmatpush.xpose.msra.mxu0 0.0
    %4780 = vmatpush.xpose.msra.mxu0 0.0
    %4781 = vmatpush.xpose.msra.mxu0 0.0
    %4782 = vmatpush.xpose.msra.mxu0 0.0
    %4783 = vmatpush.xpose.msra.mxu0 0.0
    %4784 = vmatpush.xpose.msra.mxu0 0.0
    %4785 = vmatpush.xpose.msra.mxu0 %v4769
    %4786 = vmatpush.xpose.msra.mxu0 %v4767
    %4787 = vmatmul.f32.gmra.mxu0 %v4763
    %v4788 = vpop.f32.mrf.mxu0
    %v4789 = vadd.f32 0.0, %v4788
    %4790 = vmatmul.f32.gmra.mxu0 %v4765
    %v4791 = vpop.f32.mrf.mxu0
    %v4792 = vadd.f32 0.0, %v4791
    %4793 = vdwg.mxu0
    %v4794 = vmul.f32 %v4789, 0.35355338
    %v4795 = vmul.f32 %v4792, 0.35355338
    %v4796 = vsel %vm636, %v4794, -inf
    %4797 = vmax.xlane.f32.xlu0 %v4796
    %v4798 = vpop.xlane.xlu0 %4797
    %v4799 = vsel %vm636, %v4795, -inf
    %4800 = vmax.xlane.f32.xlu0 %v4799
    %v4801 = vpop.xlane.xlu0 %4800
    %v4802 = vsub.f32 %v4794, %v4798
    %v4803 = vsub.f32 %v4795, %v4801
    %v4804 = vmul.f32 %v4802, 1.442695
    %v4805 = vpow.pop %v4804
    %v4806 = vmul.f32 %v4803, 1.442695
    %v4807 = vpow.pop %v4806
    %v4808 = vsel %vm636, %v4805, 0.0
    %4809 = vadd.xlane.f32.xlu0 %v4808
    %v4810 = vpop.xlane.xlu0 %4809
    %v4811 = vsel %vm636, %v4807, 0.0
    %4812 = vadd.xlane.f32.xlu0 %v4811
    %v4813 = vpop.xlane.xlu0 %4812
    %v4814 = vrcp.pop %v4810
    %v4815 = vrcp.pop %v4813
    %v4816 = vmul.f32 %v4805, %v4814
    %v4817 = vmul.f32 %v4807, %v4815
    %4818 = vrot.lane.b32.xlu0 %v4332, 64
    %v4819 = vpop.permute.xlu0 %4818
    %4820 = vrot.lane.b32.xlu0 %v4335, 64
    %v4821 = vpop.permute.xlu0 %4820
    %v4825 = vsel %vm636, %v4816, 0
    %v4828 = vsel %vm636, %v4817, 0
    %4830 = vmatpush.msra.mxu0 0.0
    %4831 = vmatpush.msra.mxu0 0.0
    %4832 = vmatpush.msra.mxu0 0.0
    %4833 = vmatpush.msra.mxu0 0.0
    %4834 = vmatpush.msra.mxu0 0.0
    %4835 = vmatpush.msra.mxu0 0.0
    %4836 = vmatpush.msra.mxu0 0.0
    %4837 = vmatpush.msra.mxu0 0.0
    %4838 = vmatpush.msra.mxu0 0.0
    %4839 = vmatpush.msra.mxu0 0.0
    %4840 = vmatpush.msra.mxu0 0.0
    %4841 = vmatpush.msra.mxu0 0.0
    %4842 = vmatpush.msra.mxu0 0.0
    %4843 = vmatpush.msra.mxu0 0.0
    %4844 = vmatpush.msra.mxu0 %v4821
    %4845 = vmatpush.msra.mxu0 %v4819
    %4846 = vmatmul.f32.gmra.mxu0 %v4825
    %v4847 = vpop.f32.mrf.mxu0
    %v4848 = vadd.f32 0.0, %v4847
    %4849 = vmatmul.f32.gmra.mxu0 %v4828
    %v4850 = vpop.f32.mrf.mxu0
    %v4851 = vadd.f32 0.0, %v4850
    %4852 = vdwg.mxu0
    %4853 = vrot.lane.b32.xlu0 %v4332, 120
    %v4854 = vpop.permute.xlu0 %4853
    %4855 = vrot.lane.b32.xlu0 %v4335, 120
    %v4856 = vpop.permute.xlu0 %4855
    %4857 = vrot.lane.b32.xlu0 %v4332, 88
    %v4858 = vpop.permute.xlu0 %4857
    %4859 = vrot.lane.b32.xlu0 %v4335, 88
    %v4860 = vpop.permute.xlu0 %4859
    %v4861 = vsel %vm358, %v4854, 0
    %v4863 = vsel %vm358, %v4856, 0
    %v4865 = vsel %vm358, %v4858, 0
    %v4867 = vsel %vm358, %v4860, 0
    %4869 = vmatpush.xpose.msra.mxu0 0.0
    %4870 = vmatpush.xpose.msra.mxu0 0.0
    %4871 = vmatpush.xpose.msra.mxu0 0.0
    %4872 = vmatpush.xpose.msra.mxu0 0.0
    %4873 = vmatpush.xpose.msra.mxu0 0.0
    %4874 = vmatpush.xpose.msra.mxu0 0.0
    %4875 = vmatpush.xpose.msra.mxu0 0.0
    %4876 = vmatpush.xpose.msra.mxu0 0.0
    %4877 = vmatpush.xpose.msra.mxu0 0.0
    %4878 = vmatpush.xpose.msra.mxu0 0.0
    %4879 = vmatpush.xpose.msra.mxu0 0.0
    %4880 = vmatpush.xpose.msra.mxu0 0.0
    %4881 = vmatpush.xpose.msra.mxu0 0.0
    %4882 = vmatpush.xpose.msra.mxu0 0.0
    %4883 = vmatpush.xpose.msra.mxu0 %v4867
    %4884 = vmatpush.xpose.msra.mxu0 %v4865
    %4885 = vmatmul.f32.gmra.mxu0 %v4861
    %v4886 = vpop.f32.mrf.mxu0
    %v4887 = vadd.f32 0.0, %v4886
    %4888 = vmatmul.f32.gmra.mxu0 %v4863
    %v4889 = vpop.f32.mrf.mxu0
    %v4890 = vadd.f32 0.0, %v4889
    %4891 = vdwg.mxu0
    %v4892 = vmul.f32 %v4887, 0.35355338
    %v4893 = vmul.f32 %v4890, 0.35355338
    %v4894 = vsel %vm636, %v4892, -inf
    %4895 = vmax.xlane.f32.xlu0 %v4894
    %v4896 = vpop.xlane.xlu0 %4895
    %v4897 = vsel %vm636, %v4893, -inf
    %4898 = vmax.xlane.f32.xlu0 %v4897
    %v4899 = vpop.xlane.xlu0 %4898
    %v4900 = vsub.f32 %v4892, %v4896
    %v4901 = vsub.f32 %v4893, %v4899
    %v4902 = vmul.f32 %v4900, 1.442695
    %v4903 = vpow.pop %v4902
    %v4904 = vmul.f32 %v4901, 1.442695
    %v4905 = vpow.pop %v4904
    %v4906 = vsel %vm636, %v4903, 0.0
    %4907 = vadd.xlane.f32.xlu0 %v4906
    %v4908 = vpop.xlane.xlu0 %4907
    %v4909 = vsel %vm636, %v4905, 0.0
    %4910 = vadd.xlane.f32.xlu0 %v4909
    %v4911 = vpop.xlane.xlu0 %4910
    %v4912 = vrcp.pop %v4908
    %v4913 = vrcp.pop %v4911
    %v4914 = vmul.f32 %v4903, %v4912
    %v4915 = vmul.f32 %v4905, %v4913
    %4916 = vrot.lane.b32.xlu0 %v4332, 56
    %v4917 = vpop.permute.xlu0 %4916
    %4918 = vrot.lane.b32.xlu0 %v4335, 56
    %v4919 = vpop.permute.xlu0 %4918
    %v4923 = vsel %vm636, %v4914, 0
    %v4926 = vsel %vm636, %v4915, 0
    %4928 = vmatpush.msra.mxu0 0.0
    %4929 = vmatpush.msra.mxu0 0.0
    %4930 = vmatpush.msra.mxu0 0.0
    %4931 = vmatpush.msra.mxu0 0.0
    %4932 = vmatpush.msra.mxu0 0.0
    %4933 = vmatpush.msra.mxu0 0.0
    %4934 = vmatpush.msra.mxu0 0.0
    %4935 = vmatpush.msra.mxu0 0.0
    %4936 = vmatpush.msra.mxu0 0.0
    %4937 = vmatpush.msra.mxu0 0.0
    %4938 = vmatpush.msra.mxu0 0.0
    %4939 = vmatpush.msra.mxu0 0.0
    %4940 = vmatpush.msra.mxu0 0.0
    %4941 = vmatpush.msra.mxu0 0.0
    %4942 = vmatpush.msra.mxu0 %v4919
    %4943 = vmatpush.msra.mxu0 %v4917
    %4944 = vmatmul.f32.gmra.mxu0 %v4923
    %v4945 = vpop.f32.mrf.mxu0
    %v4946 = vadd.f32 0.0, %v4945
    %4947 = vmatmul.f32.gmra.mxu0 %v4926
    %v4948 = vpop.f32.mrf.mxu0
    %v4949 = vadd.f32 0.0, %v4948
    %4950 = vdwg.mxu0
    %4951 = vrot.lane.b32.xlu0 %v4332, 112
    %v4952 = vpop.permute.xlu0 %4951
    %4953 = vrot.lane.b32.xlu0 %v4335, 112
    %v4954 = vpop.permute.xlu0 %4953
    %4955 = vrot.lane.b32.xlu0 %v4332, 80
    %v4956 = vpop.permute.xlu0 %4955
    %4957 = vrot.lane.b32.xlu0 %v4335, 80
    %v4958 = vpop.permute.xlu0 %4957
    %v4959 = vsel %vm358, %v4952, 0
    %v4961 = vsel %vm358, %v4954, 0
    %v4963 = vsel %vm358, %v4956, 0
    %v4965 = vsel %vm358, %v4958, 0
    %4967 = vmatpush.xpose.msra.mxu0 0.0
    %4968 = vmatpush.xpose.msra.mxu0 0.0
    %4969 = vmatpush.xpose.msra.mxu0 0.0
    %4970 = vmatpush.xpose.msra.mxu0 0.0
    %4971 = vmatpush.xpose.msra.mxu0 0.0
    %4972 = vmatpush.xpose.msra.mxu0 0.0
    %4973 = vmatpush.xpose.msra.mxu0 0.0
    %4974 = vmatpush.xpose.msra.mxu0 0.0
    %4975 = vmatpush.xpose.msra.mxu0 0.0
    %4976 = vmatpush.xpose.msra.mxu0 0.0
    %4977 = vmatpush.xpose.msra.mxu0 0.0
    %4978 = vmatpush.xpose.msra.mxu0 0.0
    %4979 = vmatpush.xpose.msra.mxu0 0.0
    %4980 = vmatpush.xpose.msra.mxu0 0.0
    %4981 = vmatpush.xpose.msra.mxu0 %v4965
    %4982 = vmatpush.xpose.msra.mxu0 %v4963
    %4983 = vmatmul.f32.gmra.mxu0 %v4959
    %v4984 = vpop.f32.mrf.mxu0
    %v4985 = vadd.f32 0.0, %v4984
    %4986 = vmatmul.f32.gmra.mxu0 %v4961
    %v4987 = vpop.f32.mrf.mxu0
    %v4988 = vadd.f32 0.0, %v4987
    %4989 = vdwg.mxu0
    %v4990 = vmul.f32 %v4985, 0.35355338
    %v4991 = vmul.f32 %v4988, 0.35355338
    %v4992 = vsel %vm636, %v4990, -inf
    %4993 = vmax.xlane.f32.xlu0 %v4992
    %v4994 = vpop.xlane.xlu0 %4993
    %v4995 = vsel %vm636, %v4991, -inf
    %4996 = vmax.xlane.f32.xlu0 %v4995
    %v4997 = vpop.xlane.xlu0 %4996
    %v4998 = vsub.f32 %v4990, %v4994
    %v4999 = vsub.f32 %v4991, %v4997
    %v5000 = vmul.f32 %v4998, 1.442695
    %v5001 = vpow.pop %v5000
    %v5002 = vmul.f32 %v4999, 1.442695
    %v5003 = vpow.pop %v5002
    %v5004 = vsel %vm636, %v5001, 0.0
    %5005 = vadd.xlane.f32.xlu0 %v5004
    %v5006 = vpop.xlane.xlu0 %5005
    %v5007 = vsel %vm636, %v5003, 0.0
    %5008 = vadd.xlane.f32.xlu0 %v5007
    %v5009 = vpop.xlane.xlu0 %5008
    %v5010 = vrcp.pop %v5006
    %v5011 = vrcp.pop %v5009
    %v5012 = vmul.f32 %v5001, %v5010
    %v5013 = vmul.f32 %v5003, %v5011
    %5014 = vrot.lane.b32.xlu0 %v4332, 48
    %v5015 = vpop.permute.xlu0 %5014
    %5016 = vrot.lane.b32.xlu0 %v4335, 48
    %v5017 = vpop.permute.xlu0 %5016
    %v5021 = vsel %vm636, %v5012, 0
    %v5024 = vsel %vm636, %v5013, 0
    %5026 = vmatpush.msra.mxu0 0.0
    %5027 = vmatpush.msra.mxu0 0.0
    %5028 = vmatpush.msra.mxu0 0.0
    %5029 = vmatpush.msra.mxu0 0.0
    %5030 = vmatpush.msra.mxu0 0.0
    %5031 = vmatpush.msra.mxu0 0.0
    %5032 = vmatpush.msra.mxu0 0.0
    %5033 = vmatpush.msra.mxu0 0.0
    %5034 = vmatpush.msra.mxu0 0.0
    %5035 = vmatpush.msra.mxu0 0.0
    %5036 = vmatpush.msra.mxu0 0.0
    %5037 = vmatpush.msra.mxu0 0.0
    %5038 = vmatpush.msra.mxu0 0.0
    %5039 = vmatpush.msra.mxu0 0.0
    %5040 = vmatpush.msra.mxu0 %v5017
    %5041 = vmatpush.msra.mxu0 %v5015
    %5042 = vmatmul.f32.gmra.mxu0 %v5021
    %v5043 = vpop.f32.mrf.mxu0
    %v5044 = vadd.f32 0.0, %v5043
    %5045 = vmatmul.f32.gmra.mxu0 %v5024
    %v5046 = vpop.f32.mrf.mxu0
    %v5047 = vadd.f32 0.0, %v5046
    %5048 = vdwg.mxu0
    %5049 = vrot.lane.b32.xlu0 %v4332, 104
    %v5050 = vpop.permute.xlu0 %5049
    %5051 = vrot.lane.b32.xlu0 %v4335, 104
    %v5052 = vpop.permute.xlu0 %5051
    %5053 = vrot.lane.b32.xlu0 %v4332, 72
    %v5054 = vpop.permute.xlu0 %5053
    %5055 = vrot.lane.b32.xlu0 %v4335, 72
    %v5056 = vpop.permute.xlu0 %5055
    %v5057 = vsel %vm358, %v5050, 0
    %v5059 = vsel %vm358, %v5052, 0
    %v5061 = vsel %vm358, %v5054, 0
    %v5063 = vsel %vm358, %v5056, 0
    %5065 = vmatpush.xpose.msra.mxu0 0.0
    %5066 = vmatpush.xpose.msra.mxu0 0.0
    %5067 = vmatpush.xpose.msra.mxu0 0.0
    %5068 = vmatpush.xpose.msra.mxu0 0.0
    %5069 = vmatpush.xpose.msra.mxu0 0.0
    %5070 = vmatpush.xpose.msra.mxu0 0.0
    %5071 = vmatpush.xpose.msra.mxu0 0.0
    %5072 = vmatpush.xpose.msra.mxu0 0.0
    %5073 = vmatpush.xpose.msra.mxu0 0.0
    %5074 = vmatpush.xpose.msra.mxu0 0.0
    %5075 = vmatpush.xpose.msra.mxu0 0.0
    %5076 = vmatpush.xpose.msra.mxu0 0.0
    %5077 = vmatpush.xpose.msra.mxu0 0.0
    %5078 = vmatpush.xpose.msra.mxu0 0.0
    %5079 = vmatpush.xpose.msra.mxu0 %v5063
    %5080 = vmatpush.xpose.msra.mxu0 %v5061
    %5081 = vmatmul.f32.gmra.mxu0 %v5057
    %v5082 = vpop.f32.mrf.mxu0
    %v5083 = vadd.f32 0.0, %v5082
    %5084 = vmatmul.f32.gmra.mxu0 %v5059
    %v5085 = vpop.f32.mrf.mxu0
    %v5086 = vadd.f32 0.0, %v5085
    %5087 = vdwg.mxu0
    %v5088 = vmul.f32 %v5083, 0.35355338
    %v5089 = vmul.f32 %v5086, 0.35355338
    %v5090 = vsel %vm636, %v5088, -inf
    %5091 = vmax.xlane.f32.xlu0 %v5090
    %v5092 = vpop.xlane.xlu0 %5091
    %v5093 = vsel %vm636, %v5089, -inf
    %5094 = vmax.xlane.f32.xlu0 %v5093
    %v5095 = vpop.xlane.xlu0 %5094
    %v5096 = vsub.f32 %v5088, %v5092
    %v5097 = vsub.f32 %v5089, %v5095
    %v5098 = vmul.f32 %v5096, 1.442695
    %v5099 = vpow.pop %v5098
    %v5100 = vmul.f32 %v5097, 1.442695
    %v5101 = vpow.pop %v5100
    %v5102 = vsel %vm636, %v5099, 0.0
    %5103 = vadd.xlane.f32.xlu0 %v5102
    %v5104 = vpop.xlane.xlu0 %5103
    %v5105 = vsel %vm636, %v5101, 0.0
    %5106 = vadd.xlane.f32.xlu0 %v5105
    %v5107 = vpop.xlane.xlu0 %5106
    %v5108 = vrcp.pop %v5104
    %v5109 = vrcp.pop %v5107
    %v5110 = vmul.f32 %v5099, %v5108
    %v5111 = vmul.f32 %v5101, %v5109
    %5112 = vrot.lane.b32.xlu0 %v4332, 40
    %v5113 = vpop.permute.xlu0 %5112
    %5114 = vrot.lane.b32.xlu0 %v4335, 40
    %v5115 = vpop.permute.xlu0 %5114
    %v5119 = vsel %vm636, %v5110, 0
    %v5122 = vsel %vm636, %v5111, 0
    %5124 = vmatpush.msra.mxu0 0.0
    %5125 = vmatpush.msra.mxu0 0.0
    %5126 = vmatpush.msra.mxu0 0.0
    %5127 = vmatpush.msra.mxu0 0.0
    %5128 = vmatpush.msra.mxu0 0.0
    %5129 = vmatpush.msra.mxu0 0.0
    %5130 = vmatpush.msra.mxu0 0.0
    %5131 = vmatpush.msra.mxu0 0.0
    %5132 = vmatpush.msra.mxu0 0.0
    %5133 = vmatpush.msra.mxu0 0.0
    %5134 = vmatpush.msra.mxu0 0.0
    %5135 = vmatpush.msra.mxu0 0.0
    %5136 = vmatpush.msra.mxu0 0.0
    %5137 = vmatpush.msra.mxu0 0.0
    %5138 = vmatpush.msra.mxu0 %v5115
    %5139 = vmatpush.msra.mxu0 %v5113
    %5140 = vmatmul.f32.gmra.mxu0 %v5119
    %v5141 = vpop.f32.mrf.mxu0
    %v5142 = vadd.f32 0.0, %v5141
    %5143 = vmatmul.f32.gmra.mxu0 %v5122
    %v5144 = vpop.f32.mrf.mxu0
    %v5145 = vadd.f32 0.0, %v5144
    %5146 = vdwg.mxu0
    %5149 = vrot.lane.b32.xlu0 %v4946, 8
    %v5150 = vpop.permute.xlu0 %5149
    %5151 = vrot.lane.b32.xlu0 %v4949, 8
    %v5152 = vpop.permute.xlu0 %5151
    %5157 = vrot.lane.b32.xlu0 %v5044, 16
    %v5158 = vpop.permute.xlu0 %5157
    %5159 = vrot.lane.b32.xlu0 %v5047, 16
    %v5160 = vpop.permute.xlu0 %5159
    %5165 = vrot.lane.b32.xlu0 %v5142, 24
    %v5166 = vpop.permute.xlu0 %5165
    %5167 = vrot.lane.b32.xlu0 %v5145, 24
    %v5168 = vpop.permute.xlu0 %5167
    %v5171 = vsel %vm358, %v4848, %v5150
    %v5172 = vsel %vm358, %v4851, %v5152
    %v5173 = vsel %vm636, %v5171, %v5158
    %v5174 = vsel %vm636, %v5172, %v5160
    %v5175 = vsel %vm638, %v5173, %v5166
    %v5176 = vsel %vm638, %v5174, %v5168
    %v5178 = vperm.slane %v4292, 0
    %v5181 = vsel %vm325, %v4755, 0
    %v5184 = vsel %vm325, %v4756, 0
    %v5187 = vsel %vm325, %v5175, 0
    %v5190 = vsel %vm325, %v5176, 0
    %5192 = vmatpush.msra.mxu0 0.0
    %5193 = vmatpush.msra.mxu0 0.0
    %5194 = vmatpush.msra.mxu0 0.0
    %5195 = vmatpush.msra.mxu0 0.0
    %5196 = vmatpush.msra.mxu0 0.0
    %5197 = vmatpush.msra.mxu0 0.0
    %5198 = vmatpush.msra.mxu0 0.0
    %5199 = vmatpush.msra.mxu0 0.0
    %5200 = vmatpush.msra.mxu0 0.0
    %5201 = vmatpush.msra.mxu0 0.0
    %5202 = vmatpush.msra.mxu0 0.0
    %5203 = vmatpush.msra.mxu0 0.0
    %5204 = vmatpush.msra.mxu0 %v4290
    %5205 = vmatpush.msra.mxu0 %v4289
    %5206 = vmatpush.msra.mxu0 %v4288
    %5207 = vmatpush.msra.mxu0 %v4287
    %5208 = vmatmul.f32.gmra.mxu0 %v5181
    %v5209 = vpop.f32.mrf.mxu0
    %v5210 = vadd.f32 %v5178, %v5209
    %5211 = vmatmul.f32.gmra.mxu0 %v5184
    %v5212 = vpop.f32.mrf.mxu0
    %v5213 = vadd.f32 %v5178, %v5212
    %5214 = vmatmul.f32.gmra.mxu0 %v5187
    %v5215 = vpop.f32.mrf.mxu0
    %v5216 = vadd.f32 %v5178, %v5215
    %5217 = vmatmul.f32.gmra.mxu0 %v5190
    %v5218 = vpop.f32.mrf.mxu0
    %v5219 = vadd.f32 %v5178, %v5218
    %5220 = vdwg.mxu0
    %v5221 = vadd.f32 %v4275, %v5210
    %v5222 = vadd.f32 %v4276, %v5213
    %v5223 = vadd.f32 %v4277, %v5216
    %v5224 = vadd.f32 %v4278, %v5219
    %s5225 = scalar_lea.vmem %s25, 2
    %v5226 = vld [vmem:[%s5225] sm:$0x3]
    %v5227 = vsel %vm325, %v5221, 0.0
    %5228 = vadd.xlane.f32.xlu0 %v5227
    %v5229 = vpop.xlane.xlu0 %5228
    %v5230 = vsel %vm325, %v5222, 0.0
    %5231 = vadd.xlane.f32.xlu0 %v5230
    %v5232 = vpop.xlane.xlu0 %5231
    %v5233 = vsel %vm325, %v5223, 0.0
    %5234 = vadd.xlane.f32.xlu0 %v5233
    %v5235 = vpop.xlane.xlu0 %5234
    %v5236 = vsel %vm325, %v5224, 0.0
    %5237 = vadd.xlane.f32.xlu0 %v5236
    %v5238 = vpop.xlane.xlu0 %5237
    %v5239 = vmul.f32 %v5229, %v969
    %v5240 = vmul.f32 %v5232, %v969
    %v5241 = vmul.f32 %v5235, %v969
    %v5242 = vmul.f32 %v5238, %v969
    %v5243 = vsub.f32 %v5221, %v5239
    %v5244 = vsub.f32 %v5222, %v5240
    %v5245 = vsub.f32 %v5223, %v5241
    %v5246 = vsub.f32 %v5224, %v5242
    %v5247 = vmul.f32 %v5243, %v5243
    %v5248 = vmul.f32 %v5244, %v5244
    %v5249 = vmul.f32 %v5245, %v5245
    %v5250 = vmul.f32 %v5246, %v5246
    %v5251 = vsel %vm325, %v5247, 0.0
    %5252 = vadd.xlane.f32.xlu0 %v5251
    %v5253 = vpop.xlane.xlu0 %5252
    %v5254 = vsel %vm325, %v5248, 0.0
    %5255 = vadd.xlane.f32.xlu0 %v5254
    %v5256 = vpop.xlane.xlu0 %5255
    %v5257 = vsel %vm325, %v5249, 0.0
    %5258 = vadd.xlane.f32.xlu0 %v5257
    %v5259 = vpop.xlane.xlu0 %5258
    %v5260 = vsel %vm325, %v5250, 0.0
    %5261 = vadd.xlane.f32.xlu0 %v5260
    %v5262 = vpop.xlane.xlu0 %5261
    %v5263 = vmul.f32 %v5253, %v969
    %v5264 = vmul.f32 %v5256, %v969
    %v5265 = vmul.f32 %v5259, %v969
    %v5266 = vmul.f32 %v5262, %v969
    %v5267 = vadd.f32 %v5263, 1e-05
    %v5268 = vadd.f32 %v5264, 1e-05
    %v5269 = vadd.f32 %v5265, 1e-05
    %v5270 = vadd.f32 %v5266, 1e-05
    %v5271 = vrsqrt.pop %v5267
    %v5272 = vmul.f32 %v5271, %v5267
    %v5273 = vmul.f32 %v5272, %v5271
    %v5274 = vmul.f32 0.5, %v5273
    %v5275 = vsub.f32 1.5, %v5274
    %v5276 = vmul.f32 %v5271, %v5275
    %vm5277 = vweird.f32 %v5267
    %vm5278 = vweird.f32 %v5271
    %vm5279 = vmor %vm5277, %vm5278
    %v5280 = vsel %vm5279, %v5271, %v5276
    %v5281 = vrsqrt.pop %v5268
    %v5282 = vmul.f32 %v5281, %v5268
    %v5283 = vmul.f32 %v5282, %v5281
    %v5284 = vmul.f32 0.5, %v5283
    %v5285 = vsub.f32 1.5, %v5284
    %v5286 = vmul.f32 %v5281, %v5285
    %vm5287 = vweird.f32 %v5268
    %vm5288 = vweird.f32 %v5281
    %vm5289 = vmor %vm5287, %vm5288
    %v5290 = vsel %vm5289, %v5281, %v5286
    %v5291 = vrsqrt.pop %v5269
    %v5292 = vmul.f32 %v5291, %v5269
    %v5293 = vmul.f32 %v5292, %v5291
    %v5294 = vmul.f32 0.5, %v5293
    %v5295 = vsub.f32 1.5, %v5294
    %v5296 = vmul.f32 %v5291, %v5295
    %vm5297 = vweird.f32 %v5269
    %vm5298 = vweird.f32 %v5291
    %vm5299 = vmor %vm5297, %vm5298
    %v5300 = vsel %vm5299, %v5291, %v5296
    %v5301 = vrsqrt.pop %v5270
    %v5302 = vmul.f32 %v5301, %v5270
    %v5303 = vmul.f32 %v5302, %v5301
    %v5304 = vmul.f32 0.5, %v5303
    %v5305 = vsub.f32 1.5, %v5304
    %v5306 = vmul.f32 %v5301, %v5305
    %vm5307 = vweird.f32 %v5270
    %vm5308 = vweird.f32 %v5301
    %vm5309 = vmor %vm5307, %vm5308
    %v5310 = vsel %vm5309, %v5301, %v5306
    %v5311 = vmul.f32 %v5243, %v5280
    %v5312 = vmul.f32 %v5244, %v5290
    %v5313 = vmul.f32 %v5245, %v5300
    %v5314 = vmul.f32 %v5246, %v5310
    %v5315 = vperm.slane %v5226, 0
    %v5316 = vmul.f32 %v5311, %v5315
    %v5317 = vmul.f32 %v5312, %v5315
    %v5318 = vmul.f32 %v5313, %v5315
    %v5319 = vmul.f32 %v5314, %v5315
    %v5320 = vperm.slane %v5226, 1
    %v5321 = vadd.f32 %v5316, %v5320
    %v5322 = vadd.f32 %v5317, %v5320
    %v5323 = vadd.f32 %v5318, %v5320
    %v5324 = vadd.f32 %v5319, %v5320
    %s5325 = scalar_lea.vmem %s23, 32
    %v5326 = vld [vmem:[%s5325] sm:$0xff]
    %v5327 = vld [vmem:[%s5325 + $0x8] sm:$0xff]
    %v5328 = vld [vmem:[%s5325 + $0x10] sm:$0xff]
    %v5329 = vld [vmem:[%s5325 + $0x18] sm:$0xff]
    %s5330 = scalar_lea.vmem %s19, 1
    %v5331 = vld [vmem:[%s5330] sm:$0x1]
    %s5332 = scalar_lea.vmem %s21, 32
    %v5333 = vld [vmem:[%s5332] sm:$0xff]
    %v5334 = vld [vmem:[%s5332 + $0x8] sm:$0xff]
    %v5335 = vld [vmem:[%s5332 + $0x10] sm:$0xff]
    %v5336 = vld [vmem:[%s5332 + $0x18] sm:$0xff]
    %s5337 = scalar_lea.vmem %s17, 1
    %v5338 = vld [vmem:[%s5337] sm:$0x1]
    %v5340 = vperm.slane %v5331, 0
    %v5343 = vsel %vm325, %v5321, 0
    %v5346 = vsel %vm325, %v5322, 0
    %v5349 = vsel %vm325, %v5323, 0
    %v5352 = vsel %vm325, %v5324, 0
    %5354 = vmatpush.msra.mxu0 0.0
    %5355 = vmatpush.msra.mxu0 0.0
    %5356 = vmatpush.msra.mxu0 0.0
    %5357 = vmatpush.msra.mxu0 0.0
    %5358 = vmatpush.msra.mxu0 0.0
    %5359 = vmatpush.msra.mxu0 0.0
    %5360 = vmatpush.msra.mxu0 0.0
    %5361 = vmatpush.msra.mxu0 0.0
    %5362 = vmatpush.msra.mxu0 0.0
    %5363 = vmatpush.msra.mxu0 0.0
    %5364 = vmatpush.msra.mxu0 0.0
    %5365 = vmatpush.msra.mxu0 0.0
    %5366 = vmatpush.msra.mxu0 %v5329
    %5367 = vmatpush.msra.mxu0 %v5328
    %5368 = vmatpush.msra.mxu0 %v5327
    %5369 = vmatpush.msra.mxu0 %v5326
    %5370 = vmatmul.f32.gmra.mxu0 %v5343
    %v5371 = vpop.f32.mrf.mxu0
    %v5372 = vadd.f32 %v5340, %v5371
    %5373 = vmatmul.f32.gmra.mxu0 %v5346
    %v5374 = vpop.f32.mrf.mxu0
    %v5375 = vadd.f32 %v5340, %v5374
    %5376 = vmatmul.f32.gmra.mxu0 %v5349
    %v5377 = vpop.f32.mrf.mxu0
    %v5378 = vadd.f32 %v5340, %v5377
    %5379 = vmatmul.f32.gmra.mxu0 %v5352
    %v5380 = vpop.f32.mrf.mxu0
    %v5381 = vadd.f32 %v5340, %v5380
    %5382 = vdwg.mxu0
    %5387 = vrot.lane.b32.xlu0 %v5326, 96
    %v5388 = vpop.permute.xlu0 %5387
    %5389 = vrot.lane.b32.xlu0 %v5327, 96
    %v5390 = vpop.permute.xlu0 %5389
    %5391 = vrot.lane.b32.xlu0 %v5328, 96
    %v5392 = vpop.permute.xlu0 %5391
    %5393 = vrot.lane.b32.xlu0 %v5329, 96
    %v5394 = vpop.permute.xlu0 %5393
    %5399 = vrot.lane.b32.xlu0 %v5340, 96
    %v5400 = vpop.permute.xlu0 %5399
    %5402 = vmatpush.msra.mxu0 0.0
    %5403 = vmatpush.msra.mxu0 0.0
    %5404 = vmatpush.msra.mxu0 0.0
    %5405 = vmatpush.msra.mxu0 0.0
    %5406 = vmatpush.msra.mxu0 0.0
    %5407 = vmatpush.msra.mxu0 0.0
    %5408 = vmatpush.msra.mxu0 0.0
    %5409 = vmatpush.msra.mxu0 0.0
    %5410 = vmatpush.msra.mxu0 0.0
    %5411 = vmatpush.msra.mxu0 0.0
    %5412 = vmatpush.msra.mxu0 0.0
    %5413 = vmatpush.msra.mxu0 0.0
    %5414 = vmatpush.msra.mxu0 %v5394
    %5415 = vmatpush.msra.mxu0 %v5392
    %5416 = vmatpush.msra.mxu0 %v5390
    %5417 = vmatpush.msra.mxu0 %v5388
    %5418 = vmatmul.f32.gmra.mxu0 %v3097
    %v5419 = vpop.f32.mrf.mxu0
    %v5420 = vadd.f32 %v5400, %v5419
    %5421 = vmatmul.f32.gmra.mxu0 %v3100
    %v5422 = vpop.f32.mrf.mxu0
    %v5423 = vadd.f32 %v5400, %v5422
    %5424 = vdwg.mxu0
    %v5426 = vsel %vm358, %v5372, 0
    %v5429 = vsel %vm358, %v5375, 0
    %v5432 = vsel %vm358, %v5420, 0
    %5434 = vmatpush.xpose.msra.mxu0 0.0
    %5435 = vmatpush.xpose.msra.mxu0 0.0
    %5436 = vmatpush.xpose.msra.mxu0 0.0
    %5437 = vmatpush.xpose.msra.mxu0 0.0
    %5438 = vmatpush.xpose.msra.mxu0 0.0
    %5439 = vmatpush.xpose.msra.mxu0 0.0
    %5440 = vmatpush.xpose.msra.mxu0 0.0
    %5441 = vmatpush.xpose.msra.mxu0 0.0
    %5442 = vmatpush.xpose.msra.mxu0 0.0
    %5443 = vmatpush.xpose.msra.mxu0 0.0
    %5444 = vmatpush.xpose.msra.mxu0 0.0
    %5445 = vmatpush.xpose.msra.mxu0 0.0
    %5446 = vmatpush.xpose.msra.mxu0 0.0
    %5447 = vmatpush.xpose.msra.mxu0 0.0
    %5448 = vmatpush.xpose.msra.mxu0 0.0
    %5449 = vmatpush.xpose.msra.mxu0 %v5432
    %5450 = vmatmul.f32.gmra.mxu0 %v5426
    %v5451 = vpop.f32.mrf.mxu0
    %v5452 = vadd.f32 0.0, %v5451
    %5453 = vmatmul.f32.gmra.mxu0 %v5429
    %v5454 = vpop.f32.mrf.mxu0
    %v5455 = vadd.f32 0.0, %v5454
    %5456 = vdwg.mxu0
    %v5457 = vmul.f32 %v5452, 0.35355338
    %v5458 = vmul.f32 %v5455, 0.35355338
    %v5459 = vadd.f32 %v5457, %v250
    %v5460 = vadd.f32 %v5458, %v250
    %v5461 = vsel %vm358, %v5459, -inf
    %5462 = vmax.xlane.f32.xlu0 %v5461
    %v5463 = vpop.xlane.xlu0 %5462
    %v5464 = vsel %vm358, %v5460, -inf
    %5465 = vmax.xlane.f32.xlu0 %v5464
    %v5466 = vpop.xlane.xlu0 %5465
    %v5467 = vsub.f32 %v5459, %v5463
    %v5468 = vsub.f32 %v5460, %v5466
    %v5469 = vmul.f32 %v5467, 1.442695
    %v5470 = vpow.pop %v5469
    %v5471 = vmul.f32 %v5468, 1.442695
    %v5472 = vpow.pop %v5471
    %v5473 = vsel %vm358, %v5470, 0.0
    %5474 = vadd.xlane.f32.xlu0 %v5473
    %v5475 = vpop.xlane.xlu0 %5474
    %v5476 = vsel %vm358, %v5472, 0.0
    %5477 = vadd.xlane.f32.xlu0 %v5476
    %v5478 = vpop.xlane.xlu0 %5477
    %v5479 = vrcp.pop %v5475
    %v5480 = vrcp.pop %v5478
    %v5481 = vmul.f32 %v5470, %v5479
    %v5482 = vmul.f32 %v5472, %v5480
    %5483 = vrot.lane.b32.xlu0 %v5420, 96
    %v5484 = vpop.permute.xlu0 %5483
    %v5487 = vsel %vm358, %v5481, 0
    %v5490 = vsel %vm358, %v5482, 0
    %5492 = vmatpush.msra.mxu0 0.0
    %5493 = vmatpush.msra.mxu0 0.0
    %5494 = vmatpush.msra.mxu0 0.0
    %5495 = vmatpush.msra.mxu0 0.0
    %5496 = vmatpush.msra.mxu0 0.0
    %5497 = vmatpush.msra.mxu0 0.0
    %5498 = vmatpush.msra.mxu0 0.0
    %5499 = vmatpush.msra.mxu0 0.0
    %5500 = vmatpush.msra.mxu0 0.0
    %5501 = vmatpush.msra.mxu0 0.0
    %5502 = vmatpush.msra.mxu0 0.0
    %5503 = vmatpush.msra.mxu0 0.0
    %5504 = vmatpush.msra.mxu0 0.0
    %5505 = vmatpush.msra.mxu0 0.0
    %5506 = vmatpush.msra.mxu0 0.0
    %5507 = vmatpush.msra.mxu0 %v5484
    %5508 = vmatmul.f32.gmra.mxu0 %v5487
    %v5509 = vpop.f32.mrf.mxu0
    %v5510 = vadd.f32 0.0, %v5509
    %5511 = vmatmul.f32.gmra.mxu0 %v5490
    %v5512 = vpop.f32.mrf.mxu0
    %v5513 = vadd.f32 0.0, %v5512
    %5514 = vdwg.mxu0
    %5515 = vrot.lane.b32.xlu0 %v5372, 120
    %v5516 = vpop.permute.xlu0 %5515
    %5517 = vrot.lane.b32.xlu0 %v5375, 120
    %v5518 = vpop.permute.xlu0 %5517
    %5519 = vrot.lane.b32.xlu0 %v5420, 120
    %v5520 = vpop.permute.xlu0 %5519
    %v5521 = vsel %vm358, %v5516, 0
    %v5523 = vsel %vm358, %v5518, 0
    %v5525 = vsel %vm358, %v5520, 0
    %5527 = vmatpush.xpose.msra.mxu0 0.0
    %5528 = vmatpush.xpose.msra.mxu0 0.0
    %5529 = vmatpush.xpose.msra.mxu0 0.0
    %5530 = vmatpush.xpose.msra.mxu0 0.0
    %5531 = vmatpush.xpose.msra.mxu0 0.0
    %5532 = vmatpush.xpose.msra.mxu0 0.0
    %5533 = vmatpush.xpose.msra.mxu0 0.0
    %5534 = vmatpush.xpose.msra.mxu0 0.0
    %5535 = vmatpush.xpose.msra.mxu0 0.0
    %5536 = vmatpush.xpose.msra.mxu0 0.0
    %5537 = vmatpush.xpose.msra.mxu0 0.0
    %5538 = vmatpush.xpose.msra.mxu0 0.0
    %5539 = vmatpush.xpose.msra.mxu0 0.0
    %5540 = vmatpush.xpose.msra.mxu0 0.0
    %5541 = vmatpush.xpose.msra.mxu0 0.0
    %5542 = vmatpush.xpose.msra.mxu0 %v5525
    %5543 = vmatmul.f32.gmra.mxu0 %v5521
    %v5544 = vpop.f32.mrf.mxu0
    %v5545 = vadd.f32 0.0, %v5544
    %5546 = vmatmul.f32.gmra.mxu0 %v5523
    %v5547 = vpop.f32.mrf.mxu0
    %v5548 = vadd.f32 0.0, %v5547
    %5549 = vdwg.mxu0
    %v5550 = vmul.f32 %v5545, 0.35355338
    %v5551 = vmul.f32 %v5548, 0.35355338
    %v5552 = vadd.f32 %v5550, %v250
    %v5553 = vadd.f32 %v5551, %v250
    %v5554 = vsel %vm358, %v5552, -inf
    %5555 = vmax.xlane.f32.xlu0 %v5554
    %v5556 = vpop.xlane.xlu0 %5555
    %v5557 = vsel %vm358, %v5553, -inf
    %5558 = vmax.xlane.f32.xlu0 %v5557
    %v5559 = vpop.xlane.xlu0 %5558
    %v5560 = vsub.f32 %v5552, %v5556
    %v5561 = vsub.f32 %v5553, %v5559
    %v5562 = vmul.f32 %v5560, 1.442695
    %v5563 = vpow.pop %v5562
    %v5564 = vmul.f32 %v5561, 1.442695
    %v5565 = vpow.pop %v5564
    %v5566 = vsel %vm358, %v5563, 0.0
    %5567 = vadd.xlane.f32.xlu0 %v5566
    %v5568 = vpop.xlane.xlu0 %5567
    %v5569 = vsel %vm358, %v5565, 0.0
    %5570 = vadd.xlane.f32.xlu0 %v5569
    %v5571 = vpop.xlane.xlu0 %5570
    %v5572 = vrcp.pop %v5568
    %v5573 = vrcp.pop %v5571
    %v5574 = vmul.f32 %v5563, %v5572
    %v5575 = vmul.f32 %v5565, %v5573
    %5576 = vrot.lane.b32.xlu0 %v5420, 88
    %v5577 = vpop.permute.xlu0 %5576
    %v5580 = vsel %vm358, %v5574, 0
    %v5583 = vsel %vm358, %v5575, 0
    %5585 = vmatpush.msra.mxu0 0.0
    %5586 = vmatpush.msra.mxu0 0.0
    %5587 = vmatpush.msra.mxu0 0.0
    %5588 = vmatpush.msra.mxu0 0.0
    %5589 = vmatpush.msra.mxu0 0.0
    %5590 = vmatpush.msra.mxu0 0.0
    %5591 = vmatpush.msra.mxu0 0.0
    %5592 = vmatpush.msra.mxu0 0.0
    %5593 = vmatpush.msra.mxu0 0.0
    %5594 = vmatpush.msra.mxu0 0.0
    %5595 = vmatpush.msra.mxu0 0.0
    %5596 = vmatpush.msra.mxu0 0.0
    %5597 = vmatpush.msra.mxu0 0.0
    %5598 = vmatpush.msra.mxu0 0.0
    %5599 = vmatpush.msra.mxu0 0.0
    %5600 = vmatpush.msra.mxu0 %v5577
    %5601 = vmatmul.f32.gmra.mxu0 %v5580
    %v5602 = vpop.f32.mrf.mxu0
    %v5603 = vadd.f32 0.0, %v5602
    %5604 = vmatmul.f32.gmra.mxu0 %v5583
    %v5605 = vpop.f32.mrf.mxu0
    %v5606 = vadd.f32 0.0, %v5605
    %5607 = vdwg.mxu0
    %5608 = vrot.lane.b32.xlu0 %v5372, 112
    %v5609 = vpop.permute.xlu0 %5608
    %5610 = vrot.lane.b32.xlu0 %v5375, 112
    %v5611 = vpop.permute.xlu0 %5610
    %5612 = vrot.lane.b32.xlu0 %v5420, 112
    %v5613 = vpop.permute.xlu0 %5612
    %v5614 = vsel %vm358, %v5609, 0
    %v5616 = vsel %vm358, %v5611, 0
    %v5618 = vsel %vm358, %v5613, 0
    %5620 = vmatpush.xpose.msra.mxu0 0.0
    %5621 = vmatpush.xpose.msra.mxu0 0.0
    %5622 = vmatpush.xpose.msra.mxu0 0.0
    %5623 = vmatpush.xpose.msra.mxu0 0.0
    %5624 = vmatpush.xpose.msra.mxu0 0.0
    %5625 = vmatpush.xpose.msra.mxu0 0.0
    %5626 = vmatpush.xpose.msra.mxu0 0.0
    %5627 = vmatpush.xpose.msra.mxu0 0.0
    %5628 = vmatpush.xpose.msra.mxu0 0.0
    %5629 = vmatpush.xpose.msra.mxu0 0.0
    %5630 = vmatpush.xpose.msra.mxu0 0.0
    %5631 = vmatpush.xpose.msra.mxu0 0.0
    %5632 = vmatpush.xpose.msra.mxu0 0.0
    %5633 = vmatpush.xpose.msra.mxu0 0.0
    %5634 = vmatpush.xpose.msra.mxu0 0.0
    %5635 = vmatpush.xpose.msra.mxu0 %v5618
    %5636 = vmatmul.f32.gmra.mxu0 %v5614
    %v5637 = vpop.f32.mrf.mxu0
    %v5638 = vadd.f32 0.0, %v5637
    %5639 = vmatmul.f32.gmra.mxu0 %v5616
    %v5640 = vpop.f32.mrf.mxu0
    %v5641 = vadd.f32 0.0, %v5640
    %5642 = vdwg.mxu0
    %v5643 = vmul.f32 %v5638, 0.35355338
    %v5644 = vmul.f32 %v5641, 0.35355338
    %v5645 = vadd.f32 %v5643, %v250
    %v5646 = vadd.f32 %v5644, %v250
    %v5647 = vsel %vm358, %v5645, -inf
    %5648 = vmax.xlane.f32.xlu0 %v5647
    %v5649 = vpop.xlane.xlu0 %5648
    %v5650 = vsel %vm358, %v5646, -inf
    %5651 = vmax.xlane.f32.xlu0 %v5650
    %v5652 = vpop.xlane.xlu0 %5651
    %v5653 = vsub.f32 %v5645, %v5649
    %v5654 = vsub.f32 %v5646, %v5652
    %v5655 = vmul.f32 %v5653, 1.442695
    %v5656 = vpow.pop %v5655
    %v5657 = vmul.f32 %v5654, 1.442695
    %v5658 = vpow.pop %v5657
    %v5659 = vsel %vm358, %v5656, 0.0
    %5660 = vadd.xlane.f32.xlu0 %v5659
    %v5661 = vpop.xlane.xlu0 %5660
    %v5662 = vsel %vm358, %v5658, 0.0
    %5663 = vadd.xlane.f32.xlu0 %v5662
    %v5664 = vpop.xlane.xlu0 %5663
    %v5665 = vrcp.pop %v5661
    %v5666 = vrcp.pop %v5664
    %v5667 = vmul.f32 %v5656, %v5665
    %v5668 = vmul.f32 %v5658, %v5666
    %5669 = vrot.lane.b32.xlu0 %v5420, 80
    %v5670 = vpop.permute.xlu0 %5669
    %v5673 = vsel %vm358, %v5667, 0
    %v5676 = vsel %vm358, %v5668, 0
    %5678 = vmatpush.msra.mxu0 0.0
    %5679 = vmatpush.msra.mxu0 0.0
    %5680 = vmatpush.msra.mxu0 0.0
    %5681 = vmatpush.msra.mxu0 0.0
    %5682 = vmatpush.msra.mxu0 0.0
    %5683 = vmatpush.msra.mxu0 0.0
    %5684 = vmatpush.msra.mxu0 0.0
    %5685 = vmatpush.msra.mxu0 0.0
    %5686 = vmatpush.msra.mxu0 0.0
    %5687 = vmatpush.msra.mxu0 0.0
    %5688 = vmatpush.msra.mxu0 0.0
    %5689 = vmatpush.msra.mxu0 0.0
    %5690 = vmatpush.msra.mxu0 0.0
    %5691 = vmatpush.msra.mxu0 0.0
    %5692 = vmatpush.msra.mxu0 0.0
    %5693 = vmatpush.msra.mxu0 %v5670
    %5694 = vmatmul.f32.gmra.mxu0 %v5673
    %v5695 = vpop.f32.mrf.mxu0
    %v5696 = vadd.f32 0.0, %v5695
    %5697 = vmatmul.f32.gmra.mxu0 %v5676
    %v5698 = vpop.f32.mrf.mxu0
    %v5699 = vadd.f32 0.0, %v5698
    %5700 = vdwg.mxu0
    %5701 = vrot.lane.b32.xlu0 %v5372, 104
    %v5702 = vpop.permute.xlu0 %5701
    %5703 = vrot.lane.b32.xlu0 %v5375, 104
    %v5704 = vpop.permute.xlu0 %5703
    %5705 = vrot.lane.b32.xlu0 %v5420, 104
    %v5706 = vpop.permute.xlu0 %5705
    %v5707 = vsel %vm358, %v5702, 0
    %v5709 = vsel %vm358, %v5704, 0
    %v5711 = vsel %vm358, %v5706, 0
    %5713 = vmatpush.xpose.msra.mxu0 0.0
    %5714 = vmatpush.xpose.msra.mxu0 0.0
    %5715 = vmatpush.xpose.msra.mxu0 0.0
    %5716 = vmatpush.xpose.msra.mxu0 0.0
    %5717 = vmatpush.xpose.msra.mxu0 0.0
    %5718 = vmatpush.xpose.msra.mxu0 0.0
    %5719 = vmatpush.xpose.msra.mxu0 0.0
    %5720 = vmatpush.xpose.msra.mxu0 0.0
    %5721 = vmatpush.xpose.msra.mxu0 0.0
    %5722 = vmatpush.xpose.msra.mxu0 0.0
    %5723 = vmatpush.xpose.msra.mxu0 0.0
    %5724 = vmatpush.xpose.msra.mxu0 0.0
    %5725 = vmatpush.xpose.msra.mxu0 0.0
    %5726 = vmatpush.xpose.msra.mxu0 0.0
    %5727 = vmatpush.xpose.msra.mxu0 0.0
    %5728 = vmatpush.xpose.msra.mxu0 %v5711
    %5729 = vmatmul.f32.gmra.mxu0 %v5707
    %v5730 = vpop.f32.mrf.mxu0
    %v5731 = vadd.f32 0.0, %v5730
    %5732 = vmatmul.f32.gmra.mxu0 %v5709
    %v5733 = vpop.f32.mrf.mxu0
    %v5734 = vadd.f32 0.0, %v5733
    %5735 = vdwg.mxu0
    %v5736 = vmul.f32 %v5731, 0.35355338
    %v5737 = vmul.f32 %v5734, 0.35355338
    %v5738 = vadd.f32 %v5736, %v250
    %v5739 = vadd.f32 %v5737, %v250
    %v5740 = vsel %vm358, %v5738, -inf
    %5741 = vmax.xlane.f32.xlu0 %v5740
    %v5742 = vpop.xlane.xlu0 %5741
    %v5743 = vsel %vm358, %v5739, -inf
    %5744 = vmax.xlane.f32.xlu0 %v5743
    %v5745 = vpop.xlane.xlu0 %5744
    %v5746 = vsub.f32 %v5738, %v5742
    %v5747 = vsub.f32 %v5739, %v5745
    %v5748 = vmul.f32 %v5746, 1.442695
    %v5749 = vpow.pop %v5748
    %v5750 = vmul.f32 %v5747, 1.442695
    %v5751 = vpow.pop %v5750
    %v5752 = vsel %vm358, %v5749, 0.0
    %5753 = vadd.xlane.f32.xlu0 %v5752
    %v5754 = vpop.xlane.xlu0 %5753
    %v5755 = vsel %vm358, %v5751, 0.0
    %5756 = vadd.xlane.f32.xlu0 %v5755
    %v5757 = vpop.xlane.xlu0 %5756
    %v5758 = vrcp.pop %v5754
    %v5759 = vrcp.pop %v5757
    %v5760 = vmul.f32 %v5749, %v5758
    %v5761 = vmul.f32 %v5751, %v5759
    %5762 = vrot.lane.b32.xlu0 %v5420, 72
    %v5763 = vpop.permute.xlu0 %5762
    %v5766 = vsel %vm358, %v5760, 0
    %v5769 = vsel %vm358, %v5761, 0
    %5771 = vmatpush.msra.mxu0 0.0
    %5772 = vmatpush.msra.mxu0 0.0
    %5773 = vmatpush.msra.mxu0 0.0
    %5774 = vmatpush.msra.mxu0 0.0
    %5775 = vmatpush.msra.mxu0 0.0
    %5776 = vmatpush.msra.mxu0 0.0
    %5777 = vmatpush.msra.mxu0 0.0
    %5778 = vmatpush.msra.mxu0 0.0
    %5779 = vmatpush.msra.mxu0 0.0
    %5780 = vmatpush.msra.mxu0 0.0
    %5781 = vmatpush.msra.mxu0 0.0
    %5782 = vmatpush.msra.mxu0 0.0
    %5783 = vmatpush.msra.mxu0 0.0
    %5784 = vmatpush.msra.mxu0 0.0
    %5785 = vmatpush.msra.mxu0 0.0
    %5786 = vmatpush.msra.mxu0 %v5763
    %5787 = vmatmul.f32.gmra.mxu0 %v5766
    %v5788 = vpop.f32.mrf.mxu0
    %v5789 = vadd.f32 0.0, %v5788
    %5790 = vmatmul.f32.gmra.mxu0 %v5769
    %v5791 = vpop.f32.mrf.mxu0
    %v5792 = vadd.f32 0.0, %v5791
    %5793 = vdwg.mxu0
    %5796 = vrot.lane.b32.xlu0 %v5603, 8
    %v5797 = vpop.permute.xlu0 %5796
    %5798 = vrot.lane.b32.xlu0 %v5606, 8
    %v5799 = vpop.permute.xlu0 %5798
    %5804 = vrot.lane.b32.xlu0 %v5696, 16
    %v5805 = vpop.permute.xlu0 %5804
    %5806 = vrot.lane.b32.xlu0 %v5699, 16
    %v5807 = vpop.permute.xlu0 %5806
    %5812 = vrot.lane.b32.xlu0 %v5789, 24
    %v5813 = vpop.permute.xlu0 %5812
    %5814 = vrot.lane.b32.xlu0 %v5792, 24
    %v5815 = vpop.permute.xlu0 %5814
    %v5818 = vsel %vm358, %v5510, %v5797
    %v5819 = vsel %vm358, %v5513, %v5799
    %v5820 = vsel %vm636, %v5818, %v5805
    %v5821 = vsel %vm636, %v5819, %v5807
    %v5822 = vsel %vm638, %v5820, %v5813
    %v5823 = vsel %vm638, %v5821, %v5815
    %v5825 = vsel %vm358, %v5378, 0
    %v5828 = vsel %vm358, %v5381, 0
    %v5831 = vsel %vm358, %v5423, 0
    %5833 = vmatpush.xpose.msra.mxu0 0.0
    %5834 = vmatpush.xpose.msra.mxu0 0.0
    %5835 = vmatpush.xpose.msra.mxu0 0.0
    %5836 = vmatpush.xpose.msra.mxu0 0.0
    %5837 = vmatpush.xpose.msra.mxu0 0.0
    %5838 = vmatpush.xpose.msra.mxu0 0.0
    %5839 = vmatpush.xpose.msra.mxu0 0.0
    %5840 = vmatpush.xpose.msra.mxu0 0.0
    %5841 = vmatpush.xpose.msra.mxu0 0.0
    %5842 = vmatpush.xpose.msra.mxu0 0.0
    %5843 = vmatpush.xpose.msra.mxu0 0.0
    %5844 = vmatpush.xpose.msra.mxu0 0.0
    %5845 = vmatpush.xpose.msra.mxu0 0.0
    %5846 = vmatpush.xpose.msra.mxu0 0.0
    %5847 = vmatpush.xpose.msra.mxu0 0.0
    %5848 = vmatpush.xpose.msra.mxu0 %v5831
    %5849 = vmatmul.f32.gmra.mxu0 %v5825
    %v5850 = vpop.f32.mrf.mxu0
    %v5851 = vadd.f32 0.0, %v5850
    %5852 = vmatmul.f32.gmra.mxu0 %v5828
    %v5853 = vpop.f32.mrf.mxu0
    %v5854 = vadd.f32 0.0, %v5853
    %5855 = vdwg.mxu0
    %v5856 = vmul.f32 %v5851, 0.35355338
    %v5857 = vmul.f32 %v5854, 0.35355338
    %v5858 = vadd.f32 %v5856, %v252
    %v5859 = vadd.f32 %v5857, %v252
    %v5860 = vsel %vm358, %v5858, -inf
    %5861 = vmax.xlane.f32.xlu0 %v5860
    %v5862 = vpop.xlane.xlu0 %5861
    %v5863 = vsel %vm358, %v5859, -inf
    %5864 = vmax.xlane.f32.xlu0 %v5863
    %v5865 = vpop.xlane.xlu0 %5864
    %v5866 = vsub.f32 %v5858, %v5862
    %v5867 = vsub.f32 %v5859, %v5865
    %v5868 = vmul.f32 %v5866, 1.442695
    %v5869 = vpow.pop %v5868
    %v5870 = vmul.f32 %v5867, 1.442695
    %v5871 = vpow.pop %v5870
    %v5872 = vsel %vm358, %v5869, 0.0
    %5873 = vadd.xlane.f32.xlu0 %v5872
    %v5874 = vpop.xlane.xlu0 %5873
    %v5875 = vsel %vm358, %v5871, 0.0
    %5876 = vadd.xlane.f32.xlu0 %v5875
    %v5877 = vpop.xlane.xlu0 %5876
    %v5878 = vrcp.pop %v5874
    %v5879 = vrcp.pop %v5877
    %v5880 = vmul.f32 %v5869, %v5878
    %v5881 = vmul.f32 %v5871, %v5879
    %5882 = vrot.lane.b32.xlu0 %v5423, 96
    %v5883 = vpop.permute.xlu0 %5882
    %v5886 = vsel %vm358, %v5880, 0
    %v5889 = vsel %vm358, %v5881, 0
    %5891 = vmatpush.msra.mxu0 0.0
    %5892 = vmatpush.msra.mxu0 0.0
    %5893 = vmatpush.msra.mxu0 0.0
    %5894 = vmatpush.msra.mxu0 0.0
    %5895 = vmatpush.msra.mxu0 0.0
    %5896 = vmatpush.msra.mxu0 0.0
    %5897 = vmatpush.msra.mxu0 0.0
    %5898 = vmatpush.msra.mxu0 0.0
    %5899 = vmatpush.msra.mxu0 0.0
    %5900 = vmatpush.msra.mxu0 0.0
    %5901 = vmatpush.msra.mxu0 0.0
    %5902 = vmatpush.msra.mxu0 0.0
    %5903 = vmatpush.msra.mxu0 0.0
    %5904 = vmatpush.msra.mxu0 0.0
    %5905 = vmatpush.msra.mxu0 0.0
    %5906 = vmatpush.msra.mxu0 %v5883
    %5907 = vmatmul.f32.gmra.mxu0 %v5886
    %v5908 = vpop.f32.mrf.mxu0
    %v5909 = vadd.f32 0.0, %v5908
    %5910 = vmatmul.f32.gmra.mxu0 %v5889
    %v5911 = vpop.f32.mrf.mxu0
    %v5912 = vadd.f32 0.0, %v5911
    %5913 = vdwg.mxu0
    %5914 = vrot.lane.b32.xlu0 %v5378, 120
    %v5915 = vpop.permute.xlu0 %5914
    %5916 = vrot.lane.b32.xlu0 %v5381, 120
    %v5917 = vpop.permute.xlu0 %5916
    %5918 = vrot.lane.b32.xlu0 %v5423, 120
    %v5919 = vpop.permute.xlu0 %5918
    %v5920 = vsel %vm358, %v5915, 0
    %v5922 = vsel %vm358, %v5917, 0
    %v5924 = vsel %vm358, %v5919, 0
    %5926 = vmatpush.xpose.msra.mxu0 0.0
    %5927 = vmatpush.xpose.msra.mxu0 0.0
    %5928 = vmatpush.xpose.msra.mxu0 0.0
    %5929 = vmatpush.xpose.msra.mxu0 0.0
    %5930 = vmatpush.xpose.msra.mxu0 0.0
    %5931 = vmatpush.xpose.msra.mxu0 0.0
    %5932 = vmatpush.xpose.msra.mxu0 0.0
    %5933 = vmatpush.xpose.msra.mxu0 0.0
    %5934 = vmatpush.xpose.msra.mxu0 0.0
    %5935 = vmatpush.xpose.msra.mxu0 0.0
    %5936 = vmatpush.xpose.msra.mxu0 0.0
    %5937 = vmatpush.xpose.msra.mxu0 0.0
    %5938 = vmatpush.xpose.msra.mxu0 0.0
    %5939 = vmatpush.xpose.msra.mxu0 0.0
    %5940 = vmatpush.xpose.msra.mxu0 0.0
    %5941 = vmatpush.xpose.msra.mxu0 %v5924
    %5942 = vmatmul.f32.gmra.mxu0 %v5920
    %v5943 = vpop.f32.mrf.mxu0
    %v5944 = vadd.f32 0.0, %v5943
    %5945 = vmatmul.f32.gmra.mxu0 %v5922
    %v5946 = vpop.f32.mrf.mxu0
    %v5947 = vadd.f32 0.0, %v5946
    %5948 = vdwg.mxu0
    %v5949 = vmul.f32 %v5944, 0.35355338
    %v5950 = vmul.f32 %v5947, 0.35355338
    %v5951 = vadd.f32 %v5949, %v252
    %v5952 = vadd.f32 %v5950, %v252
    %v5953 = vsel %vm358, %v5951, -inf
    %5954 = vmax.xlane.f32.xlu0 %v5953
    %v5955 = vpop.xlane.xlu0 %5954
    %v5956 = vsel %vm358, %v5952, -inf
    %5957 = vmax.xlane.f32.xlu0 %v5956
    %v5958 = vpop.xlane.xlu0 %5957
    %v5959 = vsub.f32 %v5951, %v5955
    %v5960 = vsub.f32 %v5952, %v5958
    %v5961 = vmul.f32 %v5959, 1.442695
    %v5962 = vpow.pop %v5961
    %v5963 = vmul.f32 %v5960, 1.442695
    %v5964 = vpow.pop %v5963
    %v5965 = vsel %vm358, %v5962, 0.0
    %5966 = vadd.xlane.f32.xlu0 %v5965
    %v5967 = vpop.xlane.xlu0 %5966
    %v5968 = vsel %vm358, %v5964, 0.0
    %5969 = vadd.xlane.f32.xlu0 %v5968
    %v5970 = vpop.xlane.xlu0 %5969
    %v5971 = vrcp.pop %v5967
    %v5972 = vrcp.pop %v5970
    %v5973 = vmul.f32 %v5962, %v5971
    %v5974 = vmul.f32 %v5964, %v5972
    %5975 = vrot.lane.b32.xlu0 %v5423, 88
    %v5976 = vpop.permute.xlu0 %5975
    %v5979 = vsel %vm358, %v5973, 0
    %v5982 = vsel %vm358, %v5974, 0
    %5984 = vmatpush.msra.mxu0 0.0
    %5985 = vmatpush.msra.mxu0 0.0
    %5986 = vmatpush.msra.mxu0 0.0
    %5987 = vmatpush.msra.mxu0 0.0
    %5988 = vmatpush.msra.mxu0 0.0
    %5989 = vmatpush.msra.mxu0 0.0
    %5990 = vmatpush.msra.mxu0 0.0
    %5991 = vmatpush.msra.mxu0 0.0
    %5992 = vmatpush.msra.mxu0 0.0
    %5993 = vmatpush.msra.mxu0 0.0
    %5994 = vmatpush.msra.mxu0 0.0
    %5995 = vmatpush.msra.mxu0 0.0
    %5996 = vmatpush.msra.mxu0 0.0
    %5997 = vmatpush.msra.mxu0 0.0
    %5998 = vmatpush.msra.mxu0 0.0
    %5999 = vmatpush.msra.mxu0 %v5976
    %6000 = vmatmul.f32.gmra.mxu0 %v5979
    %v6001 = vpop.f32.mrf.mxu0
    %v6002 = vadd.f32 0.0, %v6001
    %6003 = vmatmul.f32.gmra.mxu0 %v5982
    %v6004 = vpop.f32.mrf.mxu0
    %v6005 = vadd.f32 0.0, %v6004
    %6006 = vdwg.mxu0
    %6007 = vrot.lane.b32.xlu0 %v5378, 112
    %v6008 = vpop.permute.xlu0 %6007
    %6009 = vrot.lane.b32.xlu0 %v5381, 112
    %v6010 = vpop.permute.xlu0 %6009
    %6011 = vrot.lane.b32.xlu0 %v5423, 112
    %v6012 = vpop.permute.xlu0 %6011
    %v6013 = vsel %vm358, %v6008, 0
    %v6015 = vsel %vm358, %v6010, 0
    %v6017 = vsel %vm358, %v6012, 0
    %6019 = vmatpush.xpose.msra.mxu0 0.0
    %6020 = vmatpush.xpose.msra.mxu0 0.0
    %6021 = vmatpush.xpose.msra.mxu0 0.0
    %6022 = vmatpush.xpose.msra.mxu0 0.0
    %6023 = vmatpush.xpose.msra.mxu0 0.0
    %6024 = vmatpush.xpose.msra.mxu0 0.0
    %6025 = vmatpush.xpose.msra.mxu0 0.0
    %6026 = vmatpush.xpose.msra.mxu0 0.0
    %6027 = vmatpush.xpose.msra.mxu0 0.0
    %6028 = vmatpush.xpose.msra.mxu0 0.0
    %6029 = vmatpush.xpose.msra.mxu0 0.0
    %6030 = vmatpush.xpose.msra.mxu0 0.0
    %6031 = vmatpush.xpose.msra.mxu0 0.0
    %6032 = vmatpush.xpose.msra.mxu0 0.0
    %6033 = vmatpush.xpose.msra.mxu0 0.0
    %6034 = vmatpush.xpose.msra.mxu0 %v6017
    %6035 = vmatmul.f32.gmra.mxu0 %v6013
    %v6036 = vpop.f32.mrf.mxu0
    %v6037 = vadd.f32 0.0, %v6036
    %6038 = vmatmul.f32.gmra.mxu0 %v6015
    %v6039 = vpop.f32.mrf.mxu0
    %v6040 = vadd.f32 0.0, %v6039
    %6041 = vdwg.mxu0
    %v6042 = vmul.f32 %v6037, 0.35355338
    %v6043 = vmul.f32 %v6040, 0.35355338
    %v6044 = vadd.f32 %v6042, %v252
    %v6045 = vadd.f32 %v6043, %v252
    %v6046 = vsel %vm358, %v6044, -inf
    %6047 = vmax.xlane.f32.xlu0 %v6046
    %v6048 = vpop.xlane.xlu0 %6047
    %v6049 = vsel %vm358, %v6045, -inf
    %6050 = vmax.xlane.f32.xlu0 %v6049
    %v6051 = vpop.xlane.xlu0 %6050
    %v6052 = vsub.f32 %v6044, %v6048
    %v6053 = vsub.f32 %v6045, %v6051
    %v6054 = vmul.f32 %v6052, 1.442695
    %v6055 = vpow.pop %v6054
    %v6056 = vmul.f32 %v6053, 1.442695
    %v6057 = vpow.pop %v6056
    %v6058 = vsel %vm358, %v6055, 0.0
    %6059 = vadd.xlane.f32.xlu0 %v6058
    %v6060 = vpop.xlane.xlu0 %6059
    %v6061 = vsel %vm358, %v6057, 0.0
    %6062 = vadd.xlane.f32.xlu0 %v6061
    %v6063 = vpop.xlane.xlu0 %6062
    %v6064 = vrcp.pop %v6060
    %v6065 = vrcp.pop %v6063
    %v6066 = vmul.f32 %v6055, %v6064
    %v6067 = vmul.f32 %v6057, %v6065
    %6068 = vrot.lane.b32.xlu0 %v5423, 80
    %v6069 = vpop.permute.xlu0 %6068
    %v6072 = vsel %vm358, %v6066, 0
    %v6075 = vsel %vm358, %v6067, 0
    %6077 = vmatpush.msra.mxu0 0.0
    %6078 = vmatpush.msra.mxu0 0.0
    %6079 = vmatpush.msra.mxu0 0.0
    %6080 = vmatpush.msra.mxu0 0.0
    %6081 = vmatpush.msra.mxu0 0.0
    %6082 = vmatpush.msra.mxu0 0.0
    %6083 = vmatpush.msra.mxu0 0.0
    %6084 = vmatpush.msra.mxu0 0.0
    %6085 = vmatpush.msra.mxu0 0.0
    %6086 = vmatpush.msra.mxu0 0.0
    %6087 = vmatpush.msra.mxu0 0.0
    %6088 = vmatpush.msra.mxu0 0.0
    %6089 = vmatpush.msra.mxu0 0.0
    %6090 = vmatpush.msra.mxu0 0.0
    %6091 = vmatpush.msra.mxu0 0.0
    %6092 = vmatpush.msra.mxu0 %v6069
    %6093 = vmatmul.f32.gmra.mxu0 %v6072
    %v6094 = vpop.f32.mrf.mxu0
    %v6095 = vadd.f32 0.0, %v6094
    %6096 = vmatmul.f32.gmra.mxu0 %v6075
    %v6097 = vpop.f32.mrf.mxu0
    %v6098 = vadd.f32 0.0, %v6097
    %6099 = vdwg.mxu0
    %6100 = vrot.lane.b32.xlu0 %v5378, 104
    %v6101 = vpop.permute.xlu0 %6100
    %6102 = vrot.lane.b32.xlu0 %v5381, 104
    %v6103 = vpop.permute.xlu0 %6102
    %6104 = vrot.lane.b32.xlu0 %v5423, 104
    %v6105 = vpop.permute.xlu0 %6104
    %v6106 = vsel %vm358, %v6101, 0
    %v6108 = vsel %vm358, %v6103, 0
    %v6110 = vsel %vm358, %v6105, 0
    %6112 = vmatpush.xpose.msra.mxu0 0.0
    %6113 = vmatpush.xpose.msra.mxu0 0.0
    %6114 = vmatpush.xpose.msra.mxu0 0.0
    %6115 = vmatpush.xpose.msra.mxu0 0.0
    %6116 = vmatpush.xpose.msra.mxu0 0.0
    %6117 = vmatpush.xpose.msra.mxu0 0.0
    %6118 = vmatpush.xpose.msra.mxu0 0.0
    %6119 = vmatpush.xpose.msra.mxu0 0.0
    %6120 = vmatpush.xpose.msra.mxu0 0.0
    %6121 = vmatpush.xpose.msra.mxu0 0.0
    %6122 = vmatpush.xpose.msra.mxu0 0.0
    %6123 = vmatpush.xpose.msra.mxu0 0.0
    %6124 = vmatpush.xpose.msra.mxu0 0.0
    %6125 = vmatpush.xpose.msra.mxu0 0.0
    %6126 = vmatpush.xpose.msra.mxu0 0.0
    %6127 = vmatpush.xpose.msra.mxu0 %v6110
    %6128 = vmatmul.f32.gmra.mxu0 %v6106
    %v6129 = vpop.f32.mrf.mxu0
    %v6130 = vadd.f32 0.0, %v6129
    %6131 = vmatmul.f32.gmra.mxu0 %v6108
    %v6132 = vpop.f32.mrf.mxu0
    %v6133 = vadd.f32 0.0, %v6132
    %6134 = vdwg.mxu0
    %v6135 = vmul.f32 %v6130, 0.35355338
    %v6136 = vmul.f32 %v6133, 0.35355338
    %v6137 = vadd.f32 %v6135, %v252
    %v6138 = vadd.f32 %v6136, %v252
    %v6139 = vsel %vm358, %v6137, -inf
    %6140 = vmax.xlane.f32.xlu0 %v6139
    %v6141 = vpop.xlane.xlu0 %6140
    %v6142 = vsel %vm358, %v6138, -inf
    %6143 = vmax.xlane.f32.xlu0 %v6142
    %v6144 = vpop.xlane.xlu0 %6143
    %v6145 = vsub.f32 %v6137, %v6141
    %v6146 = vsub.f32 %v6138, %v6144
    %v6147 = vmul.f32 %v6145, 1.442695
    %v6148 = vpow.pop %v6147
    %v6149 = vmul.f32 %v6146, 1.442695
    %v6150 = vpow.pop %v6149
    %v6151 = vsel %vm358, %v6148, 0.0
    %6152 = vadd.xlane.f32.xlu0 %v6151
    %v6153 = vpop.xlane.xlu0 %6152
    %v6154 = vsel %vm358, %v6150, 0.0
    %6155 = vadd.xlane.f32.xlu0 %v6154
    %v6156 = vpop.xlane.xlu0 %6155
    %v6157 = vrcp.pop %v6153
    %v6158 = vrcp.pop %v6156
    %v6159 = vmul.f32 %v6148, %v6157
    %v6160 = vmul.f32 %v6150, %v6158
    %6161 = vrot.lane.b32.xlu0 %v5423, 72
    %v6162 = vpop.permute.xlu0 %6161
    %v6165 = vsel %vm358, %v6159, 0
    %v6168 = vsel %vm358, %v6160, 0
    %6170 = vmatpush.msra.mxu0 0.0
    %6171 = vmatpush.msra.mxu0 0.0
    %6172 = vmatpush.msra.mxu0 0.0
    %6173 = vmatpush.msra.mxu0 0.0
    %6174 = vmatpush.msra.mxu0 0.0
    %6175 = vmatpush.msra.mxu0 0.0
    %6176 = vmatpush.msra.mxu0 0.0
    %6177 = vmatpush.msra.mxu0 0.0
    %6178 = vmatpush.msra.mxu0 0.0
    %6179 = vmatpush.msra.mxu0 0.0
    %6180 = vmatpush.msra.mxu0 0.0
    %6181 = vmatpush.msra.mxu0 0.0
    %6182 = vmatpush.msra.mxu0 0.0
    %6183 = vmatpush.msra.mxu0 0.0
    %6184 = vmatpush.msra.mxu0 0.0
    %6185 = vmatpush.msra.mxu0 %v6162
    %6186 = vmatmul.f32.gmra.mxu0 %v6165
    %v6187 = vpop.f32.mrf.mxu0
    %v6188 = vadd.f32 0.0, %v6187
    %6189 = vmatmul.f32.gmra.mxu0 %v6168
    %v6190 = vpop.f32.mrf.mxu0
    %v6191 = vadd.f32 0.0, %v6190
    %6192 = vdwg.mxu0
    %6195 = vrot.lane.b32.xlu0 %v6002, 8
    %v6196 = vpop.permute.xlu0 %6195
    %6197 = vrot.lane.b32.xlu0 %v6005, 8
    %v6198 = vpop.permute.xlu0 %6197
    %6203 = vrot.lane.b32.xlu0 %v6095, 16
    %v6204 = vpop.permute.xlu0 %6203
    %6205 = vrot.lane.b32.xlu0 %v6098, 16
    %v6206 = vpop.permute.xlu0 %6205
    %6211 = vrot.lane.b32.xlu0 %v6188, 24
    %v6212 = vpop.permute.xlu0 %6211
    %6213 = vrot.lane.b32.xlu0 %v6191, 24
    %v6214 = vpop.permute.xlu0 %6213
    %v6217 = vsel %vm358, %v5909, %v6196
    %v6218 = vsel %vm358, %v5912, %v6198
    %v6219 = vsel %vm636, %v6217, %v6204
    %v6220 = vsel %vm636, %v6218, %v6206
    %v6221 = vsel %vm638, %v6219, %v6212
    %v6222 = vsel %vm638, %v6220, %v6214
    %v6224 = vperm.slane %v5338, 0
    %v6227 = vsel %vm325, %v5822, 0
    %v6230 = vsel %vm325, %v5823, 0
    %v6233 = vsel %vm325, %v6221, 0
    %v6236 = vsel %vm325, %v6222, 0
    %6238 = vmatpush.msra.mxu0 0.0
    %6239 = vmatpush.msra.mxu0 0.0
    %6240 = vmatpush.msra.mxu0 0.0
    %6241 = vmatpush.msra.mxu0 0.0
    %6242 = vmatpush.msra.mxu0 0.0
    %6243 = vmatpush.msra.mxu0 0.0
    %6244 = vmatpush.msra.mxu0 0.0
    %6245 = vmatpush.msra.mxu0 0.0
    %6246 = vmatpush.msra.mxu0 0.0
    %6247 = vmatpush.msra.mxu0 0.0
    %6248 = vmatpush.msra.mxu0 0.0
    %6249 = vmatpush.msra.mxu0 0.0
    %6250 = vmatpush.msra.mxu0 %v5336
    %6251 = vmatpush.msra.mxu0 %v5335
    %6252 = vmatpush.msra.mxu0 %v5334
    %6253 = vmatpush.msra.mxu0 %v5333
    %6254 = vmatmul.f32.gmra.mxu0 %v6227
    %v6255 = vpop.f32.mrf.mxu0
    %v6256 = vadd.f32 %v6224, %v6255
    %6257 = vmatmul.f32.gmra.mxu0 %v6230
    %v6258 = vpop.f32.mrf.mxu0
    %v6259 = vadd.f32 %v6224, %v6258
    %6260 = vmatmul.f32.gmra.mxu0 %v6233
    %v6261 = vpop.f32.mrf.mxu0
    %v6262 = vadd.f32 %v6224, %v6261
    %6263 = vmatmul.f32.gmra.mxu0 %v6236
    %v6264 = vpop.f32.mrf.mxu0
    %v6265 = vadd.f32 %v6224, %v6264
    %6266 = vdwg.mxu0
    %v6267 = vadd.f32 %v5321, %v6256
    %v6268 = vadd.f32 %v5322, %v6259
    %v6269 = vadd.f32 %v5323, %v6262
    %v6270 = vadd.f32 %v5324, %v6265
    %s6271 = scalar_lea.vmem %s27, 2
    %v6272 = vld [vmem:[%s6271] sm:$0x3]
    %v6273 = vsel %vm325, %v6267, 0.0
    %6274 = vadd.xlane.f32.xlu0 %v6273
    %v6275 = vpop.xlane.xlu0 %6274
    %v6276 = vsel %vm325, %v6268, 0.0
    %6277 = vadd.xlane.f32.xlu0 %v6276
    %v6278 = vpop.xlane.xlu0 %6277
    %v6279 = vsel %vm325, %v6269, 0.0
    %6280 = vadd.xlane.f32.xlu0 %v6279
    %v6281 = vpop.xlane.xlu0 %6280
    %v6282 = vsel %vm325, %v6270, 0.0
    %6283 = vadd.xlane.f32.xlu0 %v6282
    %v6284 = vpop.xlane.xlu0 %6283
    %v6285 = vmul.f32 %v6275, %v969
    %v6286 = vmul.f32 %v6278, %v969
    %v6287 = vmul.f32 %v6281, %v969
    %v6288 = vmul.f32 %v6284, %v969
    %v6289 = vsub.f32 %v6267, %v6285
    %v6290 = vsub.f32 %v6268, %v6286
    %v6291 = vsub.f32 %v6269, %v6287
    %v6292 = vsub.f32 %v6270, %v6288
    %v6293 = vmul.f32 %v6289, %v6289
    %v6294 = vmul.f32 %v6290, %v6290
    %v6295 = vmul.f32 %v6291, %v6291
    %v6296 = vmul.f32 %v6292, %v6292
    %v6297 = vsel %vm325, %v6293, 0.0
    %6298 = vadd.xlane.f32.xlu0 %v6297
    %v6299 = vpop.xlane.xlu0 %6298
    %v6300 = vsel %vm325, %v6294, 0.0
    %6301 = vadd.xlane.f32.xlu0 %v6300
    %v6302 = vpop.xlane.xlu0 %6301
    %v6303 = vsel %vm325, %v6295, 0.0
    %6304 = vadd.xlane.f32.xlu0 %v6303
    %v6305 = vpop.xlane.xlu0 %6304
    %v6306 = vsel %vm325, %v6296, 0.0
    %6307 = vadd.xlane.f32.xlu0 %v6306
    %v6308 = vpop.xlane.xlu0 %6307
    %v6309 = vmul.f32 %v6299, %v969
    %v6310 = vmul.f32 %v6302, %v969
    %v6311 = vmul.f32 %v6305, %v969
    %v6312 = vmul.f32 %v6308, %v969
    %v6313 = vadd.f32 %v6309, 1e-05
    %v6314 = vadd.f32 %v6310, 1e-05
    %v6315 = vadd.f32 %v6311, 1e-05
    %v6316 = vadd.f32 %v6312, 1e-05
    %v6317 = vrsqrt.pop %v6313
    %v6318 = vmul.f32 %v6317, %v6313
    %v6319 = vmul.f32 %v6318, %v6317
    %v6320 = vmul.f32 0.5, %v6319
    %v6321 = vsub.f32 1.5, %v6320
    %v6322 = vmul.f32 %v6317, %v6321
    %vm6323 = vweird.f32 %v6313
    %vm6324 = vweird.f32 %v6317
    %vm6325 = vmor %vm6323, %vm6324
    %v6326 = vsel %vm6325, %v6317, %v6322
    %v6327 = vrsqrt.pop %v6314
    %v6328 = vmul.f32 %v6327, %v6314
    %v6329 = vmul.f32 %v6328, %v6327
    %v6330 = vmul.f32 0.5, %v6329
    %v6331 = vsub.f32 1.5, %v6330
    %v6332 = vmul.f32 %v6327, %v6331
    %vm6333 = vweird.f32 %v6314
    %vm6334 = vweird.f32 %v6327
    %vm6335 = vmor %vm6333, %vm6334
    %v6336 = vsel %vm6335, %v6327, %v6332
    %v6337 = vrsqrt.pop %v6315
    %v6338 = vmul.f32 %v6337, %v6315
    %v6339 = vmul.f32 %v6338, %v6337
    %v6340 = vmul.f32 0.5, %v6339
    %v6341 = vsub.f32 1.5, %v6340
    %v6342 = vmul.f32 %v6337, %v6341
    %vm6343 = vweird.f32 %v6315
    %vm6344 = vweird.f32 %v6337
    %vm6345 = vmor %vm6343, %vm6344
    %v6346 = vsel %vm6345, %v6337, %v6342
    %v6347 = vrsqrt.pop %v6316
    %v6348 = vmul.f32 %v6347, %v6316
    %v6349 = vmul.f32 %v6348, %v6347
    %v6350 = vmul.f32 0.5, %v6349
    %v6351 = vsub.f32 1.5, %v6350
    %v6352 = vmul.f32 %v6347, %v6351
    %vm6353 = vweird.f32 %v6316
    %vm6354 = vweird.f32 %v6347
    %vm6355 = vmor %vm6353, %vm6354
    %v6356 = vsel %vm6355, %v6347, %v6352
    %v6357 = vmul.f32 %v6289, %v6326
    %v6358 = vmul.f32 %v6290, %v6336
    %v6359 = vmul.f32 %v6291, %v6346
    %v6360 = vmul.f32 %v6292, %v6356
    %v6361 = vperm.slane %v6272, 0
    %v6362 = vmul.f32 %v6357, %v6361
    %v6363 = vmul.f32 %v6358, %v6361
    %v6364 = vmul.f32 %v6359, %v6361
    %v6365 = vmul.f32 %v6360, %v6361
    %v6366 = vperm.slane %v6272, 1
    %v6367 = vadd.f32 %v6362, %v6366
    %v6368 = vadd.f32 %v6363, %v6366
    %v6369 = vadd.f32 %v6364, %v6366
    %v6370 = vadd.f32 %v6365, %v6366
    %s6371 = scalar_lea.vmem %s13, 32
    %v6372 = vld [vmem:[%s6371] sm:$0xff]
    %v6373 = vld [vmem:[%s6371 + $0x8] sm:$0xff]
    %v6374 = vld [vmem:[%s6371 + $0x10] sm:$0xff]
    %v6375 = vld [vmem:[%s6371 + $0x18] sm:$0xff]
    %s6376 = scalar_lea.vmem %s9, 1
    %v6377 = vld [vmem:[%s6376] sm:$0x1]
    %v6379 = vperm.slane %v6377, 0
    %v6382 = vsel %vm325, %v6367, 0
    %v6385 = vsel %vm325, %v6368, 0
    %v6388 = vsel %vm325, %v6369, 0
    %v6391 = vsel %vm325, %v6370, 0
    %6393 = vmatpush.msra.mxu0 0.0
    %6394 = vmatpush.msra.mxu0 0.0
    %6395 = vmatpush.msra.mxu0 0.0
    %6396 = vmatpush.msra.mxu0 0.0
    %6397 = vmatpush.msra.mxu0 0.0
    %6398 = vmatpush.msra.mxu0 0.0
    %6399 = vmatpush.msra.mxu0 0.0
    %6400 = vmatpush.msra.mxu0 0.0
    %6401 = vmatpush.msra.mxu0 0.0
    %6402 = vmatpush.msra.mxu0 0.0
    %6403 = vmatpush.msra.mxu0 0.0
    %6404 = vmatpush.msra.mxu0 0.0
    %6405 = vmatpush.msra.mxu0 %v6375
    %6406 = vmatpush.msra.mxu0 %v6374
    %6407 = vmatpush.msra.mxu0 %v6373
    %6408 = vmatpush.msra.mxu0 %v6372
    %6409 = vmatmul.f32.gmra.mxu0 %v6382
    %v6410 = vpop.f32.mrf.mxu0
    %v6411 = vadd.f32 %v6379, %v6410
    %6412 = vmatmul.f32.gmra.mxu0 %v6385
    %v6413 = vpop.f32.mrf.mxu0
    %v6414 = vadd.f32 %v6379, %v6413
    %6415 = vmatmul.f32.gmra.mxu0 %v6388
    %v6416 = vpop.f32.mrf.mxu0
    %v6417 = vadd.f32 %v6379, %v6416
    %6418 = vmatmul.f32.gmra.mxu0 %v6391
    %v6419 = vpop.f32.mrf.mxu0
    %v6420 = vadd.f32 %v6379, %v6419
    %6421 = vdwg.mxu0
    %v6422 = vmax.f32 %v6411, 0.0
    %v6423 = vmax.f32 %v6414, 0.0
    %v6424 = vmax.f32 %v6417, 0.0
    %v6425 = vmax.f32 %v6420, 0.0
    %s6426 = scalar_lea.vmem %s15, 64
    %v6427 = vld [vmem:[%s6426] sm:$0xff]
    %v6428 = vld [vmem:[%s6426 + $0x8] sm:$0xff]
    %v6429 = vld [vmem:[%s6426 + $0x10] sm:$0xff]
    %v6430 = vld [vmem:[%s6426 + $0x18] sm:$0xff]
    %v6431 = vld [vmem:[%s6426 + $0x20] sm:$0xff]
    %v6432 = vld [vmem:[%s6426 + $0x28] sm:$0xff]
    %v6433 = vld [vmem:[%s6426 + $0x30] sm:$0xff]
    %v6434 = vld [vmem:[%s6426 + $0x38] sm:$0xff]
    %s6435 = scalar_lea.vmem %s11, 1
    %v6436 = vld [vmem:[%s6435] sm:$0x1]
    %v6438 = vperm.slane %v6436, 0
    %v6441 = vsel %vm1065, %v6422, 0
    %v6444 = vsel %vm1065, %v6423, 0
    %v6447 = vsel %vm1065, %v6424, 0
    %v6450 = vsel %vm1065, %v6425, 0
    %6452 = vmatpush.msra.mxu0 0.0
    %6453 = vmatpush.msra.mxu0 0.0
    %6454 = vmatpush.msra.mxu0 0.0
    %6455 = vmatpush.msra.mxu0 0.0
    %6456 = vmatpush.msra.mxu0 0.0
    %6457 = vmatpush.msra.mxu0 0.0
    %6458 = vmatpush.msra.mxu0 0.0
    %6459 = vmatpush.msra.mxu0 0.0
    %6460 = vmatpush.msra.mxu0 %v6434
    %6461 = vmatpush.msra.mxu0 %v6433
    %6462 = vmatpush.msra.mxu0 %v6432
    %6463 = vmatpush.msra.mxu0 %v6431
    %6464 = vmatpush.msra.mxu0 %v6430
    %6465 = vmatpush.msra.mxu0 %v6429
    %6466 = vmatpush.msra.mxu0 %v6428
    %6467 = vmatpush.msra.mxu0 %v6427
    %6468 = vmatmul.f32.gmra.mxu0 %v6441
    %v6469 = vpop.f32.mrf.mxu0
    %v6470 = vadd.f32 %v6438, %v6469
    %6471 = vmatmul.f32.gmra.mxu0 %v6444
    %v6472 = vpop.f32.mrf.mxu0
    %v6473 = vadd.f32 %v6438, %v6472
    %6474 = vmatmul.f32.gmra.mxu0 %v6447
    %v6475 = vpop.f32.mrf.mxu0
    %v6476 = vadd.f32 %v6438, %v6475
    %6477 = vmatmul.f32.gmra.mxu0 %v6450
    %v6478 = vpop.f32.mrf.mxu0
    %v6479 = vadd.f32 %v6438, %v6478
    %6480 = vdwg.mxu0
    %v6481 = vadd.f32 %v6367, %v6470
    %v6482 = vadd.f32 %v6368, %v6473
    %v6483 = vadd.f32 %v6369, %v6476
    %v6484 = vadd.f32 %v6370, %v6479
    %s6485 = scalar_lea.vmem %s29, 2
    %v6486 = vld [vmem:[%s6485] sm:$0x3]
    %v6487 = vsel %vm325, %v6481, 0.0
    %6488 = vadd.xlane.f32.xlu0 %v6487
    %v6489 = vpop.xlane.xlu0 %6488
    %v6490 = vsel %vm325, %v6482, 0.0
    %6491 = vadd.xlane.f32.xlu0 %v6490
    %v6492 = vpop.xlane.xlu0 %6491
    %v6493 = vsel %vm325, %v6483, 0.0
    %6494 = vadd.xlane.f32.xlu0 %v6493
    %v6495 = vpop.xlane.xlu0 %6494
    %v6496 = vsel %vm325, %v6484, 0.0
    %6497 = vadd.xlane.f32.xlu0 %v6496
    %v6498 = vpop.xlane.xlu0 %6497
    %v6499 = vmul.f32 %v6489, %v969
    %v6500 = vmul.f32 %v6492, %v969
    %v6501 = vmul.f32 %v6495, %v969
    %v6502 = vmul.f32 %v6498, %v969
    %v6503 = vsub.f32 %v6481, %v6499
    %v6504 = vsub.f32 %v6482, %v6500
    %v6505 = vsub.f32 %v6483, %v6501
    %v6506 = vsub.f32 %v6484, %v6502
    %v6507 = vmul.f32 %v6503, %v6503
    %v6508 = vmul.f32 %v6504, %v6504
    %v6509 = vmul.f32 %v6505, %v6505
    %v6510 = vmul.f32 %v6506, %v6506
    %v6511 = vsel %vm325, %v6507, 0.0
    %6512 = vadd.xlane.f32.xlu0 %v6511
    %v6513 = vpop.xlane.xlu0 %6512
    %v6514 = vsel %vm325, %v6508, 0.0
    %6515 = vadd.xlane.f32.xlu0 %v6514
    %v6516 = vpop.xlane.xlu0 %6515
    %v6517 = vsel %vm325, %v6509, 0.0
    %6518 = vadd.xlane.f32.xlu0 %v6517
    %v6519 = vpop.xlane.xlu0 %6518
    %v6520 = vsel %vm325, %v6510, 0.0
    %6521 = vadd.xlane.f32.xlu0 %v6520
    %v6522 = vpop.xlane.xlu0 %6521
    %v6523 = vmul.f32 %v6513, %v969
    %v6524 = vmul.f32 %v6516, %v969
    %v6525 = vmul.f32 %v6519, %v969
    %v6526 = vmul.f32 %v6522, %v969
    %v6527 = vadd.f32 %v6523, 1e-05
    %v6528 = vadd.f32 %v6524, 1e-05
    %v6529 = vadd.f32 %v6525, 1e-05
    %v6530 = vadd.f32 %v6526, 1e-05
    %v6531 = vrsqrt.pop %v6527
    %v6532 = vmul.f32 %v6531, %v6527
    %v6533 = vmul.f32 %v6532, %v6531
    %v6534 = vmul.f32 0.5, %v6533
    %v6535 = vsub.f32 1.5, %v6534
    %v6536 = vmul.f32 %v6531, %v6535
    %vm6537 = vweird.f32 %v6527
    %vm6538 = vweird.f32 %v6531
    %vm6539 = vmor %vm6537, %vm6538
    %v6540 = vsel %vm6539, %v6531, %v6536
    %v6541 = vrsqrt.pop %v6528
    %v6542 = vmul.f32 %v6541, %v6528
    %v6543 = vmul.f32 %v6542, %v6541
    %v6544 = vmul.f32 0.5, %v6543
    %v6545 = vsub.f32 1.5, %v6544
    %v6546 = vmul.f32 %v6541, %v6545
    %vm6547 = vweird.f32 %v6528
    %vm6548 = vweird.f32 %v6541
    %vm6549 = vmor %vm6547, %vm6548
    %v6550 = vsel %vm6549, %v6541, %v6546
    %v6551 = vrsqrt.pop %v6529
    %v6552 = vmul.f32 %v6551, %v6529
    %v6553 = vmul.f32 %v6552, %v6551
    %v6554 = vmul.f32 0.5, %v6553
    %v6555 = vsub.f32 1.5, %v6554
    %v6556 = vmul.f32 %v6551, %v6555
    %vm6557 = vweird.f32 %v6529
    %vm6558 = vweird.f32 %v6551
    %vm6559 = vmor %vm6557, %vm6558
    %v6560 = vsel %vm6559, %v6551, %v6556
    %v6561 = vrsqrt.pop %v6530
    %v6562 = vmul.f32 %v6561, %v6530
    %v6563 = vmul.f32 %v6562, %v6561
    %v6564 = vmul.f32 0.5, %v6563
    %v6565 = vsub.f32 1.5, %v6564
    %v6566 = vmul.f32 %v6561, %v6565
    %vm6567 = vweird.f32 %v6530
    %vm6568 = vweird.f32 %v6561
    %vm6569 = vmor %vm6567, %vm6568
    %v6570 = vsel %vm6569, %v6561, %v6566
    %v6571 = vmul.f32 %v6503, %v6540
    %v6572 = vmul.f32 %v6504, %v6550
    %v6573 = vmul.f32 %v6505, %v6560
    %v6574 = vmul.f32 %v6506, %v6570
    %v6575 = vperm.slane %v6486, 0
    %v6576 = vmul.f32 %v6571, %v6575
    %v6577 = vmul.f32 %v6572, %v6575
    %v6578 = vmul.f32 %v6573, %v6575
    %v6579 = vmul.f32 %v6574, %v6575
    %v6580 = vperm.slane %v6486, 1
    %v6581 = vadd.f32 %v6576, %v6580
    %v6582 = vadd.f32 %v6577, %v6580
    %v6583 = vadd.f32 %v6578, %v6580
    %v6584 = vadd.f32 %v6579, %v6580
    %v6585 = vld [vmem:[%s69] sm:$0xff]
    %v6586 = vld [vmem:[%s69 + $0x8] sm:$0xff]
    %v6587 = vld [vmem:[%s69 + $0x10] sm:$0xff]
    %v6588 = vld [vmem:[%s69 + $0x18] sm:$0xff]
    %v6589 = vld [vmem:[%s61] sm:$0x1]
    %v6590 = vld [vmem:[%s71] sm:$0xff]
    %v6591 = vld [vmem:[%s71 + $0x8] sm:$0xff]
    %v6592 = vld [vmem:[%s71 + $0x10] sm:$0xff]
    %v6593 = vld [vmem:[%s71 + $0x18] sm:$0xff]
    %v6594 = vld [vmem:[%s71 + $0x20] sm:$0xff]
    %v6595 = vld [vmem:[%s71 + $0x28] sm:$0xff]
    %v6596 = vld [vmem:[%s71 + $0x30] sm:$0xff]
    %v6597 = vld [vmem:[%s71 + $0x38] sm:$0xff]
    %v6598 = vld [vmem:[#allocation2] sm:$0x1]
    %v6600 = vperm.slane %v6589, 0
    %6602 = vmatpush.msra.mxu0 0.0
    %6603 = vmatpush.msra.mxu0 0.0
    %6604 = vmatpush.msra.mxu0 0.0
    %6605 = vmatpush.msra.mxu0 0.0
    %6606 = vmatpush.msra.mxu0 0.0
    %6607 = vmatpush.msra.mxu0 0.0
    %6608 = vmatpush.msra.mxu0 0.0
    %6609 = vmatpush.msra.mxu0 0.0
    %6610 = vmatpush.msra.mxu0 0.0
    %6611 = vmatpush.msra.mxu0 0.0
    %6612 = vmatpush.msra.mxu0 0.0
    %6613 = vmatpush.msra.mxu0 0.0
    %6614 = vmatpush.msra.mxu0 %v6588
    %6615 = vmatpush.msra.mxu0 %v6587
    %6616 = vmatpush.msra.mxu0 %v6586
    %6617 = vmatpush.msra.mxu0 %v6585
    %6618 = vmatmul.f32.gmra.mxu0 %v3097
    %v6619 = vpop.f32.mrf.mxu0
    %v6620 = vadd.f32 %v6600, %v6619
    %6621 = vmatmul.f32.gmra.mxu0 %v3100
    %v6622 = vpop.f32.mrf.mxu0
    %v6623 = vadd.f32 %v6600, %v6622
    %6624 = vdwg.mxu0
    %v6625 = vmax.f32 %v6620, 0.0
    %v6626 = vmax.f32 %v6623, 0.0
    %v6628 = vperm.slane %v6598, 0
    %v6631 = vsel %vm1065, %v6625, 0
    %v6634 = vsel %vm1065, %v6626, 0
    %6636 = vmatpush.msra.mxu0 0.0
    %6637 = vmatpush.msra.mxu0 0.0
    %6638 = vmatpush.msra.mxu0 0.0
    %6639 = vmatpush.msra.mxu0 0.0
    %6640 = vmatpush.msra.mxu0 0.0
    %6641 = vmatpush.msra.mxu0 0.0
    %6642 = vmatpush.msra.mxu0 0.0
    %6643 = vmatpush.msra.mxu0 0.0
    %6644 = vmatpush.msra.mxu0 %v6597
    %6645 = vmatpush.msra.mxu0 %v6596
    %6646 = vmatpush.msra.mxu0 %v6595
    %6647 = vmatpush.msra.mxu0 %v6594
    %6648 = vmatpush.msra.mxu0 %v6593
    %6649 = vmatpush.msra.mxu0 %v6592
    %6650 = vmatpush.msra.mxu0 %v6591
    %6651 = vmatpush.msra.mxu0 %v6590
    %6652 = vmatmul.f32.gmra.mxu0 %v6631
    %v6653 = vpop.f32.mrf.mxu0
    %v6654 = vadd.f32 %v6628, %v6653
    %6655 = vmatmul.f32.gmra.mxu0 %v6634
    %v6656 = vpop.f32.mrf.mxu0
    %v6657 = vadd.f32 %v6628, %v6656
    %6658 = vdwg.mxu0
    %v6659 = vadd.f32 %v6654, %v243
    %vm6660 = vcmask 7168
    %v6661 = vsel %vm6660, %v6659, -inf
    %v6662 = vrot.slane %v6661, 4
    %v6663 = vmax.f32 %v6661, %v6662
    %v6664 = vrot.slane %v6663, 2
    %v6665 = vmax.f32 %v6663, %v6664
    %v6666 = vrot.slane %v6665, 1
    %v6667 = vmax.f32 %v6665, %v6666
    %v6668 = vsub.f32 %v6659, %v6667
    %v6669 = vmul.f32 %v6668, 1.442695
    %v6670 = vpow.pop %v6669
    %v6671 = vsel %vm6660, %v6670, 0.0
    %v6672 = vrot.slane %v6671, 4
    %v6673 = vadd.f32 %v6671, %v6672
    %v6674 = vrot.slane %v6673, 2
    %v6675 = vadd.f32 %v6673, %v6674
    %v6676 = vrot.slane %v6675, 1
    %v6677 = vadd.f32 %v6675, %v6676
    %v6678 = vrcp.pop %v6677
    %v6679 = vmul.f32 %v6670, %v6678
    %6681 = vset.pattern.permute.xlu0 0
    %6682 = vperm.xlu0 %6681, %v6679
    %v6683 = vpop.permute.xlu0 %6682
    %v6685 = vmul.f32 %v1980, %v6683
    %v6686 = vsel %vm325, %v6685, 0.0
    %v6687 = vrot.slane %v6686, 4
    %v6688 = vadd.f32 %v6686, %v6687
    %v6689 = vrot.slane %v6688, 2
    %v6690 = vadd.f32 %v6688, %v6689
    %v6691 = vrot.slane %v6690, 1
    %v6692 = vadd.f32 %v6690, %v6691
    %6694 = vrot.lane.b32.xlu0 %v243, 127
    %v6695 = vpop.permute.xlu0 %6694
    %v6697 = vadd.f32 %v6657, %v6695
    %v6698 = vsel %vm6660, %v6697, -inf
    %v6699 = vrot.slane %v6698, 4
    %v6700 = vmax.f32 %v6698, %v6699
    %v6701 = vrot.slane %v6700, 2
    %v6702 = vmax.f32 %v6700, %v6701
    %v6703 = vrot.slane %v6702, 1
    %v6704 = vmax.f32 %v6702, %v6703
    %v6705 = vsub.f32 %v6697, %v6704
    %v6706 = vmul.f32 %v6705, 1.442695
    %v6707 = vpow.pop %v6706
    %v6708 = vsel %vm6660, %v6707, 0.0
    %v6709 = vrot.slane %v6708, 4
    %v6710 = vadd.f32 %v6708, %v6709
    %v6711 = vrot.slane %v6710, 2
    %v6712 = vadd.f32 %v6710, %v6711
    %v6713 = vrot.slane %v6712, 1
    %v6714 = vadd.f32 %v6712, %v6713
    %v6715 = vrcp.pop %v6714
    %v6716 = vmul.f32 %v6707, %v6715
    %6718 = vset.pattern.permute.xlu0 0
    %6719 = vperm.xlu0 %6718, %v6716
    %v6720 = vpop.permute.xlu0 %6719
    %v6722 = vmul.f32 %v1981, %v6720
    %v6723 = vsel %vm325, %v6722, 0.0
    %v6724 = vrot.slane %v6723, 4
    %v6725 = vadd.f32 %v6723, %v6724
    %v6726 = vrot.slane %v6725, 2
    %v6727 = vadd.f32 %v6725, %v6726
    %v6728 = vrot.slane %v6727, 1
    %v6729 = vadd.f32 %v6727, %v6728
    %vm6730 = vcmask 1040384
    %v6731 = vsel %vm6730, %v6692, %v6729
    %v6732 = vld [vmem:[#allocation4] sm:$0xff]
    %v6733 = vld [vmem:[#allocation4 + $0x8] sm:$0xff]
    %v6734 = vld [vmem:[#allocation4 + $0x10] sm:$0xff]
    %v6735 = vld [vmem:[#allocation4 + $0x18] sm:$0xff]
    %v6736 = vld [vmem:[%s73] sm:$0x1]
    %v6737 = vld [vmem:[%s83] sm:$0xff]
    %v6738 = vld [vmem:[%s83 + $0x8] sm:$0xff]
    %v6739 = vld [vmem:[%s83 + $0x10] sm:$0xff]
    %v6740 = vld [vmem:[%s83 + $0x18] sm:$0xff]
    %v6741 = vld [vmem:[%s83 + $0x20] sm:$0xff]
    %v6742 = vld [vmem:[%s83 + $0x28] sm:$0xff]
    %v6743 = vld [vmem:[%s83 + $0x30] sm:$0xff]
    %v6744 = vld [vmem:[%s83 + $0x38] sm:$0xff]
    %v6745 = vld [vmem:[#allocation3] sm:$0x1]
    %v6747 = vperm.slane %v6736, 0
    %v6750 = vsel %vm325, %v6581, 0
    %v6753 = vsel %vm325, %v6582, 0
    %v6756 = vsel %vm325, %v6583, 0
    %v6759 = vsel %vm325, %v6584, 0
    %6761 = vmatpush.msra.mxu0 0.0
    %6762 = vmatpush.msra.mxu0 0.0
    %6763 = vmatpush.msra.mxu0 0.0
    %6764 = vmatpush.msra.mxu0 0.0
    %6765 = vmatpush.msra.mxu0 0.0
    %6766 = vmatpush.msra.mxu0 0.0
    %6767 = vmatpush.msra.mxu0 0.0
    %6768 = vmatpush.msra.mxu0 0.0
    %6769 = vmatpush.msra.mxu0 0.0
    %6770 = vmatpush.msra.mxu0 0.0
    %6771 = vmatpush.msra.mxu0 0.0
    %6772 = vmatpush.msra.mxu0 0.0
    %6773 = vmatpush.msra.mxu0 %v6735
    %6774 = vmatpush.msra.mxu0 %v6734
    %6775 = vmatpush.msra.mxu0 %v6733
    %6776 = vmatpush.msra.mxu0 %v6732
    %6777 = vmatmul.f32.gmra.mxu0 %v6750
    %v6778 = vpop.f32.mrf.mxu0
    %v6779 = vadd.f32 %v6747, %v6778
    %6780 = vmatmul.f32.gmra.mxu0 %v6753
    %v6781 = vpop.f32.mrf.mxu0
    %v6782 = vadd.f32 %v6747, %v6781
    %6783 = vmatmul.f32.gmra.mxu0 %v6756
    %v6784 = vpop.f32.mrf.mxu0
    %v6785 = vadd.f32 %v6747, %v6784
    %6786 = vmatmul.f32.gmra.mxu0 %v6759
    %v6787 = vpop.f32.mrf.mxu0
    %v6788 = vadd.f32 %v6747, %v6787
    %6789 = vdwg.mxu0
    %v6790 = vmax.f32 %v6779, 0.0
    %v6791 = vmax.f32 %v6782, 0.0
    %v6792 = vmax.f32 %v6785, 0.0
    %v6793 = vmax.f32 %v6788, 0.0
    %v6795 = vperm.slane %v6745, 0
    %v6798 = vsel %vm1065, %v6790, 0
    %v6801 = vsel %vm1065, %v6791, 0
    %v6804 = vsel %vm1065, %v6792, 0
    %v6807 = vsel %vm1065, %v6793, 0
    %6809 = vmatpush.msra.mxu0 0.0
    %6810 = vmatpush.msra.mxu0 0.0
    %6811 = vmatpush.msra.mxu0 0.0
    %6812 = vmatpush.msra.mxu0 0.0
    %6813 = vmatpush.msra.mxu0 0.0
    %6814 = vmatpush.msra.mxu0 0.0
    %6815 = vmatpush.msra.mxu0 0.0
    %6816 = vmatpush.msra.mxu0 0.0
    %6817 = vmatpush.msra.mxu0 %v6744
    %6818 = vmatpush.msra.mxu0 %v6743
    %6819 = vmatpush.msra.mxu0 %v6742
    %6820 = vmatpush.msra.mxu0 %v6741
    %6821 = vmatpush.msra.mxu0 %v6740
    %6822 = vmatpush.msra.mxu0 %v6739
    %6823 = vmatpush.msra.mxu0 %v6738
    %6824 = vmatpush.msra.mxu0 %v6737
    %6825 = vmatmul.f32.gmra.mxu0 %v6798
    %v6826 = vpop.f32.mrf.mxu0
    %v6827 = vadd.f32 %v6795, %v6826
    %6828 = vmatmul.f32.gmra.mxu0 %v6801
    %v6829 = vpop.f32.mrf.mxu0
    %v6830 = vadd.f32 %v6795, %v6829
    %6831 = vmatmul.f32.gmra.mxu0 %v6804
    %v6832 = vpop.f32.mrf.mxu0
    %v6833 = vadd.f32 %v6795, %v6832
    %6834 = vmatmul.f32.gmra.mxu0 %v6807
    %v6835 = vpop.f32.mrf.mxu0
    %v6836 = vadd.f32 %v6795, %v6835
    %6837 = vdwg.mxu0
    %v6838 = vsel %vm6660, %v6827, -inf
    %v6839 = vsel %vm6660, %v6830, -inf
    %v6840 = vmax.f32 %v6838, %v6839
    %v6841 = vrot.slane %v6840, 4
    %v6842 = vmax.f32 %v6840, %v6841
    %v6843 = vrot.slane %v6842, 2
    %v6844 = vmax.f32 %v6842, %v6843
    %v6845 = vrot.slane %v6844, 1
    %v6846 = vmax.f32 %v6844, %v6845
    %v6847 = vsub.f32 %v6827, %v6846
    %v6848 = vsub.f32 %v6830, %v6846
    %v6849 = vmul.f32 %v6847, 1.442695
    %v6850 = vpow.pop %v6849
    %v6851 = vmul.f32 %v6848, 1.442695
    %v6852 = vpow.pop %v6851
    %v6853 = vsel %vm6660, %v6850, 0.0
    %v6854 = vsel %vm6660, %v6852, 0.0
    %v6855 = vadd.f32 %v6853, %v6854
    %v6856 = vrot.slane %v6855, 4
    %v6857 = vadd.f32 %v6855, %v6856
    %v6858 = vrot.slane %v6857, 2
    %v6859 = vadd.f32 %v6857, %v6858
    %v6860 = vrot.slane %v6859, 1
    %v6861 = vadd.f32 %v6859, %v6860
    %v6862 = vrcp.pop %v6861
    %v6863 = vmul.f32 %v6850, %v6862
    %v6864 = vmul.f32 %v6852, %v6862
    %6866 = vset.pattern.permute.xlu0 0
    %6867 = vperm.xlu0 %6866, %v6863
    %v6868 = vpop.permute.xlu0 %6867
    %6871 = vset.pattern.permute.xlu0 0
    %6872 = vperm.xlu0 %6871, %v6864
    %v6873 = vpop.permute.xlu0 %6872
    %v6875 = vmul.f32 %v6581, %v6868
    %v6876 = vmul.f32 %v6582, %v6873
    %v6877 = vsel %vm325, %v6875, 0.0
    %v6878 = vsel %vm325, %v6876, 0.0
    %v6879 = vadd.f32 %v6877, %v6878
    %v6880 = vrot.slane %v6879, 4
    %v6881 = vadd.f32 %v6879, %v6880
    %v6882 = vrot.slane %v6881, 2
    %v6883 = vadd.f32 %v6881, %v6882
    %v6884 = vrot.slane %v6883, 1
    %v6885 = vadd.f32 %v6883, %v6884
    %v6886 = vsel %vm6660, %v6833, -inf
    %v6887 = vsel %vm6660, %v6836, -inf
    %v6888 = vmax.f32 %v6886, %v6887
    %v6889 = vrot.slane %v6888, 4
    %v6890 = vmax.f32 %v6888, %v6889
    %v6891 = vrot.slane %v6890, 2
    %v6892 = vmax.f32 %v6890, %v6891
    %v6893 = vrot.slane %v6892, 1
    %v6894 = vmax.f32 %v6892, %v6893
    %v6895 = vsub.f32 %v6833, %v6894
    %v6896 = vsub.f32 %v6836, %v6894
    %v6897 = vmul.f32 %v6895, 1.442695
    %v6898 = vpow.pop %v6897
    %v6899 = vmul.f32 %v6896, 1.442695
    %v6900 = vpow.pop %v6899
    %v6901 = vsel %vm6660, %v6898, 0.0
    %v6902 = vsel %vm6660, %v6900, 0.0
    %v6903 = vadd.f32 %v6901, %v6902
    %v6904 = vrot.slane %v6903, 4
    %v6905 = vadd.f32 %v6903, %v6904
    %v6906 = vrot.slane %v6905, 2
    %v6907 = vadd.f32 %v6905, %v6906
    %v6908 = vrot.slane %v6907, 1
    %v6909 = vadd.f32 %v6907, %v6908
    %v6910 = vrcp.pop %v6909
    %v6911 = vmul.f32 %v6898, %v6910
    %v6912 = vmul.f32 %v6900, %v6910
    %6914 = vset.pattern.permute.xlu0 0
    %6915 = vperm.xlu0 %6914, %v6911
    %v6916 = vpop.permute.xlu0 %6915
    %6919 = vset.pattern.permute.xlu0 0
    %6920 = vperm.xlu0 %6919, %v6912
    %v6921 = vpop.permute.xlu0 %6920
    %v6923 = vmul.f32 %v6583, %v6916
    %v6924 = vmul.f32 %v6584, %v6921
    %v6925 = vsel %vm325, %v6923, 0.0
    %v6926 = vsel %vm325, %v6924, 0.0
    %v6927 = vadd.f32 %v6925, %v6926
    %v6928 = vrot.slane %v6927, 4
    %v6929 = vadd.f32 %v6927, %v6928
    %v6930 = vrot.slane %v6929, 2
    %v6931 = vadd.f32 %v6929, %v6930
    %v6932 = vrot.slane %v6931, 1
    %v6933 = vadd.f32 %v6931, %v6932
    %v6934 = vsel %vm6730, %v6885, %v6933
    %v6935 = vld [vmem:[%s67] sm:$0xff]
    %v6936 = vld [vmem:[%s67 + $0x8] sm:$0xff]
    %v6937 = vld [vmem:[%s67 + $0x10] sm:$0xff]
    %v6938 = vld [vmem:[%s67 + $0x18] sm:$0xff]
    %v6939 = vld [vmem:[%s65] sm:$0x1]
    %v6941 = vperm.slane %v6939, 0
    %v6944 = vsel %vm325, %v6731, 0
    %6946 = vmatpush.msra.mxu0 0.0
    %6947 = vmatpush.msra.mxu0 0.0
    %6948 = vmatpush.msra.mxu0 0.0
    %6949 = vmatpush.msra.mxu0 0.0
    %6950 = vmatpush.msra.mxu0 0.0
    %6951 = vmatpush.msra.mxu0 0.0
    %6952 = vmatpush.msra.mxu0 0.0
    %6953 = vmatpush.msra.mxu0 0.0
    %6954 = vmatpush.msra.mxu0 0.0
    %6955 = vmatpush.msra.mxu0 0.0
    %6956 = vmatpush.msra.mxu0 0.0
    %6957 = vmatpush.msra.mxu0 0.0
    %6958 = vmatpush.msra.mxu0 %v6938
    %6959 = vmatpush.msra.mxu0 %v6937
    %6960 = vmatpush.msra.mxu0 %v6936
    %6961 = vmatpush.msra.mxu0 %v6935
    %6962 = vmatmul.f32.gmra.mxu0 %v6944
    %v6963 = vpop.f32.mrf.mxu0
    %v6964 = vadd.f32 %v6941, %v6963
    %6965 = vdwg.mxu0
    %v6966 = vld [vmem:[%s79] sm:$0xff]
    %v6967 = vld [vmem:[%s79 + $0x8] sm:$0xff]
    %v6968 = vld [vmem:[%s79 + $0x10] sm:$0xff]
    %v6969 = vld [vmem:[%s79 + $0x18] sm:$0xff]
    %v6970 = vld [vmem:[%s77] sm:$0x1]
    %v6972 = vperm.slane %v6970, 0
    %v6975 = vsel %vm325, %v6934, 0
    %6977 = vmatpush.msra.mxu0 0.0
    %6978 = vmatpush.msra.mxu0 0.0
    %6979 = vmatpush.msra.mxu0 0.0
    %6980 = vmatpush.msra.mxu0 0.0
    %6981 = vmatpush.msra.mxu0 0.0
    %6982 = vmatpush.msra.mxu0 0.0
    %6983 = vmatpush.msra.mxu0 0.0
    %6984 = vmatpush.msra.mxu0 0.0
    %6985 = vmatpush.msra.mxu0 0.0
    %6986 = vmatpush.msra.mxu0 0.0
    %6987 = vmatpush.msra.mxu0 0.0
    %6988 = vmatpush.msra.mxu0 0.0
    %6989 = vmatpush.msra.mxu0 %v6969
    %6990 = vmatpush.msra.mxu0 %v6968
    %6991 = vmatpush.msra.mxu0 %v6967
    %6992 = vmatpush.msra.mxu0 %v6966
    %6993 = vmatmul.f32.gmra.mxu0 %v6975
    %v6994 = vpop.f32.mrf.mxu0
    %v6995 = vadd.f32 %v6972, %v6994
    %6996 = vdwg.mxu0
    %v6997 = vadd.f32 %v6964, %v6995
    %v6998 = vld [vmem:[%s59] sm:$0x3]
    %vm6999 = vcmask 254976
    %v7000 = vsel %vm6999, %v6997, 0.0
    %7001 = vadd.xlane.f32.xlu0 %v7000
    %v7002 = vpop.xlane.xlu0 %7001
    %v7003 = vmul.f32 %v7002, %v969
    %v7004 = vsub.f32 %v6997, %v7003
    %v7005 = vmul.f32 %v7004, %v7004
    %v7006 = vsel %vm6999, %v7005, 0.0
    %7007 = vadd.xlane.f32.xlu0 %v7006
    %v7008 = vpop.xlane.xlu0 %7007
    %v7009 = vmul.f32 %v7008, %v969
    %v7010 = vadd.f32 %v7009, 1e-05
    %v7011 = vrsqrt.pop %v7010
    %v7012 = vmul.f32 %v7011, %v7010
    %v7013 = vmul.f32 %v7012, %v7011
    %v7014 = vmul.f32 0.5, %v7013
    %v7015 = vsub.f32 1.5, %v7014
    %v7016 = vmul.f32 %v7011, %v7015
    %vm7017 = vweird.f32 %v7010
    %vm7018 = vweird.f32 %v7011
    %vm7019 = vmor %vm7017, %vm7018
    %v7020 = vsel %vm7019, %v7011, %v7016
    %v7021 = vmul.f32 %v7004, %v7020
    %v7022 = vperm.slane %v6998, 0
    %v7023 = vmul.f32 %v7021, %v7022
    %v7024 = vperm.slane %v6998, 1
    %v7025 = vadd.f32 %v7023, %v7024
    %v7026 = vld [vmem:[%s87] sm:$0xff]
    %v7027 = vld [vmem:[%s87 + $0x8] sm:$0xff]
    %v7028 = vld [vmem:[%s87 + $0x10] sm:$0xff]
    %v7029 = vld [vmem:[%s87 + $0x18] sm:$0xff]
    %v7030 = vld [vmem:[#allocation7] sm:$0x1]
    %v7032 = vperm.slane %v7030, 0
    %v7035 = vsel %vm325, %v7025, 0
    %7037 = vmatpush.msra.mxu0 0.0
    %7038 = vmatpush.msra.mxu0 0.0
    %7039 = vmatpush.msra.mxu0 0.0
    %7040 = vmatpush.msra.mxu0 0.0
    %7041 = vmatpush.msra.mxu0 0.0
    %7042 = vmatpush.msra.mxu0 0.0
    %7043 = vmatpush.msra.mxu0 0.0
    %7044 = vmatpush.msra.mxu0 0.0
    %7045 = vmatpush.msra.mxu0 0.0
    %7046 = vmatpush.msra.mxu0 0.0
    %7047 = vmatpush.msra.mxu0 0.0
    %7048 = vmatpush.msra.mxu0 0.0
    %7049 = vmatpush.msra.mxu0 %v7029
    %7050 = vmatpush.msra.mxu0 %v7028
    %7051 = vmatpush.msra.mxu0 %v7027
    %7052 = vmatpush.msra.mxu0 %v7026
    %7053 = vmatmul.f32.gmra.mxu0 %v7035
    %v7054 = vpop.f32.mrf.mxu0
    %v7055 = vadd.f32 %v7032, %v7054
    %7056 = vdwg.mxu0
    %vm7057 = vcmask 74752
    %7058 = vst.msk [vmem:[#allocation10] sm:$0x3] %vm7057, %v7055
    // Predicated region
    $region198: #{mcan_forward.1} parent=1 // pred_check
      _
    $region199: #{mcan_forward.1} parent=1 // pred_check_branch
      %7060 = sbr.rel (0) target = $region201
    $region200: #{mcan_forward.1} parent=1 // pred_region
      %7062 = vsyncadd [#allocation6], 0
      %s7064 = sshll.u32 [#allocation10], 4
      %s7065 = int_to_ptr.vmem [resolvable:$true] %s7064
      %s7066 = sshll.u32 %s93, 4
      %s7067 = int_to_ptr.hbm [resolvable:$true] %s7066
      %7069 = dma.vmem_to_hbm [thread:$0]  %s7065, 32, %s7067, [#allocation6]
    $region201: #{mcan_forward.1} parent=1 // pred_fallthru
      _
    // Predicated region
    $region202: #{mcan_forward.1} parent=1 // pred_check
      _
    $region203: #{mcan_forward.1} parent=1 // pred_check_branch
      %7071 = sbr.rel (0) target = $region205
    $region204: #{mcan_forward.1} parent=1 // pred_region
      %7073 = dma.done [#allocation6], 32
    $region205: #{mcan_forward.1} parent=1 // pred_fallthru
      _
    %7074 = vsyncpa [#allocation5], 1
    %7075 = vsyncpa [#allocation8], 1
    %7076 = vsyncpa [#allocation6], 1

</llo_original>
